<compile_context>
chip_gen: v5e
topology: v5e:2x2
jax: 0.10.0
libtpu: 0.0.40
codegen_flags: <defaults>
</compile_context>

<pallas_src>
import functools

import jax
import jax.numpy as jnp
from jax import lax
from jax.experimental import pallas as pl
from jax.experimental.pallas import tpu as pltpu


def _round_up(v, m):
    return (v + m - 1) // m * m


def _graph_tower_kernel(x_ref, w_ref, b_ref, gmat_ref, valid_ref, o_ref, pad_ref,
                        *, Wp, num_layers, eps):
    """Fused conv3x3/GroupNorm/ReLU tower for one batch element.

    x_ref    : (1, H*Wp, C)       input activation, width-padded to Wp and flattened
    w_ref    : (L, 9, C, C)       conv weights, tap-major (t = ky*3 + kx), Cin x Cout
    b_ref    : (L, 1, C)          conv biases
    gmat_ref : (C, C)             block-diagonal "same group" matrix / (H*W*Cg)
    valid_ref: (H*Wp, 1) f32      1.0 on real image columns, 0.0 on the Wp-W slack cols
    o_ref    : (1, H*Wp, C)       output (slack columns hold garbage, dropped by wrapper)
    pad_ref  : ((H+3)*Wp, C)      VMEM scratch: zero-ringed padded activation (flat rows)
    """
    n_rows = x_ref.shape[1]            # H * Wp
    C = o_ref.shape[-1]
    interior = Wp + 1                  # flat row offset of image pixel (0, 0)
    cdt = pad_ref.dtype                # bf16 (default) or f32 compute dtype

    # Zero only the halo rows the per-layer writeback never refreshes:
    # top padded row + left border of image row 0, and bottom padded row + trailing slack.
    pad_ref[pl.ds(0, interior), :] = jnp.zeros((interior, C), cdt)
    tail = pad_ref.shape[0] - (interior + n_rows)
    pad_ref[pl.ds(interior + n_rows, tail), :] = jnp.zeros((tail, C), cdt)

    # Layer-0 activation: the wrapper already zero-padded the slack columns, so one
    # contiguous store fills the interior AND re-zeros the left/right borders.
    pad_ref[pl.ds(interior, n_rows), :] = x_ref[0].astype(cdt)

    valid = valid_ref[...]                                   # (n_rows, 1) f32 {0, 1}
    gm = gmat_ref[...].astype(jnp.float32)                   # (C, C)

    for l in range(num_layers):
        # 3x3 conv = 9 accumulating MXU matmuls over shifted flat windows of the
        # padded activation (no materialized im2col buffer).
        acc = None
        for dy in range(3):
            for dx in range(3):
                t = dy * 3 + dx
                lhs = pad_ref[pl.ds(dy * Wp + dx, n_rows), :]          # (n_rows, C)
                part = jnp.dot(lhs, w_ref[l, t],
                               preferred_element_type=jnp.float32)
                acc = part if acc is None else acc + part
        acc = acc + b_ref[l].astype(jnp.float32)                       # (n_rows, C) f32

        # GroupNorm(num_groups, C); gamma=1 / beta=0 at init -> affine folded out.
        # Reduce over valid pixels first (cheap vreg adds), then aggregate channels
        # within each group with two tiny (8,C)@(C,C) matmuls against gmat.
        acc_m = acc * valid
        p1 = jnp.sum(acc_m.reshape(-1, 8, C), axis=0)                  # (8, C)
        p2 = jnp.sum((acc_m * acc_m).reshape(-1, 8, C), axis=0)        # (8, C)
        mean_c = jnp.sum(jnp.dot(p1, gm, preferred_element_type=jnp.float32),
                         axis=0, keepdims=True)                        # (1, C) group E[x]
        ex2_c = jnp.sum(jnp.dot(p2, gm, preferred_element_type=jnp.float32),
                        axis=0, keepdims=True)                         # (1, C) group E[x^2]
        # TODO(synk): single-pass E[x^2]-E[x]^2 is fine at std-0.01 init; switch to a
        # centred second pass before loading trained checkpoints (esp. with bf16).
        var_c = ex2_c - mean_c * mean_c
        inv_c = lax.rsqrt(var_c + eps)
        y = (acc - mean_c) * inv_c

        if l != num_layers - 1:
            y = jnp.maximum(y, 0.0)                                    # ReLU between blocks
            # Masked writeback: refreshes the interior and re-zeros borders/slack so the
            # next layer's taps read a correct zero ring.
            pad_ref[pl.ds(interior, n_rows), :] = (y * valid).astype(cdt)
        else:
            o_ref[0] = y.astype(o_ref.dtype)                           # lane-dense store


@functools.partial(jax.jit, static_argnames=("num_groups", "eps"))
def _graph_tower_level(x_nchw, w_stack, b_stack, *, num_groups, eps=1e-5):
    """Run the fused conv/GN/ReLU tower on one NCHW feature level."""
    N, C, H, W = x_nchw.shape
    L = int(w_stack.shape[0])
    assert C % num_groups == 0
    cg = C // num_groups
    Wp = _round_up(W + 2, 8)            # width incl. 3x3 halo, padded to sublane multiple
    n_rows = H * Wp

    # NCHW -> NHWC, zero-pad width to Wp (these become the masked "slack" columns) and
    # flatten to the (H*Wp, C) row-strided layout the kernel works in.  XLA fuses this
    # into a single relayout copy.
    # TODO(synk): keep the surrounding model in NHWC to avoid this HBM round trip.
    x = jnp.transpose(x_nchw, (0, 2, 3, 1))
    x = jnp.pad(x, ((0, 0), (0, 0), (0, Wp - W), (0, 0)))
    x = x.reshape(N, n_rows, C)

    # Block-diagonal "same group" matrix, pre-scaled so group sums become group means.
    gids = jnp.arange(C, dtype=jnp.int32) // cg
    gmat = (gids[:, None] == gids[None, :]).astype(jnp.float32) / float(H * W * cg)

    # 1.0 on real image columns, 0.0 on the Wp - W slack columns of each row.
    valid = (jnp.arange(n_rows, dtype=jnp.int32) % Wp) < W
    valid = valid.astype(jnp.float32).reshape(n_rows, 1)

    compute_dtype = w_stack.dtype       # bf16 by default (weights pre-cast on the host)
    kern = functools.partial(_graph_tower_kernel, Wp=Wp, num_layers=L, eps=eps)

    flops = 2 * N * L * 9 * n_rows * C * C
    bytes_accessed = (2 * N * n_rows * C) * x_nchw.dtype.itemsize \
        + w_stack.size * w_stack.dtype.itemsize \
        + b_stack.size * b_stack.dtype.itemsize + gmat.size * 4 + valid.size * 4
    cost = pl.CostEstimate(flops=int(flops), transcendentals=int(N * L * C),
                           bytes_accessed=int(bytes_accessed))

    out = pl.pallas_call(
        kern,
        out_shape=jax.ShapeDtypeStruct((N, n_rows, C), x_nchw.dtype),
        grid_spec=pltpu.PrefetchScalarGridSpec(
            num_scalar_prefetch=0,
            grid=(N,),
            in_specs=[
                pl.BlockSpec((1, n_rows, C), lambda n: (n, 0, 0)),     # activation
                pl.BlockSpec((L, 9, C, C), lambda n: (0, 0, 0, 0)),    # conv weights
                pl.BlockSpec((L, 1, C), lambda n: (0, 0, 0)),          # conv biases
                pl.BlockSpec((C, C), lambda n: (0, 0)),                # group matrix
                pl.BlockSpec((n_rows, 1), lambda n: (0, 0)),           # valid-column mask
            ],
            out_specs=pl.BlockSpec((1, n_rows, C), lambda n: (n, 0, 0)),
            scratch_shapes=[
                pltpu.VMEM(((H + 3) * Wp, C), compute_dtype),          # padded activation
            ],
        ),
        compiler_params=pltpu.CompilerParams(
            dimension_semantics=("parallel",),
            # Re-derive per generation: <= 64 MiB fits v7x; v5e/v6e can go higher.
            vmem_limit_bytes=64 * 1024 * 1024,
        ),
        cost_estimate=cost,
    )(x, w_stack, b_stack, gmat, valid)

    # Drop the slack columns and return to the module's NCHW interface.
    out = out.reshape(N, H, Wp, C)[:, :, :W, :]
    return jnp.transpose(out, (0, 3, 1, 2))


class GraphHeadPallas:
    """JAX/Pallas equivalent of GRAPHHead(cfg, in_channels, out_channel, mode='in')
    with cfg.MODEL.MIDDLE_HEAD.IN_NORM == 'GN' and NUM_CONVS_IdN == num_convs."""

    def __init__(self, in_channels, out_channel, num_convs, key,
                 num_groups=32, use_bf16=True):
        # GroupNorm(32, in_channels) follows every conv in the torch module, which
        # requires in_channels == out_channel for the sequential stack to type-check.
        assert in_channels == out_channel
        assert out_channel % num_groups == 0
        self.num_convs = num_convs
        self.num_groups = num_groups
        ws, bs = [], []
        for _ in range(num_convs):
            key, sub = jax.random.split(key)
            # torch.nn.init.normal_(weight, std=0.01); bias = 0
            w = 0.01 * jax.random.normal(sub, (3, 3, in_channels, out_channel), jnp.float32)
            ws.append(w.reshape(9, in_channels, out_channel))   # tap-major (ky*3+kx, Cin, Cout)
            bs.append(jnp.zeros((1, out_channel), jnp.float32))
        w_stack = jnp.stack(ws)                                 # (L, 9, Cin, Cout)
        # bf16 weights by default: the MXU is bf16-native on v5e/v6e/v7x; accumulation
        # stays f32 inside the kernel.  Keep an f32 copy for reference/checkpointing.
        self.w_stack = w_stack.astype(jnp.bfloat16) if use_bf16 else w_stack
        self.w_stack_f32 = w_stack
        self.b_stack = jnp.stack(bs)                            # (L, 1, Cout), f32
        # TODO(synk): a trained checkpoint would additionally need GroupNorm gamma/beta
        # inputs (folded out here because default init makes the affine an identity).

    def __call__(self, features):
        """features: list of NCHW arrays -> list of NCHW arrays (same spatial shapes)."""
        return [
            _graph_tower_level(f, self.w_stack, self.b_stack, num_groups=self.num_groups)
            for f in features
        ]


def _reference_forward(x_nchw, w_stack, b_stack, num_groups, eps=1e-5):
    """Pure-JAX (XLA) reference: conv3x3 -> GroupNorm -> ReLU tower in f32."""
    L, _, C, _ = w_stack.shape
    y = x_nchw
    for l in range(L):
        w_hwio = w_stack[l].reshape(3, 3, C, C)
        y = lax.conv_general_dilated(
            y, w_hwio, window_strides=(1, 1), padding=((1, 1), (1, 1)),
            dimension_numbers=("NCHW", "HWIO", "NCHW"),
            precision=lax.Precision.HIGHEST)
        y = y + b_stack[l].reshape(1, C, 1, 1)
        N, _, H, W = y.shape
        yg = y.reshape(N, num_groups, C // num_groups, H, W)
        mean = jnp.mean(yg, axis=(2, 3, 4), keepdims=True)
        var = jnp.mean(jnp.square(yg - mean), axis=(2, 3, 4), keepdims=True)
        y = ((yg - mean) / jnp.sqrt(var + eps)).reshape(N, C, H, W)
        if l != L - 1:
            y = jnp.maximum(y, 0.0)
    return y


if __name__ == "__main__":
    key = jax.random.PRNGKey(0)
    k_head, k_f0, k_f1 = jax.random.split(key, 3)

    # Small FPN-like multi-level input (NCHW).  C=128 keeps every tile lane-aligned
    # (the real FCOS middle head uses 256) and GroupNorm(32, 128) is valid.
    N, C = 2, 128
    feat0 = jax.random.normal(k_f0, (N, C, 16, 16), jnp.float32)
    feat1 = jax.random.normal(k_f1, (N, C, 8, 8), jnp.float32)
    feats = [feat0, feat1]

    # Same weights (same key) through the bf16 (default) and exact-f32 paths.
    head_bf16 = GraphHeadPallas(in_channels=C, out_channel=C, num_convs=2,
                                key=k_head, use_bf16=True)
    head_f32 = GraphHeadPallas(in_channels=C, out_channel=C, num_convs=2,
                               key=k_head, use_bf16=False)

    outs_bf16 = [jax.block_until_ready(o) for o in head_bf16(feats)]
    outs_f32 = [jax.block_until_ready(o) for o in head_f32(feats)]

    for f, o16, o32 in zip(feats, outs_bf16, outs_f32):
        assert o16.shape == f.shape and o32.shape == f.shape
        assert bool(jnp.all(jnp.isfinite(o16))) and bool(jnp.all(jnp.isfinite(o32)))

    # Correctness check vs a pure-JAX reference (f32 exact path tight, bf16 path loose).
    for f, o16, o32 in zip(feats, outs_bf16, outs_f32):
        ref = _reference_forward(f, head_f32.w_stack_f32, head_f32.b_stack,
                                 head_f32.num_groups)
        err32 = float(jnp.max(jnp.abs(o32 - ref)))
        err16 = float(jnp.max(jnp.abs(o16 - ref)))
        assert err32 < 1e-2, f"f32 path max abs err vs reference: {err32}"
        assert err16 < 1.5e-1, f"bf16 path max abs err vs reference: {err16}"

    print("KERNEL_OK")
</pallas_src>

<mosaic_0001>
module attributes {stable_mosaic.version = 11 : i64} {
  func.func @_graph_tower_kernel(%arg0: i32, %arg1: memref<1x384x128xf32, #tpu.memory_space<vmem>>, %arg2: memref<2x9x128x128xbf16, #tpu.memory_space<vmem>>, %arg3: memref<2x1x128xf32, #tpu.memory_space<vmem>>, %arg4: memref<128x128xf32, #tpu.memory_space<vmem>>, %arg5: memref<384x1xf32, #tpu.memory_space<vmem>>, %arg6: memref<1x384x128xf32, #tpu.memory_space<vmem>>, %arg7: memref<456x128xbf16, #tpu.memory_space<vmem>>) attributes {dimension_semantics = [#tpu.dimension_semantics<parallel>], iteration_bounds = array<i64: 2>, scalar_prefetch = 0 : i64, scratch_operands = 1 : i64, tpu.core_type = #tpu.core_type<tc>, window_params = [{transform_indices = @transform_0, window_bounds = array<i64: 1, 384, 128>}, {pipeline_mode = #tpu.pipeline_mode<synchronous>, transform_indices = @transform_1, window_bounds = array<i64: 2, 9, 128, 128>}, {pipeline_mode = #tpu.pipeline_mode<synchronous>, transform_indices = @transform_2, window_bounds = array<i64: 2, 1, 128>}, {pipeline_mode = #tpu.pipeline_mode<synchronous>, transform_indices = @transform_3, window_bounds = array<i64: 128, 128>}, {pipeline_mode = #tpu.pipeline_mode<synchronous>, transform_indices = @transform_4, window_bounds = array<i64: 384, 1>}, {transform_indices = @transform_5, window_bounds = array<i64: 1, 384, 128>}]} {
    %cst = arith.constant 0.000000e+00 : bf16
    %0 = vector.broadcast %cst : bf16 to vector<25x128xbf16>
    %c0 = arith.constant 0 : index
    %c0_0 = arith.constant 0 : index
    %1 = vector.load %arg7[%c0, %c0_0] : memref<456x128xbf16, #tpu.memory_space<vmem>>, vector<25x128xbf16>
    tpu.vector_store %arg7[%c0, %c0_0], %0 {strides = array<i32>} : memref<456x128xbf16, #tpu.memory_space<vmem>>, vector<25x128xbf16>,
    %cst_1 = arith.constant 0.000000e+00 : bf16
    %2 = vector.broadcast %cst_1 : bf16 to vector<47x128xbf16>
    %c409 = arith.constant 409 : index
    %c0_2 = arith.constant 0 : index
    %3 = vector.load %arg7[%c409, %c0_2] : memref<456x128xbf16, #tpu.memory_space<vmem>>, vector<47x128xbf16>
    tpu.vector_store %arg7[%c409, %c0_2], %2 {strides = array<i32>} : memref<456x128xbf16, #tpu.memory_space<vmem>>, vector<47x128xbf16>,
    %c0_3 = arith.constant 0 : index
    %c0_4 = arith.constant 0 : index
    %c0_5 = arith.constant 0 : index
    %4 = vector.load %arg1[%c0_3, %c0_4, %c0_5] : memref<1x384x128xf32, #tpu.memory_space<vmem>>, vector<1x384x128xf32>
    %5 = vector.shape_cast %4 : vector<1x384x128xf32> to vector<384x128xf32>
    %6 = arith.truncf %5 : vector<384x128xf32> to vector<384x128xbf16>
    %c25 = arith.constant 25 : index
    %c0_6 = arith.constant 0 : index
    %7 = vector.load %arg7[%c25, %c0_6] : memref<456x128xbf16, #tpu.memory_space<vmem>>, vector<384x128xbf16>
    tpu.vector_store %arg7[%c25, %c0_6], %6 {strides = array<i32>} : memref<456x128xbf16, #tpu.memory_space<vmem>>, vector<384x128xbf16>,
    %c0_7 = arith.constant 0 : index
    %c0_8 = arith.constant 0 : index
    %8 = vector.load %arg5[%c0_7, %c0_8] : memref<384x1xf32, #tpu.memory_space<vmem>>, vector<384x1xf32>
    %c0_9 = arith.constant 0 : index
    %c0_10 = arith.constant 0 : index
    %9 = vector.load %arg4[%c0_9, %c0_10] : memref<128x128xf32, #tpu.memory_space<vmem>>, vector<128x128xf32>
    %c0_11 = arith.constant 0 : index
    %c0_12 = arith.constant 0 : index
    %10 = vector.load %arg7[%c0_11, %c0_12] : memref<456x128xbf16, #tpu.memory_space<vmem>>, vector<384x128xbf16>
    %c0_13 = arith.constant 0 : index
    %c0_14 = arith.constant 0 : index
    %c0_15 = arith.constant 0 : index
    %c0_16 = arith.constant 0 : index
    %11 = vector.load %arg2[%c0_13, %c0_14, %c0_15, %c0_16] : memref<2x9x128x128xbf16, #tpu.memory_space<vmem>>, vector<1x1x128x128xbf16>
    %12 = vector.shape_cast %11 : vector<1x1x128x128xbf16> to vector<128x128xbf16>
    %cst_17 = arith.constant dense<0.000000e+00> : vector<384x128xf32>
    %13 = tpu.matmul %10, %12, %cst_17 {dimension_numbers = #tpu.dot_dimension_numbers<[1], [0], [0], [1], [0, 0, 1, 1], [], []>} : vector<384x128xbf16>, vector<128x128xbf16>, vector<384x128xf32> -> vector<384x128xf32>
    %c1 = arith.constant 1 : index
    %c0_18 = arith.constant 0 : index
    %14 = vector.load %arg7[%c1, %c0_18] : memref<456x128xbf16, #tpu.memory_space<vmem>>, vector<384x128xbf16>
    %c0_19 = arith.constant 0 : index
    %c1_20 = arith.constant 1 : index
    %c0_21 = arith.constant 0 : index
    %c0_22 = arith.constant 0 : index
    %15 = vector.load %arg2[%c0_19, %c1_20, %c0_21, %c0_22] : memref<2x9x128x128xbf16, #tpu.memory_space<vmem>>, vector<1x1x128x128xbf16>
    %16 = vector.shape_cast %15 : vector<1x1x128x128xbf16> to vector<128x128xbf16>
    %cst_23 = arith.constant dense<0.000000e+00> : vector<384x128xf32>
    %17 = tpu.matmul %14, %16, %cst_23 {dimension_numbers = #tpu.dot_dimension_numbers<[1], [0], [0], [1], [0, 0, 1, 1], [], []>} : vector<384x128xbf16>, vector<128x128xbf16>, vector<384x128xf32> -> vector<384x128xf32>
    %18 = arith.addf %13, %17 : vector<384x128xf32>
    %c2 = arith.constant 2 : index
    %c0_24 = arith.constant 0 : index
    %19 = vector.load %arg7[%c2, %c0_24] : memref<456x128xbf16, #tpu.memory_space<vmem>>, vector<384x128xbf16>
    %c0_25 = arith.constant 0 : index
    %c2_26 = arith.constant 2 : index
    %c0_27 = arith.constant 0 : index
    %c0_28 = arith.constant 0 : index
    %20 = vector.load %arg2[%c0_25, %c2_26, %c0_27, %c0_28] : memref<2x9x128x128xbf16, #tpu.memory_space<vmem>>, vector<1x1x128x128xbf16>
    %21 = vector.shape_cast %20 : vector<1x1x128x128xbf16> to vector<128x128xbf16>
    %cst_29 = arith.constant dense<0.000000e+00> : vector<384x128xf32>
    %22 = tpu.matmul %19, %21, %cst_29 {dimension_numbers = #tpu.dot_dimension_numbers<[1], [0], [0], [1], [0, 0, 1, 1], [], []>} : vector<384x128xbf16>, vector<128x128xbf16>, vector<384x128xf32> -> vector<384x128xf32>
    %23 = arith.addf %18, %22 : vector<384x128xf32>
    %c24 = arith.constant 24 : index
    %c0_30 = arith.constant 0 : index
    %24 = vector.load %arg7[%c24, %c0_30] : memref<456x128xbf16, #tpu.memory_space<vmem>>, vector<384x128xbf16>
    %c0_31 = arith.constant 0 : index
    %c3 = arith.constant 3 : index
    %c0_32 = arith.constant 0 : index
    %c0_33 = arith.constant 0 : index
    %25 = vector.load %arg2[%c0_31, %c3, %c0_32, %c0_33] : memref<2x9x128x128xbf16, #tpu.memory_space<vmem>>, vector<1x1x128x128xbf16>
    %26 = vector.shape_cast %25 : vector<1x1x128x128xbf16> to vector<128x128xbf16>
    %cst_34 = arith.constant dense<0.000000e+00> : vector<384x128xf32>
    %27 = tpu.matmul %24, %26, %cst_34 {dimension_numbers = #tpu.dot_dimension_numbers<[1], [0], [0], [1], [0, 0, 1, 1], [], []>} : vector<384x128xbf16>, vector<128x128xbf16>, vector<384x128xf32> -> vector<384x128xf32>
    %28 = arith.addf %23, %27 : vector<384x128xf32>
    %c25_35 = arith.constant 25 : index
    %c0_36 = arith.constant 0 : index
    %29 = vector.load %arg7[%c25_35, %c0_36] : memref<456x128xbf16, #tpu.memory_space<vmem>>, vector<384x128xbf16>
    %c0_37 = arith.constant 0 : index
    %c4 = arith.constant 4 : index
    %c0_38 = arith.constant 0 : index
    %c0_39 = arith.constant 0 : index
    %30 = vector.load %arg2[%c0_37, %c4, %c0_38, %c0_39] : memref<2x9x128x128xbf16, #tpu.memory_space<vmem>>, vector<1x1x128x128xbf16>
    %31 = vector.shape_cast %30 : vector<1x1x128x128xbf16> to vector<128x128xbf16>
    %cst_40 = arith.constant dense<0.000000e+00> : vector<384x128xf32>
    %32 = tpu.matmul %29, %31, %cst_40 {dimension_numbers = #tpu.dot_dimension_numbers<[1], [0], [0], [1], [0, 0, 1, 1], [], []>} : vector<384x128xbf16>, vector<128x128xbf16>, vector<384x128xf32> -> vector<384x128xf32>
    %33 = arith.addf %28, %32 : vector<384x128xf32>
    %c26 = arith.constant 26 : index
    %c0_41 = arith.constant 0 : index
    %34 = vector.load %arg7[%c26, %c0_41] : memref<456x128xbf16, #tpu.memory_space<vmem>>, vector<384x128xbf16>
    %c0_42 = arith.constant 0 : index
    %c5 = arith.constant 5 : index
    %c0_43 = arith.constant 0 : index
    %c0_44 = arith.constant 0 : index
    %35 = vector.load %arg2[%c0_42, %c5, %c0_43, %c0_44] : memref<2x9x128x128xbf16, #tpu.memory_space<vmem>>, vector<1x1x128x128xbf16>
    %36 = vector.shape_cast %35 : vector<1x1x128x128xbf16> to vector<128x128xbf16>
    %cst_45 = arith.constant dense<0.000000e+00> : vector<384x128xf32>
    %37 = tpu.matmul %34, %36, %cst_45 {dimension_numbers = #tpu.dot_dimension_numbers<[1], [0], [0], [1], [0, 0, 1, 1], [], []>} : vector<384x128xbf16>, vector<128x128xbf16>, vector<384x128xf32> -> vector<384x128xf32>
    %38 = arith.addf %33, %37 : vector<384x128xf32>
    %c48 = arith.constant 48 : index
    %c0_46 = arith.constant 0 : index
    %39 = vector.load %arg7[%c48, %c0_46] : memref<456x128xbf16, #tpu.memory_space<vmem>>, vector<384x128xbf16>
    %c0_47 = arith.constant 0 : index
    %c6 = arith.constant 6 : index
    %c0_48 = arith.constant 0 : index
    %c0_49 = arith.constant 0 : index
    %40 = vector.load %arg2[%c0_47, %c6, %c0_48, %c0_49] : memref<2x9x128x128xbf16, #tpu.memory_space<vmem>>, vector<1x1x128x128xbf16>
    %41 = vector.shape_cast %40 : vector<1x1x128x128xbf16> to vector<128x128xbf16>
    %cst_50 = arith.constant dense<0.000000e+00> : vector<384x128xf32>
    %42 = tpu.matmul %39, %41, %cst_50 {dimension_numbers = #tpu.dot_dimension_numbers<[1], [0], [0], [1], [0, 0, 1, 1], [], []>} : vector<384x128xbf16>, vector<128x128xbf16>, vector<384x128xf32> -> vector<384x128xf32>
    %43 = arith.addf %38, %42 : vector<384x128xf32>
    %c49 = arith.constant 49 : index
    %c0_51 = arith.constant 0 : index
    %44 = vector.load %arg7[%c49, %c0_51] : memref<456x128xbf16, #tpu.memory_space<vmem>>, vector<384x128xbf16>
    %c0_52 = arith.constant 0 : index
    %c7 = arith.constant 7 : index
    %c0_53 = arith.constant 0 : index
    %c0_54 = arith.constant 0 : index
    %45 = vector.load %arg2[%c0_52, %c7, %c0_53, %c0_54] : memref<2x9x128x128xbf16, #tpu.memory_space<vmem>>, vector<1x1x128x128xbf16>
    %46 = vector.shape_cast %45 : vector<1x1x128x128xbf16> to vector<128x128xbf16>
    %cst_55 = arith.constant dense<0.000000e+00> : vector<384x128xf32>
    %47 = tpu.matmul %44, %46, %cst_55 {dimension_numbers = #tpu.dot_dimension_numbers<[1], [0], [0], [1], [0, 0, 1, 1], [], []>} : vector<384x128xbf16>, vector<128x128xbf16>, vector<384x128xf32> -> vector<384x128xf32>
    %48 = arith.addf %43, %47 : vector<384x128xf32>
    %c50 = arith.constant 50 : index
    %c0_56 = arith.constant 0 : index
    %49 = vector.load %arg7[%c50, %c0_56] : memref<456x128xbf16, #tpu.memory_space<vmem>>, vector<384x128xbf16>
    %c0_57 = arith.constant 0 : index
    %c8 = arith.constant 8 : index
    %c0_58 = arith.constant 0 : index
    %c0_59 = arith.constant 0 : index
    %50 = vector.load %arg2[%c0_57, %c8, %c0_58, %c0_59] : memref<2x9x128x128xbf16, #tpu.memory_space<vmem>>, vector<1x1x128x128xbf16>
    %51 = vector.shape_cast %50 : vector<1x1x128x128xbf16> to vector<128x128xbf16>
    %cst_60 = arith.constant dense<0.000000e+00> : vector<384x128xf32>
    %52 = tpu.matmul %49, %51, %cst_60 {dimension_numbers = #tpu.dot_dimension_numbers<[1], [0], [0], [1], [0, 0, 1, 1], [], []>} : vector<384x128xbf16>, vector<128x128xbf16>, vector<384x128xf32> -> vector<384x128xf32>
    %53 = arith.addf %48, %52 : vector<384x128xf32>
    %c0_61 = arith.constant 0 : index
    %c0_62 = arith.constant 0 : index
    %c0_63 = arith.constant 0 : index
    %54 = vector.load %arg3[%c0_61, %c0_62, %c0_63] : memref<2x1x128xf32, #tpu.memory_space<vmem>>, vector<1x1x128xf32>
    %55 = vector.shape_cast %54 : vector<1x1x128xf32> to vector<1x128xf32>
    %56 = vector.broadcast %55 : vector<1x128xf32> to vector<384x128xf32>
    %57 = arith.addf %53, %56 : vector<384x128xf32>
    %58 = vector.broadcast %8 : vector<384x1xf32> to vector<384x128xf32>
    %59 = arith.mulf %57, %58 : vector<384x128xf32>
    %60 = vector.shape_cast %59 : vector<384x128xf32> to vector<48x8x128xf32>
    %cst_64 = arith.constant dense<0.000000e+00> : vector<8x128xf32>
    %61 = vector.multi_reduction <add>, %60, %cst_64 [0] : vector<48x8x128xf32> to vector<8x128xf32>
    %62 = arith.mulf %59, %59 : vector<384x128xf32>
    %63 = vector.shape_cast %62 : vector<384x128xf32> to vector<48x8x128xf32>
    %cst_65 = arith.constant dense<0.000000e+00> : vector<8x128xf32>
    %64 = vector.multi_reduction <add>, %63, %cst_65 [0] : vector<48x8x128xf32> to vector<8x128xf32>
    %cst_66 = arith.constant dense<0.000000e+00> : vector<8x128xf32>
    %65 = tpu.matmul %61, %9, %cst_66 {dimension_numbers = #tpu.dot_dimension_numbers<[1], [0], [0], [1], [0, 0, 1, 1], [], []>} : vector<8x128xf32>, vector<128x128xf32>, vector<8x128xf32> -> vector<8x128xf32>
    %cst_67 = arith.constant dense<0.000000e+00> : vector<128xf32>
    %66 = vector.multi_reduction <add>, %65, %cst_67 [0] : vector<8x128xf32> to vector<128xf32>
    %67 = vector.shape_cast %66 : vector<128xf32> to vector<1x128xf32>
    %cst_68 = arith.constant dense<0.000000e+00> : vector<8x128xf32>
    %68 = tpu.matmul %64, %9, %cst_68 {dimension_numbers = #tpu.dot_dimension_numbers<[1], [0], [0], [1], [0, 0, 1, 1], [], []>} : vector<8x128xf32>, vector<128x128xf32>, vector<8x128xf32> -> vector<8x128xf32>
    %cst_69 = arith.constant dense<0.000000e+00> : vector<128xf32>
    %69 = vector.multi_reduction <add>, %68, %cst_69 [0] : vector<8x128xf32> to vector<128xf32>
    %70 = vector.shape_cast %69 : vector<128xf32> to vector<1x128xf32>
    %71 = arith.mulf %67, %67 : vector<1x128xf32>
    %72 = arith.subf %70, %71 : vector<1x128xf32>
    %cst_70 = arith.constant 9.99999974E-6 : f32
    %73 = vector.broadcast %cst_70 : f32 to vector<1x128xf32>
    %74 = arith.addf %72, %73 : vector<1x128xf32>
    %75 = math.rsqrt %74 : vector<1x128xf32>
    %76 = vector.broadcast %67 : vector<1x128xf32> to vector<384x128xf32>
    %77 = arith.subf %57, %76 : vector<384x128xf32>
    %78 = vector.broadcast %75 : vector<1x128xf32> to vector<384x128xf32>
    %79 = arith.mulf %77, %78 : vector<384x128xf32>
    %cst_71 = arith.constant 0.000000e+00 : f32
    %80 = vector.broadcast %cst_71 : f32 to vector<384x128xf32>
    %81 = arith.maximumf %79, %80 : vector<384x128xf32>
    %82 = vector.broadcast %8 : vector<384x1xf32> to vector<384x128xf32>
    %83 = arith.mulf %81, %82 : vector<384x128xf32>
    %84 = arith.truncf %83 : vector<384x128xf32> to vector<384x128xbf16>
    %c25_72 = arith.constant 25 : index
    %c0_73 = arith.constant 0 : index
    %85 = vector.load %arg7[%c25_72, %c0_73] : memref<456x128xbf16, #tpu.memory_space<vmem>>, vector<384x128xbf16>
    tpu.vector_store %arg7[%c25_72, %c0_73], %84 {strides = array<i32>} : memref<456x128xbf16, #tpu.memory_space<vmem>>, vector<384x128xbf16>,
    %c0_74 = arith.constant 0 : index
    %c0_75 = arith.constant 0 : index
    %86 = vector.load %arg7[%c0_74, %c0_75] : memref<456x128xbf16, #tpu.memory_space<vmem>>, vector<384x128xbf16>
    %c1_76 = arith.constant 1 : index
    %c0_77 = arith.constant 0 : index
    %c0_78 = arith.constant 0 : index
    %c0_79 = arith.constant 0 : index
    %87 = vector.load %arg2[%c1_76, %c0_77, %c0_78, %c0_79] : memref<2x9x128x128xbf16, #tpu.memory_space<vmem>>, vector<1x1x128x128xbf16>
    %88 = vector.shape_cast %87 : vector<1x1x128x128xbf16> to vector<128x128xbf16>
    %cst_80 = arith.constant dense<0.000000e+00> : vector<384x128xf32>
    %89 = tpu.matmul %86, %88, %cst_80 {dimension_numbers = #tpu.dot_dimension_numbers<[1], [0], [0], [1], [0, 0, 1, 1], [], []>} : vector<384x128xbf16>, vector<128x128xbf16>, vector<384x128xf32> -> vector<384x128xf32>
    %c1_81 = arith.constant 1 : index
    %c0_82 = arith.constant 0 : index
    %90 = vector.load %arg7[%c1_81, %c0_82] : memref<456x128xbf16, #tpu.memory_space<vmem>>, vector<384x128xbf16>
    %c1_83 = arith.constant 1 : index
    %c1_84 = arith.constant 1 : index
    %c0_85 = arith.constant 0 : index
    %c0_86 = arith.constant 0 : index
    %91 = vector.load %arg2[%c1_83, %c1_84, %c0_85, %c0_86] : memref<2x9x128x128xbf16, #tpu.memory_space<vmem>>, vector<1x1x128x128xbf16>
    %92 = vector.shape_cast %91 : vector<1x1x128x128xbf16> to vector<128x128xbf16>
    %cst_87 = arith.constant dense<0.000000e+00> : vector<384x128xf32>
    %93 = tpu.matmul %90, %92, %cst_87 {dimension_numbers = #tpu.dot_dimension_numbers<[1], [0], [0], [1], [0, 0, 1, 1], [], []>} : vector<384x128xbf16>, vector<128x128xbf16>, vector<384x128xf32> -> vector<384x128xf32>
    %94 = arith.addf %89, %93 : vector<384x128xf32>
    %c2_88 = arith.constant 2 : index
    %c0_89 = arith.constant 0 : index
    %95 = vector.load %arg7[%c2_88, %c0_89] : memref<456x128xbf16, #tpu.memory_space<vmem>>, vector<384x128xbf16>
    %c1_90 = arith.constant 1 : index
    %c2_91 = arith.constant 2 : index
    %c0_92 = arith.constant 0 : index
    %c0_93 = arith.constant 0 : index
    %96 = vector.load %arg2[%c1_90, %c2_91, %c0_92, %c0_93] : memref<2x9x128x128xbf16, #tpu.memory_space<vmem>>, vector<1x1x128x128xbf16>
    %97 = vector.shape_cast %96 : vector<1x1x128x128xbf16> to vector<128x128xbf16>
    %cst_94 = arith.constant dense<0.000000e+00> : vector<384x128xf32>
    %98 = tpu.matmul %95, %97, %cst_94 {dimension_numbers = #tpu.dot_dimension_numbers<[1], [0], [0], [1], [0, 0, 1, 1], [], []>} : vector<384x128xbf16>, vector<128x128xbf16>, vector<384x128xf32> -> vector<384x128xf32>
    %99 = arith.addf %94, %98 : vector<384x128xf32>
    %c24_95 = arith.constant 24 : index
    %c0_96 = arith.constant 0 : index
    %100 = vector.load %arg7[%c24_95, %c0_96] : memref<456x128xbf16, #tpu.memory_space<vmem>>, vector<384x128xbf16>
    %c1_97 = arith.constant 1 : index
    %c3_98 = arith.constant 3 : index
    %c0_99 = arith.constant 0 : index
    %c0_100 = arith.constant 0 : index
    %101 = vector.load %arg2[%c1_97, %c3_98, %c0_99, %c0_100] : memref<2x9x128x128xbf16, #tpu.memory_space<vmem>>, vector<1x1x128x128xbf16>
    %102 = vector.shape_cast %101 : vector<1x1x128x128xbf16> to vector<128x128xbf16>
    %cst_101 = arith.constant dense<0.000000e+00> : vector<384x128xf32>
    %103 = tpu.matmul %100, %102, %cst_101 {dimension_numbers = #tpu.dot_dimension_numbers<[1], [0], [0], [1], [0, 0, 1, 1], [], []>} : vector<384x128xbf16>, vector<128x128xbf16>, vector<384x128xf32> -> vector<384x128xf32>
    %104 = arith.addf %99, %103 : vector<384x128xf32>
    %c25_102 = arith.constant 25 : index
    %c0_103 = arith.constant 0 : index
    %105 = vector.load %arg7[%c25_102, %c0_103] : memref<456x128xbf16, #tpu.memory_space<vmem>>, vector<384x128xbf16>
    %c1_104 = arith.constant 1 : index
    %c4_105 = arith.constant 4 : index
    %c0_106 = arith.constant 0 : index
    %c0_107 = arith.constant 0 : index
    %106 = vector.load %arg2[%c1_104, %c4_105, %c0_106, %c0_107] : memref<2x9x128x128xbf16, #tpu.memory_space<vmem>>, vector<1x1x128x128xbf16>
    %107 = vector.shape_cast %106 : vector<1x1x128x128xbf16> to vector<128x128xbf16>
    %cst_108 = arith.constant dense<0.000000e+00> : vector<384x128xf32>
    %108 = tpu.matmul %105, %107, %cst_108 {dimension_numbers = #tpu.dot_dimension_numbers<[1], [0], [0], [1], [0, 0, 1, 1], [], []>} : vector<384x128xbf16>, vector<128x128xbf16>, vector<384x128xf32> -> vector<384x128xf32>
    %109 = arith.addf %104, %108 : vector<384x128xf32>
    %c26_109 = arith.constant 26 : index
    %c0_110 = arith.constant 0 : index
    %110 = vector.load %arg7[%c26_109, %c0_110] : memref<456x128xbf16, #tpu.memory_space<vmem>>, vector<384x128xbf16>
    %c1_111 = arith.constant 1 : index
    %c5_112 = arith.constant 5 : index
    %c0_113 = arith.constant 0 : index
    %c0_114 = arith.constant 0 : index
    %111 = vector.load %arg2[%c1_111, %c5_112, %c0_113, %c0_114] : memref<2x9x128x128xbf16, #tpu.memory_space<vmem>>, vector<1x1x128x128xbf16>
    %112 = vector.shape_cast %111 : vector<1x1x128x128xbf16> to vector<128x128xbf16>
    %cst_115 = arith.constant dense<0.000000e+00> : vector<384x128xf32>
    %113 = tpu.matmul %110, %112, %cst_115 {dimension_numbers = #tpu.dot_dimension_numbers<[1], [0], [0], [1], [0, 0, 1, 1], [], []>} : vector<384x128xbf16>, vector<128x128xbf16>, vector<384x128xf32> -> vector<384x128xf32>
    %114 = arith.addf %109, %113 : vector<384x128xf32>
    %c48_116 = arith.constant 48 : index
    %c0_117 = arith.constant 0 : index
    %115 = vector.load %arg7[%c48_116, %c0_117] : memref<456x128xbf16, #tpu.memory_space<vmem>>, vector<384x128xbf16>
    %c1_118 = arith.constant 1 : index
    %c6_119 = arith.constant 6 : index
    %c0_120 = arith.constant 0 : index
    %c0_121 = arith.constant 0 : index
    %116 = vector.load %arg2[%c1_118, %c6_119, %c0_120, %c0_121] : memref<2x9x128x128xbf16, #tpu.memory_space<vmem>>, vector<1x1x128x128xbf16>
    %117 = vector.shape_cast %116 : vector<1x1x128x128xbf16> to vector<128x128xbf16>
    %cst_122 = arith.constant dense<0.000000e+00> : vector<384x128xf32>
    %118 = tpu.matmul %115, %117, %cst_122 {dimension_numbers = #tpu.dot_dimension_numbers<[1], [0], [0], [1], [0, 0, 1, 1], [], []>} : vector<384x128xbf16>, vector<128x128xbf16>, vector<384x128xf32> -> vector<384x128xf32>
    %119 = arith.addf %114, %118 : vector<384x128xf32>
    %c49_123 = arith.constant 49 : index
    %c0_124 = arith.constant 0 : index
    %120 = vector.load %arg7[%c49_123, %c0_124] : memref<456x128xbf16, #tpu.memory_space<vmem>>, vector<384x128xbf16>
    %c1_125 = arith.constant 1 : index
    %c7_126 = arith.constant 7 : index
    %c0_127 = arith.constant 0 : index
    %c0_128 = arith.constant 0 : index
    %121 = vector.load %arg2[%c1_125, %c7_126, %c0_127, %c0_128] : memref<2x9x128x128xbf16, #tpu.memory_space<vmem>>, vector<1x1x128x128xbf16>
    %122 = vector.shape_cast %121 : vector<1x1x128x128xbf16> to vector<128x128xbf16>
    %cst_129 = arith.constant dense<0.000000e+00> : vector<384x128xf32>
    %123 = tpu.matmul %120, %122, %cst_129 {dimension_numbers = #tpu.dot_dimension_numbers<[1], [0], [0], [1], [0, 0, 1, 1], [], []>} : vector<384x128xbf16>, vector<128x128xbf16>, vector<384x128xf32> -> vector<384x128xf32>
    %124 = arith.addf %119, %123 : vector<384x128xf32>
    %c50_130 = arith.constant 50 : index
    %c0_131 = arith.constant 0 : index
    %125 = vector.load %arg7[%c50_130, %c0_131] : memref<456x128xbf16, #tpu.memory_space<vmem>>, vector<384x128xbf16>
    %c1_132 = arith.constant 1 : index
    %c8_133 = arith.constant 8 : index
    %c0_134 = arith.constant 0 : index
    %c0_135 = arith.constant 0 : index
    %126 = vector.load %arg2[%c1_132, %c8_133, %c0_134, %c0_135] : memref<2x9x128x128xbf16, #tpu.memory_space<vmem>>, vector<1x1x128x128xbf16>
    %127 = vector.shape_cast %126 : vector<1x1x128x128xbf16> to vector<128x128xbf16>
    %cst_136 = arith.constant dense<0.000000e+00> : vector<384x128xf32>
    %128 = tpu.matmul %125, %127, %cst_136 {dimension_numbers = #tpu.dot_dimension_numbers<[1], [0], [0], [1], [0, 0, 1, 1], [], []>} : vector<384x128xbf16>, vector<128x128xbf16>, vector<384x128xf32> -> vector<384x128xf32>
    %129 = arith.addf %124, %128 : vector<384x128xf32>
    %c1_137 = arith.constant 1 : index
    %c0_138 = arith.constant 0 : index
    %c0_139 = arith.constant 0 : index
    %130 = vector.load %arg3[%c1_137, %c0_138, %c0_139] : memref<2x1x128xf32, #tpu.memory_space<vmem>>, vector<1x1x128xf32>
    %131 = vector.shape_cast %130 : vector<1x1x128xf32> to vector<1x128xf32>
    %132 = vector.broadcast %131 : vector<1x128xf32> to vector<384x128xf32>
    %133 = arith.addf %129, %132 : vector<384x128xf32>
    %134 = vector.broadcast %8 : vector<384x1xf32> to vector<384x128xf32>
    %135 = arith.mulf %133, %134 : vector<384x128xf32>
    %136 = vector.shape_cast %135 : vector<384x128xf32> to vector<48x8x128xf32>
    %cst_140 = arith.constant dense<0.000000e+00> : vector<8x128xf32>
    %137 = vector.multi_reduction <add>, %136, %cst_140 [0] : vector<48x8x128xf32> to vector<8x128xf32>
    %138 = arith.mulf %135, %135 : vector<384x128xf32>
    %139 = vector.shape_cast %138 : vector<384x128xf32> to vector<48x8x128xf32>
    %cst_141 = arith.constant dense<0.000000e+00> : vector<8x128xf32>
    %140 = vector.multi_reduction <add>, %139, %cst_141 [0] : vector<48x8x128xf32> to vector<8x128xf32>
    %cst_142 = arith.constant dense<0.000000e+00> : vector<8x128xf32>
    %141 = tpu.matmul %137, %9, %cst_142 {dimension_numbers = #tpu.dot_dimension_numbers<[1], [0], [0], [1], [0, 0, 1, 1], [], []>} : vector<8x128xf32>, vector<128x128xf32>, vector<8x128xf32> -> vector<8x128xf32>
    %cst_143 = arith.constant dense<0.000000e+00> : vector<128xf32>
    %142 = vector.multi_reduction <add>, %141, %cst_143 [0] : vector<8x128xf32> to vector<128xf32>
    %143 = vector.shape_cast %142 : vector<128xf32> to vector<1x128xf32>
    %cst_144 = arith.constant dense<0.000000e+00> : vector<8x128xf32>
    %144 = tpu.matmul %140, %9, %cst_144 {dimension_numbers = #tpu.dot_dimension_numbers<[1], [0], [0], [1], [0, 0, 1, 1], [], []>} : vector<8x128xf32>, vector<128x128xf32>, vector<8x128xf32> -> vector<8x128xf32>
    %cst_145 = arith.constant dense<0.000000e+00> : vector<128xf32>
    %145 = vector.multi_reduction <add>, %144, %cst_145 [0] : vector<8x128xf32> to vector<128xf32>
    %146 = vector.shape_cast %145 : vector<128xf32> to vector<1x128xf32>
    %147 = arith.mulf %143, %143 : vector<1x128xf32>
    %148 = arith.subf %146, %147 : vector<1x128xf32>
    %cst_146 = arith.constant 9.99999974E-6 : f32
    %149 = vector.broadcast %cst_146 : f32 to vector<1x128xf32>
    %150 = arith.addf %148, %149 : vector<1x128xf32>
    %151 = math.rsqrt %150 : vector<1x128xf32>
    %152 = vector.broadcast %143 : vector<1x128xf32> to vector<384x128xf32>
    %153 = arith.subf %133, %152 : vector<384x128xf32>
    %154 = vector.broadcast %151 : vector<1x128xf32> to vector<384x128xf32>
    %155 = arith.mulf %153, %154 : vector<384x128xf32>
    %c0_147 = arith.constant 0 : index
    %c0_148 = arith.constant 0 : index
    %c0_149 = arith.constant 0 : index
    %156 = vector.load %arg6[%c0_147, %c0_148, %c0_149] : memref<1x384x128xf32, #tpu.memory_space<vmem>>, vector<1x384x128xf32>
    %157 = vector.shape_cast %156 : vector<1x384x128xf32> to vector<384x128xf32>
    %158 = vector.shape_cast %155 : vector<384x128xf32> to vector<1x384x128xf32>
    tpu.vector_store %arg6[%c0_147, %c0_148, %c0_149], %158 {strides = array<i32>} : memref<1x384x128xf32, #tpu.memory_space<vmem>>, vector<1x384x128xf32>,
    return
  }
  func.func @transform_0(%arg0: i32) -> (i32, i32, i32) {
    %c0_i32 = arith.constant 0 : i32
    %c0_i32_0 = arith.constant 0 : i32
    %c0_i32_1 = arith.constant 0 : i32
    return %arg0, %c0_i32, %c0_i32_0 : i32, i32, i32
  }
  func.func @transform_1(%arg0: i32) -> (i32, i32, i32, i32) {
    %c0_i32 = arith.constant 0 : i32
    %c0_i32_0 = arith.constant 0 : i32
    %c0_i32_1 = arith.constant 0 : i32
    %c0_i32_2 = arith.constant 0 : i32
    %c0_i32_3 = arith.constant 0 : i32
    return %c0_i32, %c0_i32_0, %c0_i32_1, %c0_i32_2 : i32, i32, i32, i32
  }
  func.func @transform_2(%arg0: i32) -> (i32, i32, i32) {
    %c0_i32 = arith.constant 0 : i32
    %c0_i32_0 = arith.constant 0 : i32
    %c0_i32_1 = arith.constant 0 : i32
    %c0_i32_2 = arith.constant 0 : i32
    return %c0_i32, %c0_i32_0, %c0_i32_1 : i32, i32, i32
  }
  func.func @transform_3(%arg0: i32) -> (i32, i32) {
    %c0_i32 = arith.constant 0 : i32
    %c0_i32_0 = arith.constant 0 : i32
    %c0_i32_1 = arith.constant 0 : i32
    return %c0_i32, %c0_i32_0 : i32, i32
  }
  func.func @transform_4(%arg0: i32) -> (i32, i32) {
    %c0_i32 = arith.constant 0 : i32
    %c0_i32_0 = arith.constant 0 : i32
    %c0_i32_1 = arith.constant 0 : i32
    return %c0_i32, %c0_i32_0 : i32, i32
  }
  func.func @transform_5(%arg0: i32) -> (i32, i32, i32) {
    %c0_i32 = arith.constant 0 : i32
    %c0_i32_0 = arith.constant 0 : i32
    %c0_i32_1 = arith.constant 0 : i32
    return %arg0, %c0_i32, %c0_i32_0 : i32, i32, i32
  }
}

</mosaic_0001>

<llo_original>
// kernel: _graph_tower_level.1
$region0: #{_graph_tower_level.1}
  #allocation0 [shape = 'u32[]', space=smem, size = 0x4, offset = 0x4, fixed_abs, tag = 'smem constant byte address 0x4 - core index']
  #allocation1 [shape = 'u32[72,128]{1,0:T(1,128)}', space=vmem, size = 0x9000, scoped, tag = 'internal scratch']
  #allocation2 [shape = 'bf16[456,128]{1,0:T(8,128)(2,1)}', space=vmem, size = 0x1c800, scoped, tag = 'scratch operand']
  %s0 = inlined_call_operand.vmem [shape: f32[2,384,128], index: 0, kind: input, shape index: {}]
  %s1 = inlined_call_operand.vmem [shape: bf16[2,9,128,128], index: 1, kind: input, shape index: {}]
  %s2 = inlined_call_operand.vmem [shape: f32[2,1,128], index: 2, kind: input, shape index: {}]
  %s3 = inlined_call_operand.vmem [shape: f32[128,128], index: 3, kind: input, shape index: {}]
  %s4 = inlined_call_operand.vmem [shape: f32[384,1], index: 4, kind: input, shape index: {}]
  %s5 = inlined_call_operand.vmem [shape: f32[2,384,128], index: 5, kind: output, shape index: {}]
  %s6 = sld [smem:[#allocation0]]
  $region53: #{_graph_tower_level.1} parent=0
    _
  %s8 = ssub.s32 1, %s6
  %s9 = scalar_select 0, %s8, %s6
  loop: start=0, step=1, limit=4
  $region2: #{_graph_tower_level.1} parent=0 // loop_pre_header
    _
  $region3: #{_graph_tower_level.1} parent=0 // loop_header
    %s11 = sphi 0, %s15
    %p12 = scmp.ge.s32.totalorder %s11, 4
    %s21 = sphi 0, %s23
    %s24 = sphi 0, %s21
    %s25 = sphi 0, %s24
    %s41 = sphi 0, %s25
    %s45 = sphi 0, %s45
    %s47 = sphi 0, %s45
    %s48 = sphi 0, %s47
    %s62 = sphi 0, %s48
    %s66 = sphi 0, %s66
    %s68 = sphi 0, %s66
    %s69 = sphi 0, %s68
    %s83 = sphi 0, %s69
    %s87 = sphi 0, %s87
    %s89 = sphi 0, %s87
    %s90 = sphi 0, %s89
    %s104 = sphi 0, %s90
    %s108 = sphi 0, %s108
    %s110 = sphi 0, %s108
    %s111 = sphi 0, %s110
    %s125 = sphi 0, %s111
    %s131 = sphi 0, %s133
    %s134 = sphi 0, %s131
    %s135 = sphi 0, %s134
    %s151 = sphi 0, %s135
  $region4: #{_graph_tower_level.1} parent=0 // loop_header_branch
    %14 = sbr.rel (%p12) target = $region8
  $region5: #{_graph_tower_level.1} parent=0 // loop_body
    %s16 = ssub.s32 %s11, 1
    %s17 = ssub.s32 %s11, 2
    %s18 = sadd.s32 %s11, 1
    %s19 = ssub.s32 %s11, %s18
    %p20 = scmp.eq.s32.totalorder %s19, 0
    %s22 = sadd.s32 %s21, 1
    %s23 = scalar_select %p20, %s21, %s22
    %p26 = pneg %p20
    %p27 = scmp.eq.s32.totalorder %s11, 1
    %p28 = por %p26, %p27
    %p29 = scmp.ne.s32.totalorder %s21, %s24
    %p30 = scmp.eq.s32.totalorder %s11, 0
    %p31 = por %p29, %p30
    %p32 = scmp.ne.s32.totalorder %s21, %s24
    %p33 = scmp.eq.s32.totalorder %s16, 1
    %p34 = por %p32, %p33
    %p35 = scmp.ne.s32.totalorder %s24, %s25
    %p36 = scmp.eq.s32.totalorder %s16, 0
    %p37 = por %p35, %p36
    %p38 = scmp.ne.s32.totalorder %s24, %s25
    %p39 = scmp.eq.s32.totalorder %s17, 1
    %p40 = por %p38, %p39
    %p42 = scmp.ne.s32.totalorder %s25, %s41
    %p43 = scmp.eq.s32.totalorder %s17, 0
    %p44 = por %p42, %p43
    %s46 = sadd.s32 %s45, 1
    %p49 = scmp.eq.s32.totalorder %s11, 1
    %p50 = scmp.ne.s32.totalorder %s45, %s47
    %p51 = scmp.eq.s32.totalorder %s11, 0
    %p52 = por %p50, %p51
    %p53 = scmp.ne.s32.totalorder %s45, %s47
    %p54 = scmp.eq.s32.totalorder %s16, 1
    %p55 = por %p53, %p54
    %p56 = scmp.ne.s32.totalorder %s47, %s48
    %p57 = scmp.eq.s32.totalorder %s16, 0
    %p58 = por %p56, %p57
    %p59 = scmp.ne.s32.totalorder %s47, %s48
    %p60 = scmp.eq.s32.totalorder %s17, 1
    %p61 = por %p59, %p60
    %p63 = scmp.ne.s32.totalorder %s48, %s62
    %p64 = scmp.eq.s32.totalorder %s17, 0
    %p65 = por %p63, %p64
    %s67 = sadd.s32 %s66, 1
    %p70 = scmp.eq.s32.totalorder %s11, 1
    %p71 = scmp.ne.s32.totalorder %s66, %s68
    %p72 = scmp.eq.s32.totalorder %s11, 0
    %p73 = por %p71, %p72
    %p74 = scmp.ne.s32.totalorder %s66, %s68
    %p75 = scmp.eq.s32.totalorder %s16, 1
    %p76 = por %p74, %p75
    %p77 = scmp.ne.s32.totalorder %s68, %s69
    %p78 = scmp.eq.s32.totalorder %s16, 0
    %p79 = por %p77, %p78
    %p80 = scmp.ne.s32.totalorder %s68, %s69
    %p81 = scmp.eq.s32.totalorder %s17, 1
    %p82 = por %p80, %p81
    %p84 = scmp.ne.s32.totalorder %s69, %s83
    %p85 = scmp.eq.s32.totalorder %s17, 0
    %p86 = por %p84, %p85
    %s88 = sadd.s32 %s87, 1
    %p91 = scmp.eq.s32.totalorder %s11, 1
    %p92 = scmp.ne.s32.totalorder %s87, %s89
    %p93 = scmp.eq.s32.totalorder %s11, 0
    %p94 = por %p92, %p93
    %p95 = scmp.ne.s32.totalorder %s87, %s89
    %p96 = scmp.eq.s32.totalorder %s16, 1
    %p97 = por %p95, %p96
    %p98 = scmp.ne.s32.totalorder %s89, %s90
    %p99 = scmp.eq.s32.totalorder %s16, 0
    %p100 = por %p98, %p99
    %p101 = scmp.ne.s32.totalorder %s89, %s90
    %p102 = scmp.eq.s32.totalorder %s17, 1
    %p103 = por %p101, %p102
    %p105 = scmp.ne.s32.totalorder %s90, %s104
    %p106 = scmp.eq.s32.totalorder %s17, 0
    %p107 = por %p105, %p106
    %s109 = sadd.s32 %s108, 1
    %p112 = scmp.eq.s32.totalorder %s11, 1
    %p113 = scmp.ne.s32.totalorder %s108, %s110
    %p114 = scmp.eq.s32.totalorder %s11, 0
    %p115 = por %p113, %p114
    %p116 = scmp.ne.s32.totalorder %s108, %s110
    %p117 = scmp.eq.s32.totalorder %s16, 1
    %p118 = por %p116, %p117
    %p119 = scmp.ne.s32.totalorder %s110, %s111
    %p120 = scmp.eq.s32.totalorder %s16, 0
    %p121 = por %p119, %p120
    %p122 = scmp.ne.s32.totalorder %s110, %s111
    %p123 = scmp.eq.s32.totalorder %s17, 1
    %p124 = por %p122, %p123
    %p126 = scmp.ne.s32.totalorder %s111, %s125
    %p127 = scmp.eq.s32.totalorder %s17, 0
    %p128 = por %p126, %p127
    %s129 = ssub.s32 %s11, %s18
    %p130 = scmp.eq.s32.totalorder %s129, 0
    %s132 = sadd.s32 %s131, 1
    %s133 = scalar_select %p130, %s131, %s132
    %p136 = pneg %p130
    %p137 = scmp.eq.s32.totalorder %s11, 1
    %p138 = por %p136, %p137
    %p139 = scmp.ne.s32.totalorder %s131, %s134
    %p140 = scmp.eq.s32.totalorder %s11, 0
    %p141 = por %p139, %p140
    %p142 = scmp.ne.s32.totalorder %s131, %s134
    %p143 = scmp.eq.s32.totalorder %s16, 1
    %p144 = por %p142, %p143
    %p145 = scmp.ne.s32.totalorder %s134, %s135
    %p146 = scmp.eq.s32.totalorder %s16, 0
    %p147 = por %p145, %p146
    %p148 = scmp.ne.s32.totalorder %s134, %s135
    %p149 = scmp.eq.s32.totalorder %s17, 1
    %p150 = por %p148, %p149
    %p152 = scmp.ne.s32.totalorder %s135, %s151
    %p153 = scmp.eq.s32.totalorder %s17, 0
    %p154 = por %p152, %p153
    %p155 = scmp.le.s32.totalorder 1, %s11
    %p156 = scmp.lt.s32.totalorder %s11, 3
    %p157 = pnand %p155, %p156
    %p158 = pneg %p157
    // Predicated region
    $region9: #{_graph_tower_level.1} parent=5 // pred_check
      _
    $region10: #{_graph_tower_level.1} parent=5 // pred_check_branch
      %160 = sbr.rel (%p157) target = $region12
    $region11: #{_graph_tower_level.1} parent=5 // pred_region
      %s161 = ssub.s32 %s11, 1
      // Predicated region
      $region13: #{_graph_tower_level.1} parent=11 // pred_check
        %p162 = pneg %p58
      $region14: #{_graph_tower_level.1} parent=11 // pred_check_branch
        %164 = sbr.rel (%p162) target = $region16
      $region15: #{_graph_tower_level.1} parent=11 // pred_region
        _
      $region16: #{_graph_tower_level.1} parent=11 // pred_fallthru
        _
      // Predicated region
      $region17: #{_graph_tower_level.1} parent=11 // pred_check
        %p165 = pneg %p79
      $region18: #{_graph_tower_level.1} parent=11 // pred_check_branch
        %167 = sbr.rel (%p165) target = $region20
      $region19: #{_graph_tower_level.1} parent=11 // pred_region
        _
      $region20: #{_graph_tower_level.1} parent=11 // pred_fallthru
        _
      // Predicated region
      $region21: #{_graph_tower_level.1} parent=11 // pred_check
        %p168 = pneg %p100
      $region22: #{_graph_tower_level.1} parent=11 // pred_check_branch
        %170 = sbr.rel (%p168) target = $region24
      $region23: #{_graph_tower_level.1} parent=11 // pred_region
        _
      $region24: #{_graph_tower_level.1} parent=11 // pred_fallthru
        _
      // Predicated region
      $region25: #{_graph_tower_level.1} parent=11 // pred_check
        %p171 = pneg %p121
      $region26: #{_graph_tower_level.1} parent=11 // pred_check_branch
        %173 = sbr.rel (%p171) target = $region28
      $region27: #{_graph_tower_level.1} parent=11 // pred_region
        _
      $region28: #{_graph_tower_level.1} parent=11 // pred_fallthru
        _
    $region12: #{_graph_tower_level.1} parent=5 // pred_fallthru
      _
    %p174 = scmp.lt.s32.totalorder %s11, 2
    // Predicated region
    $region29: #{_graph_tower_level.1} parent=5 // pred_check
      %p175 = pneg %p174
    $region30: #{_graph_tower_level.1} parent=5 // pred_check_branch
      %177 = sbr.rel (%p175) target = $region32
    $region31: #{_graph_tower_level.1} parent=5 // pred_region
      // Predicated region
      $region33: #{_graph_tower_level.1} parent=31 // pred_check
        %p178 = pneg %p31
      $region34: #{_graph_tower_level.1} parent=31 // pred_check_branch
        %180 = sbr.rel (%p178) target = $region36
      $region35: #{_graph_tower_level.1} parent=31 // pred_region
        %p181 = scmp.lt.s32.totalorder %s11, 1
        %s182 = scalar_select %p181, %s11, 1
        %s183 = smul.addr %s182, 48
        %s184 = smul.addr %s183, 8
        %s185 = scalar_lea.vmem %s0, %s184
      $region36: #{_graph_tower_level.1} parent=31 // pred_fallthru
        _
    $region32: #{_graph_tower_level.1} parent=5 // pred_fallthru
      _
    %p186 = scmp.le.s32.totalorder 1, %s11
    %p187 = scmp.lt.s32.totalorder %s11, 3
    %p188 = pnand %p186, %p187
    %p189 = pneg %p188
    // Predicated region
    $region37: #{_graph_tower_level.1} parent=5 // pred_check
      _
    $region38: #{_graph_tower_level.1} parent=5 // pred_check_branch
      %191 = sbr.rel (%p188) target = $region40
    $region39: #{_graph_tower_level.1} parent=5 // pred_region
      %s192 = ssub.s32 %s11, 1
      %p193 = scmp.lt.s32.totalorder %s16, 1
      %s194 = scalar_select %p193, %s16, 1
      %s195 = smul.addr %s194, 48
      %s196 = smul.addr %s195, 8
      %s197 = scalar_lea.vmem %s0, %s196
      %p198 = pneg %p37
      %p199 = pneg %p34
      %p200 = pneg %p58
      %p201 = pneg %p55
      %p202 = pneg %p79
      %p203 = pneg %p76
      %p204 = pneg %p100
      %p205 = pneg %p97
      %p206 = pneg %p121
      %p207 = pneg %p118
      %p208 = pneg %p147
      %p209 = pneg %p144
      %p210 = scmp.lt.s32.totalorder %s16, 1
      %s211 = scalar_select %p210, %s16, 1
      %s212 = smul.addr %s211, 48
      %s213 = smul.addr %s212, 8
      %s214 = scalar_lea.vmem %s5, %s213
      %p215 = scmp.lt.s32.totalorder %s16, 1
      %s216 = scalar_select %p215, %s16, 1
      %s217 = smul.addr %s216, 48
      %s218 = smul.addr %s217, 8
      %s219 = scalar_lea.vmem %s0, %s218
      %p220 = scmp.lt.s32.totalorder %s16, 1
      %s221 = scalar_select %p220, %s16, 1
      %s222 = smul.addr %s221, 48
      %s223 = smul.addr %s222, 8
      %s224 = scalar_lea.vmem %s5, %s223
      %226 = vst [vmem:[#allocation2] sm:$0xf] 0
      %227 = vst [vmem:[#allocation2 + $0x4] sm:$0xf] 0
      %228 = vst [vmem:[#allocation2 + $0x8] sm:$0xf] 0
      %vm229 = vcmask 1040384
      %vm230 = vsmask.f32 256
      %vm231 = vmand %vm229, %vm230
      %v232 = vld [vmem:[#allocation2 + $0xc] sm:$0x1]
      %v233 = vsel %vm231, 0, %v232
      %234 = vst [vmem:[#allocation2 + $0xc] sm:$0x1] %v233
      %vm235 = vcmask 1043456
      %vm236 = vsmask.f32 7938
      %vm237 = vmand %vm235, %vm236
      %v238 = vld [vmem:[#allocation2 + $0xcc] sm:$0xf]
      %v239 = vsel %vm237, 0, %v238
      %240 = vst [vmem:[#allocation2 + $0xcc] sm:$0xf] %v239
      %241 = vst [vmem:[#allocation2 + $0xd0] sm:$0xf] 0
      %242 = vst [vmem:[#allocation2 + $0xd4] sm:$0xf] 0
      %243 = vst [vmem:[#allocation2 + $0xd8] sm:$0xf] 0
      %244 = vst [vmem:[#allocation2 + $0xdc] sm:$0xf] 0
      %245 = vst [vmem:[#allocation2 + $0xe0] sm:$0xf] 0
      %v246 = vld [vmem:[%s219] sm:$0xff]
      %v247 = vld [vmem:[%s219 + $0x8] sm:$0xff]
      %v248 = vld [vmem:[%s219 + $0x10] sm:$0xff]
      %v249 = vld [vmem:[%s219 + $0x18] sm:$0xff]
      %v250 = vld [vmem:[%s219 + $0x20] sm:$0xff]
      %v251 = vld [vmem:[%s219 + $0x28] sm:$0xff]
      %v252 = vld [vmem:[%s219 + $0x30] sm:$0xff]
      %v253 = vld [vmem:[%s219 + $0x38] sm:$0xff]
      %v254 = vld [vmem:[%s219 + $0x40] sm:$0xff]
      %v255 = vld [vmem:[%s219 + $0x48] sm:$0xff]
      %v256 = vld [vmem:[%s219 + $0x50] sm:$0xff]
      %v257 = vld [vmem:[%s219 + $0x58] sm:$0xff]
      %v258 = vld [vmem:[%s219 + $0x60] sm:$0xff]
      %v259 = vld [vmem:[%s219 + $0x68] sm:$0xff]
      %v260 = vld [vmem:[%s219 + $0x70] sm:$0xff]
      %v261 = vld [vmem:[%s219 + $0x78] sm:$0xff]
      %v262 = vld [vmem:[%s219 + $0x80] sm:$0xff]
      %v263 = vld [vmem:[%s219 + $0x88] sm:$0xff]
      %v264 = vld [vmem:[%s219 + $0x90] sm:$0xff]
      %v265 = vld [vmem:[%s219 + $0x98] sm:$0xff]
      %v266 = vld [vmem:[%s219 + $0xa0] sm:$0xff]
      %v267 = vld [vmem:[%s219 + $0xa8] sm:$0xff]
      %v268 = vld [vmem:[%s219 + $0xb0] sm:$0xff]
      %v269 = vld [vmem:[%s219 + $0xb8] sm:$0xff]
      %v270 = vld [vmem:[%s219 + $0xc0] sm:$0xff]
      %v271 = vld [vmem:[%s219 + $0xc8] sm:$0xff]
      %v272 = vld [vmem:[%s219 + $0xd0] sm:$0xff]
      %v273 = vld [vmem:[%s219 + $0xd8] sm:$0xff]
      %v274 = vld [vmem:[%s219 + $0xe0] sm:$0xff]
      %v275 = vld [vmem:[%s219 + $0xe8] sm:$0xff]
      %v276 = vld [vmem:[%s219 + $0xf0] sm:$0xff]
      %v277 = vld [vmem:[%s219 + $0xf8] sm:$0xff]
      %v278 = vld [vmem:[%s219 + $0x100] sm:$0xff]
      %v279 = vld [vmem:[%s219 + $0x108] sm:$0xff]
      %v280 = vld [vmem:[%s219 + $0x110] sm:$0xff]
      %v281 = vld [vmem:[%s219 + $0x118] sm:$0xff]
      %v282 = vld [vmem:[%s219 + $0x120] sm:$0xff]
      %v283 = vld [vmem:[%s219 + $0x128] sm:$0xff]
      %v284 = vld [vmem:[%s219 + $0x130] sm:$0xff]
      %v285 = vld [vmem:[%s219 + $0x138] sm:$0xff]
      %v286 = vld [vmem:[%s219 + $0x140] sm:$0xff]
      %v287 = vld [vmem:[%s219 + $0x148] sm:$0xff]
      %v288 = vld [vmem:[%s219 + $0x150] sm:$0xff]
      %v289 = vld [vmem:[%s219 + $0x158] sm:$0xff]
      %v290 = vld [vmem:[%s219 + $0x160] sm:$0xff]
      %v291 = vld [vmem:[%s219 + $0x168] sm:$0xff]
      %v292 = vld [vmem:[%s219 + $0x170] sm:$0xff]
      %v293 = vld [vmem:[%s219 + $0x178] sm:$0xff]
      %v294 = vpack.c.bf16 %v246, %v246
      %v295 = vpack.c.bf16 %v247, %v247
      %v296 = vpack.c.bf16 %v248, %v248
      %v297 = vpack.c.bf16 %v249, %v249
      %v298 = vpack.c.bf16 %v250, %v250
      %v299 = vpack.c.bf16 %v251, %v251
      %v300 = vpack.c.bf16 %v252, %v252
      %v301 = vpack.c.bf16 %v253, %v253
      %v302 = vpack.c.bf16 %v254, %v254
      %v303 = vpack.c.bf16 %v255, %v255
      %v304 = vpack.c.bf16 %v256, %v256
      %v305 = vpack.c.bf16 %v257, %v257
      %v306 = vpack.c.bf16 %v258, %v258
      %v307 = vpack.c.bf16 %v259, %v259
      %v308 = vpack.c.bf16 %v260, %v260
      %v309 = vpack.c.bf16 %v261, %v261
      %v310 = vpack.c.bf16 %v262, %v262
      %v311 = vpack.c.bf16 %v263, %v263
      %v312 = vpack.c.bf16 %v264, %v264
      %v313 = vpack.c.bf16 %v265, %v265
      %v314 = vpack.c.bf16 %v266, %v266
      %v315 = vpack.c.bf16 %v267, %v267
      %v316 = vpack.c.bf16 %v268, %v268
      %v317 = vpack.c.bf16 %v269, %v269
      %v318 = vpack.c.bf16 %v270, %v270
      %v319 = vpack.c.bf16 %v271, %v271
      %v320 = vpack.c.bf16 %v272, %v272
      %v321 = vpack.c.bf16 %v273, %v273
      %v322 = vpack.c.bf16 %v274, %v274
      %v323 = vpack.c.bf16 %v275, %v275
      %v324 = vpack.c.bf16 %v276, %v276
      %v325 = vpack.c.bf16 %v277, %v277
      %v326 = vpack.c.bf16 %v278, %v278
      %v327 = vpack.c.bf16 %v279, %v279
      %v328 = vpack.c.bf16 %v280, %v280
      %v329 = vpack.c.bf16 %v281, %v281
      %v330 = vpack.c.bf16 %v282, %v282
      %v331 = vpack.c.bf16 %v283, %v283
      %v332 = vpack.c.bf16 %v284, %v284
      %v333 = vpack.c.bf16 %v285, %v285
      %v334 = vpack.c.bf16 %v286, %v286
      %v335 = vpack.c.bf16 %v287, %v287
      %v336 = vpack.c.bf16 %v288, %v288
      %v337 = vpack.c.bf16 %v289, %v289
      %v338 = vpack.c.bf16 %v290, %v290
      %v339 = vpack.c.bf16 %v291, %v291
      %v340 = vpack.c.bf16 %v292, %v292
      %v341 = vpack.c.bf16 %v293, %v293
      %vm342 = vsmask.f32 4368
      %vm343 = vmor %vm230, %vm342
      %v345 = vshrl.u32 %v294, 16
      %v347 = vrot.slane %v345, 7
      %v348 = vshll.u32 %v294, 16
      %v350 = vor.u32 %v347, %v348
      %v351 = vrot.slane %v347, 4
      %v353 = vshrl.u32 %v295, 16
      %v355 = vrot.slane %v353, 7
      %v356 = vshll.u32 %v295, 16
      %v358 = vor.u32 %v355, %v356
      %v359 = vsel %vm343, %v351, %v358
      %v360 = vrot.slane %v355, 4
      %v362 = vshrl.u32 %v296, 16
      %v364 = vrot.slane %v362, 7
      %v365 = vshll.u32 %v296, 16
      %v367 = vor.u32 %v364, %v365
      %v368 = vsel %vm343, %v360, %v367
      %v369 = vrot.slane %v364, 4
      %v371 = vshrl.u32 %v297, 16
      %v373 = vrot.slane %v371, 7
      %v374 = vshll.u32 %v297, 16
      %v376 = vor.u32 %v373, %v374
      %v377 = vsel %vm343, %v369, %v376
      %v378 = vrot.slane %v373, 4
      %v380 = vshrl.u32 %v298, 16
      %v382 = vrot.slane %v380, 7
      %v383 = vshll.u32 %v298, 16
      %v385 = vor.u32 %v382, %v383
      %v386 = vsel %vm343, %v378, %v385
      %v387 = vrot.slane %v382, 4
      %v389 = vshrl.u32 %v299, 16
      %v391 = vrot.slane %v389, 7
      %v392 = vshll.u32 %v299, 16
      %v394 = vor.u32 %v391, %v392
      %v395 = vsel %vm343, %v387, %v394
      %v396 = vrot.slane %v391, 4
      %v398 = vshrl.u32 %v300, 16
      %v400 = vrot.slane %v398, 7
      %v401 = vshll.u32 %v300, 16
      %v403 = vor.u32 %v400, %v401
      %v404 = vsel %vm343, %v396, %v403
      %v405 = vrot.slane %v400, 4
      %v407 = vshrl.u32 %v301, 16
      %v409 = vrot.slane %v407, 7
      %v410 = vshll.u32 %v301, 16
      %v412 = vor.u32 %v409, %v410
      %v413 = vsel %vm343, %v405, %v412
      %v414 = vrot.slane %v409, 4
      %v416 = vshrl.u32 %v302, 16
      %v418 = vrot.slane %v416, 7
      %v419 = vshll.u32 %v302, 16
      %v421 = vor.u32 %v418, %v419
      %v422 = vsel %vm343, %v414, %v421
      %v423 = vrot.slane %v418, 4
      %v425 = vshrl.u32 %v303, 16
      %v427 = vrot.slane %v425, 7
      %v428 = vshll.u32 %v303, 16
      %v430 = vor.u32 %v427, %v428
      %v431 = vsel %vm343, %v423, %v430
      %v432 = vrot.slane %v427, 4
      %v434 = vshrl.u32 %v304, 16
      %v436 = vrot.slane %v434, 7
      %v437 = vshll.u32 %v304, 16
      %v439 = vor.u32 %v436, %v437
      %v440 = vsel %vm343, %v432, %v439
      %v441 = vrot.slane %v436, 4
      %v443 = vshrl.u32 %v305, 16
      %v445 = vrot.slane %v443, 7
      %v446 = vshll.u32 %v305, 16
      %v448 = vor.u32 %v445, %v446
      %v449 = vsel %vm343, %v441, %v448
      %v450 = vrot.slane %v445, 4
      %v452 = vshrl.u32 %v306, 16
      %v454 = vrot.slane %v452, 7
      %v455 = vshll.u32 %v306, 16
      %v457 = vor.u32 %v454, %v455
      %v458 = vsel %vm343, %v450, %v457
      %v459 = vrot.slane %v454, 4
      %v461 = vshrl.u32 %v307, 16
      %v463 = vrot.slane %v461, 7
      %v464 = vshll.u32 %v307, 16
      %v466 = vor.u32 %v463, %v464
      %v467 = vsel %vm343, %v459, %v466
      %v468 = vrot.slane %v463, 4
      %v470 = vshrl.u32 %v308, 16
      %v472 = vrot.slane %v470, 7
      %v473 = vshll.u32 %v308, 16
      %v475 = vor.u32 %v472, %v473
      %v476 = vsel %vm343, %v468, %v475
      %v477 = vrot.slane %v472, 4
      %v479 = vshrl.u32 %v309, 16
      %v481 = vrot.slane %v479, 7
      %v482 = vshll.u32 %v309, 16
      %v484 = vor.u32 %v481, %v482
      %v485 = vsel %vm343, %v477, %v484
      %v486 = vrot.slane %v481, 4
      %v488 = vshrl.u32 %v310, 16
      %v490 = vrot.slane %v488, 7
      %v491 = vshll.u32 %v310, 16
      %v493 = vor.u32 %v490, %v491
      %v494 = vsel %vm343, %v486, %v493
      %v495 = vrot.slane %v490, 4
      %v497 = vshrl.u32 %v311, 16
      %v499 = vrot.slane %v497, 7
      %v500 = vshll.u32 %v311, 16
      %v502 = vor.u32 %v499, %v500
      %v503 = vsel %vm343, %v495, %v502
      %v504 = vrot.slane %v499, 4
      %v506 = vshrl.u32 %v312, 16
      %v508 = vrot.slane %v506, 7
      %v509 = vshll.u32 %v312, 16
      %v511 = vor.u32 %v508, %v509
      %v512 = vsel %vm343, %v504, %v511
      %v513 = vrot.slane %v508, 4
      %v515 = vshrl.u32 %v313, 16
      %v517 = vrot.slane %v515, 7
      %v518 = vshll.u32 %v313, 16
      %v520 = vor.u32 %v517, %v518
      %v521 = vsel %vm343, %v513, %v520
      %v522 = vrot.slane %v517, 4
      %v524 = vshrl.u32 %v314, 16
      %v526 = vrot.slane %v524, 7
      %v527 = vshll.u32 %v314, 16
      %v529 = vor.u32 %v526, %v527
      %v530 = vsel %vm343, %v522, %v529
      %v531 = vrot.slane %v526, 4
      %v533 = vshrl.u32 %v315, 16
      %v535 = vrot.slane %v533, 7
      %v536 = vshll.u32 %v315, 16
      %v538 = vor.u32 %v535, %v536
      %v539 = vsel %vm343, %v531, %v538
      %v540 = vrot.slane %v535, 4
      %v542 = vshrl.u32 %v316, 16
      %v544 = vrot.slane %v542, 7
      %v545 = vshll.u32 %v316, 16
      %v547 = vor.u32 %v544, %v545
      %v548 = vsel %vm343, %v540, %v547
      %v549 = vrot.slane %v544, 4
      %v551 = vshrl.u32 %v317, 16
      %v553 = vrot.slane %v551, 7
      %v554 = vshll.u32 %v317, 16
      %v556 = vor.u32 %v553, %v554
      %v557 = vsel %vm343, %v549, %v556
      %v558 = vrot.slane %v553, 4
      %v560 = vshrl.u32 %v318, 16
      %v562 = vrot.slane %v560, 7
      %v563 = vshll.u32 %v318, 16
      %v565 = vor.u32 %v562, %v563
      %v566 = vsel %vm343, %v558, %v565
      %v567 = vrot.slane %v562, 4
      %v569 = vshrl.u32 %v319, 16
      %v571 = vrot.slane %v569, 7
      %v572 = vshll.u32 %v319, 16
      %v574 = vor.u32 %v571, %v572
      %v575 = vsel %vm343, %v567, %v574
      %v576 = vrot.slane %v571, 4
      %v578 = vshrl.u32 %v320, 16
      %v580 = vrot.slane %v578, 7
      %v581 = vshll.u32 %v320, 16
      %v583 = vor.u32 %v580, %v581
      %v584 = vsel %vm343, %v576, %v583
      %v585 = vrot.slane %v580, 4
      %v587 = vshrl.u32 %v321, 16
      %v589 = vrot.slane %v587, 7
      %v590 = vshll.u32 %v321, 16
      %v592 = vor.u32 %v589, %v590
      %v593 = vsel %vm343, %v585, %v592
      %v594 = vrot.slane %v589, 4
      %v596 = vshrl.u32 %v322, 16
      %v598 = vrot.slane %v596, 7
      %v599 = vshll.u32 %v322, 16
      %v601 = vor.u32 %v598, %v599
      %v602 = vsel %vm343, %v594, %v601
      %v603 = vrot.slane %v598, 4
      %v605 = vshrl.u32 %v323, 16
      %v607 = vrot.slane %v605, 7
      %v608 = vshll.u32 %v323, 16
      %v610 = vor.u32 %v607, %v608
      %v611 = vsel %vm343, %v603, %v610
      %v612 = vrot.slane %v607, 4
      %v614 = vshrl.u32 %v324, 16
      %v616 = vrot.slane %v614, 7
      %v617 = vshll.u32 %v324, 16
      %v619 = vor.u32 %v616, %v617
      %v620 = vsel %vm343, %v612, %v619
      %v621 = vrot.slane %v616, 4
      %v623 = vshrl.u32 %v325, 16
      %v625 = vrot.slane %v623, 7
      %v626 = vshll.u32 %v325, 16
      %v628 = vor.u32 %v625, %v626
      %v629 = vsel %vm343, %v621, %v628
      %v630 = vrot.slane %v625, 4
      %v632 = vshrl.u32 %v326, 16
      %v634 = vrot.slane %v632, 7
      %v635 = vshll.u32 %v326, 16
      %v637 = vor.u32 %v634, %v635
      %v638 = vsel %vm343, %v630, %v637
      %v639 = vrot.slane %v634, 4
      %v641 = vshrl.u32 %v327, 16
      %v643 = vrot.slane %v641, 7
      %v644 = vshll.u32 %v327, 16
      %v646 = vor.u32 %v643, %v644
      %v647 = vsel %vm343, %v639, %v646
      %v648 = vrot.slane %v643, 4
      %v650 = vshrl.u32 %v328, 16
      %v652 = vrot.slane %v650, 7
      %v653 = vshll.u32 %v328, 16
      %v655 = vor.u32 %v652, %v653
      %v656 = vsel %vm343, %v648, %v655
      %v657 = vrot.slane %v652, 4
      %v659 = vshrl.u32 %v329, 16
      %v661 = vrot.slane %v659, 7
      %v662 = vshll.u32 %v329, 16
      %v664 = vor.u32 %v661, %v662
      %v665 = vsel %vm343, %v657, %v664
      %v666 = vrot.slane %v661, 4
      %v668 = vshrl.u32 %v330, 16
      %v670 = vrot.slane %v668, 7
      %v671 = vshll.u32 %v330, 16
      %v673 = vor.u32 %v670, %v671
      %v674 = vsel %vm343, %v666, %v673
      %v675 = vrot.slane %v670, 4
      %v677 = vshrl.u32 %v331, 16
      %v679 = vrot.slane %v677, 7
      %v680 = vshll.u32 %v331, 16
      %v682 = vor.u32 %v679, %v680
      %v683 = vsel %vm343, %v675, %v682
      %v684 = vrot.slane %v679, 4
      %v686 = vshrl.u32 %v332, 16
      %v688 = vrot.slane %v686, 7
      %v689 = vshll.u32 %v332, 16
      %v691 = vor.u32 %v688, %v689
      %v692 = vsel %vm343, %v684, %v691
      %v693 = vrot.slane %v688, 4
      %v695 = vshrl.u32 %v333, 16
      %v697 = vrot.slane %v695, 7
      %v698 = vshll.u32 %v333, 16
      %v700 = vor.u32 %v697, %v698
      %v701 = vsel %vm343, %v693, %v700
      %v702 = vrot.slane %v697, 4
      %v704 = vshrl.u32 %v334, 16
      %v706 = vrot.slane %v704, 7
      %v707 = vshll.u32 %v334, 16
      %v709 = vor.u32 %v706, %v707
      %v710 = vsel %vm343, %v702, %v709
      %v711 = vrot.slane %v706, 4
      %v713 = vshrl.u32 %v335, 16
      %v715 = vrot.slane %v713, 7
      %v716 = vshll.u32 %v335, 16
      %v718 = vor.u32 %v715, %v716
      %v719 = vsel %vm343, %v711, %v718
      %v720 = vrot.slane %v715, 4
      %v722 = vshrl.u32 %v336, 16
      %v724 = vrot.slane %v722, 7
      %v725 = vshll.u32 %v336, 16
      %v727 = vor.u32 %v724, %v725
      %v728 = vsel %vm343, %v720, %v727
      %v729 = vrot.slane %v724, 4
      %v731 = vshrl.u32 %v337, 16
      %v733 = vrot.slane %v731, 7
      %v734 = vshll.u32 %v337, 16
      %v736 = vor.u32 %v733, %v734
      %v737 = vsel %vm343, %v729, %v736
      %v738 = vrot.slane %v733, 4
      %v740 = vshrl.u32 %v338, 16
      %v742 = vrot.slane %v740, 7
      %v743 = vshll.u32 %v338, 16
      %v745 = vor.u32 %v742, %v743
      %v746 = vsel %vm343, %v738, %v745
      %v747 = vrot.slane %v742, 4
      %v749 = vshrl.u32 %v339, 16
      %v751 = vrot.slane %v749, 7
      %v752 = vshll.u32 %v339, 16
      %v754 = vor.u32 %v751, %v752
      %v755 = vsel %vm343, %v747, %v754
      %v756 = vrot.slane %v751, 4
      %v758 = vshrl.u32 %v340, 16
      %v760 = vrot.slane %v758, 7
      %v761 = vshll.u32 %v340, 16
      %v763 = vor.u32 %v760, %v761
      %v764 = vsel %vm343, %v756, %v763
      %v765 = vrot.slane %v760, 4
      %v767 = vshrl.u32 %v341, 16
      %v769 = vrot.slane %v767, 7
      %v770 = vshll.u32 %v341, 16
      %v772 = vor.u32 %v769, %v770
      %v773 = vsel %vm343, %v765, %v772
      %v774 = vrot.slane %v769, 4
      %v824 = vld [vmem:[#allocation2 + $0xc] sm:$0xf]
      %v825 = vsel %vm237, %v350, %v824
      %826 = vst [vmem:[#allocation2 + $0xc] sm:$0xf] %v825
      %827 = vst [vmem:[#allocation2 + $0x10] sm:$0xf] %v359
      %828 = vst [vmem:[#allocation2 + $0x14] sm:$0xf] %v368
      %829 = vst [vmem:[#allocation2 + $0x18] sm:$0xf] %v377
      %830 = vst [vmem:[#allocation2 + $0x1c] sm:$0xf] %v386
      %831 = vst [vmem:[#allocation2 + $0x20] sm:$0xf] %v395
      %832 = vst [vmem:[#allocation2 + $0x24] sm:$0xf] %v404
      %833 = vst [vmem:[#allocation2 + $0x28] sm:$0xf] %v413
      %834 = vst [vmem:[#allocation2 + $0x2c] sm:$0xf] %v422
      %835 = vst [vmem:[#allocation2 + $0x30] sm:$0xf] %v431
      %836 = vst [vmem:[#allocation2 + $0x34] sm:$0xf] %v440
      %837 = vst [vmem:[#allocation2 + $0x38] sm:$0xf] %v449
      %838 = vst [vmem:[#allocation2 + $0x3c] sm:$0xf] %v458
      %839 = vst [vmem:[#allocation2 + $0x40] sm:$0xf] %v467
      %840 = vst [vmem:[#allocation2 + $0x44] sm:$0xf] %v476
      %841 = vst [vmem:[#allocation2 + $0x48] sm:$0xf] %v485
      %842 = vst [vmem:[#allocation2 + $0x4c] sm:$0xf] %v494
      %843 = vst [vmem:[#allocation2 + $0x50] sm:$0xf] %v503
      %844 = vst [vmem:[#allocation2 + $0x54] sm:$0xf] %v512
      %845 = vst [vmem:[#allocation2 + $0x58] sm:$0xf] %v521
      %846 = vst [vmem:[#allocation2 + $0x5c] sm:$0xf] %v530
      %847 = vst [vmem:[#allocation2 + $0x60] sm:$0xf] %v539
      %848 = vst [vmem:[#allocation2 + $0x64] sm:$0xf] %v548
      %849 = vst [vmem:[#allocation2 + $0x68] sm:$0xf] %v557
      %850 = vst [vmem:[#allocation2 + $0x6c] sm:$0xf] %v566
      %851 = vst [vmem:[#allocation2 + $0x70] sm:$0xf] %v575
      %852 = vst [vmem:[#allocation2 + $0x74] sm:$0xf] %v584
      %853 = vst [vmem:[#allocation2 + $0x78] sm:$0xf] %v593
      %854 = vst [vmem:[#allocation2 + $0x7c] sm:$0xf] %v602
      %855 = vst [vmem:[#allocation2 + $0x80] sm:$0xf] %v611
      %856 = vst [vmem:[#allocation2 + $0x84] sm:$0xf] %v620
      %857 = vst [vmem:[#allocation2 + $0x88] sm:$0xf] %v629
      %858 = vst [vmem:[#allocation2 + $0x8c] sm:$0xf] %v638
      %859 = vst [vmem:[#allocation2 + $0x90] sm:$0xf] %v647
      %860 = vst [vmem:[#allocation2 + $0x94] sm:$0xf] %v656
      %861 = vst [vmem:[#allocation2 + $0x98] sm:$0xf] %v665
      %862 = vst [vmem:[#allocation2 + $0x9c] sm:$0xf] %v674
      %863 = vst [vmem:[#allocation2 + $0xa0] sm:$0xf] %v683
      %864 = vst [vmem:[#allocation2 + $0xa4] sm:$0xf] %v692
      %865 = vst [vmem:[#allocation2 + $0xa8] sm:$0xf] %v701
      %866 = vst [vmem:[#allocation2 + $0xac] sm:$0xf] %v710
      %867 = vst [vmem:[#allocation2 + $0xb0] sm:$0xf] %v719
      %868 = vst [vmem:[#allocation2 + $0xb4] sm:$0xf] %v728
      %869 = vst [vmem:[#allocation2 + $0xb8] sm:$0xf] %v737
      %870 = vst [vmem:[#allocation2 + $0xbc] sm:$0xf] %v746
      %871 = vst [vmem:[#allocation2 + $0xc0] sm:$0xf] %v755
      %872 = vst [vmem:[#allocation2 + $0xc4] sm:$0xf] %v764
      %873 = vst [vmem:[#allocation2 + $0xc8] sm:$0xf] %v773
      %v874 = vld [vmem:[#allocation2 + $0xcc] sm:$0x1]
      %v875 = vsel %vm231, %v774, %v874
      %876 = vst [vmem:[#allocation2 + $0xcc] sm:$0x1] %v875
      %v877 = vld [vmem:[%s4] sm:$0xff]
      %v878 = vld [vmem:[%s4 + $0x8] sm:$0xff]
      %v879 = vld [vmem:[%s4 + $0x10] sm:$0xff]
      %v880 = vld [vmem:[%s4 + $0x18] sm:$0xff]
      %v881 = vld [vmem:[%s4 + $0x20] sm:$0xff]
      %v882 = vld [vmem:[%s4 + $0x28] sm:$0xff]
      %v883 = vld [vmem:[%s4 + $0x30] sm:$0xff]
      %v884 = vld [vmem:[%s4 + $0x38] sm:$0xff]
      %v885 = vld [vmem:[%s4 + $0x40] sm:$0xff]
      %v886 = vld [vmem:[%s4 + $0x48] sm:$0xff]
      %v887 = vld [vmem:[%s4 + $0x50] sm:$0xff]
      %v888 = vld [vmem:[%s4 + $0x58] sm:$0xff]
      %v889 = vld [vmem:[%s4 + $0x60] sm:$0xff]
      %v890 = vld [vmem:[%s4 + $0x68] sm:$0xff]
      %v891 = vld [vmem:[%s4 + $0x70] sm:$0xff]
      %v892 = vld [vmem:[%s4 + $0x78] sm:$0xff]
      %v893 = vld [vmem:[%s4 + $0x80] sm:$0xff]
      %v894 = vld [vmem:[%s4 + $0x88] sm:$0xff]
      %v895 = vld [vmem:[%s4 + $0x90] sm:$0xff]
      %v896 = vld [vmem:[%s4 + $0x98] sm:$0xff]
      %v897 = vld [vmem:[%s4 + $0xa0] sm:$0xff]
      %v898 = vld [vmem:[%s4 + $0xa8] sm:$0xff]
      %v899 = vld [vmem:[%s4 + $0xb0] sm:$0xff]
      %v900 = vld [vmem:[%s4 + $0xb8] sm:$0xff]
      %v901 = vld [vmem:[%s4 + $0xc0] sm:$0xff]
      %v902 = vld [vmem:[%s4 + $0xc8] sm:$0xff]
      %v903 = vld [vmem:[%s4 + $0xd0] sm:$0xff]
      %v904 = vld [vmem:[%s4 + $0xd8] sm:$0xff]
      %v905 = vld [vmem:[%s4 + $0xe0] sm:$0xff]
      %v906 = vld [vmem:[%s4 + $0xe8] sm:$0xff]
      %v907 = vld [vmem:[%s4 + $0xf0] sm:$0xff]
      %v908 = vld [vmem:[%s4 + $0xf8] sm:$0xff]
      %v909 = vld [vmem:[%s4 + $0x100] sm:$0xff]
      %v910 = vld [vmem:[%s4 + $0x108] sm:$0xff]
      %v911 = vld [vmem:[%s4 + $0x110] sm:$0xff]
      %v912 = vld [vmem:[%s4 + $0x118] sm:$0xff]
      %v913 = vld [vmem:[%s4 + $0x120] sm:$0xff]
      %v914 = vld [vmem:[%s4 + $0x128] sm:$0xff]
      %v915 = vld [vmem:[%s4 + $0x130] sm:$0xff]
      %v916 = vld [vmem:[%s4 + $0x138] sm:$0xff]
      %v917 = vld [vmem:[%s4 + $0x140] sm:$0xff]
      %v918 = vld [vmem:[%s4 + $0x148] sm:$0xff]
      %v919 = vld [vmem:[%s4 + $0x150] sm:$0xff]
      %v920 = vld [vmem:[%s4 + $0x158] sm:$0xff]
      %v921 = vld [vmem:[%s4 + $0x160] sm:$0xff]
      %v922 = vld [vmem:[%s4 + $0x168] sm:$0xff]
      %v923 = vld [vmem:[%s4 + $0x170] sm:$0xff]
      %v924 = vld [vmem:[%s4 + $0x178] sm:$0xff]
      %v925 = vld [vmem:[%s3] sm:$0xff]
      %v926 = vld [vmem:[%s3 + $0x8] sm:$0xff]
      %v927 = vld [vmem:[%s3 + $0x10] sm:$0xff]
      %v928 = vld [vmem:[%s3 + $0x18] sm:$0xff]
      %v929 = vld [vmem:[%s3 + $0x20] sm:$0xff]
      %v930 = vld [vmem:[%s3 + $0x28] sm:$0xff]
      %v931 = vld [vmem:[%s3 + $0x30] sm:$0xff]
      %v932 = vld [vmem:[%s3 + $0x38] sm:$0xff]
      %v933 = vld [vmem:[%s3 + $0x40] sm:$0xff]
      %v934 = vld [vmem:[%s3 + $0x48] sm:$0xff]
      %v935 = vld [vmem:[%s3 + $0x50] sm:$0xff]
      %v936 = vld [vmem:[%s3 + $0x58] sm:$0xff]
      %v937 = vld [vmem:[%s3 + $0x60] sm:$0xff]
      %v938 = vld [vmem:[%s3 + $0x68] sm:$0xff]
      %v939 = vld [vmem:[%s3 + $0x70] sm:$0xff]
      %v940 = vld [vmem:[%s3 + $0x78] sm:$0xff]
      %v941 = vld [vmem:[#allocation2] sm:$0xf]
      %v942 = vld [vmem:[#allocation2 + $0x4] sm:$0xf]
      %v943 = vld [vmem:[#allocation2 + $0x8] sm:$0xf]
      %v944 = vld [vmem:[#allocation2 + $0xc] sm:$0xf]
      %v945 = vld [vmem:[#allocation2 + $0x10] sm:$0xf]
      %v946 = vld [vmem:[#allocation2 + $0x14] sm:$0xf]
      %v947 = vld [vmem:[#allocation2 + $0x18] sm:$0xf]
      %v948 = vld [vmem:[#allocation2 + $0x1c] sm:$0xf]
      %v949 = vld [vmem:[#allocation2 + $0x20] sm:$0xf]
      %v950 = vld [vmem:[#allocation2 + $0x24] sm:$0xf]
      %v951 = vld [vmem:[#allocation2 + $0x28] sm:$0xf]
      %v952 = vld [vmem:[#allocation2 + $0x2c] sm:$0xf]
      %v953 = vld [vmem:[#allocation2 + $0x30] sm:$0xf]
      %v954 = vld [vmem:[#allocation2 + $0x34] sm:$0xf]
      %v955 = vld [vmem:[#allocation2 + $0x38] sm:$0xf]
      %v956 = vld [vmem:[#allocation2 + $0x3c] sm:$0xf]
      %v957 = vld [vmem:[#allocation2 + $0x40] sm:$0xf]
      %v958 = vld [vmem:[#allocation2 + $0x44] sm:$0xf]
      %v959 = vld [vmem:[#allocation2 + $0x48] sm:$0xf]
      %v960 = vld [vmem:[#allocation2 + $0x4c] sm:$0xf]
      %v961 = vld [vmem:[#allocation2 + $0x50] sm:$0xf]
      %v962 = vld [vmem:[#allocation2 + $0x54] sm:$0xf]
      %v963 = vld [vmem:[#allocation2 + $0x58] sm:$0xf]
      %v964 = vld [vmem:[#allocation2 + $0x5c] sm:$0xf]
      %v965 = vld [vmem:[#allocation2 + $0x60] sm:$0xf]
      %v966 = vld [vmem:[#allocation2 + $0x64] sm:$0xf]
      %v967 = vld [vmem:[#allocation2 + $0x68] sm:$0xf]
      %v968 = vld [vmem:[#allocation2 + $0x6c] sm:$0xf]
      %v969 = vld [vmem:[#allocation2 + $0x70] sm:$0xf]
      %v970 = vld [vmem:[#allocation2 + $0x74] sm:$0xf]
      %v971 = vld [vmem:[#allocation2 + $0x78] sm:$0xf]
      %v972 = vld [vmem:[#allocation2 + $0x7c] sm:$0xf]
      %v973 = vld [vmem:[#allocation2 + $0x80] sm:$0xf]
      %v974 = vld [vmem:[#allocation2 + $0x84] sm:$0xf]
      %v975 = vld [vmem:[#allocation2 + $0x88] sm:$0xf]
      %v976 = vld [vmem:[#allocation2 + $0x8c] sm:$0xf]
      %v977 = vld [vmem:[#allocation2 + $0x90] sm:$0xf]
      %v978 = vld [vmem:[#allocation2 + $0x94] sm:$0xf]
      %v979 = vld [vmem:[#allocation2 + $0x98] sm:$0xf]
      %v980 = vld [vmem:[#allocation2 + $0x9c] sm:$0xf]
      %v981 = vld [vmem:[#allocation2 + $0xa0] sm:$0xf]
      %v982 = vld [vmem:[#allocation2 + $0xa4] sm:$0xf]
      %v983 = vld [vmem:[#allocation2 + $0xa8] sm:$0xf]
      %v984 = vld [vmem:[#allocation2 + $0xac] sm:$0xf]
      %v985 = vld [vmem:[#allocation2 + $0xb0] sm:$0xf]
      %v986 = vld [vmem:[#allocation2 + $0xb4] sm:$0xf]
      %v987 = vld [vmem:[#allocation2 + $0xb8] sm:$0xf]
      %v988 = vld [vmem:[#allocation2 + $0xbc] sm:$0xf]
      %v989 = vld [vmem:[%s1] sm:$0xf]
      %v990 = vld [vmem:[%s1 + $0x4] sm:$0xf]
      %v991 = vld [vmem:[%s1 + $0x8] sm:$0xf]
      %v992 = vld [vmem:[%s1 + $0xc] sm:$0xf]
      %v993 = vld [vmem:[%s1 + $0x10] sm:$0xf]
      %v994 = vld [vmem:[%s1 + $0x14] sm:$0xf]
      %v995 = vld [vmem:[%s1 + $0x18] sm:$0xf]
      %v996 = vld [vmem:[%s1 + $0x1c] sm:$0xf]
      %v997 = vld [vmem:[%s1 + $0x20] sm:$0xf]
      %v998 = vld [vmem:[%s1 + $0x24] sm:$0xf]
      %v999 = vld [vmem:[%s1 + $0x28] sm:$0xf]
      %v1000 = vld [vmem:[%s1 + $0x2c] sm:$0xf]
      %v1001 = vld [vmem:[%s1 + $0x30] sm:$0xf]
      %v1002 = vld [vmem:[%s1 + $0x34] sm:$0xf]
      %v1003 = vld [vmem:[%s1 + $0x38] sm:$0xf]
      %v1004 = vld [vmem:[%s1 + $0x3c] sm:$0xf]
      %v1005 = vld [vmem:[#allocation2 + $0xc0] sm:$0x1]
      %s1006 = scalar_lea.vmem %s1, 64
      %v1007 = vld [vmem:[%s1006] sm:$0xf]
      %v1008 = vld [vmem:[%s1006 + $0x4] sm:$0xf]
      %v1009 = vld [vmem:[%s1006 + $0x8] sm:$0xf]
      %v1010 = vld [vmem:[%s1006 + $0xc] sm:$0xf]
      %v1011 = vld [vmem:[%s1006 + $0x10] sm:$0xf]
      %v1012 = vld [vmem:[%s1006 + $0x14] sm:$0xf]
      %v1013 = vld [vmem:[%s1006 + $0x18] sm:$0xf]
      %v1014 = vld [vmem:[%s1006 + $0x1c] sm:$0xf]
      %v1015 = vld [vmem:[%s1006 + $0x20] sm:$0xf]
      %v1016 = vld [vmem:[%s1006 + $0x24] sm:$0xf]
      %v1017 = vld [vmem:[%s1006 + $0x28] sm:$0xf]
      %v1018 = vld [vmem:[%s1006 + $0x2c] sm:$0xf]
      %v1019 = vld [vmem:[%s1006 + $0x30] sm:$0xf]
      %v1020 = vld [vmem:[%s1006 + $0x34] sm:$0xf]
      %v1021 = vld [vmem:[%s1006 + $0x38] sm:$0xf]
      %v1022 = vld [vmem:[%s1006 + $0x3c] sm:$0xf]
      %v1072 = vunpack.c.l.b16 %v941
      %v1073 = vunpack.c.l.b16 %v942
      %v1074 = vunpack.c.l.b16 %v943
      %v1075 = vunpack.c.l.b16 %v944
      %v1076 = vunpack.c.l.b16 %v945
      %v1077 = vunpack.c.l.b16 %v946
      %v1078 = vunpack.c.l.b16 %v947
      %v1079 = vunpack.c.l.b16 %v948
      %v1080 = vunpack.c.l.b16 %v949
      %v1081 = vunpack.c.l.b16 %v950
      %v1082 = vunpack.c.l.b16 %v951
      %v1083 = vunpack.c.l.b16 %v952
      %v1084 = vunpack.c.l.b16 %v953
      %v1085 = vunpack.c.l.b16 %v954
      %v1086 = vunpack.c.l.b16 %v955
      %v1087 = vunpack.c.l.b16 %v956
      %v1088 = vunpack.c.l.b16 %v957
      %v1089 = vunpack.c.l.b16 %v958
      %v1090 = vunpack.c.l.b16 %v959
      %v1091 = vunpack.c.l.b16 %v960
      %v1092 = vunpack.c.l.b16 %v961
      %v1093 = vunpack.c.l.b16 %v962
      %v1094 = vunpack.c.l.b16 %v963
      %v1095 = vunpack.c.l.b16 %v964
      %v1096 = vunpack.c.l.b16 %v965
      %v1097 = vunpack.c.l.b16 %v966
      %v1098 = vunpack.c.l.b16 %v967
      %v1099 = vunpack.c.l.b16 %v968
      %v1100 = vunpack.c.l.b16 %v969
      %v1101 = vunpack.c.l.b16 %v970
      %v1102 = vunpack.c.l.b16 %v971
      %v1103 = vunpack.c.l.b16 %v972
      %v1104 = vunpack.c.l.b16 %v973
      %v1105 = vunpack.c.l.b16 %v974
      %v1106 = vunpack.c.l.b16 %v975
      %v1107 = vunpack.c.l.b16 %v976
      %v1108 = vunpack.c.l.b16 %v977
      %v1109 = vunpack.c.l.b16 %v978
      %v1110 = vunpack.c.l.b16 %v979
      %v1111 = vunpack.c.l.b16 %v980
      %v1112 = vunpack.c.l.b16 %v981
      %v1113 = vunpack.c.l.b16 %v982
      %v1114 = vunpack.c.l.b16 %v983
      %v1115 = vunpack.c.l.b16 %v984
      %v1116 = vunpack.c.l.b16 %v985
      %v1117 = vunpack.c.l.b16 %v986
      %v1118 = vunpack.c.l.b16 %v987
      %v1119 = vunpack.c.l.b16 %v988
      %v1120 = vunpack.c.l.b16 %v1005
      %v1121 = vpack.c.b16 %v1073, %v1072
      %v1122 = vpack.c.b16 %v1075, %v1074
      %v1123 = vpack.c.b16 %v1077, %v1076
      %v1124 = vpack.c.b16 %v1079, %v1078
      %v1125 = vpack.c.b16 %v1081, %v1080
      %v1126 = vpack.c.b16 %v1083, %v1082
      %v1127 = vpack.c.b16 %v1085, %v1084
      %v1128 = vpack.c.b16 %v1087, %v1086
      %v1129 = vpack.c.b16 %v1089, %v1088
      %v1130 = vpack.c.b16 %v1091, %v1090
      %v1131 = vpack.c.b16 %v1093, %v1092
      %v1132 = vpack.c.b16 %v1095, %v1094
      %v1133 = vpack.c.b16 %v1097, %v1096
      %v1134 = vpack.c.b16 %v1099, %v1098
      %v1135 = vpack.c.b16 %v1101, %v1100
      %v1136 = vpack.c.b16 %v1103, %v1102
      %v1137 = vpack.c.b16 %v1105, %v1104
      %v1138 = vpack.c.b16 %v1107, %v1106
      %v1139 = vpack.c.b16 %v1109, %v1108
      %v1140 = vpack.c.b16 %v1111, %v1110
      %v1141 = vpack.c.b16 %v1113, %v1112
      %v1142 = vpack.c.b16 %v1115, %v1114
      %v1143 = vpack.c.b16 %v1117, %v1116
      %v1144 = vpack.c.b16 %v1119, %v1118
      %v1145 = vpack.c.b16 %v1120, %v1120
      %vm1146 = vsmask.f32 7424
      %v1148 = vshrl.u32 %v1121, 16
      %v1150 = vshll.u32 %v1121, 16
      %v1152 = vrot.slane %v1150, 1
      %v1153 = vor.u32 %v1148, %v1152
      %v1155 = vshll.u32 %v1122, 16
      %v1157 = vrot.slane %v1155, 1
      %v1158 = vsel %vm1146, %v1153, %v1157
      %v1159 = vshrl.u32 %v1122, 16
      %v1161 = vor.u32 %v1159, %v1157
      %v1163 = vshll.u32 %v1123, 16
      %v1165 = vrot.slane %v1163, 1
      %v1166 = vsel %vm1146, %v1161, %v1165
      %v1167 = vshrl.u32 %v1123, 16
      %v1169 = vor.u32 %v1167, %v1165
      %v1171 = vshll.u32 %v1124, 16
      %v1173 = vrot.slane %v1171, 1
      %v1174 = vsel %vm1146, %v1169, %v1173
      %v1175 = vshrl.u32 %v1124, 16
      %v1177 = vor.u32 %v1175, %v1173
      %v1179 = vshll.u32 %v1125, 16
      %v1181 = vrot.slane %v1179, 1
      %v1182 = vsel %vm1146, %v1177, %v1181
      %v1183 = vshrl.u32 %v1125, 16
      %v1185 = vor.u32 %v1183, %v1181
      %v1187 = vshll.u32 %v1126, 16
      %v1189 = vrot.slane %v1187, 1
      %v1190 = vsel %vm1146, %v1185, %v1189
      %v1191 = vshrl.u32 %v1126, 16
      %v1193 = vor.u32 %v1191, %v1189
      %v1195 = vshll.u32 %v1127, 16
      %v1197 = vrot.slane %v1195, 1
      %v1198 = vsel %vm1146, %v1193, %v1197
      %v1199 = vshrl.u32 %v1127, 16
      %v1201 = vor.u32 %v1199, %v1197
      %v1203 = vshll.u32 %v1128, 16
      %v1205 = vrot.slane %v1203, 1
      %v1206 = vsel %vm1146, %v1201, %v1205
      %v1207 = vshrl.u32 %v1128, 16
      %v1209 = vor.u32 %v1207, %v1205
      %v1211 = vshll.u32 %v1129, 16
      %v1213 = vrot.slane %v1211, 1
      %v1214 = vsel %vm1146, %v1209, %v1213
      %v1215 = vshrl.u32 %v1129, 16
      %v1217 = vor.u32 %v1215, %v1213
      %v1219 = vshll.u32 %v1130, 16
      %v1221 = vrot.slane %v1219, 1
      %v1222 = vsel %vm1146, %v1217, %v1221
      %v1223 = vshrl.u32 %v1130, 16
      %v1225 = vor.u32 %v1223, %v1221
      %v1227 = vshll.u32 %v1131, 16
      %v1229 = vrot.slane %v1227, 1
      %v1230 = vsel %vm1146, %v1225, %v1229
      %v1231 = vshrl.u32 %v1131, 16
      %v1233 = vor.u32 %v1231, %v1229
      %v1235 = vshll.u32 %v1132, 16
      %v1237 = vrot.slane %v1235, 1
      %v1238 = vsel %vm1146, %v1233, %v1237
      %v1239 = vshrl.u32 %v1132, 16
      %v1241 = vor.u32 %v1239, %v1237
      %v1243 = vshll.u32 %v1133, 16
      %v1245 = vrot.slane %v1243, 1
      %v1246 = vsel %vm1146, %v1241, %v1245
      %v1247 = vshrl.u32 %v1133, 16
      %v1249 = vor.u32 %v1247, %v1245
      %v1251 = vshll.u32 %v1134, 16
      %v1253 = vrot.slane %v1251, 1
      %v1254 = vsel %vm1146, %v1249, %v1253
      %v1255 = vshrl.u32 %v1134, 16
      %v1257 = vor.u32 %v1255, %v1253
      %v1259 = vshll.u32 %v1135, 16
      %v1261 = vrot.slane %v1259, 1
      %v1262 = vsel %vm1146, %v1257, %v1261
      %v1263 = vshrl.u32 %v1135, 16
      %v1265 = vor.u32 %v1263, %v1261
      %v1267 = vshll.u32 %v1136, 16
      %v1269 = vrot.slane %v1267, 1
      %v1270 = vsel %vm1146, %v1265, %v1269
      %v1271 = vshrl.u32 %v1136, 16
      %v1273 = vor.u32 %v1271, %v1269
      %v1275 = vshll.u32 %v1137, 16
      %v1277 = vrot.slane %v1275, 1
      %v1278 = vsel %vm1146, %v1273, %v1277
      %v1279 = vshrl.u32 %v1137, 16
      %v1281 = vor.u32 %v1279, %v1277
      %v1283 = vshll.u32 %v1138, 16
      %v1285 = vrot.slane %v1283, 1
      %v1286 = vsel %vm1146, %v1281, %v1285
      %v1287 = vshrl.u32 %v1138, 16
      %v1289 = vor.u32 %v1287, %v1285
      %v1291 = vshll.u32 %v1139, 16
      %v1293 = vrot.slane %v1291, 1
      %v1294 = vsel %vm1146, %v1289, %v1293
      %v1295 = vshrl.u32 %v1139, 16
      %v1297 = vor.u32 %v1295, %v1293
      %v1299 = vshll.u32 %v1140, 16
      %v1301 = vrot.slane %v1299, 1
      %v1302 = vsel %vm1146, %v1297, %v1301
      %v1303 = vshrl.u32 %v1140, 16
      %v1305 = vor.u32 %v1303, %v1301
      %v1307 = vshll.u32 %v1141, 16
      %v1309 = vrot.slane %v1307, 1
      %v1310 = vsel %vm1146, %v1305, %v1309
      %v1311 = vshrl.u32 %v1141, 16
      %v1313 = vor.u32 %v1311, %v1309
      %v1315 = vshll.u32 %v1142, 16
      %v1317 = vrot.slane %v1315, 1
      %v1318 = vsel %vm1146, %v1313, %v1317
      %v1319 = vshrl.u32 %v1142, 16
      %v1321 = vor.u32 %v1319, %v1317
      %v1323 = vshll.u32 %v1143, 16
      %v1325 = vrot.slane %v1323, 1
      %v1326 = vsel %vm1146, %v1321, %v1325
      %v1327 = vshrl.u32 %v1143, 16
      %v1329 = vor.u32 %v1327, %v1325
      %v1331 = vshll.u32 %v1144, 16
      %v1333 = vrot.slane %v1331, 1
      %v1334 = vsel %vm1146, %v1329, %v1333
      %v1335 = vshrl.u32 %v1144, 16
      %v1337 = vor.u32 %v1335, %v1333
      %v1339 = vshll.u32 %v1145, 16
      %v1341 = vrot.slane %v1339, 1
      %v1342 = vsel %vm1146, %v1337, %v1341
      %v1383 = vunpack.c.l.b16 %v1007
      %v1384 = vunpack.c.l.b16 %v1008
      %v1385 = vunpack.c.l.b16 %v1009
      %v1386 = vunpack.c.l.b16 %v1010
      %v1387 = vunpack.c.l.b16 %v1011
      %v1388 = vunpack.c.l.b16 %v1012
      %v1389 = vunpack.c.l.b16 %v1013
      %v1390 = vunpack.c.l.b16 %v1014
      %v1391 = vunpack.c.l.b16 %v1015
      %v1392 = vunpack.c.l.b16 %v1016
      %v1393 = vunpack.c.l.b16 %v1017
      %v1394 = vunpack.c.l.b16 %v1018
      %v1395 = vunpack.c.l.b16 %v1019
      %v1396 = vunpack.c.l.b16 %v1020
      %v1397 = vunpack.c.l.b16 %v1021
      %v1398 = vunpack.c.l.b16 %v1022
      %v1399 = vpack.c.b16 %v1384, %v1383
      %v1400 = vpack.c.b16 %v1386, %v1385
      %v1401 = vpack.c.b16 %v1388, %v1387
      %v1402 = vpack.c.b16 %v1390, %v1389
      %v1403 = vpack.c.b16 %v1392, %v1391
      %v1404 = vpack.c.b16 %v1394, %v1393
      %v1405 = vpack.c.b16 %v1396, %v1395
      %v1406 = vpack.c.b16 %v1398, %v1397
      %1415 = vmatpush.bf16.msra.mxu0 %v1406
      %1416 = vmatpush.bf16.msra.mxu0 %v1405
      %1417 = vmatpush.bf16.msra.mxu0 %v1404
      %1418 = vmatpush.bf16.msra.mxu0 %v1403
      %1419 = vmatpush.bf16.msra.mxu0 %v1402
      %1420 = vmatpush.bf16.msra.mxu0 %v1401
      %1421 = vmatpush.bf16.msra.mxu0 %v1400
      %1422 = vmatpush.bf16.msra.mxu0 %v1399
      %1423 = vmatmul.bf16.gmra.mxu0 %v1158
      %v1424 = vpop.f32.mrf.mxu0
      %v1425 = vadd.f32 0.0, %v1424
      %v1426 = vpop.f32.mrf.mxu0
      %v1427 = vadd.f32 0.0, %v1426
      %1428 = vmatmul.bf16.gmra.mxu0 %v1166
      %v1429 = vpop.f32.mrf.mxu0
      %v1430 = vadd.f32 0.0, %v1429
      %v1431 = vpop.f32.mrf.mxu0
      %v1432 = vadd.f32 0.0, %v1431
      %1433 = vmatmul.bf16.gmra.mxu0 %v1174
      %v1434 = vpop.f32.mrf.mxu0
      %v1435 = vadd.f32 0.0, %v1434
      %v1436 = vpop.f32.mrf.mxu0
      %v1437 = vadd.f32 0.0, %v1436
      %1438 = vmatmul.bf16.gmra.mxu0 %v1182
      %v1439 = vpop.f32.mrf.mxu0
      %v1440 = vadd.f32 0.0, %v1439
      %v1441 = vpop.f32.mrf.mxu0
      %v1442 = vadd.f32 0.0, %v1441
      %1443 = vmatmul.bf16.gmra.mxu0 %v1190
      %v1444 = vpop.f32.mrf.mxu0
      %v1445 = vadd.f32 0.0, %v1444
      %v1446 = vpop.f32.mrf.mxu0
      %v1447 = vadd.f32 0.0, %v1446
      %1448 = vmatmul.bf16.gmra.mxu0 %v1198
      %v1449 = vpop.f32.mrf.mxu0
      %v1450 = vadd.f32 0.0, %v1449
      %v1451 = vpop.f32.mrf.mxu0
      %v1452 = vadd.f32 0.0, %v1451
      %1453 = vmatmul.bf16.gmra.mxu0 %v1206
      %v1454 = vpop.f32.mrf.mxu0
      %v1455 = vadd.f32 0.0, %v1454
      %v1456 = vpop.f32.mrf.mxu0
      %v1457 = vadd.f32 0.0, %v1456
      %1458 = vmatmul.bf16.gmra.mxu0 %v1214
      %v1459 = vpop.f32.mrf.mxu0
      %v1460 = vadd.f32 0.0, %v1459
      %v1461 = vpop.f32.mrf.mxu0
      %v1462 = vadd.f32 0.0, %v1461
      %1463 = vmatmul.bf16.gmra.mxu0 %v1222
      %v1464 = vpop.f32.mrf.mxu0
      %v1465 = vadd.f32 0.0, %v1464
      %v1466 = vpop.f32.mrf.mxu0
      %v1467 = vadd.f32 0.0, %v1466
      %1468 = vmatmul.bf16.gmra.mxu0 %v1230
      %v1469 = vpop.f32.mrf.mxu0
      %v1470 = vadd.f32 0.0, %v1469
      %v1471 = vpop.f32.mrf.mxu0
      %v1472 = vadd.f32 0.0, %v1471
      %1473 = vmatmul.bf16.gmra.mxu0 %v1238
      %v1474 = vpop.f32.mrf.mxu0
      %v1475 = vadd.f32 0.0, %v1474
      %v1476 = vpop.f32.mrf.mxu0
      %v1477 = vadd.f32 0.0, %v1476
      %1478 = vmatmul.bf16.gmra.mxu0 %v1246
      %v1479 = vpop.f32.mrf.mxu0
      %v1480 = vadd.f32 0.0, %v1479
      %v1481 = vpop.f32.mrf.mxu0
      %v1482 = vadd.f32 0.0, %v1481
      %1483 = vmatmul.bf16.gmra.mxu0 %v1254
      %v1484 = vpop.f32.mrf.mxu0
      %v1485 = vadd.f32 0.0, %v1484
      %v1486 = vpop.f32.mrf.mxu0
      %v1487 = vadd.f32 0.0, %v1486
      %1488 = vmatmul.bf16.gmra.mxu0 %v1262
      %v1489 = vpop.f32.mrf.mxu0
      %v1490 = vadd.f32 0.0, %v1489
      %v1491 = vpop.f32.mrf.mxu0
      %v1492 = vadd.f32 0.0, %v1491
      %1493 = vmatmul.bf16.gmra.mxu0 %v1270
      %v1494 = vpop.f32.mrf.mxu0
      %v1495 = vadd.f32 0.0, %v1494
      %v1496 = vpop.f32.mrf.mxu0
      %v1497 = vadd.f32 0.0, %v1496
      %1498 = vmatmul.bf16.gmra.mxu0 %v1278
      %v1499 = vpop.f32.mrf.mxu0
      %v1500 = vadd.f32 0.0, %v1499
      %v1501 = vpop.f32.mrf.mxu0
      %v1502 = vadd.f32 0.0, %v1501
      %1503 = vmatmul.bf16.gmra.mxu0 %v1286
      %v1504 = vpop.f32.mrf.mxu0
      %v1505 = vadd.f32 0.0, %v1504
      %v1506 = vpop.f32.mrf.mxu0
      %v1507 = vadd.f32 0.0, %v1506
      %1508 = vmatmul.bf16.gmra.mxu0 %v1294
      %v1509 = vpop.f32.mrf.mxu0
      %v1510 = vadd.f32 0.0, %v1509
      %v1511 = vpop.f32.mrf.mxu0
      %v1512 = vadd.f32 0.0, %v1511
      %1513 = vmatmul.bf16.gmra.mxu0 %v1302
      %v1514 = vpop.f32.mrf.mxu0
      %v1515 = vadd.f32 0.0, %v1514
      %v1516 = vpop.f32.mrf.mxu0
      %v1517 = vadd.f32 0.0, %v1516
      %1518 = vmatmul.bf16.gmra.mxu0 %v1310
      %v1519 = vpop.f32.mrf.mxu0
      %v1520 = vadd.f32 0.0, %v1519
      %v1521 = vpop.f32.mrf.mxu0
      %v1522 = vadd.f32 0.0, %v1521
      %1523 = vmatmul.bf16.gmra.mxu0 %v1318
      %v1524 = vpop.f32.mrf.mxu0
      %v1525 = vadd.f32 0.0, %v1524
      %v1526 = vpop.f32.mrf.mxu0
      %v1527 = vadd.f32 0.0, %v1526
      %1528 = vmatmul.bf16.gmra.mxu0 %v1326
      %v1529 = vpop.f32.mrf.mxu0
      %v1530 = vadd.f32 0.0, %v1529
      %v1531 = vpop.f32.mrf.mxu0
      %v1532 = vadd.f32 0.0, %v1531
      %1533 = vmatmul.bf16.gmra.mxu0 %v1334
      %v1534 = vpop.f32.mrf.mxu0
      %v1535 = vadd.f32 0.0, %v1534
      %v1536 = vpop.f32.mrf.mxu0
      %v1537 = vadd.f32 0.0, %v1536
      %1538 = vmatmul.bf16.gmra.mxu0 %v1342
      %v1539 = vpop.f32.mrf.mxu0
      %v1540 = vadd.f32 0.0, %v1539
      %v1541 = vpop.f32.mrf.mxu0
      %v1542 = vadd.f32 0.0, %v1541
      %1543 = vdwg.mxu0
      %v1584 = vunpack.c.l.b16 %v989
      %v1585 = vunpack.c.l.b16 %v990
      %v1586 = vunpack.c.l.b16 %v991
      %v1587 = vunpack.c.l.b16 %v992
      %v1588 = vunpack.c.l.b16 %v993
      %v1589 = vunpack.c.l.b16 %v994
      %v1590 = vunpack.c.l.b16 %v995
      %v1591 = vunpack.c.l.b16 %v996
      %v1592 = vunpack.c.l.b16 %v997
      %v1593 = vunpack.c.l.b16 %v998
      %v1594 = vunpack.c.l.b16 %v999
      %v1595 = vunpack.c.l.b16 %v1000
      %v1596 = vunpack.c.l.b16 %v1001
      %v1597 = vunpack.c.l.b16 %v1002
      %v1598 = vunpack.c.l.b16 %v1003
      %v1599 = vunpack.c.l.b16 %v1004
      %v1600 = vpack.c.b16 %v1585, %v1584
      %v1601 = vpack.c.b16 %v1587, %v1586
      %v1602 = vpack.c.b16 %v1589, %v1588
      %v1603 = vpack.c.b16 %v1591, %v1590
      %v1604 = vpack.c.b16 %v1593, %v1592
      %v1605 = vpack.c.b16 %v1595, %v1594
      %v1606 = vpack.c.b16 %v1597, %v1596
      %v1607 = vpack.c.b16 %v1599, %v1598
      %1616 = vmatpush.bf16.msra.mxu0 %v1607
      %1617 = vmatpush.bf16.msra.mxu0 %v1606
      %1618 = vmatpush.bf16.msra.mxu0 %v1605
      %1619 = vmatpush.bf16.msra.mxu0 %v1604
      %1620 = vmatpush.bf16.msra.mxu0 %v1603
      %1621 = vmatpush.bf16.msra.mxu0 %v1602
      %1622 = vmatpush.bf16.msra.mxu0 %v1601
      %1623 = vmatpush.bf16.msra.mxu0 %v1600
      %1624 = vmatmul.bf16.gmra.mxu0 %v1121
      %v1625 = vpop.f32.mrf.mxu0
      %v1626 = vadd.f32 %v1425, %v1625
      %v1627 = vpop.f32.mrf.mxu0
      %v1628 = vadd.f32 %v1427, %v1627
      %1629 = vmatmul.bf16.gmra.mxu0 %v1122
      %v1630 = vpop.f32.mrf.mxu0
      %v1631 = vadd.f32 %v1430, %v1630
      %v1632 = vpop.f32.mrf.mxu0
      %v1633 = vadd.f32 %v1432, %v1632
      %1634 = vmatmul.bf16.gmra.mxu0 %v1123
      %v1635 = vpop.f32.mrf.mxu0
      %v1636 = vadd.f32 %v1435, %v1635
      %v1637 = vpop.f32.mrf.mxu0
      %v1638 = vadd.f32 %v1437, %v1637
      %1639 = vmatmul.bf16.gmra.mxu0 %v1124
      %v1640 = vpop.f32.mrf.mxu0
      %v1641 = vadd.f32 %v1440, %v1640
      %v1642 = vpop.f32.mrf.mxu0
      %v1643 = vadd.f32 %v1442, %v1642
      %1644 = vmatmul.bf16.gmra.mxu0 %v1125
      %v1645 = vpop.f32.mrf.mxu0
      %v1646 = vadd.f32 %v1445, %v1645
      %v1647 = vpop.f32.mrf.mxu0
      %v1648 = vadd.f32 %v1447, %v1647
      %1649 = vmatmul.bf16.gmra.mxu0 %v1126
      %v1650 = vpop.f32.mrf.mxu0
      %v1651 = vadd.f32 %v1450, %v1650
      %v1652 = vpop.f32.mrf.mxu0
      %v1653 = vadd.f32 %v1452, %v1652
      %1654 = vmatmul.bf16.gmra.mxu0 %v1127
      %v1655 = vpop.f32.mrf.mxu0
      %v1656 = vadd.f32 %v1455, %v1655
      %v1657 = vpop.f32.mrf.mxu0
      %v1658 = vadd.f32 %v1457, %v1657
      %1659 = vmatmul.bf16.gmra.mxu0 %v1128
      %v1660 = vpop.f32.mrf.mxu0
      %v1661 = vadd.f32 %v1460, %v1660
      %v1662 = vpop.f32.mrf.mxu0
      %v1663 = vadd.f32 %v1462, %v1662
      %1664 = vmatmul.bf16.gmra.mxu0 %v1129
      %v1665 = vpop.f32.mrf.mxu0
      %v1666 = vadd.f32 %v1465, %v1665
      %v1667 = vpop.f32.mrf.mxu0
      %v1668 = vadd.f32 %v1467, %v1667
      %1669 = vmatmul.bf16.gmra.mxu0 %v1130
      %v1670 = vpop.f32.mrf.mxu0
      %v1671 = vadd.f32 %v1470, %v1670
      %v1672 = vpop.f32.mrf.mxu0
      %v1673 = vadd.f32 %v1472, %v1672
      %1674 = vmatmul.bf16.gmra.mxu0 %v1131
      %v1675 = vpop.f32.mrf.mxu0
      %v1676 = vadd.f32 %v1475, %v1675
      %v1677 = vpop.f32.mrf.mxu0
      %v1678 = vadd.f32 %v1477, %v1677
      %1679 = vmatmul.bf16.gmra.mxu0 %v1132
      %v1680 = vpop.f32.mrf.mxu0
      %v1681 = vadd.f32 %v1480, %v1680
      %v1682 = vpop.f32.mrf.mxu0
      %v1683 = vadd.f32 %v1482, %v1682
      %1684 = vmatmul.bf16.gmra.mxu0 %v1133
      %v1685 = vpop.f32.mrf.mxu0
      %v1686 = vadd.f32 %v1485, %v1685
      %v1687 = vpop.f32.mrf.mxu0
      %v1688 = vadd.f32 %v1487, %v1687
      %1689 = vmatmul.bf16.gmra.mxu0 %v1134
      %v1690 = vpop.f32.mrf.mxu0
      %v1691 = vadd.f32 %v1490, %v1690
      %v1692 = vpop.f32.mrf.mxu0
      %v1693 = vadd.f32 %v1492, %v1692
      %1694 = vmatmul.bf16.gmra.mxu0 %v1135
      %v1695 = vpop.f32.mrf.mxu0
      %v1696 = vadd.f32 %v1495, %v1695
      %v1697 = vpop.f32.mrf.mxu0
      %v1698 = vadd.f32 %v1497, %v1697
      %1699 = vmatmul.bf16.gmra.mxu0 %v1136
      %v1700 = vpop.f32.mrf.mxu0
      %v1701 = vadd.f32 %v1500, %v1700
      %v1702 = vpop.f32.mrf.mxu0
      %v1703 = vadd.f32 %v1502, %v1702
      %1704 = vmatmul.bf16.gmra.mxu0 %v1137
      %v1705 = vpop.f32.mrf.mxu0
      %v1706 = vadd.f32 %v1505, %v1705
      %v1707 = vpop.f32.mrf.mxu0
      %v1708 = vadd.f32 %v1507, %v1707
      %1709 = vmatmul.bf16.gmra.mxu0 %v1138
      %v1710 = vpop.f32.mrf.mxu0
      %v1711 = vadd.f32 %v1510, %v1710
      %v1712 = vpop.f32.mrf.mxu0
      %v1713 = vadd.f32 %v1512, %v1712
      %1714 = vmatmul.bf16.gmra.mxu0 %v1139
      %v1715 = vpop.f32.mrf.mxu0
      %v1716 = vadd.f32 %v1515, %v1715
      %v1717 = vpop.f32.mrf.mxu0
      %v1718 = vadd.f32 %v1517, %v1717
      %1719 = vmatmul.bf16.gmra.mxu0 %v1140
      %v1720 = vpop.f32.mrf.mxu0
      %v1721 = vadd.f32 %v1520, %v1720
      %v1722 = vpop.f32.mrf.mxu0
      %v1723 = vadd.f32 %v1522, %v1722
      %1724 = vmatmul.bf16.gmra.mxu0 %v1141
      %v1725 = vpop.f32.mrf.mxu0
      %v1726 = vadd.f32 %v1525, %v1725
      %v1727 = vpop.f32.mrf.mxu0
      %v1728 = vadd.f32 %v1527, %v1727
      %1729 = vmatmul.bf16.gmra.mxu0 %v1142
      %v1730 = vpop.f32.mrf.mxu0
      %v1731 = vadd.f32 %v1530, %v1730
      %v1732 = vpop.f32.mrf.mxu0
      %v1733 = vadd.f32 %v1532, %v1732
      %1734 = vmatmul.bf16.gmra.mxu0 %v1143
      %v1735 = vpop.f32.mrf.mxu0
      %v1736 = vadd.f32 %v1535, %v1735
      %v1737 = vpop.f32.mrf.mxu0
      %v1738 = vadd.f32 %v1537, %v1737
      %1739 = vmatmul.bf16.gmra.mxu0 %v1144
      %v1740 = vpop.f32.mrf.mxu0
      %v1741 = vadd.f32 %v1540, %v1740
      %v1742 = vpop.f32.mrf.mxu0
      %v1743 = vadd.f32 %v1542, %v1742
      %1744 = vdwg.mxu0
      %v1745 = vld [vmem:[#allocation2] sm:$0xe]
      %s1746 = scalar_lea.vmem %s1, 128
      %v1747 = vld [vmem:[%s1746] sm:$0xf]
      %v1748 = vld [vmem:[%s1746 + $0x4] sm:$0xf]
      %v1749 = vld [vmem:[%s1746 + $0x8] sm:$0xf]
      %v1750 = vld [vmem:[%s1746 + $0xc] sm:$0xf]
      %v1751 = vld [vmem:[%s1746 + $0x10] sm:$0xf]
      %v1752 = vld [vmem:[%s1746 + $0x14] sm:$0xf]
      %v1753 = vld [vmem:[%s1746 + $0x18] sm:$0xf]
      %v1754 = vld [vmem:[%s1746 + $0x1c] sm:$0xf]
      %v1755 = vld [vmem:[%s1746 + $0x20] sm:$0xf]
      %v1756 = vld [vmem:[%s1746 + $0x24] sm:$0xf]
      %v1757 = vld [vmem:[%s1746 + $0x28] sm:$0xf]
      %v1758 = vld [vmem:[%s1746 + $0x2c] sm:$0xf]
      %v1759 = vld [vmem:[%s1746 + $0x30] sm:$0xf]
      %v1760 = vld [vmem:[%s1746 + $0x34] sm:$0xf]
      %v1761 = vld [vmem:[%s1746 + $0x38] sm:$0xf]
      %v1762 = vld [vmem:[%s1746 + $0x3c] sm:$0xf]
      %v1764 = vunpack.c.l.b16 %v1745
      %v1765 = vpack.c.b16 %v1073, %v1764
      %vm1766 = vcmask 1046528
      %v1767 = vrot.slane %v1765, 1
      %v1768 = vrot.slane %v1122, 1
      %v1769 = vsel %vm1766, %v1767, %v1768
      %v1770 = vrot.slane %v1123, 1
      %v1771 = vsel %vm1766, %v1768, %v1770
      %v1772 = vrot.slane %v1124, 1
      %v1773 = vsel %vm1766, %v1770, %v1772
      %v1774 = vrot.slane %v1125, 1
      %v1775 = vsel %vm1766, %v1772, %v1774
      %v1776 = vrot.slane %v1126, 1
      %v1777 = vsel %vm1766, %v1774, %v1776
      %v1778 = vrot.slane %v1127, 1
      %v1779 = vsel %vm1766, %v1776, %v1778
      %v1780 = vrot.slane %v1128, 1
      %v1781 = vsel %vm1766, %v1778, %v1780
      %v1782 = vrot.slane %v1129, 1
      %v1783 = vsel %vm1766, %v1780, %v1782
      %v1784 = vrot.slane %v1130, 1
      %v1785 = vsel %vm1766, %v1782, %v1784
      %v1786 = vrot.slane %v1131, 1
      %v1787 = vsel %vm1766, %v1784, %v1786
      %v1788 = vrot.slane %v1132, 1
      %v1789 = vsel %vm1766, %v1786, %v1788
      %v1790 = vrot.slane %v1133, 1
      %v1791 = vsel %vm1766, %v1788, %v1790
      %v1792 = vrot.slane %v1134, 1
      %v1793 = vsel %vm1766, %v1790, %v1792
      %v1794 = vrot.slane %v1135, 1
      %v1795 = vsel %vm1766, %v1792, %v1794
      %v1796 = vrot.slane %v1136, 1
      %v1797 = vsel %vm1766, %v1794, %v1796
      %v1798 = vrot.slane %v1137, 1
      %v1799 = vsel %vm1766, %v1796, %v1798
      %v1800 = vrot.slane %v1138, 1
      %v1801 = vsel %vm1766, %v1798, %v1800
      %v1802 = vrot.slane %v1139, 1
      %v1803 = vsel %vm1766, %v1800, %v1802
      %v1804 = vrot.slane %v1140, 1
      %v1805 = vsel %vm1766, %v1802, %v1804
      %v1806 = vrot.slane %v1141, 1
      %v1807 = vsel %vm1766, %v1804, %v1806
      %v1808 = vrot.slane %v1142, 1
      %v1809 = vsel %vm1766, %v1806, %v1808
      %v1810 = vrot.slane %v1143, 1
      %v1811 = vsel %vm1766, %v1808, %v1810
      %v1812 = vrot.slane %v1144, 1
      %v1813 = vsel %vm1766, %v1810, %v1812
      %v1814 = vrot.slane %v1145, 1
      %v1815 = vsel %vm1766, %v1812, %v1814
      %v1856 = vunpack.c.l.b16 %v1747
      %v1857 = vunpack.c.l.b16 %v1748
      %v1858 = vunpack.c.l.b16 %v1749
      %v1859 = vunpack.c.l.b16 %v1750
      %v1860 = vunpack.c.l.b16 %v1751
      %v1861 = vunpack.c.l.b16 %v1752
      %v1862 = vunpack.c.l.b16 %v1753
      %v1863 = vunpack.c.l.b16 %v1754
      %v1864 = vunpack.c.l.b16 %v1755
      %v1865 = vunpack.c.l.b16 %v1756
      %v1866 = vunpack.c.l.b16 %v1757
      %v1867 = vunpack.c.l.b16 %v1758
      %v1868 = vunpack.c.l.b16 %v1759
      %v1869 = vunpack.c.l.b16 %v1760
      %v1870 = vunpack.c.l.b16 %v1761
      %v1871 = vunpack.c.l.b16 %v1762
      %v1872 = vpack.c.b16 %v1857, %v1856
      %v1873 = vpack.c.b16 %v1859, %v1858
      %v1874 = vpack.c.b16 %v1861, %v1860
      %v1875 = vpack.c.b16 %v1863, %v1862
      %v1876 = vpack.c.b16 %v1865, %v1864
      %v1877 = vpack.c.b16 %v1867, %v1866
      %v1878 = vpack.c.b16 %v1869, %v1868
      %v1879 = vpack.c.b16 %v1871, %v1870
      %1888 = vmatpush.bf16.msra.mxu0 %v1879
      %1889 = vmatpush.bf16.msra.mxu0 %v1878
      %1890 = vmatpush.bf16.msra.mxu0 %v1877
      %1891 = vmatpush.bf16.msra.mxu0 %v1876
      %1892 = vmatpush.bf16.msra.mxu0 %v1875
      %1893 = vmatpush.bf16.msra.mxu0 %v1874
      %1894 = vmatpush.bf16.msra.mxu0 %v1873
      %1895 = vmatpush.bf16.msra.mxu0 %v1872
      %1896 = vmatmul.bf16.gmra.mxu0 %v1769
      %v1897 = vpop.f32.mrf.mxu0
      %v1898 = vadd.f32 0.0, %v1897
      %v1899 = vpop.f32.mrf.mxu0
      %v1900 = vadd.f32 0.0, %v1899
      %1901 = vmatmul.bf16.gmra.mxu0 %v1771
      %v1902 = vpop.f32.mrf.mxu0
      %v1903 = vadd.f32 0.0, %v1902
      %v1904 = vpop.f32.mrf.mxu0
      %v1905 = vadd.f32 0.0, %v1904
      %1906 = vmatmul.bf16.gmra.mxu0 %v1773
      %v1907 = vpop.f32.mrf.mxu0
      %v1908 = vadd.f32 0.0, %v1907
      %v1909 = vpop.f32.mrf.mxu0
      %v1910 = vadd.f32 0.0, %v1909
      %1911 = vmatmul.bf16.gmra.mxu0 %v1775
      %v1912 = vpop.f32.mrf.mxu0
      %v1913 = vadd.f32 0.0, %v1912
      %v1914 = vpop.f32.mrf.mxu0
      %v1915 = vadd.f32 0.0, %v1914
      %1916 = vmatmul.bf16.gmra.mxu0 %v1777
      %v1917 = vpop.f32.mrf.mxu0
      %v1918 = vadd.f32 0.0, %v1917
      %v1919 = vpop.f32.mrf.mxu0
      %v1920 = vadd.f32 0.0, %v1919
      %1921 = vmatmul.bf16.gmra.mxu0 %v1779
      %v1922 = vpop.f32.mrf.mxu0
      %v1923 = vadd.f32 0.0, %v1922
      %v1924 = vpop.f32.mrf.mxu0
      %v1925 = vadd.f32 0.0, %v1924
      %1926 = vmatmul.bf16.gmra.mxu0 %v1781
      %v1927 = vpop.f32.mrf.mxu0
      %v1928 = vadd.f32 0.0, %v1927
      %v1929 = vpop.f32.mrf.mxu0
      %v1930 = vadd.f32 0.0, %v1929
      %1931 = vmatmul.bf16.gmra.mxu0 %v1783
      %v1932 = vpop.f32.mrf.mxu0
      %v1933 = vadd.f32 0.0, %v1932
      %v1934 = vpop.f32.mrf.mxu0
      %v1935 = vadd.f32 0.0, %v1934
      %1936 = vmatmul.bf16.gmra.mxu0 %v1785
      %v1937 = vpop.f32.mrf.mxu0
      %v1938 = vadd.f32 0.0, %v1937
      %v1939 = vpop.f32.mrf.mxu0
      %v1940 = vadd.f32 0.0, %v1939
      %1941 = vmatmul.bf16.gmra.mxu0 %v1787
      %v1942 = vpop.f32.mrf.mxu0
      %v1943 = vadd.f32 0.0, %v1942
      %v1944 = vpop.f32.mrf.mxu0
      %v1945 = vadd.f32 0.0, %v1944
      %1946 = vmatmul.bf16.gmra.mxu0 %v1789
      %v1947 = vpop.f32.mrf.mxu0
      %v1948 = vadd.f32 0.0, %v1947
      %v1949 = vpop.f32.mrf.mxu0
      %v1950 = vadd.f32 0.0, %v1949
      %1951 = vmatmul.bf16.gmra.mxu0 %v1791
      %v1952 = vpop.f32.mrf.mxu0
      %v1953 = vadd.f32 0.0, %v1952
      %v1954 = vpop.f32.mrf.mxu0
      %v1955 = vadd.f32 0.0, %v1954
      %1956 = vmatmul.bf16.gmra.mxu0 %v1793
      %v1957 = vpop.f32.mrf.mxu0
      %v1958 = vadd.f32 0.0, %v1957
      %v1959 = vpop.f32.mrf.mxu0
      %v1960 = vadd.f32 0.0, %v1959
      %1961 = vmatmul.bf16.gmra.mxu0 %v1795
      %v1962 = vpop.f32.mrf.mxu0
      %v1963 = vadd.f32 0.0, %v1962
      %v1964 = vpop.f32.mrf.mxu0
      %v1965 = vadd.f32 0.0, %v1964
      %1966 = vmatmul.bf16.gmra.mxu0 %v1797
      %v1967 = vpop.f32.mrf.mxu0
      %v1968 = vadd.f32 0.0, %v1967
      %v1969 = vpop.f32.mrf.mxu0
      %v1970 = vadd.f32 0.0, %v1969
      %1971 = vmatmul.bf16.gmra.mxu0 %v1799
      %v1972 = vpop.f32.mrf.mxu0
      %v1973 = vadd.f32 0.0, %v1972
      %v1974 = vpop.f32.mrf.mxu0
      %v1975 = vadd.f32 0.0, %v1974
      %1976 = vmatmul.bf16.gmra.mxu0 %v1801
      %v1977 = vpop.f32.mrf.mxu0
      %v1978 = vadd.f32 0.0, %v1977
      %v1979 = vpop.f32.mrf.mxu0
      %v1980 = vadd.f32 0.0, %v1979
      %1981 = vmatmul.bf16.gmra.mxu0 %v1803
      %v1982 = vpop.f32.mrf.mxu0
      %v1983 = vadd.f32 0.0, %v1982
      %v1984 = vpop.f32.mrf.mxu0
      %v1985 = vadd.f32 0.0, %v1984
      %1986 = vmatmul.bf16.gmra.mxu0 %v1805
      %v1987 = vpop.f32.mrf.mxu0
      %v1988 = vadd.f32 0.0, %v1987
      %v1989 = vpop.f32.mrf.mxu0
      %v1990 = vadd.f32 0.0, %v1989
      %1991 = vmatmul.bf16.gmra.mxu0 %v1807
      %v1992 = vpop.f32.mrf.mxu0
      %v1993 = vadd.f32 0.0, %v1992
      %v1994 = vpop.f32.mrf.mxu0
      %v1995 = vadd.f32 0.0, %v1994
      %1996 = vmatmul.bf16.gmra.mxu0 %v1809
      %v1997 = vpop.f32.mrf.mxu0
      %v1998 = vadd.f32 0.0, %v1997
      %v1999 = vpop.f32.mrf.mxu0
      %v2000 = vadd.f32 0.0, %v1999
      %2001 = vmatmul.bf16.gmra.mxu0 %v1811
      %v2002 = vpop.f32.mrf.mxu0
      %v2003 = vadd.f32 0.0, %v2002
      %v2004 = vpop.f32.mrf.mxu0
      %v2005 = vadd.f32 0.0, %v2004
      %2006 = vmatmul.bf16.gmra.mxu0 %v1813
      %v2007 = vpop.f32.mrf.mxu0
      %v2008 = vadd.f32 0.0, %v2007
      %v2009 = vpop.f32.mrf.mxu0
      %v2010 = vadd.f32 0.0, %v2009
      %2011 = vmatmul.bf16.gmra.mxu0 %v1815
      %v2012 = vpop.f32.mrf.mxu0
      %v2013 = vadd.f32 0.0, %v2012
      %v2014 = vpop.f32.mrf.mxu0
      %v2015 = vadd.f32 0.0, %v2014
      %2016 = vdwg.mxu0
      %v2017 = vadd.f32 %v1626, %v1898
      %v2018 = vadd.f32 %v1628, %v1900
      %v2019 = vadd.f32 %v1631, %v1903
      %v2020 = vadd.f32 %v1633, %v1905
      %v2021 = vadd.f32 %v1636, %v1908
      %v2022 = vadd.f32 %v1638, %v1910
      %v2023 = vadd.f32 %v1641, %v1913
      %v2024 = vadd.f32 %v1643, %v1915
      %v2025 = vadd.f32 %v1646, %v1918
      %v2026 = vadd.f32 %v1648, %v1920
      %v2027 = vadd.f32 %v1651, %v1923
      %v2028 = vadd.f32 %v1653, %v1925
      %v2029 = vadd.f32 %v1656, %v1928
      %v2030 = vadd.f32 %v1658, %v1930
      %v2031 = vadd.f32 %v1661, %v1933
      %v2032 = vadd.f32 %v1663, %v1935
      %v2033 = vadd.f32 %v1666, %v1938
      %v2034 = vadd.f32 %v1668, %v1940
      %v2035 = vadd.f32 %v1671, %v1943
      %v2036 = vadd.f32 %v1673, %v1945
      %v2037 = vadd.f32 %v1676, %v1948
      %v2038 = vadd.f32 %v1678, %v1950
      %v2039 = vadd.f32 %v1681, %v1953
      %v2040 = vadd.f32 %v1683, %v1955
      %v2041 = vadd.f32 %v1686, %v1958
      %v2042 = vadd.f32 %v1688, %v1960
      %v2043 = vadd.f32 %v1691, %v1963
      %v2044 = vadd.f32 %v1693, %v1965
      %v2045 = vadd.f32 %v1696, %v1968
      %v2046 = vadd.f32 %v1698, %v1970
      %v2047 = vadd.f32 %v1701, %v1973
      %v2048 = vadd.f32 %v1703, %v1975
      %v2049 = vadd.f32 %v1706, %v1978
      %v2050 = vadd.f32 %v1708, %v1980
      %v2051 = vadd.f32 %v1711, %v1983
      %v2052 = vadd.f32 %v1713, %v1985
      %v2053 = vadd.f32 %v1716, %v1988
      %v2054 = vadd.f32 %v1718, %v1990
      %v2055 = vadd.f32 %v1721, %v1993
      %v2056 = vadd.f32 %v1723, %v1995
      %v2057 = vadd.f32 %v1726, %v1998
      %v2058 = vadd.f32 %v1728, %v2000
      %v2059 = vadd.f32 %v1731, %v2003
      %v2060 = vadd.f32 %v1733, %v2005
      %v2061 = vadd.f32 %v1736, %v2008
      %v2062 = vadd.f32 %v1738, %v2010
      %v2063 = vadd.f32 %v1741, %v2013
      %v2064 = vadd.f32 %v1743, %v2015
      %v2065 = vld [vmem:[#allocation2 + $0xc] sm:$0xf]
      %v2066 = vld [vmem:[#allocation2 + $0x10] sm:$0xf]
      %v2067 = vld [vmem:[#allocation2 + $0x14] sm:$0xf]
      %v2068 = vld [vmem:[#allocation2 + $0x18] sm:$0xf]
      %v2069 = vld [vmem:[#allocation2 + $0x1c] sm:$0xf]
      %v2070 = vld [vmem:[#allocation2 + $0x20] sm:$0xf]
      %v2071 = vld [vmem:[#allocation2 + $0x24] sm:$0xf]
      %v2072 = vld [vmem:[#allocation2 + $0x28] sm:$0xf]
      %v2073 = vld [vmem:[#allocation2 + $0x2c] sm:$0xf]
      %v2074 = vld [vmem:[#allocation2 + $0x30] sm:$0xf]
      %v2075 = vld [vmem:[#allocation2 + $0x34] sm:$0xf]
      %v2076 = vld [vmem:[#allocation2 + $0x38] sm:$0xf]
      %v2077 = vld [vmem:[#allocation2 + $0x3c] sm:$0xf]
      %v2078 = vld [vmem:[#allocation2 + $0x40] sm:$0xf]
      %v2079 = vld [vmem:[#allocation2 + $0x44] sm:$0xf]
      %v2080 = vld [vmem:[#allocation2 + $0x48] sm:$0xf]
      %v2081 = vld [vmem:[#allocation2 + $0x4c] sm:$0xf]
      %v2082 = vld [vmem:[#allocation2 + $0x50] sm:$0xf]
      %v2083 = vld [vmem:[#allocation2 + $0x54] sm:$0xf]
      %v2084 = vld [vmem:[#allocation2 + $0x58] sm:$0xf]
      %v2085 = vld [vmem:[#allocation2 + $0x5c] sm:$0xf]
      %v2086 = vld [vmem:[#allocation2 + $0x60] sm:$0xf]
      %v2087 = vld [vmem:[#allocation2 + $0x64] sm:$0xf]
      %v2088 = vld [vmem:[#allocation2 + $0x68] sm:$0xf]
      %v2089 = vld [vmem:[#allocation2 + $0x6c] sm:$0xf]
      %v2090 = vld [vmem:[#allocation2 + $0x70] sm:$0xf]
      %v2091 = vld [vmem:[#allocation2 + $0x74] sm:$0xf]
      %v2092 = vld [vmem:[#allocation2 + $0x78] sm:$0xf]
      %v2093 = vld [vmem:[#allocation2 + $0x7c] sm:$0xf]
      %v2094 = vld [vmem:[#allocation2 + $0x80] sm:$0xf]
      %v2095 = vld [vmem:[#allocation2 + $0x84] sm:$0xf]
      %v2096 = vld [vmem:[#allocation2 + $0x88] sm:$0xf]
      %v2097 = vld [vmem:[#allocation2 + $0x8c] sm:$0xf]
      %v2098 = vld [vmem:[#allocation2 + $0x90] sm:$0xf]
      %v2099 = vld [vmem:[#allocation2 + $0x94] sm:$0xf]
      %v2100 = vld [vmem:[#allocation2 + $0x98] sm:$0xf]
      %v2101 = vld [vmem:[#allocation2 + $0x9c] sm:$0xf]
      %v2102 = vld [vmem:[#allocation2 + $0xa0] sm:$0xf]
      %v2103 = vld [vmem:[#allocation2 + $0xa4] sm:$0xf]
      %v2104 = vld [vmem:[#allocation2 + $0xa8] sm:$0xf]
      %v2105 = vld [vmem:[#allocation2 + $0xac] sm:$0xf]
      %v2106 = vld [vmem:[#allocation2 + $0xb0] sm:$0xf]
      %v2107 = vld [vmem:[#allocation2 + $0xb4] sm:$0xf]
      %v2108 = vld [vmem:[#allocation2 + $0xb8] sm:$0xf]
      %v2109 = vld [vmem:[#allocation2 + $0xbc] sm:$0xf]
      %v2110 = vld [vmem:[#allocation2 + $0xc0] sm:$0xf]
      %v2111 = vld [vmem:[#allocation2 + $0xc4] sm:$0xf]
      %v2112 = vld [vmem:[#allocation2 + $0xc8] sm:$0xf]
      %s2113 = scalar_lea.vmem %s1, 192
      %v2114 = vld [vmem:[%s2113] sm:$0xf]
      %v2115 = vld [vmem:[%s2113 + $0x4] sm:$0xf]
      %v2116 = vld [vmem:[%s2113 + $0x8] sm:$0xf]
      %v2117 = vld [vmem:[%s2113 + $0xc] sm:$0xf]
      %v2118 = vld [vmem:[%s2113 + $0x10] sm:$0xf]
      %v2119 = vld [vmem:[%s2113 + $0x14] sm:$0xf]
      %v2120 = vld [vmem:[%s2113 + $0x18] sm:$0xf]
      %v2121 = vld [vmem:[%s2113 + $0x1c] sm:$0xf]
      %v2122 = vld [vmem:[%s2113 + $0x20] sm:$0xf]
      %v2123 = vld [vmem:[%s2113 + $0x24] sm:$0xf]
      %v2124 = vld [vmem:[%s2113 + $0x28] sm:$0xf]
      %v2125 = vld [vmem:[%s2113 + $0x2c] sm:$0xf]
      %v2126 = vld [vmem:[%s2113 + $0x30] sm:$0xf]
      %v2127 = vld [vmem:[%s2113 + $0x34] sm:$0xf]
      %v2128 = vld [vmem:[%s2113 + $0x38] sm:$0xf]
      %v2129 = vld [vmem:[%s2113 + $0x3c] sm:$0xf]
      %v2178 = vunpack.c.l.b16 %v2065
      %v2179 = vunpack.c.l.b16 %v2066
      %v2180 = vunpack.c.l.b16 %v2067
      %v2181 = vunpack.c.l.b16 %v2068
      %v2182 = vunpack.c.l.b16 %v2069
      %v2183 = vunpack.c.l.b16 %v2070
      %v2184 = vunpack.c.l.b16 %v2071
      %v2185 = vunpack.c.l.b16 %v2072
      %v2186 = vunpack.c.l.b16 %v2073
      %v2187 = vunpack.c.l.b16 %v2074
      %v2188 = vunpack.c.l.b16 %v2075
      %v2189 = vunpack.c.l.b16 %v2076
      %v2190 = vunpack.c.l.b16 %v2077
      %v2191 = vunpack.c.l.b16 %v2078
      %v2192 = vunpack.c.l.b16 %v2079
      %v2193 = vunpack.c.l.b16 %v2080
      %v2194 = vunpack.c.l.b16 %v2081
      %v2195 = vunpack.c.l.b16 %v2082
      %v2196 = vunpack.c.l.b16 %v2083
      %v2197 = vunpack.c.l.b16 %v2084
      %v2198 = vunpack.c.l.b16 %v2085
      %v2199 = vunpack.c.l.b16 %v2086
      %v2200 = vunpack.c.l.b16 %v2087
      %v2201 = vunpack.c.l.b16 %v2088
      %v2202 = vunpack.c.l.b16 %v2089
      %v2203 = vunpack.c.l.b16 %v2090
      %v2204 = vunpack.c.l.b16 %v2091
      %v2205 = vunpack.c.l.b16 %v2092
      %v2206 = vunpack.c.l.b16 %v2093
      %v2207 = vunpack.c.l.b16 %v2094
      %v2208 = vunpack.c.l.b16 %v2095
      %v2209 = vunpack.c.l.b16 %v2096
      %v2210 = vunpack.c.l.b16 %v2097
      %v2211 = vunpack.c.l.b16 %v2098
      %v2212 = vunpack.c.l.b16 %v2099
      %v2213 = vunpack.c.l.b16 %v2100
      %v2214 = vunpack.c.l.b16 %v2101
      %v2215 = vunpack.c.l.b16 %v2102
      %v2216 = vunpack.c.l.b16 %v2103
      %v2217 = vunpack.c.l.b16 %v2104
      %v2218 = vunpack.c.l.b16 %v2105
      %v2219 = vunpack.c.l.b16 %v2106
      %v2220 = vunpack.c.l.b16 %v2107
      %v2221 = vunpack.c.l.b16 %v2108
      %v2222 = vunpack.c.l.b16 %v2109
      %v2223 = vunpack.c.l.b16 %v2110
      %v2224 = vunpack.c.l.b16 %v2111
      %v2225 = vunpack.c.l.b16 %v2112
      %v2226 = vpack.c.b16 %v2179, %v2178
      %v2227 = vpack.c.b16 %v2181, %v2180
      %v2228 = vpack.c.b16 %v2183, %v2182
      %v2229 = vpack.c.b16 %v2185, %v2184
      %v2230 = vpack.c.b16 %v2187, %v2186
      %v2231 = vpack.c.b16 %v2189, %v2188
      %v2232 = vpack.c.b16 %v2191, %v2190
      %v2233 = vpack.c.b16 %v2193, %v2192
      %v2234 = vpack.c.b16 %v2195, %v2194
      %v2235 = vpack.c.b16 %v2197, %v2196
      %v2236 = vpack.c.b16 %v2199, %v2198
      %v2237 = vpack.c.b16 %v2201, %v2200
      %v2238 = vpack.c.b16 %v2203, %v2202
      %v2239 = vpack.c.b16 %v2205, %v2204
      %v2240 = vpack.c.b16 %v2207, %v2206
      %v2241 = vpack.c.b16 %v2209, %v2208
      %v2242 = vpack.c.b16 %v2211, %v2210
      %v2243 = vpack.c.b16 %v2213, %v2212
      %v2244 = vpack.c.b16 %v2215, %v2214
      %v2245 = vpack.c.b16 %v2217, %v2216
      %v2246 = vpack.c.b16 %v2219, %v2218
      %v2247 = vpack.c.b16 %v2221, %v2220
      %v2248 = vpack.c.b16 %v2223, %v2222
      %v2249 = vpack.c.b16 %v2225, %v2224
      %v2290 = vunpack.c.l.b16 %v2114
      %v2291 = vunpack.c.l.b16 %v2115
      %v2292 = vunpack.c.l.b16 %v2116
      %v2293 = vunpack.c.l.b16 %v2117
      %v2294 = vunpack.c.l.b16 %v2118
      %v2295 = vunpack.c.l.b16 %v2119
      %v2296 = vunpack.c.l.b16 %v2120
      %v2297 = vunpack.c.l.b16 %v2121
      %v2298 = vunpack.c.l.b16 %v2122
      %v2299 = vunpack.c.l.b16 %v2123
      %v2300 = vunpack.c.l.b16 %v2124
      %v2301 = vunpack.c.l.b16 %v2125
      %v2302 = vunpack.c.l.b16 %v2126
      %v2303 = vunpack.c.l.b16 %v2127
      %v2304 = vunpack.c.l.b16 %v2128
      %v2305 = vunpack.c.l.b16 %v2129
      %v2306 = vpack.c.b16 %v2291, %v2290
      %v2307 = vpack.c.b16 %v2293, %v2292
      %v2308 = vpack.c.b16 %v2295, %v2294
      %v2309 = vpack.c.b16 %v2297, %v2296
      %v2310 = vpack.c.b16 %v2299, %v2298
      %v2311 = vpack.c.b16 %v2301, %v2300
      %v2312 = vpack.c.b16 %v2303, %v2302
      %v2313 = vpack.c.b16 %v2305, %v2304
      %2322 = vmatpush.bf16.msra.mxu0 %v2313
      %2323 = vmatpush.bf16.msra.mxu0 %v2312
      %2324 = vmatpush.bf16.msra.mxu0 %v2311
      %2325 = vmatpush.bf16.msra.mxu0 %v2310
      %2326 = vmatpush.bf16.msra.mxu0 %v2309
      %2327 = vmatpush.bf16.msra.mxu0 %v2308
      %2328 = vmatpush.bf16.msra.mxu0 %v2307
      %2329 = vmatpush.bf16.msra.mxu0 %v2306
      %2330 = vmatmul.bf16.gmra.mxu0 %v2226
      %v2331 = vpop.f32.mrf.mxu0
      %v2332 = vadd.f32 0.0, %v2331
      %v2333 = vpop.f32.mrf.mxu0
      %v2334 = vadd.f32 0.0, %v2333
      %2335 = vmatmul.bf16.gmra.mxu0 %v2227
      %v2336 = vpop.f32.mrf.mxu0
      %v2337 = vadd.f32 0.0, %v2336
      %v2338 = vpop.f32.mrf.mxu0
      %v2339 = vadd.f32 0.0, %v2338
      %2340 = vmatmul.bf16.gmra.mxu0 %v2228
      %v2341 = vpop.f32.mrf.mxu0
      %v2342 = vadd.f32 0.0, %v2341
      %v2343 = vpop.f32.mrf.mxu0
      %v2344 = vadd.f32 0.0, %v2343
      %2345 = vmatmul.bf16.gmra.mxu0 %v2229
      %v2346 = vpop.f32.mrf.mxu0
      %v2347 = vadd.f32 0.0, %v2346
      %v2348 = vpop.f32.mrf.mxu0
      %v2349 = vadd.f32 0.0, %v2348
      %2350 = vmatmul.bf16.gmra.mxu0 %v2230
      %v2351 = vpop.f32.mrf.mxu0
      %v2352 = vadd.f32 0.0, %v2351
      %v2353 = vpop.f32.mrf.mxu0
      %v2354 = vadd.f32 0.0, %v2353
      %2355 = vmatmul.bf16.gmra.mxu0 %v2231
      %v2356 = vpop.f32.mrf.mxu0
      %v2357 = vadd.f32 0.0, %v2356
      %v2358 = vpop.f32.mrf.mxu0
      %v2359 = vadd.f32 0.0, %v2358
      %2360 = vmatmul.bf16.gmra.mxu0 %v2232
      %v2361 = vpop.f32.mrf.mxu0
      %v2362 = vadd.f32 0.0, %v2361
      %v2363 = vpop.f32.mrf.mxu0
      %v2364 = vadd.f32 0.0, %v2363
      %2365 = vmatmul.bf16.gmra.mxu0 %v2233
      %v2366 = vpop.f32.mrf.mxu0
      %v2367 = vadd.f32 0.0, %v2366
      %v2368 = vpop.f32.mrf.mxu0
      %v2369 = vadd.f32 0.0, %v2368
      %2370 = vmatmul.bf16.gmra.mxu0 %v2234
      %v2371 = vpop.f32.mrf.mxu0
      %v2372 = vadd.f32 0.0, %v2371
      %v2373 = vpop.f32.mrf.mxu0
      %v2374 = vadd.f32 0.0, %v2373
      %2375 = vmatmul.bf16.gmra.mxu0 %v2235
      %v2376 = vpop.f32.mrf.mxu0
      %v2377 = vadd.f32 0.0, %v2376
      %v2378 = vpop.f32.mrf.mxu0
      %v2379 = vadd.f32 0.0, %v2378
      %2380 = vmatmul.bf16.gmra.mxu0 %v2236
      %v2381 = vpop.f32.mrf.mxu0
      %v2382 = vadd.f32 0.0, %v2381
      %v2383 = vpop.f32.mrf.mxu0
      %v2384 = vadd.f32 0.0, %v2383
      %2385 = vmatmul.bf16.gmra.mxu0 %v2237
      %v2386 = vpop.f32.mrf.mxu0
      %v2387 = vadd.f32 0.0, %v2386
      %v2388 = vpop.f32.mrf.mxu0
      %v2389 = vadd.f32 0.0, %v2388
      %2390 = vmatmul.bf16.gmra.mxu0 %v2238
      %v2391 = vpop.f32.mrf.mxu0
      %v2392 = vadd.f32 0.0, %v2391
      %v2393 = vpop.f32.mrf.mxu0
      %v2394 = vadd.f32 0.0, %v2393
      %2395 = vmatmul.bf16.gmra.mxu0 %v2239
      %v2396 = vpop.f32.mrf.mxu0
      %v2397 = vadd.f32 0.0, %v2396
      %v2398 = vpop.f32.mrf.mxu0
      %v2399 = vadd.f32 0.0, %v2398
      %2400 = vmatmul.bf16.gmra.mxu0 %v2240
      %v2401 = vpop.f32.mrf.mxu0
      %v2402 = vadd.f32 0.0, %v2401
      %v2403 = vpop.f32.mrf.mxu0
      %v2404 = vadd.f32 0.0, %v2403
      %2405 = vmatmul.bf16.gmra.mxu0 %v2241
      %v2406 = vpop.f32.mrf.mxu0
      %v2407 = vadd.f32 0.0, %v2406
      %v2408 = vpop.f32.mrf.mxu0
      %v2409 = vadd.f32 0.0, %v2408
      %2410 = vmatmul.bf16.gmra.mxu0 %v2242
      %v2411 = vpop.f32.mrf.mxu0
      %v2412 = vadd.f32 0.0, %v2411
      %v2413 = vpop.f32.mrf.mxu0
      %v2414 = vadd.f32 0.0, %v2413
      %2415 = vmatmul.bf16.gmra.mxu0 %v2243
      %v2416 = vpop.f32.mrf.mxu0
      %v2417 = vadd.f32 0.0, %v2416
      %v2418 = vpop.f32.mrf.mxu0
      %v2419 = vadd.f32 0.0, %v2418
      %2420 = vmatmul.bf16.gmra.mxu0 %v2244
      %v2421 = vpop.f32.mrf.mxu0
      %v2422 = vadd.f32 0.0, %v2421
      %v2423 = vpop.f32.mrf.mxu0
      %v2424 = vadd.f32 0.0, %v2423
      %2425 = vmatmul.bf16.gmra.mxu0 %v2245
      %v2426 = vpop.f32.mrf.mxu0
      %v2427 = vadd.f32 0.0, %v2426
      %v2428 = vpop.f32.mrf.mxu0
      %v2429 = vadd.f32 0.0, %v2428
      %2430 = vmatmul.bf16.gmra.mxu0 %v2246
      %v2431 = vpop.f32.mrf.mxu0
      %v2432 = vadd.f32 0.0, %v2431
      %v2433 = vpop.f32.mrf.mxu0
      %v2434 = vadd.f32 0.0, %v2433
      %2435 = vmatmul.bf16.gmra.mxu0 %v2247
      %v2436 = vpop.f32.mrf.mxu0
      %v2437 = vadd.f32 0.0, %v2436
      %v2438 = vpop.f32.mrf.mxu0
      %v2439 = vadd.f32 0.0, %v2438
      %2440 = vmatmul.bf16.gmra.mxu0 %v2248
      %v2441 = vpop.f32.mrf.mxu0
      %v2442 = vadd.f32 0.0, %v2441
      %v2443 = vpop.f32.mrf.mxu0
      %v2444 = vadd.f32 0.0, %v2443
      %2445 = vmatmul.bf16.gmra.mxu0 %v2249
      %v2446 = vpop.f32.mrf.mxu0
      %v2447 = vadd.f32 0.0, %v2446
      %v2448 = vpop.f32.mrf.mxu0
      %v2449 = vadd.f32 0.0, %v2448
      %2450 = vdwg.mxu0
      %v2451 = vadd.f32 %v2017, %v2332
      %v2452 = vadd.f32 %v2018, %v2334
      %v2453 = vadd.f32 %v2019, %v2337
      %v2454 = vadd.f32 %v2020, %v2339
      %v2455 = vadd.f32 %v2021, %v2342
      %v2456 = vadd.f32 %v2022, %v2344
      %v2457 = vadd.f32 %v2023, %v2347
      %v2458 = vadd.f32 %v2024, %v2349
      %v2459 = vadd.f32 %v2025, %v2352
      %v2460 = vadd.f32 %v2026, %v2354
      %v2461 = vadd.f32 %v2027, %v2357
      %v2462 = vadd.f32 %v2028, %v2359
      %v2463 = vadd.f32 %v2029, %v2362
      %v2464 = vadd.f32 %v2030, %v2364
      %v2465 = vadd.f32 %v2031, %v2367
      %v2466 = vadd.f32 %v2032, %v2369
      %v2467 = vadd.f32 %v2033, %v2372
      %v2468 = vadd.f32 %v2034, %v2374
      %v2469 = vadd.f32 %v2035, %v2377
      %v2470 = vadd.f32 %v2036, %v2379
      %v2471 = vadd.f32 %v2037, %v2382
      %v2472 = vadd.f32 %v2038, %v2384
      %v2473 = vadd.f32 %v2039, %v2387
      %v2474 = vadd.f32 %v2040, %v2389
      %v2475 = vadd.f32 %v2041, %v2392
      %v2476 = vadd.f32 %v2042, %v2394
      %v2477 = vadd.f32 %v2043, %v2397
      %v2478 = vadd.f32 %v2044, %v2399
      %v2479 = vadd.f32 %v2045, %v2402
      %v2480 = vadd.f32 %v2046, %v2404
      %v2481 = vadd.f32 %v2047, %v2407
      %v2482 = vadd.f32 %v2048, %v2409
      %v2483 = vadd.f32 %v2049, %v2412
      %v2484 = vadd.f32 %v2050, %v2414
      %v2485 = vadd.f32 %v2051, %v2417
      %v2486 = vadd.f32 %v2052, %v2419
      %v2487 = vadd.f32 %v2053, %v2422
      %v2488 = vadd.f32 %v2054, %v2424
      %v2489 = vadd.f32 %v2055, %v2427
      %v2490 = vadd.f32 %v2056, %v2429
      %v2491 = vadd.f32 %v2057, %v2432
      %v2492 = vadd.f32 %v2058, %v2434
      %v2493 = vadd.f32 %v2059, %v2437
      %v2494 = vadd.f32 %v2060, %v2439
      %v2495 = vadd.f32 %v2061, %v2442
      %v2496 = vadd.f32 %v2062, %v2444
      %v2497 = vadd.f32 %v2063, %v2447
      %v2498 = vadd.f32 %v2064, %v2449
      %v2499 = vld [vmem:[#allocation2 + $0xc] sm:$0xf]
      %v2500 = vld [vmem:[#allocation2 + $0x10] sm:$0xf]
      %v2501 = vld [vmem:[#allocation2 + $0x14] sm:$0xf]
      %v2502 = vld [vmem:[#allocation2 + $0x18] sm:$0xf]
      %v2503 = vld [vmem:[#allocation2 + $0x1c] sm:$0xf]
      %v2504 = vld [vmem:[#allocation2 + $0x20] sm:$0xf]
      %v2505 = vld [vmem:[#allocation2 + $0x24] sm:$0xf]
      %v2506 = vld [vmem:[#allocation2 + $0x28] sm:$0xf]
      %v2507 = vld [vmem:[#allocation2 + $0x2c] sm:$0xf]
      %v2508 = vld [vmem:[#allocation2 + $0x30] sm:$0xf]
      %v2509 = vld [vmem:[#allocation2 + $0x34] sm:$0xf]
      %v2510 = vld [vmem:[#allocation2 + $0x38] sm:$0xf]
      %v2511 = vld [vmem:[#allocation2 + $0x3c] sm:$0xf]
      %v2512 = vld [vmem:[#allocation2 + $0x40] sm:$0xf]
      %v2513 = vld [vmem:[#allocation2 + $0x44] sm:$0xf]
      %v2514 = vld [vmem:[#allocation2 + $0x48] sm:$0xf]
      %v2515 = vld [vmem:[#allocation2 + $0x4c] sm:$0xf]
      %v2516 = vld [vmem:[#allocation2 + $0x50] sm:$0xf]
      %v2517 = vld [vmem:[#allocation2 + $0x54] sm:$0xf]
      %v2518 = vld [vmem:[#allocation2 + $0x58] sm:$0xf]
      %v2519 = vld [vmem:[#allocation2 + $0x5c] sm:$0xf]
      %v2520 = vld [vmem:[#allocation2 + $0x60] sm:$0xf]
      %v2521 = vld [vmem:[#allocation2 + $0x64] sm:$0xf]
      %v2522 = vld [vmem:[#allocation2 + $0x68] sm:$0xf]
      %v2523 = vld [vmem:[#allocation2 + $0x6c] sm:$0xf]
      %v2524 = vld [vmem:[#allocation2 + $0x70] sm:$0xf]
      %v2525 = vld [vmem:[#allocation2 + $0x74] sm:$0xf]
      %v2526 = vld [vmem:[#allocation2 + $0x78] sm:$0xf]
      %v2527 = vld [vmem:[#allocation2 + $0x7c] sm:$0xf]
      %v2528 = vld [vmem:[#allocation2 + $0x80] sm:$0xf]
      %v2529 = vld [vmem:[#allocation2 + $0x84] sm:$0xf]
      %v2530 = vld [vmem:[#allocation2 + $0x88] sm:$0xf]
      %v2531 = vld [vmem:[#allocation2 + $0x8c] sm:$0xf]
      %v2532 = vld [vmem:[#allocation2 + $0x90] sm:$0xf]
      %v2533 = vld [vmem:[#allocation2 + $0x94] sm:$0xf]
      %v2534 = vld [vmem:[#allocation2 + $0x98] sm:$0xf]
      %v2535 = vld [vmem:[#allocation2 + $0x9c] sm:$0xf]
      %v2536 = vld [vmem:[#allocation2 + $0xa0] sm:$0xf]
      %v2537 = vld [vmem:[#allocation2 + $0xa4] sm:$0xf]
      %v2538 = vld [vmem:[#allocation2 + $0xa8] sm:$0xf]
      %v2539 = vld [vmem:[#allocation2 + $0xac] sm:$0xf]
      %v2540 = vld [vmem:[#allocation2 + $0xb0] sm:$0xf]
      %v2541 = vld [vmem:[#allocation2 + $0xb4] sm:$0xf]
      %v2542 = vld [vmem:[#allocation2 + $0xb8] sm:$0xf]
      %v2543 = vld [vmem:[#allocation2 + $0xbc] sm:$0xf]
      %v2544 = vld [vmem:[#allocation2 + $0xc0] sm:$0xf]
      %v2545 = vld [vmem:[#allocation2 + $0xc4] sm:$0xf]
      %v2546 = vld [vmem:[#allocation2 + $0xc8] sm:$0xf]
      %v2547 = vld [vmem:[#allocation2 + $0xcc] sm:$0x1]
      %s2548 = scalar_lea.vmem %s1, 256
      %v2549 = vld [vmem:[%s2548] sm:$0xf]
      %v2550 = vld [vmem:[%s2548 + $0x4] sm:$0xf]
      %v2551 = vld [vmem:[%s2548 + $0x8] sm:$0xf]
      %v2552 = vld [vmem:[%s2548 + $0xc] sm:$0xf]
      %v2553 = vld [vmem:[%s2548 + $0x10] sm:$0xf]
      %v2554 = vld [vmem:[%s2548 + $0x14] sm:$0xf]
      %v2555 = vld [vmem:[%s2548 + $0x18] sm:$0xf]
      %v2556 = vld [vmem:[%s2548 + $0x1c] sm:$0xf]
      %v2557 = vld [vmem:[%s2548 + $0x20] sm:$0xf]
      %v2558 = vld [vmem:[%s2548 + $0x24] sm:$0xf]
      %v2559 = vld [vmem:[%s2548 + $0x28] sm:$0xf]
      %v2560 = vld [vmem:[%s2548 + $0x2c] sm:$0xf]
      %v2561 = vld [vmem:[%s2548 + $0x30] sm:$0xf]
      %v2562 = vld [vmem:[%s2548 + $0x34] sm:$0xf]
      %v2563 = vld [vmem:[%s2548 + $0x38] sm:$0xf]
      %v2564 = vld [vmem:[%s2548 + $0x3c] sm:$0xf]
      %v2614 = vunpack.c.l.b16 %v2499
      %v2615 = vunpack.c.l.b16 %v2500
      %v2616 = vunpack.c.l.b16 %v2501
      %v2617 = vunpack.c.l.b16 %v2502
      %v2618 = vunpack.c.l.b16 %v2503
      %v2619 = vunpack.c.l.b16 %v2504
      %v2620 = vunpack.c.l.b16 %v2505
      %v2621 = vunpack.c.l.b16 %v2506
      %v2622 = vunpack.c.l.b16 %v2507
      %v2623 = vunpack.c.l.b16 %v2508
      %v2624 = vunpack.c.l.b16 %v2509
      %v2625 = vunpack.c.l.b16 %v2510
      %v2626 = vunpack.c.l.b16 %v2511
      %v2627 = vunpack.c.l.b16 %v2512
      %v2628 = vunpack.c.l.b16 %v2513
      %v2629 = vunpack.c.l.b16 %v2514
      %v2630 = vunpack.c.l.b16 %v2515
      %v2631 = vunpack.c.l.b16 %v2516
      %v2632 = vunpack.c.l.b16 %v2517
      %v2633 = vunpack.c.l.b16 %v2518
      %v2634 = vunpack.c.l.b16 %v2519
      %v2635 = vunpack.c.l.b16 %v2520
      %v2636 = vunpack.c.l.b16 %v2521
      %v2637 = vunpack.c.l.b16 %v2522
      %v2638 = vunpack.c.l.b16 %v2523
      %v2639 = vunpack.c.l.b16 %v2524
      %v2640 = vunpack.c.l.b16 %v2525
      %v2641 = vunpack.c.l.b16 %v2526
      %v2642 = vunpack.c.l.b16 %v2527
      %v2643 = vunpack.c.l.b16 %v2528
      %v2644 = vunpack.c.l.b16 %v2529
      %v2645 = vunpack.c.l.b16 %v2530
      %v2646 = vunpack.c.l.b16 %v2531
      %v2647 = vunpack.c.l.b16 %v2532
      %v2648 = vunpack.c.l.b16 %v2533
      %v2649 = vunpack.c.l.b16 %v2534
      %v2650 = vunpack.c.l.b16 %v2535
      %v2651 = vunpack.c.l.b16 %v2536
      %v2652 = vunpack.c.l.b16 %v2537
      %v2653 = vunpack.c.l.b16 %v2538
      %v2654 = vunpack.c.l.b16 %v2539
      %v2655 = vunpack.c.l.b16 %v2540
      %v2656 = vunpack.c.l.b16 %v2541
      %v2657 = vunpack.c.l.b16 %v2542
      %v2658 = vunpack.c.l.b16 %v2543
      %v2659 = vunpack.c.l.b16 %v2544
      %v2660 = vunpack.c.l.b16 %v2545
      %v2661 = vunpack.c.l.b16 %v2546
      %v2662 = vunpack.c.l.b16 %v2547
      %v2663 = vpack.c.b16 %v2615, %v2614
      %v2664 = vpack.c.b16 %v2617, %v2616
      %v2665 = vpack.c.b16 %v2619, %v2618
      %v2666 = vpack.c.b16 %v2621, %v2620
      %v2667 = vpack.c.b16 %v2623, %v2622
      %v2668 = vpack.c.b16 %v2625, %v2624
      %v2669 = vpack.c.b16 %v2627, %v2626
      %v2670 = vpack.c.b16 %v2629, %v2628
      %v2671 = vpack.c.b16 %v2631, %v2630
      %v2672 = vpack.c.b16 %v2633, %v2632
      %v2673 = vpack.c.b16 %v2635, %v2634
      %v2674 = vpack.c.b16 %v2637, %v2636
      %v2675 = vpack.c.b16 %v2639, %v2638
      %v2676 = vpack.c.b16 %v2641, %v2640
      %v2677 = vpack.c.b16 %v2643, %v2642
      %v2678 = vpack.c.b16 %v2645, %v2644
      %v2679 = vpack.c.b16 %v2647, %v2646
      %v2680 = vpack.c.b16 %v2649, %v2648
      %v2681 = vpack.c.b16 %v2651, %v2650
      %v2682 = vpack.c.b16 %v2653, %v2652
      %v2683 = vpack.c.b16 %v2655, %v2654
      %v2684 = vpack.c.b16 %v2657, %v2656
      %v2685 = vpack.c.b16 %v2659, %v2658
      %v2686 = vpack.c.b16 %v2661, %v2660
      %v2687 = vpack.c.b16 %v2662, %v2662
      %v2689 = vshrl.u32 %v2663, 16
      %v2691 = vshll.u32 %v2663, 16
      %v2693 = vrot.slane %v2691, 1
      %v2694 = vor.u32 %v2689, %v2693
      %v2696 = vshll.u32 %v2664, 16
      %v2698 = vrot.slane %v2696, 1
      %v2699 = vsel %vm1146, %v2694, %v2698
      %v2700 = vshrl.u32 %v2664, 16
      %v2702 = vor.u32 %v2700, %v2698
      %v2704 = vshll.u32 %v2665, 16
      %v2706 = vrot.slane %v2704, 1
      %v2707 = vsel %vm1146, %v2702, %v2706
      %v2708 = vshrl.u32 %v2665, 16
      %v2710 = vor.u32 %v2708, %v2706
      %v2712 = vshll.u32 %v2666, 16
      %v2714 = vrot.slane %v2712, 1
      %v2715 = vsel %vm1146, %v2710, %v2714
      %v2716 = vshrl.u32 %v2666, 16
      %v2718 = vor.u32 %v2716, %v2714
      %v2720 = vshll.u32 %v2667, 16
      %v2722 = vrot.slane %v2720, 1
      %v2723 = vsel %vm1146, %v2718, %v2722
      %v2724 = vshrl.u32 %v2667, 16
      %v2726 = vor.u32 %v2724, %v2722
      %v2728 = vshll.u32 %v2668, 16
      %v2730 = vrot.slane %v2728, 1
      %v2731 = vsel %vm1146, %v2726, %v2730
      %v2732 = vshrl.u32 %v2668, 16
      %v2734 = vor.u32 %v2732, %v2730
      %v2736 = vshll.u32 %v2669, 16
      %v2738 = vrot.slane %v2736, 1
      %v2739 = vsel %vm1146, %v2734, %v2738
      %v2740 = vshrl.u32 %v2669, 16
      %v2742 = vor.u32 %v2740, %v2738
      %v2744 = vshll.u32 %v2670, 16
      %v2746 = vrot.slane %v2744, 1
      %v2747 = vsel %vm1146, %v2742, %v2746
      %v2748 = vshrl.u32 %v2670, 16
      %v2750 = vor.u32 %v2748, %v2746
      %v2752 = vshll.u32 %v2671, 16
      %v2754 = vrot.slane %v2752, 1
      %v2755 = vsel %vm1146, %v2750, %v2754
      %v2756 = vshrl.u32 %v2671, 16
      %v2758 = vor.u32 %v2756, %v2754
      %v2760 = vshll.u32 %v2672, 16
      %v2762 = vrot.slane %v2760, 1
      %v2763 = vsel %vm1146, %v2758, %v2762
      %v2764 = vshrl.u32 %v2672, 16
      %v2766 = vor.u32 %v2764, %v2762
      %v2768 = vshll.u32 %v2673, 16
      %v2770 = vrot.slane %v2768, 1
      %v2771 = vsel %vm1146, %v2766, %v2770
      %v2772 = vshrl.u32 %v2673, 16
      %v2774 = vor.u32 %v2772, %v2770
      %v2776 = vshll.u32 %v2674, 16
      %v2778 = vrot.slane %v2776, 1
      %v2779 = vsel %vm1146, %v2774, %v2778
      %v2780 = vshrl.u32 %v2674, 16
      %v2782 = vor.u32 %v2780, %v2778
      %v2784 = vshll.u32 %v2675, 16
      %v2786 = vrot.slane %v2784, 1
      %v2787 = vsel %vm1146, %v2782, %v2786
      %v2788 = vshrl.u32 %v2675, 16
      %v2790 = vor.u32 %v2788, %v2786
      %v2792 = vshll.u32 %v2676, 16
      %v2794 = vrot.slane %v2792, 1
      %v2795 = vsel %vm1146, %v2790, %v2794
      %v2796 = vshrl.u32 %v2676, 16
      %v2798 = vor.u32 %v2796, %v2794
      %v2800 = vshll.u32 %v2677, 16
      %v2802 = vrot.slane %v2800, 1
      %v2803 = vsel %vm1146, %v2798, %v2802
      %v2804 = vshrl.u32 %v2677, 16
      %v2806 = vor.u32 %v2804, %v2802
      %v2808 = vshll.u32 %v2678, 16
      %v2810 = vrot.slane %v2808, 1
      %v2811 = vsel %vm1146, %v2806, %v2810
      %v2812 = vshrl.u32 %v2678, 16
      %v2814 = vor.u32 %v2812, %v2810
      %v2816 = vshll.u32 %v2679, 16
      %v2818 = vrot.slane %v2816, 1
      %v2819 = vsel %vm1146, %v2814, %v2818
      %v2820 = vshrl.u32 %v2679, 16
      %v2822 = vor.u32 %v2820, %v2818
      %v2824 = vshll.u32 %v2680, 16
      %v2826 = vrot.slane %v2824, 1
      %v2827 = vsel %vm1146, %v2822, %v2826
      %v2828 = vshrl.u32 %v2680, 16
      %v2830 = vor.u32 %v2828, %v2826
      %v2832 = vshll.u32 %v2681, 16
      %v2834 = vrot.slane %v2832, 1
      %v2835 = vsel %vm1146, %v2830, %v2834
      %v2836 = vshrl.u32 %v2681, 16
      %v2838 = vor.u32 %v2836, %v2834
      %v2840 = vshll.u32 %v2682, 16
      %v2842 = vrot.slane %v2840, 1
      %v2843 = vsel %vm1146, %v2838, %v2842
      %v2844 = vshrl.u32 %v2682, 16
      %v2846 = vor.u32 %v2844, %v2842
      %v2848 = vshll.u32 %v2683, 16
      %v2850 = vrot.slane %v2848, 1
      %v2851 = vsel %vm1146, %v2846, %v2850
      %v2852 = vshrl.u32 %v2683, 16
      %v2854 = vor.u32 %v2852, %v2850
      %v2856 = vshll.u32 %v2684, 16
      %v2858 = vrot.slane %v2856, 1
      %v2859 = vsel %vm1146, %v2854, %v2858
      %v2860 = vshrl.u32 %v2684, 16
      %v2862 = vor.u32 %v2860, %v2858
      %v2864 = vshll.u32 %v2685, 16
      %v2866 = vrot.slane %v2864, 1
      %v2867 = vsel %vm1146, %v2862, %v2866
      %v2868 = vshrl.u32 %v2685, 16
      %v2870 = vor.u32 %v2868, %v2866
      %v2872 = vshll.u32 %v2686, 16
      %v2874 = vrot.slane %v2872, 1
      %v2875 = vsel %vm1146, %v2870, %v2874
      %v2876 = vshrl.u32 %v2686, 16
      %v2878 = vor.u32 %v2876, %v2874
      %v2880 = vshll.u32 %v2687, 16
      %v2882 = vrot.slane %v2880, 1
      %v2883 = vsel %vm1146, %v2878, %v2882
      %v2924 = vunpack.c.l.b16 %v2549
      %v2925 = vunpack.c.l.b16 %v2550
      %v2926 = vunpack.c.l.b16 %v2551
      %v2927 = vunpack.c.l.b16 %v2552
      %v2928 = vunpack.c.l.b16 %v2553
      %v2929 = vunpack.c.l.b16 %v2554
      %v2930 = vunpack.c.l.b16 %v2555
      %v2931 = vunpack.c.l.b16 %v2556
      %v2932 = vunpack.c.l.b16 %v2557
      %v2933 = vunpack.c.l.b16 %v2558
      %v2934 = vunpack.c.l.b16 %v2559
      %v2935 = vunpack.c.l.b16 %v2560
      %v2936 = vunpack.c.l.b16 %v2561
      %v2937 = vunpack.c.l.b16 %v2562
      %v2938 = vunpack.c.l.b16 %v2563
      %v2939 = vunpack.c.l.b16 %v2564
      %v2940 = vpack.c.b16 %v2925, %v2924
      %v2941 = vpack.c.b16 %v2927, %v2926
      %v2942 = vpack.c.b16 %v2929, %v2928
      %v2943 = vpack.c.b16 %v2931, %v2930
      %v2944 = vpack.c.b16 %v2933, %v2932
      %v2945 = vpack.c.b16 %v2935, %v2934
      %v2946 = vpack.c.b16 %v2937, %v2936
      %v2947 = vpack.c.b16 %v2939, %v2938
      %2956 = vmatpush.bf16.msra.mxu0 %v2947
      %2957 = vmatpush.bf16.msra.mxu0 %v2946
      %2958 = vmatpush.bf16.msra.mxu0 %v2945
      %2959 = vmatpush.bf16.msra.mxu0 %v2944
      %2960 = vmatpush.bf16.msra.mxu0 %v2943
      %2961 = vmatpush.bf16.msra.mxu0 %v2942
      %2962 = vmatpush.bf16.msra.mxu0 %v2941
      %2963 = vmatpush.bf16.msra.mxu0 %v2940
      %2964 = vmatmul.bf16.gmra.mxu0 %v2699
      %v2965 = vpop.f32.mrf.mxu0
      %v2966 = vadd.f32 0.0, %v2965
      %v2967 = vpop.f32.mrf.mxu0
      %v2968 = vadd.f32 0.0, %v2967
      %2969 = vmatmul.bf16.gmra.mxu0 %v2707
      %v2970 = vpop.f32.mrf.mxu0
      %v2971 = vadd.f32 0.0, %v2970
      %v2972 = vpop.f32.mrf.mxu0
      %v2973 = vadd.f32 0.0, %v2972
      %2974 = vmatmul.bf16.gmra.mxu0 %v2715
      %v2975 = vpop.f32.mrf.mxu0
      %v2976 = vadd.f32 0.0, %v2975
      %v2977 = vpop.f32.mrf.mxu0
      %v2978 = vadd.f32 0.0, %v2977
      %2979 = vmatmul.bf16.gmra.mxu0 %v2723
      %v2980 = vpop.f32.mrf.mxu0
      %v2981 = vadd.f32 0.0, %v2980
      %v2982 = vpop.f32.mrf.mxu0
      %v2983 = vadd.f32 0.0, %v2982
      %2984 = vmatmul.bf16.gmra.mxu0 %v2731
      %v2985 = vpop.f32.mrf.mxu0
      %v2986 = vadd.f32 0.0, %v2985
      %v2987 = vpop.f32.mrf.mxu0
      %v2988 = vadd.f32 0.0, %v2987
      %2989 = vmatmul.bf16.gmra.mxu0 %v2739
      %v2990 = vpop.f32.mrf.mxu0
      %v2991 = vadd.f32 0.0, %v2990
      %v2992 = vpop.f32.mrf.mxu0
      %v2993 = vadd.f32 0.0, %v2992
      %2994 = vmatmul.bf16.gmra.mxu0 %v2747
      %v2995 = vpop.f32.mrf.mxu0
      %v2996 = vadd.f32 0.0, %v2995
      %v2997 = vpop.f32.mrf.mxu0
      %v2998 = vadd.f32 0.0, %v2997
      %2999 = vmatmul.bf16.gmra.mxu0 %v2755
      %v3000 = vpop.f32.mrf.mxu0
      %v3001 = vadd.f32 0.0, %v3000
      %v3002 = vpop.f32.mrf.mxu0
      %v3003 = vadd.f32 0.0, %v3002
      %3004 = vmatmul.bf16.gmra.mxu0 %v2763
      %v3005 = vpop.f32.mrf.mxu0
      %v3006 = vadd.f32 0.0, %v3005
      %v3007 = vpop.f32.mrf.mxu0
      %v3008 = vadd.f32 0.0, %v3007
      %3009 = vmatmul.bf16.gmra.mxu0 %v2771
      %v3010 = vpop.f32.mrf.mxu0
      %v3011 = vadd.f32 0.0, %v3010
      %v3012 = vpop.f32.mrf.mxu0
      %v3013 = vadd.f32 0.0, %v3012
      %3014 = vmatmul.bf16.gmra.mxu0 %v2779
      %v3015 = vpop.f32.mrf.mxu0
      %v3016 = vadd.f32 0.0, %v3015
      %v3017 = vpop.f32.mrf.mxu0
      %v3018 = vadd.f32 0.0, %v3017
      %3019 = vmatmul.bf16.gmra.mxu0 %v2787
      %v3020 = vpop.f32.mrf.mxu0
      %v3021 = vadd.f32 0.0, %v3020
      %v3022 = vpop.f32.mrf.mxu0
      %v3023 = vadd.f32 0.0, %v3022
      %3024 = vmatmul.bf16.gmra.mxu0 %v2795
      %v3025 = vpop.f32.mrf.mxu0
      %v3026 = vadd.f32 0.0, %v3025
      %v3027 = vpop.f32.mrf.mxu0
      %v3028 = vadd.f32 0.0, %v3027
      %3029 = vmatmul.bf16.gmra.mxu0 %v2803
      %v3030 = vpop.f32.mrf.mxu0
      %v3031 = vadd.f32 0.0, %v3030
      %v3032 = vpop.f32.mrf.mxu0
      %v3033 = vadd.f32 0.0, %v3032
      %3034 = vmatmul.bf16.gmra.mxu0 %v2811
      %v3035 = vpop.f32.mrf.mxu0
      %v3036 = vadd.f32 0.0, %v3035
      %v3037 = vpop.f32.mrf.mxu0
      %v3038 = vadd.f32 0.0, %v3037
      %3039 = vmatmul.bf16.gmra.mxu0 %v2819
      %v3040 = vpop.f32.mrf.mxu0
      %v3041 = vadd.f32 0.0, %v3040
      %v3042 = vpop.f32.mrf.mxu0
      %v3043 = vadd.f32 0.0, %v3042
      %3044 = vmatmul.bf16.gmra.mxu0 %v2827
      %v3045 = vpop.f32.mrf.mxu0
      %v3046 = vadd.f32 0.0, %v3045
      %v3047 = vpop.f32.mrf.mxu0
      %v3048 = vadd.f32 0.0, %v3047
      %3049 = vmatmul.bf16.gmra.mxu0 %v2835
      %v3050 = vpop.f32.mrf.mxu0
      %v3051 = vadd.f32 0.0, %v3050
      %v3052 = vpop.f32.mrf.mxu0
      %v3053 = vadd.f32 0.0, %v3052
      %3054 = vmatmul.bf16.gmra.mxu0 %v2843
      %v3055 = vpop.f32.mrf.mxu0
      %v3056 = vadd.f32 0.0, %v3055
      %v3057 = vpop.f32.mrf.mxu0
      %v3058 = vadd.f32 0.0, %v3057
      %3059 = vmatmul.bf16.gmra.mxu0 %v2851
      %v3060 = vpop.f32.mrf.mxu0
      %v3061 = vadd.f32 0.0, %v3060
      %v3062 = vpop.f32.mrf.mxu0
      %v3063 = vadd.f32 0.0, %v3062
      %3064 = vmatmul.bf16.gmra.mxu0 %v2859
      %v3065 = vpop.f32.mrf.mxu0
      %v3066 = vadd.f32 0.0, %v3065
      %v3067 = vpop.f32.mrf.mxu0
      %v3068 = vadd.f32 0.0, %v3067
      %3069 = vmatmul.bf16.gmra.mxu0 %v2867
      %v3070 = vpop.f32.mrf.mxu0
      %v3071 = vadd.f32 0.0, %v3070
      %v3072 = vpop.f32.mrf.mxu0
      %v3073 = vadd.f32 0.0, %v3072
      %3074 = vmatmul.bf16.gmra.mxu0 %v2875
      %v3075 = vpop.f32.mrf.mxu0
      %v3076 = vadd.f32 0.0, %v3075
      %v3077 = vpop.f32.mrf.mxu0
      %v3078 = vadd.f32 0.0, %v3077
      %3079 = vmatmul.bf16.gmra.mxu0 %v2883
      %v3080 = vpop.f32.mrf.mxu0
      %v3081 = vadd.f32 0.0, %v3080
      %v3082 = vpop.f32.mrf.mxu0
      %v3083 = vadd.f32 0.0, %v3082
      %3084 = vdwg.mxu0
      %v3085 = vadd.f32 %v2451, %v2966
      %v3086 = vadd.f32 %v2452, %v2968
      %v3087 = vadd.f32 %v2453, %v2971
      %v3088 = vadd.f32 %v2454, %v2973
      %v3089 = vadd.f32 %v2455, %v2976
      %v3090 = vadd.f32 %v2456, %v2978
      %v3091 = vadd.f32 %v2457, %v2981
      %v3092 = vadd.f32 %v2458, %v2983
      %v3093 = vadd.f32 %v2459, %v2986
      %v3094 = vadd.f32 %v2460, %v2988
      %v3095 = vadd.f32 %v2461, %v2991
      %v3096 = vadd.f32 %v2462, %v2993
      %v3097 = vadd.f32 %v2463, %v2996
      %v3098 = vadd.f32 %v2464, %v2998
      %v3099 = vadd.f32 %v2465, %v3001
      %v3100 = vadd.f32 %v2466, %v3003
      %v3101 = vadd.f32 %v2467, %v3006
      %v3102 = vadd.f32 %v2468, %v3008
      %v3103 = vadd.f32 %v2469, %v3011
      %v3104 = vadd.f32 %v2470, %v3013
      %v3105 = vadd.f32 %v2471, %v3016
      %v3106 = vadd.f32 %v2472, %v3018
      %v3107 = vadd.f32 %v2473, %v3021
      %v3108 = vadd.f32 %v2474, %v3023
      %v3109 = vadd.f32 %v2475, %v3026
      %v3110 = vadd.f32 %v2476, %v3028
      %v3111 = vadd.f32 %v2477, %v3031
      %v3112 = vadd.f32 %v2478, %v3033
      %v3113 = vadd.f32 %v2479, %v3036
      %v3114 = vadd.f32 %v2480, %v3038
      %v3115 = vadd.f32 %v2481, %v3041
      %v3116 = vadd.f32 %v2482, %v3043
      %v3117 = vadd.f32 %v2483, %v3046
      %v3118 = vadd.f32 %v2484, %v3048
      %v3119 = vadd.f32 %v2485, %v3051
      %v3120 = vadd.f32 %v2486, %v3053
      %v3121 = vadd.f32 %v2487, %v3056
      %v3122 = vadd.f32 %v2488, %v3058
      %v3123 = vadd.f32 %v2489, %v3061
      %v3124 = vadd.f32 %v2490, %v3063
      %v3125 = vadd.f32 %v2491, %v3066
      %v3126 = vadd.f32 %v2492, %v3068
      %v3127 = vadd.f32 %v2493, %v3071
      %v3128 = vadd.f32 %v2494, %v3073
      %v3129 = vadd.f32 %v2495, %v3076
      %v3130 = vadd.f32 %v2496, %v3078
      %v3131 = vadd.f32 %v2497, %v3081
      %v3132 = vadd.f32 %v2498, %v3083
      %v3133 = vld [vmem:[#allocation2 + $0xc] sm:$0xe]
      %s3134 = scalar_lea.vmem %s1, 320
      %v3135 = vld [vmem:[%s3134] sm:$0xf]
      %v3136 = vld [vmem:[%s3134 + $0x4] sm:$0xf]
      %v3137 = vld [vmem:[%s3134 + $0x8] sm:$0xf]
      %v3138 = vld [vmem:[%s3134 + $0xc] sm:$0xf]
      %v3139 = vld [vmem:[%s3134 + $0x10] sm:$0xf]
      %v3140 = vld [vmem:[%s3134 + $0x14] sm:$0xf]
      %v3141 = vld [vmem:[%s3134 + $0x18] sm:$0xf]
      %v3142 = vld [vmem:[%s3134 + $0x1c] sm:$0xf]
      %v3143 = vld [vmem:[%s3134 + $0x20] sm:$0xf]
      %v3144 = vld [vmem:[%s3134 + $0x24] sm:$0xf]
      %v3145 = vld [vmem:[%s3134 + $0x28] sm:$0xf]
      %v3146 = vld [vmem:[%s3134 + $0x2c] sm:$0xf]
      %v3147 = vld [vmem:[%s3134 + $0x30] sm:$0xf]
      %v3148 = vld [vmem:[%s3134 + $0x34] sm:$0xf]
      %v3149 = vld [vmem:[%s3134 + $0x38] sm:$0xf]
      %v3150 = vld [vmem:[%s3134 + $0x3c] sm:$0xf]
      %v3152 = vunpack.c.l.b16 %v3133
      %v3153 = vpack.c.b16 %v2615, %v3152
      %v3154 = vrot.slane %v3153, 1
      %v3155 = vrot.slane %v2664, 1
      %v3156 = vsel %vm1766, %v3154, %v3155
      %v3157 = vrot.slane %v2665, 1
      %v3158 = vsel %vm1766, %v3155, %v3157
      %v3159 = vrot.slane %v2666, 1
      %v3160 = vsel %vm1766, %v3157, %v3159
      %v3161 = vrot.slane %v2667, 1
      %v3162 = vsel %vm1766, %v3159, %v3161
      %v3163 = vrot.slane %v2668, 1
      %v3164 = vsel %vm1766, %v3161, %v3163
      %v3165 = vrot.slane %v2669, 1
      %v3166 = vsel %vm1766, %v3163, %v3165
      %v3167 = vrot.slane %v2670, 1
      %v3168 = vsel %vm1766, %v3165, %v3167
      %v3169 = vrot.slane %v2671, 1
      %v3170 = vsel %vm1766, %v3167, %v3169
      %v3171 = vrot.slane %v2672, 1
      %v3172 = vsel %vm1766, %v3169, %v3171
      %v3173 = vrot.slane %v2673, 1
      %v3174 = vsel %vm1766, %v3171, %v3173
      %v3175 = vrot.slane %v2674, 1
      %v3176 = vsel %vm1766, %v3173, %v3175
      %v3177 = vrot.slane %v2675, 1
      %v3178 = vsel %vm1766, %v3175, %v3177
      %v3179 = vrot.slane %v2676, 1
      %v3180 = vsel %vm1766, %v3177, %v3179
      %v3181 = vrot.slane %v2677, 1
      %v3182 = vsel %vm1766, %v3179, %v3181
      %v3183 = vrot.slane %v2678, 1
      %v3184 = vsel %vm1766, %v3181, %v3183
      %v3185 = vrot.slane %v2679, 1
      %v3186 = vsel %vm1766, %v3183, %v3185
      %v3187 = vrot.slane %v2680, 1
      %v3188 = vsel %vm1766, %v3185, %v3187
      %v3189 = vrot.slane %v2681, 1
      %v3190 = vsel %vm1766, %v3187, %v3189
      %v3191 = vrot.slane %v2682, 1
      %v3192 = vsel %vm1766, %v3189, %v3191
      %v3193 = vrot.slane %v2683, 1
      %v3194 = vsel %vm1766, %v3191, %v3193
      %v3195 = vrot.slane %v2684, 1
      %v3196 = vsel %vm1766, %v3193, %v3195
      %v3197 = vrot.slane %v2685, 1
      %v3198 = vsel %vm1766, %v3195, %v3197
      %v3199 = vrot.slane %v2686, 1
      %v3200 = vsel %vm1766, %v3197, %v3199
      %v3201 = vrot.slane %v2687, 1
      %v3202 = vsel %vm1766, %v3199, %v3201
      %v3243 = vunpack.c.l.b16 %v3135
      %v3244 = vunpack.c.l.b16 %v3136
      %v3245 = vunpack.c.l.b16 %v3137
      %v3246 = vunpack.c.l.b16 %v3138
      %v3247 = vunpack.c.l.b16 %v3139
      %v3248 = vunpack.c.l.b16 %v3140
      %v3249 = vunpack.c.l.b16 %v3141
      %v3250 = vunpack.c.l.b16 %v3142
      %v3251 = vunpack.c.l.b16 %v3143
      %v3252 = vunpack.c.l.b16 %v3144
      %v3253 = vunpack.c.l.b16 %v3145
      %v3254 = vunpack.c.l.b16 %v3146
      %v3255 = vunpack.c.l.b16 %v3147
      %v3256 = vunpack.c.l.b16 %v3148
      %v3257 = vunpack.c.l.b16 %v3149
      %v3258 = vunpack.c.l.b16 %v3150
      %v3259 = vpack.c.b16 %v3244, %v3243
      %v3260 = vpack.c.b16 %v3246, %v3245
      %v3261 = vpack.c.b16 %v3248, %v3247
      %v3262 = vpack.c.b16 %v3250, %v3249
      %v3263 = vpack.c.b16 %v3252, %v3251
      %v3264 = vpack.c.b16 %v3254, %v3253
      %v3265 = vpack.c.b16 %v3256, %v3255
      %v3266 = vpack.c.b16 %v3258, %v3257
      %3275 = vmatpush.bf16.msra.mxu0 %v3266
      %3276 = vmatpush.bf16.msra.mxu0 %v3265
      %3277 = vmatpush.bf16.msra.mxu0 %v3264
      %3278 = vmatpush.bf16.msra.mxu0 %v3263
      %3279 = vmatpush.bf16.msra.mxu0 %v3262
      %3280 = vmatpush.bf16.msra.mxu0 %v3261
      %3281 = vmatpush.bf16.msra.mxu0 %v3260
      %3282 = vmatpush.bf16.msra.mxu0 %v3259
      %3283 = vmatmul.bf16.gmra.mxu0 %v3156
      %v3284 = vpop.f32.mrf.mxu0
      %v3285 = vadd.f32 0.0, %v3284
      %v3286 = vpop.f32.mrf.mxu0
      %v3287 = vadd.f32 0.0, %v3286
      %3288 = vmatmul.bf16.gmra.mxu0 %v3158
      %v3289 = vpop.f32.mrf.mxu0
      %v3290 = vadd.f32 0.0, %v3289
      %v3291 = vpop.f32.mrf.mxu0
      %v3292 = vadd.f32 0.0, %v3291
      %3293 = vmatmul.bf16.gmra.mxu0 %v3160
      %v3294 = vpop.f32.mrf.mxu0
      %v3295 = vadd.f32 0.0, %v3294
      %v3296 = vpop.f32.mrf.mxu0
      %v3297 = vadd.f32 0.0, %v3296
      %3298 = vmatmul.bf16.gmra.mxu0 %v3162
      %v3299 = vpop.f32.mrf.mxu0
      %v3300 = vadd.f32 0.0, %v3299
      %v3301 = vpop.f32.mrf.mxu0
      %v3302 = vadd.f32 0.0, %v3301
      %3303 = vmatmul.bf16.gmra.mxu0 %v3164
      %v3304 = vpop.f32.mrf.mxu0
      %v3305 = vadd.f32 0.0, %v3304
      %v3306 = vpop.f32.mrf.mxu0
      %v3307 = vadd.f32 0.0, %v3306
      %3308 = vmatmul.bf16.gmra.mxu0 %v3166
      %v3309 = vpop.f32.mrf.mxu0
      %v3310 = vadd.f32 0.0, %v3309
      %v3311 = vpop.f32.mrf.mxu0
      %v3312 = vadd.f32 0.0, %v3311
      %3313 = vmatmul.bf16.gmra.mxu0 %v3168
      %v3314 = vpop.f32.mrf.mxu0
      %v3315 = vadd.f32 0.0, %v3314
      %v3316 = vpop.f32.mrf.mxu0
      %v3317 = vadd.f32 0.0, %v3316
      %3318 = vmatmul.bf16.gmra.mxu0 %v3170
      %v3319 = vpop.f32.mrf.mxu0
      %v3320 = vadd.f32 0.0, %v3319
      %v3321 = vpop.f32.mrf.mxu0
      %v3322 = vadd.f32 0.0, %v3321
      %3323 = vmatmul.bf16.gmra.mxu0 %v3172
      %v3324 = vpop.f32.mrf.mxu0
      %v3325 = vadd.f32 0.0, %v3324
      %v3326 = vpop.f32.mrf.mxu0
      %v3327 = vadd.f32 0.0, %v3326
      %3328 = vmatmul.bf16.gmra.mxu0 %v3174
      %v3329 = vpop.f32.mrf.mxu0
      %v3330 = vadd.f32 0.0, %v3329
      %v3331 = vpop.f32.mrf.mxu0
      %v3332 = vadd.f32 0.0, %v3331
      %3333 = vmatmul.bf16.gmra.mxu0 %v3176
      %v3334 = vpop.f32.mrf.mxu0
      %v3335 = vadd.f32 0.0, %v3334
      %v3336 = vpop.f32.mrf.mxu0
      %v3337 = vadd.f32 0.0, %v3336
      %3338 = vmatmul.bf16.gmra.mxu0 %v3178
      %v3339 = vpop.f32.mrf.mxu0
      %v3340 = vadd.f32 0.0, %v3339
      %v3341 = vpop.f32.mrf.mxu0
      %v3342 = vadd.f32 0.0, %v3341
      %3343 = vmatmul.bf16.gmra.mxu0 %v3180
      %v3344 = vpop.f32.mrf.mxu0
      %v3345 = vadd.f32 0.0, %v3344
      %v3346 = vpop.f32.mrf.mxu0
      %v3347 = vadd.f32 0.0, %v3346
      %3348 = vmatmul.bf16.gmra.mxu0 %v3182
      %v3349 = vpop.f32.mrf.mxu0
      %v3350 = vadd.f32 0.0, %v3349
      %v3351 = vpop.f32.mrf.mxu0
      %v3352 = vadd.f32 0.0, %v3351
      %3353 = vmatmul.bf16.gmra.mxu0 %v3184
      %v3354 = vpop.f32.mrf.mxu0
      %v3355 = vadd.f32 0.0, %v3354
      %v3356 = vpop.f32.mrf.mxu0
      %v3357 = vadd.f32 0.0, %v3356
      %3358 = vmatmul.bf16.gmra.mxu0 %v3186
      %v3359 = vpop.f32.mrf.mxu0
      %v3360 = vadd.f32 0.0, %v3359
      %v3361 = vpop.f32.mrf.mxu0
      %v3362 = vadd.f32 0.0, %v3361
      %3363 = vmatmul.bf16.gmra.mxu0 %v3188
      %v3364 = vpop.f32.mrf.mxu0
      %v3365 = vadd.f32 0.0, %v3364
      %v3366 = vpop.f32.mrf.mxu0
      %v3367 = vadd.f32 0.0, %v3366
      %3368 = vmatmul.bf16.gmra.mxu0 %v3190
      %v3369 = vpop.f32.mrf.mxu0
      %v3370 = vadd.f32 0.0, %v3369
      %v3371 = vpop.f32.mrf.mxu0
      %v3372 = vadd.f32 0.0, %v3371
      %3373 = vmatmul.bf16.gmra.mxu0 %v3192
      %v3374 = vpop.f32.mrf.mxu0
      %v3375 = vadd.f32 0.0, %v3374
      %v3376 = vpop.f32.mrf.mxu0
      %v3377 = vadd.f32 0.0, %v3376
      %3378 = vmatmul.bf16.gmra.mxu0 %v3194
      %v3379 = vpop.f32.mrf.mxu0
      %v3380 = vadd.f32 0.0, %v3379
      %v3381 = vpop.f32.mrf.mxu0
      %v3382 = vadd.f32 0.0, %v3381
      %3383 = vmatmul.bf16.gmra.mxu0 %v3196
      %v3384 = vpop.f32.mrf.mxu0
      %v3385 = vadd.f32 0.0, %v3384
      %v3386 = vpop.f32.mrf.mxu0
      %v3387 = vadd.f32 0.0, %v3386
      %3388 = vmatmul.bf16.gmra.mxu0 %v3198
      %v3389 = vpop.f32.mrf.mxu0
      %v3390 = vadd.f32 0.0, %v3389
      %v3391 = vpop.f32.mrf.mxu0
      %v3392 = vadd.f32 0.0, %v3391
      %3393 = vmatmul.bf16.gmra.mxu0 %v3200
      %v3394 = vpop.f32.mrf.mxu0
      %v3395 = vadd.f32 0.0, %v3394
      %v3396 = vpop.f32.mrf.mxu0
      %v3397 = vadd.f32 0.0, %v3396
      %3398 = vmatmul.bf16.gmra.mxu0 %v3202
      %v3399 = vpop.f32.mrf.mxu0
      %v3400 = vadd.f32 0.0, %v3399
      %v3401 = vpop.f32.mrf.mxu0
      %v3402 = vadd.f32 0.0, %v3401
      %3403 = vdwg.mxu0
      %v3404 = vadd.f32 %v3085, %v3285
      %v3405 = vadd.f32 %v3086, %v3287
      %v3406 = vadd.f32 %v3087, %v3290
      %v3407 = vadd.f32 %v3088, %v3292
      %v3408 = vadd.f32 %v3089, %v3295
      %v3409 = vadd.f32 %v3090, %v3297
      %v3410 = vadd.f32 %v3091, %v3300
      %v3411 = vadd.f32 %v3092, %v3302
      %v3412 = vadd.f32 %v3093, %v3305
      %v3413 = vadd.f32 %v3094, %v3307
      %v3414 = vadd.f32 %v3095, %v3310
      %v3415 = vadd.f32 %v3096, %v3312
      %v3416 = vadd.f32 %v3097, %v3315
      %v3417 = vadd.f32 %v3098, %v3317
      %v3418 = vadd.f32 %v3099, %v3320
      %v3419 = vadd.f32 %v3100, %v3322
      %v3420 = vadd.f32 %v3101, %v3325
      %v3421 = vadd.f32 %v3102, %v3327
      %v3422 = vadd.f32 %v3103, %v3330
      %v3423 = vadd.f32 %v3104, %v3332
      %v3424 = vadd.f32 %v3105, %v3335
      %v3425 = vadd.f32 %v3106, %v3337
      %v3426 = vadd.f32 %v3107, %v3340
      %v3427 = vadd.f32 %v3108, %v3342
      %v3428 = vadd.f32 %v3109, %v3345
      %v3429 = vadd.f32 %v3110, %v3347
      %v3430 = vadd.f32 %v3111, %v3350
      %v3431 = vadd.f32 %v3112, %v3352
      %v3432 = vadd.f32 %v3113, %v3355
      %v3433 = vadd.f32 %v3114, %v3357
      %v3434 = vadd.f32 %v3115, %v3360
      %v3435 = vadd.f32 %v3116, %v3362
      %v3436 = vadd.f32 %v3117, %v3365
      %v3437 = vadd.f32 %v3118, %v3367
      %v3438 = vadd.f32 %v3119, %v3370
      %v3439 = vadd.f32 %v3120, %v3372
      %v3440 = vadd.f32 %v3121, %v3375
      %v3441 = vadd.f32 %v3122, %v3377
      %v3442 = vadd.f32 %v3123, %v3380
      %v3443 = vadd.f32 %v3124, %v3382
      %v3444 = vadd.f32 %v3125, %v3385
      %v3445 = vadd.f32 %v3126, %v3387
      %v3446 = vadd.f32 %v3127, %v3390
      %v3447 = vadd.f32 %v3128, %v3392
      %v3448 = vadd.f32 %v3129, %v3395
      %v3449 = vadd.f32 %v3130, %v3397
      %v3450 = vadd.f32 %v3131, %v3400
      %v3451 = vadd.f32 %v3132, %v3402
      %v3452 = vld [vmem:[#allocation2 + $0x18] sm:$0xf]
      %v3453 = vld [vmem:[#allocation2 + $0x1c] sm:$0xf]
      %v3454 = vld [vmem:[#allocation2 + $0x20] sm:$0xf]
      %v3455 = vld [vmem:[#allocation2 + $0x24] sm:$0xf]
      %v3456 = vld [vmem:[#allocation2 + $0x28] sm:$0xf]
      %v3457 = vld [vmem:[#allocation2 + $0x2c] sm:$0xf]
      %v3458 = vld [vmem:[#allocation2 + $0x30] sm:$0xf]
      %v3459 = vld [vmem:[#allocation2 + $0x34] sm:$0xf]
      %v3460 = vld [vmem:[#allocation2 + $0x38] sm:$0xf]
      %v3461 = vld [vmem:[#allocation2 + $0x3c] sm:$0xf]
      %v3462 = vld [vmem:[#allocation2 + $0x40] sm:$0xf]
      %v3463 = vld [vmem:[#allocation2 + $0x44] sm:$0xf]
      %v3464 = vld [vmem:[#allocation2 + $0x48] sm:$0xf]
      %v3465 = vld [vmem:[#allocation2 + $0x4c] sm:$0xf]
      %v3466 = vld [vmem:[#allocation2 + $0x50] sm:$0xf]
      %v3467 = vld [vmem:[#allocation2 + $0x54] sm:$0xf]
      %v3468 = vld [vmem:[#allocation2 + $0x58] sm:$0xf]
      %v3469 = vld [vmem:[#allocation2 + $0x5c] sm:$0xf]
      %v3470 = vld [vmem:[#allocation2 + $0x60] sm:$0xf]
      %v3471 = vld [vmem:[#allocation2 + $0x64] sm:$0xf]
      %v3472 = vld [vmem:[#allocation2 + $0x68] sm:$0xf]
      %v3473 = vld [vmem:[#allocation2 + $0x6c] sm:$0xf]
      %v3474 = vld [vmem:[#allocation2 + $0x70] sm:$0xf]
      %v3475 = vld [vmem:[#allocation2 + $0x74] sm:$0xf]
      %v3476 = vld [vmem:[#allocation2 + $0x78] sm:$0xf]
      %v3477 = vld [vmem:[#allocation2 + $0x7c] sm:$0xf]
      %v3478 = vld [vmem:[#allocation2 + $0x80] sm:$0xf]
      %v3479 = vld [vmem:[#allocation2 + $0x84] sm:$0xf]
      %v3480 = vld [vmem:[#allocation2 + $0x88] sm:$0xf]
      %v3481 = vld [vmem:[#allocation2 + $0x8c] sm:$0xf]
      %v3482 = vld [vmem:[#allocation2 + $0x90] sm:$0xf]
      %v3483 = vld [vmem:[#allocation2 + $0x94] sm:$0xf]
      %v3484 = vld [vmem:[#allocation2 + $0x98] sm:$0xf]
      %v3485 = vld [vmem:[#allocation2 + $0x9c] sm:$0xf]
      %v3486 = vld [vmem:[#allocation2 + $0xa0] sm:$0xf]
      %v3487 = vld [vmem:[#allocation2 + $0xa4] sm:$0xf]
      %v3488 = vld [vmem:[#allocation2 + $0xa8] sm:$0xf]
      %v3489 = vld [vmem:[#allocation2 + $0xac] sm:$0xf]
      %v3490 = vld [vmem:[#allocation2 + $0xb0] sm:$0xf]
      %v3491 = vld [vmem:[#allocation2 + $0xb4] sm:$0xf]
      %v3492 = vld [vmem:[#allocation2 + $0xb8] sm:$0xf]
      %v3493 = vld [vmem:[#allocation2 + $0xbc] sm:$0xf]
      %v3494 = vld [vmem:[#allocation2 + $0xc0] sm:$0xf]
      %v3495 = vld [vmem:[#allocation2 + $0xc4] sm:$0xf]
      %v3496 = vld [vmem:[#allocation2 + $0xc8] sm:$0xf]
      %v3497 = vld [vmem:[#allocation2 + $0xcc] sm:$0xf]
      %v3498 = vld [vmem:[#allocation2 + $0xd0] sm:$0xf]
      %v3499 = vld [vmem:[#allocation2 + $0xd4] sm:$0xf]
      %s3500 = scalar_lea.vmem %s1, 384
      %v3501 = vld [vmem:[%s3500] sm:$0xf]
      %v3502 = vld [vmem:[%s3500 + $0x4] sm:$0xf]
      %v3503 = vld [vmem:[%s3500 + $0x8] sm:$0xf]
      %v3504 = vld [vmem:[%s3500 + $0xc] sm:$0xf]
      %v3505 = vld [vmem:[%s3500 + $0x10] sm:$0xf]
      %v3506 = vld [vmem:[%s3500 + $0x14] sm:$0xf]
      %v3507 = vld [vmem:[%s3500 + $0x18] sm:$0xf]
      %v3508 = vld [vmem:[%s3500 + $0x1c] sm:$0xf]
      %v3509 = vld [vmem:[%s3500 + $0x20] sm:$0xf]
      %v3510 = vld [vmem:[%s3500 + $0x24] sm:$0xf]
      %v3511 = vld [vmem:[%s3500 + $0x28] sm:$0xf]
      %v3512 = vld [vmem:[%s3500 + $0x2c] sm:$0xf]
      %v3513 = vld [vmem:[%s3500 + $0x30] sm:$0xf]
      %v3514 = vld [vmem:[%s3500 + $0x34] sm:$0xf]
      %v3515 = vld [vmem:[%s3500 + $0x38] sm:$0xf]
      %v3516 = vld [vmem:[%s3500 + $0x3c] sm:$0xf]
      %v3565 = vunpack.c.l.b16 %v3452
      %v3566 = vunpack.c.l.b16 %v3453
      %v3567 = vunpack.c.l.b16 %v3454
      %v3568 = vunpack.c.l.b16 %v3455
      %v3569 = vunpack.c.l.b16 %v3456
      %v3570 = vunpack.c.l.b16 %v3457
      %v3571 = vunpack.c.l.b16 %v3458
      %v3572 = vunpack.c.l.b16 %v3459
      %v3573 = vunpack.c.l.b16 %v3460
      %v3574 = vunpack.c.l.b16 %v3461
      %v3575 = vunpack.c.l.b16 %v3462
      %v3576 = vunpack.c.l.b16 %v3463
      %v3577 = vunpack.c.l.b16 %v3464
      %v3578 = vunpack.c.l.b16 %v3465
      %v3579 = vunpack.c.l.b16 %v3466
      %v3580 = vunpack.c.l.b16 %v3467
      %v3581 = vunpack.c.l.b16 %v3468
      %v3582 = vunpack.c.l.b16 %v3469
      %v3583 = vunpack.c.l.b16 %v3470
      %v3584 = vunpack.c.l.b16 %v3471
      %v3585 = vunpack.c.l.b16 %v3472
      %v3586 = vunpack.c.l.b16 %v3473
      %v3587 = vunpack.c.l.b16 %v3474
      %v3588 = vunpack.c.l.b16 %v3475
      %v3589 = vunpack.c.l.b16 %v3476
      %v3590 = vunpack.c.l.b16 %v3477
      %v3591 = vunpack.c.l.b16 %v3478
      %v3592 = vunpack.c.l.b16 %v3479
      %v3593 = vunpack.c.l.b16 %v3480
      %v3594 = vunpack.c.l.b16 %v3481
      %v3595 = vunpack.c.l.b16 %v3482
      %v3596 = vunpack.c.l.b16 %v3483
      %v3597 = vunpack.c.l.b16 %v3484
      %v3598 = vunpack.c.l.b16 %v3485
      %v3599 = vunpack.c.l.b16 %v3486
      %v3600 = vunpack.c.l.b16 %v3487
      %v3601 = vunpack.c.l.b16 %v3488
      %v3602 = vunpack.c.l.b16 %v3489
      %v3603 = vunpack.c.l.b16 %v3490
      %v3604 = vunpack.c.l.b16 %v3491
      %v3605 = vunpack.c.l.b16 %v3492
      %v3606 = vunpack.c.l.b16 %v3493
      %v3607 = vunpack.c.l.b16 %v3494
      %v3608 = vunpack.c.l.b16 %v3495
      %v3609 = vunpack.c.l.b16 %v3496
      %v3610 = vunpack.c.l.b16 %v3497
      %v3611 = vunpack.c.l.b16 %v3498
      %v3612 = vunpack.c.l.b16 %v3499
      %v3613 = vpack.c.b16 %v3566, %v3565
      %v3614 = vpack.c.b16 %v3568, %v3567
      %v3615 = vpack.c.b16 %v3570, %v3569
      %v3616 = vpack.c.b16 %v3572, %v3571
      %v3617 = vpack.c.b16 %v3574, %v3573
      %v3618 = vpack.c.b16 %v3576, %v3575
      %v3619 = vpack.c.b16 %v3578, %v3577
      %v3620 = vpack.c.b16 %v3580, %v3579
      %v3621 = vpack.c.b16 %v3582, %v3581
      %v3622 = vpack.c.b16 %v3584, %v3583
      %v3623 = vpack.c.b16 %v3586, %v3585
      %v3624 = vpack.c.b16 %v3588, %v3587
      %v3625 = vpack.c.b16 %v3590, %v3589
      %v3626 = vpack.c.b16 %v3592, %v3591
      %v3627 = vpack.c.b16 %v3594, %v3593
      %v3628 = vpack.c.b16 %v3596, %v3595
      %v3629 = vpack.c.b16 %v3598, %v3597
      %v3630 = vpack.c.b16 %v3600, %v3599
      %v3631 = vpack.c.b16 %v3602, %v3601
      %v3632 = vpack.c.b16 %v3604, %v3603
      %v3633 = vpack.c.b16 %v3606, %v3605
      %v3634 = vpack.c.b16 %v3608, %v3607
      %v3635 = vpack.c.b16 %v3610, %v3609
      %v3636 = vpack.c.b16 %v3612, %v3611
      %v3677 = vunpack.c.l.b16 %v3501
      %v3678 = vunpack.c.l.b16 %v3502
      %v3679 = vunpack.c.l.b16 %v3503
      %v3680 = vunpack.c.l.b16 %v3504
      %v3681 = vunpack.c.l.b16 %v3505
      %v3682 = vunpack.c.l.b16 %v3506
      %v3683 = vunpack.c.l.b16 %v3507
      %v3684 = vunpack.c.l.b16 %v3508
      %v3685 = vunpack.c.l.b16 %v3509
      %v3686 = vunpack.c.l.b16 %v3510
      %v3687 = vunpack.c.l.b16 %v3511
      %v3688 = vunpack.c.l.b16 %v3512
      %v3689 = vunpack.c.l.b16 %v3513
      %v3690 = vunpack.c.l.b16 %v3514
      %v3691 = vunpack.c.l.b16 %v3515
      %v3692 = vunpack.c.l.b16 %v3516
      %v3693 = vpack.c.b16 %v3678, %v3677
      %v3694 = vpack.c.b16 %v3680, %v3679
      %v3695 = vpack.c.b16 %v3682, %v3681
      %v3696 = vpack.c.b16 %v3684, %v3683
      %v3697 = vpack.c.b16 %v3686, %v3685
      %v3698 = vpack.c.b16 %v3688, %v3687
      %v3699 = vpack.c.b16 %v3690, %v3689
      %v3700 = vpack.c.b16 %v3692, %v3691
      %3709 = vmatpush.bf16.msra.mxu0 %v3700
      %3710 = vmatpush.bf16.msra.mxu0 %v3699
      %3711 = vmatpush.bf16.msra.mxu0 %v3698
      %3712 = vmatpush.bf16.msra.mxu0 %v3697
      %3713 = vmatpush.bf16.msra.mxu0 %v3696
      %3714 = vmatpush.bf16.msra.mxu0 %v3695
      %3715 = vmatpush.bf16.msra.mxu0 %v3694
      %3716 = vmatpush.bf16.msra.mxu0 %v3693
      %3717 = vmatmul.bf16.gmra.mxu0 %v3613
      %v3718 = vpop.f32.mrf.mxu0
      %v3719 = vadd.f32 0.0, %v3718
      %v3720 = vpop.f32.mrf.mxu0
      %v3721 = vadd.f32 0.0, %v3720
      %3722 = vmatmul.bf16.gmra.mxu0 %v3614
      %v3723 = vpop.f32.mrf.mxu0
      %v3724 = vadd.f32 0.0, %v3723
      %v3725 = vpop.f32.mrf.mxu0
      %v3726 = vadd.f32 0.0, %v3725
      %3727 = vmatmul.bf16.gmra.mxu0 %v3615
      %v3728 = vpop.f32.mrf.mxu0
      %v3729 = vadd.f32 0.0, %v3728
      %v3730 = vpop.f32.mrf.mxu0
      %v3731 = vadd.f32 0.0, %v3730
      %3732 = vmatmul.bf16.gmra.mxu0 %v3616
      %v3733 = vpop.f32.mrf.mxu0
      %v3734 = vadd.f32 0.0, %v3733
      %v3735 = vpop.f32.mrf.mxu0
      %v3736 = vadd.f32 0.0, %v3735
      %3737 = vmatmul.bf16.gmra.mxu0 %v3617
      %v3738 = vpop.f32.mrf.mxu0
      %v3739 = vadd.f32 0.0, %v3738
      %v3740 = vpop.f32.mrf.mxu0
      %v3741 = vadd.f32 0.0, %v3740
      %3742 = vmatmul.bf16.gmra.mxu0 %v3618
      %v3743 = vpop.f32.mrf.mxu0
      %v3744 = vadd.f32 0.0, %v3743
      %v3745 = vpop.f32.mrf.mxu0
      %v3746 = vadd.f32 0.0, %v3745
      %3747 = vmatmul.bf16.gmra.mxu0 %v3619
      %v3748 = vpop.f32.mrf.mxu0
      %v3749 = vadd.f32 0.0, %v3748
      %v3750 = vpop.f32.mrf.mxu0
      %v3751 = vadd.f32 0.0, %v3750
      %3752 = vmatmul.bf16.gmra.mxu0 %v3620
      %v3753 = vpop.f32.mrf.mxu0
      %v3754 = vadd.f32 0.0, %v3753
      %v3755 = vpop.f32.mrf.mxu0
      %v3756 = vadd.f32 0.0, %v3755
      %3757 = vmatmul.bf16.gmra.mxu0 %v3621
      %v3758 = vpop.f32.mrf.mxu0
      %v3759 = vadd.f32 0.0, %v3758
      %v3760 = vpop.f32.mrf.mxu0
      %v3761 = vadd.f32 0.0, %v3760
      %3762 = vmatmul.bf16.gmra.mxu0 %v3622
      %v3763 = vpop.f32.mrf.mxu0
      %v3764 = vadd.f32 0.0, %v3763
      %v3765 = vpop.f32.mrf.mxu0
      %v3766 = vadd.f32 0.0, %v3765
      %3767 = vmatmul.bf16.gmra.mxu0 %v3623
      %v3768 = vpop.f32.mrf.mxu0
      %v3769 = vadd.f32 0.0, %v3768
      %v3770 = vpop.f32.mrf.mxu0
      %v3771 = vadd.f32 0.0, %v3770
      %3772 = vmatmul.bf16.gmra.mxu0 %v3624
      %v3773 = vpop.f32.mrf.mxu0
      %v3774 = vadd.f32 0.0, %v3773
      %v3775 = vpop.f32.mrf.mxu0
      %v3776 = vadd.f32 0.0, %v3775
      %3777 = vmatmul.bf16.gmra.mxu0 %v3625
      %v3778 = vpop.f32.mrf.mxu0
      %v3779 = vadd.f32 0.0, %v3778
      %v3780 = vpop.f32.mrf.mxu0
      %v3781 = vadd.f32 0.0, %v3780
      %3782 = vmatmul.bf16.gmra.mxu0 %v3626
      %v3783 = vpop.f32.mrf.mxu0
      %v3784 = vadd.f32 0.0, %v3783
      %v3785 = vpop.f32.mrf.mxu0
      %v3786 = vadd.f32 0.0, %v3785
      %3787 = vmatmul.bf16.gmra.mxu0 %v3627
      %v3788 = vpop.f32.mrf.mxu0
      %v3789 = vadd.f32 0.0, %v3788
      %v3790 = vpop.f32.mrf.mxu0
      %v3791 = vadd.f32 0.0, %v3790
      %3792 = vmatmul.bf16.gmra.mxu0 %v3628
      %v3793 = vpop.f32.mrf.mxu0
      %v3794 = vadd.f32 0.0, %v3793
      %v3795 = vpop.f32.mrf.mxu0
      %v3796 = vadd.f32 0.0, %v3795
      %3797 = vmatmul.bf16.gmra.mxu0 %v3629
      %v3798 = vpop.f32.mrf.mxu0
      %v3799 = vadd.f32 0.0, %v3798
      %v3800 = vpop.f32.mrf.mxu0
      %v3801 = vadd.f32 0.0, %v3800
      %3802 = vmatmul.bf16.gmra.mxu0 %v3630
      %v3803 = vpop.f32.mrf.mxu0
      %v3804 = vadd.f32 0.0, %v3803
      %v3805 = vpop.f32.mrf.mxu0
      %v3806 = vadd.f32 0.0, %v3805
      %3807 = vmatmul.bf16.gmra.mxu0 %v3631
      %v3808 = vpop.f32.mrf.mxu0
      %v3809 = vadd.f32 0.0, %v3808
      %v3810 = vpop.f32.mrf.mxu0
      %v3811 = vadd.f32 0.0, %v3810
      %3812 = vmatmul.bf16.gmra.mxu0 %v3632
      %v3813 = vpop.f32.mrf.mxu0
      %v3814 = vadd.f32 0.0, %v3813
      %v3815 = vpop.f32.mrf.mxu0
      %v3816 = vadd.f32 0.0, %v3815
      %3817 = vmatmul.bf16.gmra.mxu0 %v3633
      %v3818 = vpop.f32.mrf.mxu0
      %v3819 = vadd.f32 0.0, %v3818
      %v3820 = vpop.f32.mrf.mxu0
      %v3821 = vadd.f32 0.0, %v3820
      %3822 = vmatmul.bf16.gmra.mxu0 %v3634
      %v3823 = vpop.f32.mrf.mxu0
      %v3824 = vadd.f32 0.0, %v3823
      %v3825 = vpop.f32.mrf.mxu0
      %v3826 = vadd.f32 0.0, %v3825
      %3827 = vmatmul.bf16.gmra.mxu0 %v3635
      %v3828 = vpop.f32.mrf.mxu0
      %v3829 = vadd.f32 0.0, %v3828
      %v3830 = vpop.f32.mrf.mxu0
      %v3831 = vadd.f32 0.0, %v3830
      %3832 = vmatmul.bf16.gmra.mxu0 %v3636
      %v3833 = vpop.f32.mrf.mxu0
      %v3834 = vadd.f32 0.0, %v3833
      %v3835 = vpop.f32.mrf.mxu0
      %v3836 = vadd.f32 0.0, %v3835
      %3837 = vdwg.mxu0
      %v3838 = vadd.f32 %v3404, %v3719
      %v3839 = vadd.f32 %v3405, %v3721
      %v3840 = vadd.f32 %v3406, %v3724
      %v3841 = vadd.f32 %v3407, %v3726
      %v3842 = vadd.f32 %v3408, %v3729
      %v3843 = vadd.f32 %v3409, %v3731
      %v3844 = vadd.f32 %v3410, %v3734
      %v3845 = vadd.f32 %v3411, %v3736
      %v3846 = vadd.f32 %v3412, %v3739
      %v3847 = vadd.f32 %v3413, %v3741
      %v3848 = vadd.f32 %v3414, %v3744
      %v3849 = vadd.f32 %v3415, %v3746
      %v3850 = vadd.f32 %v3416, %v3749
      %v3851 = vadd.f32 %v3417, %v3751
      %v3852 = vadd.f32 %v3418, %v3754
      %v3853 = vadd.f32 %v3419, %v3756
      %v3854 = vadd.f32 %v3420, %v3759
      %v3855 = vadd.f32 %v3421, %v3761
      %v3856 = vadd.f32 %v3422, %v3764
      %v3857 = vadd.f32 %v3423, %v3766
      %v3858 = vadd.f32 %v3424, %v3769
      %v3859 = vadd.f32 %v3425, %v3771
      %v3860 = vadd.f32 %v3426, %v3774
      %v3861 = vadd.f32 %v3427, %v3776
      %v3862 = vadd.f32 %v3428, %v3779
      %v3863 = vadd.f32 %v3429, %v3781
      %v3864 = vadd.f32 %v3430, %v3784
      %v3865 = vadd.f32 %v3431, %v3786
      %v3866 = vadd.f32 %v3432, %v3789
      %v3867 = vadd.f32 %v3433, %v3791
      %v3868 = vadd.f32 %v3434, %v3794
      %v3869 = vadd.f32 %v3435, %v3796
      %v3870 = vadd.f32 %v3436, %v3799
      %v3871 = vadd.f32 %v3437, %v3801
      %v3872 = vadd.f32 %v3438, %v3804
      %v3873 = vadd.f32 %v3439, %v3806
      %v3874 = vadd.f32 %v3440, %v3809
      %v3875 = vadd.f32 %v3441, %v3811
      %v3876 = vadd.f32 %v3442, %v3814
      %v3877 = vadd.f32 %v3443, %v3816
      %v3878 = vadd.f32 %v3444, %v3819
      %v3879 = vadd.f32 %v3445, %v3821
      %v3880 = vadd.f32 %v3446, %v3824
      %v3881 = vadd.f32 %v3447, %v3826
      %v3882 = vadd.f32 %v3448, %v3829
      %v3883 = vadd.f32 %v3449, %v3831
      %v3884 = vadd.f32 %v3450, %v3834
      %v3885 = vadd.f32 %v3451, %v3836
      %v3886 = vld [vmem:[#allocation2 + $0x18] sm:$0xf]
      %v3887 = vld [vmem:[#allocation2 + $0x1c] sm:$0xf]
      %v3888 = vld [vmem:[#allocation2 + $0x20] sm:$0xf]
      %v3889 = vld [vmem:[#allocation2 + $0x24] sm:$0xf]
      %v3890 = vld [vmem:[#allocation2 + $0x28] sm:$0xf]
      %v3891 = vld [vmem:[#allocation2 + $0x2c] sm:$0xf]
      %v3892 = vld [vmem:[#allocation2 + $0x30] sm:$0xf]
      %v3893 = vld [vmem:[#allocation2 + $0x34] sm:$0xf]
      %v3894 = vld [vmem:[#allocation2 + $0x38] sm:$0xf]
      %v3895 = vld [vmem:[#allocation2 + $0x3c] sm:$0xf]
      %v3896 = vld [vmem:[#allocation2 + $0x40] sm:$0xf]
      %v3897 = vld [vmem:[#allocation2 + $0x44] sm:$0xf]
      %v3898 = vld [vmem:[#allocation2 + $0x48] sm:$0xf]
      %v3899 = vld [vmem:[#allocation2 + $0x4c] sm:$0xf]
      %v3900 = vld [vmem:[#allocation2 + $0x50] sm:$0xf]
      %v3901 = vld [vmem:[#allocation2 + $0x54] sm:$0xf]
      %v3902 = vld [vmem:[#allocation2 + $0x58] sm:$0xf]
      %v3903 = vld [vmem:[#allocation2 + $0x5c] sm:$0xf]
      %v3904 = vld [vmem:[#allocation2 + $0x60] sm:$0xf]
      %v3905 = vld [vmem:[#allocation2 + $0x64] sm:$0xf]
      %v3906 = vld [vmem:[#allocation2 + $0x68] sm:$0xf]
      %v3907 = vld [vmem:[#allocation2 + $0x6c] sm:$0xf]
      %v3908 = vld [vmem:[#allocation2 + $0x70] sm:$0xf]
      %v3909 = vld [vmem:[#allocation2 + $0x74] sm:$0xf]
      %v3910 = vld [vmem:[#allocation2 + $0x78] sm:$0xf]
      %v3911 = vld [vmem:[#allocation2 + $0x7c] sm:$0xf]
      %v3912 = vld [vmem:[#allocation2 + $0x80] sm:$0xf]
      %v3913 = vld [vmem:[#allocation2 + $0x84] sm:$0xf]
      %v3914 = vld [vmem:[#allocation2 + $0x88] sm:$0xf]
      %v3915 = vld [vmem:[#allocation2 + $0x8c] sm:$0xf]
      %v3916 = vld [vmem:[#allocation2 + $0x90] sm:$0xf]
      %v3917 = vld [vmem:[#allocation2 + $0x94] sm:$0xf]
      %v3918 = vld [vmem:[#allocation2 + $0x98] sm:$0xf]
      %v3919 = vld [vmem:[#allocation2 + $0x9c] sm:$0xf]
      %v3920 = vld [vmem:[#allocation2 + $0xa0] sm:$0xf]
      %v3921 = vld [vmem:[#allocation2 + $0xa4] sm:$0xf]
      %v3922 = vld [vmem:[#allocation2 + $0xa8] sm:$0xf]
      %v3923 = vld [vmem:[#allocation2 + $0xac] sm:$0xf]
      %v3924 = vld [vmem:[#allocation2 + $0xb0] sm:$0xf]
      %v3925 = vld [vmem:[#allocation2 + $0xb4] sm:$0xf]
      %v3926 = vld [vmem:[#allocation2 + $0xb8] sm:$0xf]
      %v3927 = vld [vmem:[#allocation2 + $0xbc] sm:$0xf]
      %v3928 = vld [vmem:[#allocation2 + $0xc0] sm:$0xf]
      %v3929 = vld [vmem:[#allocation2 + $0xc4] sm:$0xf]
      %v3930 = vld [vmem:[#allocation2 + $0xc8] sm:$0xf]
      %v3931 = vld [vmem:[#allocation2 + $0xcc] sm:$0xf]
      %v3932 = vld [vmem:[#allocation2 + $0xd0] sm:$0xf]
      %v3933 = vld [vmem:[#allocation2 + $0xd4] sm:$0xf]
      %v3934 = vld [vmem:[#allocation2 + $0xd8] sm:$0x1]
      %s3935 = scalar_lea.vmem %s1, 448
      %v3936 = vld [vmem:[%s3935] sm:$0xf]
      %v3937 = vld [vmem:[%s3935 + $0x4] sm:$0xf]
      %v3938 = vld [vmem:[%s3935 + $0x8] sm:$0xf]
      %v3939 = vld [vmem:[%s3935 + $0xc] sm:$0xf]
      %v3940 = vld [vmem:[%s3935 + $0x10] sm:$0xf]
      %v3941 = vld [vmem:[%s3935 + $0x14] sm:$0xf]
      %v3942 = vld [vmem:[%s3935 + $0x18] sm:$0xf]
      %v3943 = vld [vmem:[%s3935 + $0x1c] sm:$0xf]
      %v3944 = vld [vmem:[%s3935 + $0x20] sm:$0xf]
      %v3945 = vld [vmem:[%s3935 + $0x24] sm:$0xf]
      %v3946 = vld [vmem:[%s3935 + $0x28] sm:$0xf]
      %v3947 = vld [vmem:[%s3935 + $0x2c] sm:$0xf]
      %v3948 = vld [vmem:[%s3935 + $0x30] sm:$0xf]
      %v3949 = vld [vmem:[%s3935 + $0x34] sm:$0xf]
      %v3950 = vld [vmem:[%s3935 + $0x38] sm:$0xf]
      %v3951 = vld [vmem:[%s3935 + $0x3c] sm:$0xf]
      %v4001 = vunpack.c.l.b16 %v3886
      %v4002 = vunpack.c.l.b16 %v3887
      %v4003 = vunpack.c.l.b16 %v3888
      %v4004 = vunpack.c.l.b16 %v3889
      %v4005 = vunpack.c.l.b16 %v3890
      %v4006 = vunpack.c.l.b16 %v3891
      %v4007 = vunpack.c.l.b16 %v3892
      %v4008 = vunpack.c.l.b16 %v3893
      %v4009 = vunpack.c.l.b16 %v3894
      %v4010 = vunpack.c.l.b16 %v3895
      %v4011 = vunpack.c.l.b16 %v3896
      %v4012 = vunpack.c.l.b16 %v3897
      %v4013 = vunpack.c.l.b16 %v3898
      %v4014 = vunpack.c.l.b16 %v3899
      %v4015 = vunpack.c.l.b16 %v3900
      %v4016 = vunpack.c.l.b16 %v3901
      %v4017 = vunpack.c.l.b16 %v3902
      %v4018 = vunpack.c.l.b16 %v3903
      %v4019 = vunpack.c.l.b16 %v3904
      %v4020 = vunpack.c.l.b16 %v3905
      %v4021 = vunpack.c.l.b16 %v3906
      %v4022 = vunpack.c.l.b16 %v3907
      %v4023 = vunpack.c.l.b16 %v3908
      %v4024 = vunpack.c.l.b16 %v3909
      %v4025 = vunpack.c.l.b16 %v3910
      %v4026 = vunpack.c.l.b16 %v3911
      %v4027 = vunpack.c.l.b16 %v3912
      %v4028 = vunpack.c.l.b16 %v3913
      %v4029 = vunpack.c.l.b16 %v3914
      %v4030 = vunpack.c.l.b16 %v3915
      %v4031 = vunpack.c.l.b16 %v3916
      %v4032 = vunpack.c.l.b16 %v3917
      %v4033 = vunpack.c.l.b16 %v3918
      %v4034 = vunpack.c.l.b16 %v3919
      %v4035 = vunpack.c.l.b16 %v3920
      %v4036 = vunpack.c.l.b16 %v3921
      %v4037 = vunpack.c.l.b16 %v3922
      %v4038 = vunpack.c.l.b16 %v3923
      %v4039 = vunpack.c.l.b16 %v3924
      %v4040 = vunpack.c.l.b16 %v3925
      %v4041 = vunpack.c.l.b16 %v3926
      %v4042 = vunpack.c.l.b16 %v3927
      %v4043 = vunpack.c.l.b16 %v3928
      %v4044 = vunpack.c.l.b16 %v3929
      %v4045 = vunpack.c.l.b16 %v3930
      %v4046 = vunpack.c.l.b16 %v3931
      %v4047 = vunpack.c.l.b16 %v3932
      %v4048 = vunpack.c.l.b16 %v3933
      %v4049 = vunpack.c.l.b16 %v3934
      %v4050 = vpack.c.b16 %v4002, %v4001
      %v4051 = vpack.c.b16 %v4004, %v4003
      %v4052 = vpack.c.b16 %v4006, %v4005
      %v4053 = vpack.c.b16 %v4008, %v4007
      %v4054 = vpack.c.b16 %v4010, %v4009
      %v4055 = vpack.c.b16 %v4012, %v4011
      %v4056 = vpack.c.b16 %v4014, %v4013
      %v4057 = vpack.c.b16 %v4016, %v4015
      %v4058 = vpack.c.b16 %v4018, %v4017
      %v4059 = vpack.c.b16 %v4020, %v4019
      %v4060 = vpack.c.b16 %v4022, %v4021
      %v4061 = vpack.c.b16 %v4024, %v4023
      %v4062 = vpack.c.b16 %v4026, %v4025
      %v4063 = vpack.c.b16 %v4028, %v4027
      %v4064 = vpack.c.b16 %v4030, %v4029
      %v4065 = vpack.c.b16 %v4032, %v4031
      %v4066 = vpack.c.b16 %v4034, %v4033
      %v4067 = vpack.c.b16 %v4036, %v4035
      %v4068 = vpack.c.b16 %v4038, %v4037
      %v4069 = vpack.c.b16 %v4040, %v4039
      %v4070 = vpack.c.b16 %v4042, %v4041
      %v4071 = vpack.c.b16 %v4044, %v4043
      %v4072 = vpack.c.b16 %v4046, %v4045
      %v4073 = vpack.c.b16 %v4048, %v4047
      %v4074 = vpack.c.b16 %v4049, %v4049
      %v4076 = vshrl.u32 %v4050, 16
      %v4078 = vshll.u32 %v4050, 16
      %v4080 = vrot.slane %v4078, 1
      %v4081 = vor.u32 %v4076, %v4080
      %v4083 = vshll.u32 %v4051, 16
      %v4085 = vrot.slane %v4083, 1
      %v4086 = vsel %vm1146, %v4081, %v4085
      %v4087 = vshrl.u32 %v4051, 16
      %v4089 = vor.u32 %v4087, %v4085
      %v4091 = vshll.u32 %v4052, 16
      %v4093 = vrot.slane %v4091, 1
      %v4094 = vsel %vm1146, %v4089, %v4093
      %v4095 = vshrl.u32 %v4052, 16
      %v4097 = vor.u32 %v4095, %v4093
      %v4099 = vshll.u32 %v4053, 16
      %v4101 = vrot.slane %v4099, 1
      %v4102 = vsel %vm1146, %v4097, %v4101
      %v4103 = vshrl.u32 %v4053, 16
      %v4105 = vor.u32 %v4103, %v4101
      %v4107 = vshll.u32 %v4054, 16
      %v4109 = vrot.slane %v4107, 1
      %v4110 = vsel %vm1146, %v4105, %v4109
      %v4111 = vshrl.u32 %v4054, 16
      %v4113 = vor.u32 %v4111, %v4109
      %v4115 = vshll.u32 %v4055, 16
      %v4117 = vrot.slane %v4115, 1
      %v4118 = vsel %vm1146, %v4113, %v4117
      %v4119 = vshrl.u32 %v4055, 16
      %v4121 = vor.u32 %v4119, %v4117
      %v4123 = vshll.u32 %v4056, 16
      %v4125 = vrot.slane %v4123, 1
      %v4126 = vsel %vm1146, %v4121, %v4125
      %v4127 = vshrl.u32 %v4056, 16
      %v4129 = vor.u32 %v4127, %v4125
      %v4131 = vshll.u32 %v4057, 16
      %v4133 = vrot.slane %v4131, 1
      %v4134 = vsel %vm1146, %v4129, %v4133
      %v4135 = vshrl.u32 %v4057, 16
      %v4137 = vor.u32 %v4135, %v4133
      %v4139 = vshll.u32 %v4058, 16
      %v4141 = vrot.slane %v4139, 1
      %v4142 = vsel %vm1146, %v4137, %v4141
      %v4143 = vshrl.u32 %v4058, 16
      %v4145 = vor.u32 %v4143, %v4141
      %v4147 = vshll.u32 %v4059, 16
      %v4149 = vrot.slane %v4147, 1
      %v4150 = vsel %vm1146, %v4145, %v4149
      %v4151 = vshrl.u32 %v4059, 16
      %v4153 = vor.u32 %v4151, %v4149
      %v4155 = vshll.u32 %v4060, 16
      %v4157 = vrot.slane %v4155, 1
      %v4158 = vsel %vm1146, %v4153, %v4157
      %v4159 = vshrl.u32 %v4060, 16
      %v4161 = vor.u32 %v4159, %v4157
      %v4163 = vshll.u32 %v4061, 16
      %v4165 = vrot.slane %v4163, 1
      %v4166 = vsel %vm1146, %v4161, %v4165
      %v4167 = vshrl.u32 %v4061, 16
      %v4169 = vor.u32 %v4167, %v4165
      %v4171 = vshll.u32 %v4062, 16
      %v4173 = vrot.slane %v4171, 1
      %v4174 = vsel %vm1146, %v4169, %v4173
      %v4175 = vshrl.u32 %v4062, 16
      %v4177 = vor.u32 %v4175, %v4173
      %v4179 = vshll.u32 %v4063, 16
      %v4181 = vrot.slane %v4179, 1
      %v4182 = vsel %vm1146, %v4177, %v4181
      %v4183 = vshrl.u32 %v4063, 16
      %v4185 = vor.u32 %v4183, %v4181
      %v4187 = vshll.u32 %v4064, 16
      %v4189 = vrot.slane %v4187, 1
      %v4190 = vsel %vm1146, %v4185, %v4189
      %v4191 = vshrl.u32 %v4064, 16
      %v4193 = vor.u32 %v4191, %v4189
      %v4195 = vshll.u32 %v4065, 16
      %v4197 = vrot.slane %v4195, 1
      %v4198 = vsel %vm1146, %v4193, %v4197
      %v4199 = vshrl.u32 %v4065, 16
      %v4201 = vor.u32 %v4199, %v4197
      %v4203 = vshll.u32 %v4066, 16
      %v4205 = vrot.slane %v4203, 1
      %v4206 = vsel %vm1146, %v4201, %v4205
      %v4207 = vshrl.u32 %v4066, 16
      %v4209 = vor.u32 %v4207, %v4205
      %v4211 = vshll.u32 %v4067, 16
      %v4213 = vrot.slane %v4211, 1
      %v4214 = vsel %vm1146, %v4209, %v4213
      %v4215 = vshrl.u32 %v4067, 16
      %v4217 = vor.u32 %v4215, %v4213
      %v4219 = vshll.u32 %v4068, 16
      %v4221 = vrot.slane %v4219, 1
      %v4222 = vsel %vm1146, %v4217, %v4221
      %v4223 = vshrl.u32 %v4068, 16
      %v4225 = vor.u32 %v4223, %v4221
      %v4227 = vshll.u32 %v4069, 16
      %v4229 = vrot.slane %v4227, 1
      %v4230 = vsel %vm1146, %v4225, %v4229
      %v4231 = vshrl.u32 %v4069, 16
      %v4233 = vor.u32 %v4231, %v4229
      %v4235 = vshll.u32 %v4070, 16
      %v4237 = vrot.slane %v4235, 1
      %v4238 = vsel %vm1146, %v4233, %v4237
      %v4239 = vshrl.u32 %v4070, 16
      %v4241 = vor.u32 %v4239, %v4237
      %v4243 = vshll.u32 %v4071, 16
      %v4245 = vrot.slane %v4243, 1
      %v4246 = vsel %vm1146, %v4241, %v4245
      %v4247 = vshrl.u32 %v4071, 16
      %v4249 = vor.u32 %v4247, %v4245
      %v4251 = vshll.u32 %v4072, 16
      %v4253 = vrot.slane %v4251, 1
      %v4254 = vsel %vm1146, %v4249, %v4253
      %v4255 = vshrl.u32 %v4072, 16
      %v4257 = vor.u32 %v4255, %v4253
      %v4259 = vshll.u32 %v4073, 16
      %v4261 = vrot.slane %v4259, 1
      %v4262 = vsel %vm1146, %v4257, %v4261
      %v4263 = vshrl.u32 %v4073, 16
      %v4265 = vor.u32 %v4263, %v4261
      %v4267 = vshll.u32 %v4074, 16
      %v4269 = vrot.slane %v4267, 1
      %v4270 = vsel %vm1146, %v4265, %v4269
      %v4311 = vunpack.c.l.b16 %v3936
      %v4312 = vunpack.c.l.b16 %v3937
      %v4313 = vunpack.c.l.b16 %v3938
      %v4314 = vunpack.c.l.b16 %v3939
      %v4315 = vunpack.c.l.b16 %v3940
      %v4316 = vunpack.c.l.b16 %v3941
      %v4317 = vunpack.c.l.b16 %v3942
      %v4318 = vunpack.c.l.b16 %v3943
      %v4319 = vunpack.c.l.b16 %v3944
      %v4320 = vunpack.c.l.b16 %v3945
      %v4321 = vunpack.c.l.b16 %v3946
      %v4322 = vunpack.c.l.b16 %v3947
      %v4323 = vunpack.c.l.b16 %v3948
      %v4324 = vunpack.c.l.b16 %v3949
      %v4325 = vunpack.c.l.b16 %v3950
      %v4326 = vunpack.c.l.b16 %v3951
      %v4327 = vpack.c.b16 %v4312, %v4311
      %v4328 = vpack.c.b16 %v4314, %v4313
      %v4329 = vpack.c.b16 %v4316, %v4315
      %v4330 = vpack.c.b16 %v4318, %v4317
      %v4331 = vpack.c.b16 %v4320, %v4319
      %v4332 = vpack.c.b16 %v4322, %v4321
      %v4333 = vpack.c.b16 %v4324, %v4323
      %v4334 = vpack.c.b16 %v4326, %v4325
      %4343 = vmatpush.bf16.msra.mxu0 %v4334
      %4344 = vmatpush.bf16.msra.mxu0 %v4333
      %4345 = vmatpush.bf16.msra.mxu0 %v4332
      %4346 = vmatpush.bf16.msra.mxu0 %v4331
      %4347 = vmatpush.bf16.msra.mxu0 %v4330
      %4348 = vmatpush.bf16.msra.mxu0 %v4329
      %4349 = vmatpush.bf16.msra.mxu0 %v4328
      %4350 = vmatpush.bf16.msra.mxu0 %v4327
      %4351 = vmatmul.bf16.gmra.mxu0 %v4086
      %v4352 = vpop.f32.mrf.mxu0
      %v4353 = vadd.f32 0.0, %v4352
      %v4354 = vpop.f32.mrf.mxu0
      %v4355 = vadd.f32 0.0, %v4354
      %4356 = vmatmul.bf16.gmra.mxu0 %v4094
      %v4357 = vpop.f32.mrf.mxu0
      %v4358 = vadd.f32 0.0, %v4357
      %v4359 = vpop.f32.mrf.mxu0
      %v4360 = vadd.f32 0.0, %v4359
      %4361 = vmatmul.bf16.gmra.mxu0 %v4102
      %v4362 = vpop.f32.mrf.mxu0
      %v4363 = vadd.f32 0.0, %v4362
      %v4364 = vpop.f32.mrf.mxu0
      %v4365 = vadd.f32 0.0, %v4364
      %4366 = vmatmul.bf16.gmra.mxu0 %v4110
      %v4367 = vpop.f32.mrf.mxu0
      %v4368 = vadd.f32 0.0, %v4367
      %v4369 = vpop.f32.mrf.mxu0
      %v4370 = vadd.f32 0.0, %v4369
      %4371 = vmatmul.bf16.gmra.mxu0 %v4118
      %v4372 = vpop.f32.mrf.mxu0
      %v4373 = vadd.f32 0.0, %v4372
      %v4374 = vpop.f32.mrf.mxu0
      %v4375 = vadd.f32 0.0, %v4374
      %4376 = vmatmul.bf16.gmra.mxu0 %v4126
      %v4377 = vpop.f32.mrf.mxu0
      %v4378 = vadd.f32 0.0, %v4377
      %v4379 = vpop.f32.mrf.mxu0
      %v4380 = vadd.f32 0.0, %v4379
      %4381 = vmatmul.bf16.gmra.mxu0 %v4134
      %v4382 = vpop.f32.mrf.mxu0
      %v4383 = vadd.f32 0.0, %v4382
      %v4384 = vpop.f32.mrf.mxu0
      %v4385 = vadd.f32 0.0, %v4384
      %4386 = vmatmul.bf16.gmra.mxu0 %v4142
      %v4387 = vpop.f32.mrf.mxu0
      %v4388 = vadd.f32 0.0, %v4387
      %v4389 = vpop.f32.mrf.mxu0
      %v4390 = vadd.f32 0.0, %v4389
      %4391 = vmatmul.bf16.gmra.mxu0 %v4150
      %v4392 = vpop.f32.mrf.mxu0
      %v4393 = vadd.f32 0.0, %v4392
      %v4394 = vpop.f32.mrf.mxu0
      %v4395 = vadd.f32 0.0, %v4394
      %4396 = vmatmul.bf16.gmra.mxu0 %v4158
      %v4397 = vpop.f32.mrf.mxu0
      %v4398 = vadd.f32 0.0, %v4397
      %v4399 = vpop.f32.mrf.mxu0
      %v4400 = vadd.f32 0.0, %v4399
      %4401 = vmatmul.bf16.gmra.mxu0 %v4166
      %v4402 = vpop.f32.mrf.mxu0
      %v4403 = vadd.f32 0.0, %v4402
      %v4404 = vpop.f32.mrf.mxu0
      %v4405 = vadd.f32 0.0, %v4404
      %4406 = vmatmul.bf16.gmra.mxu0 %v4174
      %v4407 = vpop.f32.mrf.mxu0
      %v4408 = vadd.f32 0.0, %v4407
      %v4409 = vpop.f32.mrf.mxu0
      %v4410 = vadd.f32 0.0, %v4409
      %4411 = vmatmul.bf16.gmra.mxu0 %v4182
      %v4412 = vpop.f32.mrf.mxu0
      %v4413 = vadd.f32 0.0, %v4412
      %v4414 = vpop.f32.mrf.mxu0
      %v4415 = vadd.f32 0.0, %v4414
      %4416 = vmatmul.bf16.gmra.mxu0 %v4190
      %v4417 = vpop.f32.mrf.mxu0
      %v4418 = vadd.f32 0.0, %v4417
      %v4419 = vpop.f32.mrf.mxu0
      %v4420 = vadd.f32 0.0, %v4419
      %4421 = vmatmul.bf16.gmra.mxu0 %v4198
      %v4422 = vpop.f32.mrf.mxu0
      %v4423 = vadd.f32 0.0, %v4422
      %v4424 = vpop.f32.mrf.mxu0
      %v4425 = vadd.f32 0.0, %v4424
      %4426 = vmatmul.bf16.gmra.mxu0 %v4206
      %v4427 = vpop.f32.mrf.mxu0
      %v4428 = vadd.f32 0.0, %v4427
      %v4429 = vpop.f32.mrf.mxu0
      %v4430 = vadd.f32 0.0, %v4429
      %4431 = vmatmul.bf16.gmra.mxu0 %v4214
      %v4432 = vpop.f32.mrf.mxu0
      %v4433 = vadd.f32 0.0, %v4432
      %v4434 = vpop.f32.mrf.mxu0
      %v4435 = vadd.f32 0.0, %v4434
      %4436 = vmatmul.bf16.gmra.mxu0 %v4222
      %v4437 = vpop.f32.mrf.mxu0
      %v4438 = vadd.f32 0.0, %v4437
      %v4439 = vpop.f32.mrf.mxu0
      %v4440 = vadd.f32 0.0, %v4439
      %4441 = vmatmul.bf16.gmra.mxu0 %v4230
      %v4442 = vpop.f32.mrf.mxu0
      %v4443 = vadd.f32 0.0, %v4442
      %v4444 = vpop.f32.mrf.mxu0
      %v4445 = vadd.f32 0.0, %v4444
      %4446 = vmatmul.bf16.gmra.mxu0 %v4238
      %v4447 = vpop.f32.mrf.mxu0
      %v4448 = vadd.f32 0.0, %v4447
      %v4449 = vpop.f32.mrf.mxu0
      %v4450 = vadd.f32 0.0, %v4449
      %4451 = vmatmul.bf16.gmra.mxu0 %v4246
      %v4452 = vpop.f32.mrf.mxu0
      %v4453 = vadd.f32 0.0, %v4452
      %v4454 = vpop.f32.mrf.mxu0
      %v4455 = vadd.f32 0.0, %v4454
      %4456 = vmatmul.bf16.gmra.mxu0 %v4254
      %v4457 = vpop.f32.mrf.mxu0
      %v4458 = vadd.f32 0.0, %v4457
      %v4459 = vpop.f32.mrf.mxu0
      %v4460 = vadd.f32 0.0, %v4459
      %4461 = vmatmul.bf16.gmra.mxu0 %v4262
      %v4462 = vpop.f32.mrf.mxu0
      %v4463 = vadd.f32 0.0, %v4462
      %v4464 = vpop.f32.mrf.mxu0
      %v4465 = vadd.f32 0.0, %v4464
      %4466 = vmatmul.bf16.gmra.mxu0 %v4270
      %v4467 = vpop.f32.mrf.mxu0
      %v4468 = vadd.f32 0.0, %v4467
      %v4469 = vpop.f32.mrf.mxu0
      %v4470 = vadd.f32 0.0, %v4469
      %4471 = vdwg.mxu0
      %v4472 = vadd.f32 %v3838, %v4353
      %v4473 = vadd.f32 %v3839, %v4355
      %v4474 = vadd.f32 %v3840, %v4358
      %v4475 = vadd.f32 %v3841, %v4360
      %v4476 = vadd.f32 %v3842, %v4363
      %v4477 = vadd.f32 %v3843, %v4365
      %v4478 = vadd.f32 %v3844, %v4368
      %v4479 = vadd.f32 %v3845, %v4370
      %v4480 = vadd.f32 %v3846, %v4373
      %v4481 = vadd.f32 %v3847, %v4375
      %v4482 = vadd.f32 %v3848, %v4378
      %v4483 = vadd.f32 %v3849, %v4380
      %v4484 = vadd.f32 %v3850, %v4383
      %v4485 = vadd.f32 %v3851, %v4385
      %v4486 = vadd.f32 %v3852, %v4388
      %v4487 = vadd.f32 %v3853, %v4390
      %v4488 = vadd.f32 %v3854, %v4393
      %v4489 = vadd.f32 %v3855, %v4395
      %v4490 = vadd.f32 %v3856, %v4398
      %v4491 = vadd.f32 %v3857, %v4400
      %v4492 = vadd.f32 %v3858, %v4403
      %v4493 = vadd.f32 %v3859, %v4405
      %v4494 = vadd.f32 %v3860, %v4408
      %v4495 = vadd.f32 %v3861, %v4410
      %v4496 = vadd.f32 %v3862, %v4413
      %v4497 = vadd.f32 %v3863, %v4415
      %v4498 = vadd.f32 %v3864, %v4418
      %v4499 = vadd.f32 %v3865, %v4420
      %v4500 = vadd.f32 %v3866, %v4423
      %v4501 = vadd.f32 %v3867, %v4425
      %v4502 = vadd.f32 %v3868, %v4428
      %v4503 = vadd.f32 %v3869, %v4430
      %v4504 = vadd.f32 %v3870, %v4433
      %v4505 = vadd.f32 %v3871, %v4435
      %v4506 = vadd.f32 %v3872, %v4438
      %v4507 = vadd.f32 %v3873, %v4440
      %v4508 = vadd.f32 %v3874, %v4443
      %v4509 = vadd.f32 %v3875, %v4445
      %v4510 = vadd.f32 %v3876, %v4448
      %v4511 = vadd.f32 %v3877, %v4450
      %v4512 = vadd.f32 %v3878, %v4453
      %v4513 = vadd.f32 %v3879, %v4455
      %v4514 = vadd.f32 %v3880, %v4458
      %v4515 = vadd.f32 %v3881, %v4460
      %v4516 = vadd.f32 %v3882, %v4463
      %v4517 = vadd.f32 %v3883, %v4465
      %v4518 = vadd.f32 %v3884, %v4468
      %v4519 = vadd.f32 %v3885, %v4470
      %v4520 = vld [vmem:[#allocation2 + $0x18] sm:$0xe]
      %s4521 = scalar_lea.vmem %s1, 512
      %v4522 = vld [vmem:[%s4521] sm:$0xf]
      %v4523 = vld [vmem:[%s4521 + $0x4] sm:$0xf]
      %v4524 = vld [vmem:[%s4521 + $0x8] sm:$0xf]
      %v4525 = vld [vmem:[%s4521 + $0xc] sm:$0xf]
      %v4526 = vld [vmem:[%s4521 + $0x10] sm:$0xf]
      %v4527 = vld [vmem:[%s4521 + $0x14] sm:$0xf]
      %v4528 = vld [vmem:[%s4521 + $0x18] sm:$0xf]
      %v4529 = vld [vmem:[%s4521 + $0x1c] sm:$0xf]
      %v4530 = vld [vmem:[%s4521 + $0x20] sm:$0xf]
      %v4531 = vld [vmem:[%s4521 + $0x24] sm:$0xf]
      %v4532 = vld [vmem:[%s4521 + $0x28] sm:$0xf]
      %v4533 = vld [vmem:[%s4521 + $0x2c] sm:$0xf]
      %v4534 = vld [vmem:[%s4521 + $0x30] sm:$0xf]
      %v4535 = vld [vmem:[%s4521 + $0x34] sm:$0xf]
      %v4536 = vld [vmem:[%s4521 + $0x38] sm:$0xf]
      %v4537 = vld [vmem:[%s4521 + $0x3c] sm:$0xf]
      %v4539 = vunpack.c.l.b16 %v4520
      %v4540 = vpack.c.b16 %v4002, %v4539
      %v4541 = vrot.slane %v4540, 1
      %v4542 = vrot.slane %v4051, 1
      %v4543 = vsel %vm1766, %v4541, %v4542
      %v4544 = vrot.slane %v4052, 1
      %v4545 = vsel %vm1766, %v4542, %v4544
      %v4546 = vrot.slane %v4053, 1
      %v4547 = vsel %vm1766, %v4544, %v4546
      %v4548 = vrot.slane %v4054, 1
      %v4549 = vsel %vm1766, %v4546, %v4548
      %v4550 = vrot.slane %v4055, 1
      %v4551 = vsel %vm1766, %v4548, %v4550
      %v4552 = vrot.slane %v4056, 1
      %v4553 = vsel %vm1766, %v4550, %v4552
      %v4554 = vrot.slane %v4057, 1
      %v4555 = vsel %vm1766, %v4552, %v4554
      %v4556 = vrot.slane %v4058, 1
      %v4557 = vsel %vm1766, %v4554, %v4556
      %v4558 = vrot.slane %v4059, 1
      %v4559 = vsel %vm1766, %v4556, %v4558
      %v4560 = vrot.slane %v4060, 1
      %v4561 = vsel %vm1766, %v4558, %v4560
      %v4562 = vrot.slane %v4061, 1
      %v4563 = vsel %vm1766, %v4560, %v4562
      %v4564 = vrot.slane %v4062, 1
      %v4565 = vsel %vm1766, %v4562, %v4564
      %v4566 = vrot.slane %v4063, 1
      %v4567 = vsel %vm1766, %v4564, %v4566
      %v4568 = vrot.slane %v4064, 1
      %v4569 = vsel %vm1766, %v4566, %v4568
      %v4570 = vrot.slane %v4065, 1
      %v4571 = vsel %vm1766, %v4568, %v4570
      %v4572 = vrot.slane %v4066, 1
      %v4573 = vsel %vm1766, %v4570, %v4572
      %v4574 = vrot.slane %v4067, 1
      %v4575 = vsel %vm1766, %v4572, %v4574
      %v4576 = vrot.slane %v4068, 1
      %v4577 = vsel %vm1766, %v4574, %v4576
      %v4578 = vrot.slane %v4069, 1
      %v4579 = vsel %vm1766, %v4576, %v4578
      %v4580 = vrot.slane %v4070, 1
      %v4581 = vsel %vm1766, %v4578, %v4580
      %v4582 = vrot.slane %v4071, 1
      %v4583 = vsel %vm1766, %v4580, %v4582
      %v4584 = vrot.slane %v4072, 1
      %v4585 = vsel %vm1766, %v4582, %v4584
      %v4586 = vrot.slane %v4073, 1
      %v4587 = vsel %vm1766, %v4584, %v4586
      %v4588 = vrot.slane %v4074, 1
      %v4589 = vsel %vm1766, %v4586, %v4588
      %v4630 = vunpack.c.l.b16 %v4522
      %v4631 = vunpack.c.l.b16 %v4523
      %v4632 = vunpack.c.l.b16 %v4524
      %v4633 = vunpack.c.l.b16 %v4525
      %v4634 = vunpack.c.l.b16 %v4526
      %v4635 = vunpack.c.l.b16 %v4527
      %v4636 = vunpack.c.l.b16 %v4528
      %v4637 = vunpack.c.l.b16 %v4529
      %v4638 = vunpack.c.l.b16 %v4530
      %v4639 = vunpack.c.l.b16 %v4531
      %v4640 = vunpack.c.l.b16 %v4532
      %v4641 = vunpack.c.l.b16 %v4533
      %v4642 = vunpack.c.l.b16 %v4534
      %v4643 = vunpack.c.l.b16 %v4535
      %v4644 = vunpack.c.l.b16 %v4536
      %v4645 = vunpack.c.l.b16 %v4537
      %v4646 = vpack.c.b16 %v4631, %v4630
      %v4647 = vpack.c.b16 %v4633, %v4632
      %v4648 = vpack.c.b16 %v4635, %v4634
      %v4649 = vpack.c.b16 %v4637, %v4636
      %v4650 = vpack.c.b16 %v4639, %v4638
      %v4651 = vpack.c.b16 %v4641, %v4640
      %v4652 = vpack.c.b16 %v4643, %v4642
      %v4653 = vpack.c.b16 %v4645, %v4644
      %4662 = vmatpush.bf16.msra.mxu0 %v4653
      %4663 = vmatpush.bf16.msra.mxu0 %v4652
      %4664 = vmatpush.bf16.msra.mxu0 %v4651
      %4665 = vmatpush.bf16.msra.mxu0 %v4650
      %4666 = vmatpush.bf16.msra.mxu0 %v4649
      %4667 = vmatpush.bf16.msra.mxu0 %v4648
      %4668 = vmatpush.bf16.msra.mxu0 %v4647
      %4669 = vmatpush.bf16.msra.mxu0 %v4646
      %4670 = vmatmul.bf16.gmra.mxu0 %v4543
      %v4671 = vpop.f32.mrf.mxu0
      %v4672 = vadd.f32 0.0, %v4671
      %v4673 = vpop.f32.mrf.mxu0
      %v4674 = vadd.f32 0.0, %v4673
      %4675 = vmatmul.bf16.gmra.mxu0 %v4545
      %v4676 = vpop.f32.mrf.mxu0
      %v4677 = vadd.f32 0.0, %v4676
      %v4678 = vpop.f32.mrf.mxu0
      %v4679 = vadd.f32 0.0, %v4678
      %4680 = vmatmul.bf16.gmra.mxu0 %v4547
      %v4681 = vpop.f32.mrf.mxu0
      %v4682 = vadd.f32 0.0, %v4681
      %v4683 = vpop.f32.mrf.mxu0
      %v4684 = vadd.f32 0.0, %v4683
      %4685 = vmatmul.bf16.gmra.mxu0 %v4549
      %v4686 = vpop.f32.mrf.mxu0
      %v4687 = vadd.f32 0.0, %v4686
      %v4688 = vpop.f32.mrf.mxu0
      %v4689 = vadd.f32 0.0, %v4688
      %4690 = vmatmul.bf16.gmra.mxu0 %v4551
      %v4691 = vpop.f32.mrf.mxu0
      %v4692 = vadd.f32 0.0, %v4691
      %v4693 = vpop.f32.mrf.mxu0
      %v4694 = vadd.f32 0.0, %v4693
      %4695 = vmatmul.bf16.gmra.mxu0 %v4553
      %v4696 = vpop.f32.mrf.mxu0
      %v4697 = vadd.f32 0.0, %v4696
      %v4698 = vpop.f32.mrf.mxu0
      %v4699 = vadd.f32 0.0, %v4698
      %4700 = vmatmul.bf16.gmra.mxu0 %v4555
      %v4701 = vpop.f32.mrf.mxu0
      %v4702 = vadd.f32 0.0, %v4701
      %v4703 = vpop.f32.mrf.mxu0
      %v4704 = vadd.f32 0.0, %v4703
      %4705 = vmatmul.bf16.gmra.mxu0 %v4557
      %v4706 = vpop.f32.mrf.mxu0
      %v4707 = vadd.f32 0.0, %v4706
      %v4708 = vpop.f32.mrf.mxu0
      %v4709 = vadd.f32 0.0, %v4708
      %4710 = vmatmul.bf16.gmra.mxu0 %v4559
      %v4711 = vpop.f32.mrf.mxu0
      %v4712 = vadd.f32 0.0, %v4711
      %v4713 = vpop.f32.mrf.mxu0
      %v4714 = vadd.f32 0.0, %v4713
      %4715 = vmatmul.bf16.gmra.mxu0 %v4561
      %v4716 = vpop.f32.mrf.mxu0
      %v4717 = vadd.f32 0.0, %v4716
      %v4718 = vpop.f32.mrf.mxu0
      %v4719 = vadd.f32 0.0, %v4718
      %4720 = vmatmul.bf16.gmra.mxu0 %v4563
      %v4721 = vpop.f32.mrf.mxu0
      %v4722 = vadd.f32 0.0, %v4721
      %v4723 = vpop.f32.mrf.mxu0
      %v4724 = vadd.f32 0.0, %v4723
      %4725 = vmatmul.bf16.gmra.mxu0 %v4565
      %v4726 = vpop.f32.mrf.mxu0
      %v4727 = vadd.f32 0.0, %v4726
      %v4728 = vpop.f32.mrf.mxu0
      %v4729 = vadd.f32 0.0, %v4728
      %4730 = vmatmul.bf16.gmra.mxu0 %v4567
      %v4731 = vpop.f32.mrf.mxu0
      %v4732 = vadd.f32 0.0, %v4731
      %v4733 = vpop.f32.mrf.mxu0
      %v4734 = vadd.f32 0.0, %v4733
      %4735 = vmatmul.bf16.gmra.mxu0 %v4569
      %v4736 = vpop.f32.mrf.mxu0
      %v4737 = vadd.f32 0.0, %v4736
      %v4738 = vpop.f32.mrf.mxu0
      %v4739 = vadd.f32 0.0, %v4738
      %4740 = vmatmul.bf16.gmra.mxu0 %v4571
      %v4741 = vpop.f32.mrf.mxu0
      %v4742 = vadd.f32 0.0, %v4741
      %v4743 = vpop.f32.mrf.mxu0
      %v4744 = vadd.f32 0.0, %v4743
      %4745 = vmatmul.bf16.gmra.mxu0 %v4573
      %v4746 = vpop.f32.mrf.mxu0
      %v4747 = vadd.f32 0.0, %v4746
      %v4748 = vpop.f32.mrf.mxu0
      %v4749 = vadd.f32 0.0, %v4748
      %4750 = vmatmul.bf16.gmra.mxu0 %v4575
      %v4751 = vpop.f32.mrf.mxu0
      %v4752 = vadd.f32 0.0, %v4751
      %v4753 = vpop.f32.mrf.mxu0
      %v4754 = vadd.f32 0.0, %v4753
      %4755 = vmatmul.bf16.gmra.mxu0 %v4577
      %v4756 = vpop.f32.mrf.mxu0
      %v4757 = vadd.f32 0.0, %v4756
      %v4758 = vpop.f32.mrf.mxu0
      %v4759 = vadd.f32 0.0, %v4758
      %4760 = vmatmul.bf16.gmra.mxu0 %v4579
      %v4761 = vpop.f32.mrf.mxu0
      %v4762 = vadd.f32 0.0, %v4761
      %v4763 = vpop.f32.mrf.mxu0
      %v4764 = vadd.f32 0.0, %v4763
      %4765 = vmatmul.bf16.gmra.mxu0 %v4581
      %v4766 = vpop.f32.mrf.mxu0
      %v4767 = vadd.f32 0.0, %v4766
      %v4768 = vpop.f32.mrf.mxu0
      %v4769 = vadd.f32 0.0, %v4768
      %4770 = vmatmul.bf16.gmra.mxu0 %v4583
      %v4771 = vpop.f32.mrf.mxu0
      %v4772 = vadd.f32 0.0, %v4771
      %v4773 = vpop.f32.mrf.mxu0
      %v4774 = vadd.f32 0.0, %v4773
      %4775 = vmatmul.bf16.gmra.mxu0 %v4585
      %v4776 = vpop.f32.mrf.mxu0
      %v4777 = vadd.f32 0.0, %v4776
      %v4778 = vpop.f32.mrf.mxu0
      %v4779 = vadd.f32 0.0, %v4778
      %4780 = vmatmul.bf16.gmra.mxu0 %v4587
      %v4781 = vpop.f32.mrf.mxu0
      %v4782 = vadd.f32 0.0, %v4781
      %v4783 = vpop.f32.mrf.mxu0
      %v4784 = vadd.f32 0.0, %v4783
      %4785 = vmatmul.bf16.gmra.mxu0 %v4589
      %v4786 = vpop.f32.mrf.mxu0
      %v4787 = vadd.f32 0.0, %v4786
      %v4788 = vpop.f32.mrf.mxu0
      %v4789 = vadd.f32 0.0, %v4788
      %4790 = vdwg.mxu0
      %v4791 = vadd.f32 %v4472, %v4672
      %v4792 = vadd.f32 %v4473, %v4674
      %v4793 = vadd.f32 %v4474, %v4677
      %v4794 = vadd.f32 %v4475, %v4679
      %v4795 = vadd.f32 %v4476, %v4682
      %v4796 = vadd.f32 %v4477, %v4684
      %v4797 = vadd.f32 %v4478, %v4687
      %v4798 = vadd.f32 %v4479, %v4689
      %v4799 = vadd.f32 %v4480, %v4692
      %v4800 = vadd.f32 %v4481, %v4694
      %v4801 = vadd.f32 %v4482, %v4697
      %v4802 = vadd.f32 %v4483, %v4699
      %v4803 = vadd.f32 %v4484, %v4702
      %v4804 = vadd.f32 %v4485, %v4704
      %v4805 = vadd.f32 %v4486, %v4707
      %v4806 = vadd.f32 %v4487, %v4709
      %v4807 = vadd.f32 %v4488, %v4712
      %v4808 = vadd.f32 %v4489, %v4714
      %v4809 = vadd.f32 %v4490, %v4717
      %v4810 = vadd.f32 %v4491, %v4719
      %v4811 = vadd.f32 %v4492, %v4722
      %v4812 = vadd.f32 %v4493, %v4724
      %v4813 = vadd.f32 %v4494, %v4727
      %v4814 = vadd.f32 %v4495, %v4729
      %v4815 = vadd.f32 %v4496, %v4732
      %v4816 = vadd.f32 %v4497, %v4734
      %v4817 = vadd.f32 %v4498, %v4737
      %v4818 = vadd.f32 %v4499, %v4739
      %v4819 = vadd.f32 %v4500, %v4742
      %v4820 = vadd.f32 %v4501, %v4744
      %v4821 = vadd.f32 %v4502, %v4747
      %v4822 = vadd.f32 %v4503, %v4749
      %v4823 = vadd.f32 %v4504, %v4752
      %v4824 = vadd.f32 %v4505, %v4754
      %v4825 = vadd.f32 %v4506, %v4757
      %v4826 = vadd.f32 %v4507, %v4759
      %v4827 = vadd.f32 %v4508, %v4762
      %v4828 = vadd.f32 %v4509, %v4764
      %v4829 = vadd.f32 %v4510, %v4767
      %v4830 = vadd.f32 %v4511, %v4769
      %v4831 = vadd.f32 %v4512, %v4772
      %v4832 = vadd.f32 %v4513, %v4774
      %v4833 = vadd.f32 %v4514, %v4777
      %v4834 = vadd.f32 %v4515, %v4779
      %v4835 = vadd.f32 %v4516, %v4782
      %v4836 = vadd.f32 %v4517, %v4784
      %v4837 = vadd.f32 %v4518, %v4787
      %v4838 = vadd.f32 %v4519, %v4789
      %v4839 = vld [vmem:[%s2] sm:$0x1]
      %v4841 = vperm.slane %v4839, 0
      %v4843 = vadd.f32 %v4791, %v4841
      %v4844 = vadd.f32 %v4792, %v4841
      %v4845 = vadd.f32 %v4793, %v4841
      %v4846 = vadd.f32 %v4794, %v4841
      %v4847 = vadd.f32 %v4795, %v4841
      %v4848 = vadd.f32 %v4796, %v4841
      %v4849 = vadd.f32 %v4797, %v4841
      %v4850 = vadd.f32 %v4798, %v4841
      %v4851 = vadd.f32 %v4799, %v4841
      %v4852 = vadd.f32 %v4800, %v4841
      %v4853 = vadd.f32 %v4801, %v4841
      %v4854 = vadd.f32 %v4802, %v4841
      %v4855 = vadd.f32 %v4803, %v4841
      %v4856 = vadd.f32 %v4804, %v4841
      %v4857 = vadd.f32 %v4805, %v4841
      %v4858 = vadd.f32 %v4806, %v4841
      %v4859 = vadd.f32 %v4807, %v4841
      %v4860 = vadd.f32 %v4808, %v4841
      %v4861 = vadd.f32 %v4809, %v4841
      %v4862 = vadd.f32 %v4810, %v4841
      %v4863 = vadd.f32 %v4811, %v4841
      %v4864 = vadd.f32 %v4812, %v4841
      %v4865 = vadd.f32 %v4813, %v4841
      %v4866 = vadd.f32 %v4814, %v4841
      %v4867 = vadd.f32 %v4815, %v4841
      %v4868 = vadd.f32 %v4816, %v4841
      %v4869 = vadd.f32 %v4817, %v4841
      %v4870 = vadd.f32 %v4818, %v4841
      %v4871 = vadd.f32 %v4819, %v4841
      %v4872 = vadd.f32 %v4820, %v4841
      %v4873 = vadd.f32 %v4821, %v4841
      %v4874 = vadd.f32 %v4822, %v4841
      %v4875 = vadd.f32 %v4823, %v4841
      %v4876 = vadd.f32 %v4824, %v4841
      %v4877 = vadd.f32 %v4825, %v4841
      %v4878 = vadd.f32 %v4826, %v4841
      %v4879 = vadd.f32 %v4827, %v4841
      %v4880 = vadd.f32 %v4828, %v4841
      %v4881 = vadd.f32 %v4829, %v4841
      %v4882 = vadd.f32 %v4830, %v4841
      %v4883 = vadd.f32 %v4831, %v4841
      %v4884 = vadd.f32 %v4832, %v4841
      %v4885 = vadd.f32 %v4833, %v4841
      %v4886 = vadd.f32 %v4834, %v4841
      %v4887 = vadd.f32 %v4835, %v4841
      %v4888 = vadd.f32 %v4836, %v4841
      %v4889 = vadd.f32 %v4837, %v4841
      %v4890 = vadd.f32 %v4838, %v4841
      %4892 = vset.pattern.permute.xlu0 0
      %4893 = vperm.xlu0 %4892, %v877
      %v4894 = vpop.permute.xlu0 %4893
      %4897 = vset.pattern.permute.xlu0 0
      %4898 = vperm.xlu0 %4897, %v878
      %v4899 = vpop.permute.xlu0 %4898
      %4902 = vset.pattern.permute.xlu0 0
      %4903 = vperm.xlu0 %4902, %v879
      %v4904 = vpop.permute.xlu0 %4903
      %4907 = vset.pattern.permute.xlu0 0
      %4908 = vperm.xlu0 %4907, %v880
      %v4909 = vpop.permute.xlu0 %4908
      %4912 = vset.pattern.permute.xlu0 0
      %4913 = vperm.xlu0 %4912, %v881
      %v4914 = vpop.permute.xlu0 %4913
      %4917 = vset.pattern.permute.xlu0 0
      %4918 = vperm.xlu0 %4917, %v882
      %v4919 = vpop.permute.xlu0 %4918
      %4922 = vset.pattern.permute.xlu0 0
      %4923 = vperm.xlu0 %4922, %v883
      %v4924 = vpop.permute.xlu0 %4923
      %4927 = vset.pattern.permute.xlu0 0
      %4928 = vperm.xlu0 %4927, %v884
      %v4929 = vpop.permute.xlu0 %4928
      %4932 = vset.pattern.permute.xlu0 0
      %4933 = vperm.xlu0 %4932, %v885
      %v4934 = vpop.permute.xlu0 %4933
      %4937 = vset.pattern.permute.xlu0 0
      %4938 = vperm.xlu0 %4937, %v886
      %v4939 = vpop.permute.xlu0 %4938
      %4942 = vset.pattern.permute.xlu0 0
      %4943 = vperm.xlu0 %4942, %v887
      %v4944 = vpop.permute.xlu0 %4943
      %4947 = vset.pattern.permute.xlu0 0
      %4948 = vperm.xlu0 %4947, %v888
      %v4949 = vpop.permute.xlu0 %4948
      %4952 = vset.pattern.permute.xlu0 0
      %4953 = vperm.xlu0 %4952, %v889
      %v4954 = vpop.permute.xlu0 %4953
      %4957 = vset.pattern.permute.xlu0 0
      %4958 = vperm.xlu0 %4957, %v890
      %v4959 = vpop.permute.xlu0 %4958
      %4962 = vset.pattern.permute.xlu0 0
      %4963 = vperm.xlu0 %4962, %v891
      %v4964 = vpop.permute.xlu0 %4963
      %4967 = vset.pattern.permute.xlu0 0
      %4968 = vperm.xlu0 %4967, %v892
      %v4969 = vpop.permute.xlu0 %4968
      %4972 = vset.pattern.permute.xlu0 0
      %4973 = vperm.xlu0 %4972, %v893
      %v4974 = vpop.permute.xlu0 %4973
      %4977 = vset.pattern.permute.xlu0 0
      %4978 = vperm.xlu0 %4977, %v894
      %v4979 = vpop.permute.xlu0 %4978
      %4982 = vset.pattern.permute.xlu0 0
      %4983 = vperm.xlu0 %4982, %v895
      %v4984 = vpop.permute.xlu0 %4983
      %4987 = vset.pattern.permute.xlu0 0
      %4988 = vperm.xlu0 %4987, %v896
      %v4989 = vpop.permute.xlu0 %4988
      %4992 = vset.pattern.permute.xlu0 0
      %4993 = vperm.xlu0 %4992, %v897
      %v4994 = vpop.permute.xlu0 %4993
      %4997 = vset.pattern.permute.xlu0 0
      %4998 = vperm.xlu0 %4997, %v898
      %v4999 = vpop.permute.xlu0 %4998
      %5002 = vset.pattern.permute.xlu0 0
      %5003 = vperm.xlu0 %5002, %v899
      %v5004 = vpop.permute.xlu0 %5003
      %5007 = vset.pattern.permute.xlu0 0
      %5008 = vperm.xlu0 %5007, %v900
      %v5009 = vpop.permute.xlu0 %5008
      %5012 = vset.pattern.permute.xlu0 0
      %5013 = vperm.xlu0 %5012, %v901
      %v5014 = vpop.permute.xlu0 %5013
      %5017 = vset.pattern.permute.xlu0 0
      %5018 = vperm.xlu0 %5017, %v902
      %v5019 = vpop.permute.xlu0 %5018
      %5022 = vset.pattern.permute.xlu0 0
      %5023 = vperm.xlu0 %5022, %v903
      %v5024 = vpop.permute.xlu0 %5023
      %5027 = vset.pattern.permute.xlu0 0
      %5028 = vperm.xlu0 %5027, %v904
      %v5029 = vpop.permute.xlu0 %5028
      %5032 = vset.pattern.permute.xlu0 0
      %5033 = vperm.xlu0 %5032, %v905
      %v5034 = vpop.permute.xlu0 %5033
      %5037 = vset.pattern.permute.xlu0 0
      %5038 = vperm.xlu0 %5037, %v906
      %v5039 = vpop.permute.xlu0 %5038
      %5042 = vset.pattern.permute.xlu0 0
      %5043 = vperm.xlu0 %5042, %v907
      %v5044 = vpop.permute.xlu0 %5043
      %5047 = vset.pattern.permute.xlu0 0
      %5048 = vperm.xlu0 %5047, %v908
      %v5049 = vpop.permute.xlu0 %5048
      %5052 = vset.pattern.permute.xlu0 0
      %5053 = vperm.xlu0 %5052, %v909
      %v5054 = vpop.permute.xlu0 %5053
      %5057 = vset.pattern.permute.xlu0 0
      %5058 = vperm.xlu0 %5057, %v910
      %v5059 = vpop.permute.xlu0 %5058
      %5062 = vset.pattern.permute.xlu0 0
      %5063 = vperm.xlu0 %5062, %v911
      %v5064 = vpop.permute.xlu0 %5063
      %5067 = vset.pattern.permute.xlu0 0
      %5068 = vperm.xlu0 %5067, %v912
      %v5069 = vpop.permute.xlu0 %5068
      %5072 = vset.pattern.permute.xlu0 0
      %5073 = vperm.xlu0 %5072, %v913
      %v5074 = vpop.permute.xlu0 %5073
      %5077 = vset.pattern.permute.xlu0 0
      %5078 = vperm.xlu0 %5077, %v914
      %v5079 = vpop.permute.xlu0 %5078
      %5082 = vset.pattern.permute.xlu0 0
      %5083 = vperm.xlu0 %5082, %v915
      %v5084 = vpop.permute.xlu0 %5083
      %5087 = vset.pattern.permute.xlu0 0
      %5088 = vperm.xlu0 %5087, %v916
      %v5089 = vpop.permute.xlu0 %5088
      %5092 = vset.pattern.permute.xlu0 0
      %5093 = vperm.xlu0 %5092, %v917
      %v5094 = vpop.permute.xlu0 %5093
      %5097 = vset.pattern.permute.xlu0 0
      %5098 = vperm.xlu0 %5097, %v918
      %v5099 = vpop.permute.xlu0 %5098
      %5102 = vset.pattern.permute.xlu0 0
      %5103 = vperm.xlu0 %5102, %v919
      %v5104 = vpop.permute.xlu0 %5103
      %5107 = vset.pattern.permute.xlu0 0
      %5108 = vperm.xlu0 %5107, %v920
      %v5109 = vpop.permute.xlu0 %5108
      %5112 = vset.pattern.permute.xlu0 0
      %5113 = vperm.xlu0 %5112, %v921
      %v5114 = vpop.permute.xlu0 %5113
      %5117 = vset.pattern.permute.xlu0 0
      %5118 = vperm.xlu0 %5117, %v922
      %v5119 = vpop.permute.xlu0 %5118
      %5122 = vset.pattern.permute.xlu0 0
      %5123 = vperm.xlu0 %5122, %v923
      %v5124 = vpop.permute.xlu0 %5123
      %5127 = vset.pattern.permute.xlu0 0
      %5128 = vperm.xlu0 %5127, %v924
      %v5129 = vpop.permute.xlu0 %5128
      %v5131 = vmul.f32 %v4843, %v4894
      %v5132 = vmul.f32 %v4844, %v4899
      %v5133 = vmul.f32 %v4845, %v4904
      %v5134 = vmul.f32 %v4846, %v4909
      %v5135 = vmul.f32 %v4847, %v4914
      %v5136 = vmul.f32 %v4848, %v4919
      %v5137 = vmul.f32 %v4849, %v4924
      %v5138 = vmul.f32 %v4850, %v4929
      %v5139 = vmul.f32 %v4851, %v4934
      %v5140 = vmul.f32 %v4852, %v4939
      %v5141 = vmul.f32 %v4853, %v4944
      %v5142 = vmul.f32 %v4854, %v4949
      %v5143 = vmul.f32 %v4855, %v4954
      %v5144 = vmul.f32 %v4856, %v4959
      %v5145 = vmul.f32 %v4857, %v4964
      %v5146 = vmul.f32 %v4858, %v4969
      %v5147 = vmul.f32 %v4859, %v4974
      %v5148 = vmul.f32 %v4860, %v4979
      %v5149 = vmul.f32 %v4861, %v4984
      %v5150 = vmul.f32 %v4862, %v4989
      %v5151 = vmul.f32 %v4863, %v4994
      %v5152 = vmul.f32 %v4864, %v4999
      %v5153 = vmul.f32 %v4865, %v5004
      %v5154 = vmul.f32 %v4866, %v5009
      %v5155 = vmul.f32 %v4867, %v5014
      %v5156 = vmul.f32 %v4868, %v5019
      %v5157 = vmul.f32 %v4869, %v5024
      %v5158 = vmul.f32 %v4870, %v5029
      %v5159 = vmul.f32 %v4871, %v5034
      %v5160 = vmul.f32 %v4872, %v5039
      %v5161 = vmul.f32 %v4873, %v5044
      %v5162 = vmul.f32 %v4874, %v5049
      %v5163 = vmul.f32 %v4875, %v5054
      %v5164 = vmul.f32 %v4876, %v5059
      %v5165 = vmul.f32 %v4877, %v5064
      %v5166 = vmul.f32 %v4878, %v5069
      %v5167 = vmul.f32 %v4879, %v5074
      %v5168 = vmul.f32 %v4880, %v5079
      %v5169 = vmul.f32 %v4881, %v5084
      %v5170 = vmul.f32 %v4882, %v5089
      %v5171 = vmul.f32 %v4883, %v5094
      %v5172 = vmul.f32 %v4884, %v5099
      %v5173 = vmul.f32 %v4885, %v5104
      %v5174 = vmul.f32 %v4886, %v5109
      %v5175 = vmul.f32 %v4887, %v5114
      %v5176 = vmul.f32 %v4888, %v5119
      %v5177 = vmul.f32 %v4889, %v5124
      %v5178 = vmul.f32 %v4890, %v5129
      %v5179 = vadd.f32 %v5131, %v5132
      %v5180 = vadd.f32 %v5179, %v5133
      %v5181 = vadd.f32 %v5180, %v5134
      %v5182 = vadd.f32 %v5181, %v5135
      %v5183 = vadd.f32 %v5182, %v5136
      %v5184 = vadd.f32 %v5183, %v5137
      %v5185 = vadd.f32 %v5184, %v5138
      %v5186 = vadd.f32 %v5185, %v5139
      %v5187 = vadd.f32 %v5186, %v5140
      %v5188 = vadd.f32 %v5187, %v5141
      %v5189 = vadd.f32 %v5188, %v5142
      %v5190 = vadd.f32 %v5189, %v5143
      %v5191 = vadd.f32 %v5190, %v5144
      %v5192 = vadd.f32 %v5191, %v5145
      %v5193 = vadd.f32 %v5192, %v5146
      %v5194 = vadd.f32 %v5193, %v5147
      %v5195 = vadd.f32 %v5194, %v5148
      %v5196 = vadd.f32 %v5195, %v5149
      %v5197 = vadd.f32 %v5196, %v5150
      %v5198 = vadd.f32 %v5197, %v5151
      %v5199 = vadd.f32 %v5198, %v5152
      %v5200 = vadd.f32 %v5199, %v5153
      %v5201 = vadd.f32 %v5200, %v5154
      %v5202 = vadd.f32 %v5201, %v5155
      %v5203 = vadd.f32 %v5202, %v5156
      %v5204 = vadd.f32 %v5203, %v5157
      %v5205 = vadd.f32 %v5204, %v5158
      %v5206 = vadd.f32 %v5205, %v5159
      %v5207 = vadd.f32 %v5206, %v5160
      %v5208 = vadd.f32 %v5207, %v5161
      %v5209 = vadd.f32 %v5208, %v5162
      %v5210 = vadd.f32 %v5209, %v5163
      %v5211 = vadd.f32 %v5210, %v5164
      %v5212 = vadd.f32 %v5211, %v5165
      %v5213 = vadd.f32 %v5212, %v5166
      %v5214 = vadd.f32 %v5213, %v5167
      %v5215 = vadd.f32 %v5214, %v5168
      %v5216 = vadd.f32 %v5215, %v5169
      %v5217 = vadd.f32 %v5216, %v5170
      %v5218 = vadd.f32 %v5217, %v5171
      %v5219 = vadd.f32 %v5218, %v5172
      %v5220 = vadd.f32 %v5219, %v5173
      %v5221 = vadd.f32 %v5220, %v5174
      %v5222 = vadd.f32 %v5221, %v5175
      %v5223 = vadd.f32 %v5222, %v5176
      %v5224 = vadd.f32 %v5223, %v5177
      %v5225 = vadd.f32 %v5224, %v5178
      %v5226 = vmul.f32 %v5131, %v5131
      %v5227 = vmul.f32 %v5132, %v5132
      %v5228 = vmul.f32 %v5133, %v5133
      %v5229 = vmul.f32 %v5134, %v5134
      %v5230 = vmul.f32 %v5135, %v5135
      %v5231 = vmul.f32 %v5136, %v5136
      %v5232 = vmul.f32 %v5137, %v5137
      %v5233 = vmul.f32 %v5138, %v5138
      %v5234 = vmul.f32 %v5139, %v5139
      %v5235 = vmul.f32 %v5140, %v5140
      %v5236 = vmul.f32 %v5141, %v5141
      %v5237 = vmul.f32 %v5142, %v5142
      %v5238 = vmul.f32 %v5143, %v5143
      %v5239 = vmul.f32 %v5144, %v5144
      %v5240 = vmul.f32 %v5145, %v5145
      %v5241 = vmul.f32 %v5146, %v5146
      %v5242 = vmul.f32 %v5147, %v5147
      %v5243 = vmul.f32 %v5148, %v5148
      %v5244 = vmul.f32 %v5149, %v5149
      %v5245 = vmul.f32 %v5150, %v5150
      %v5246 = vmul.f32 %v5151, %v5151
      %v5247 = vmul.f32 %v5152, %v5152
      %v5248 = vmul.f32 %v5153, %v5153
      %v5249 = vmul.f32 %v5154, %v5154
      %v5250 = vmul.f32 %v5155, %v5155
      %v5251 = vmul.f32 %v5156, %v5156
      %v5252 = vmul.f32 %v5157, %v5157
      %v5253 = vmul.f32 %v5158, %v5158
      %v5254 = vmul.f32 %v5159, %v5159
      %v5255 = vmul.f32 %v5160, %v5160
      %v5256 = vmul.f32 %v5161, %v5161
      %v5257 = vmul.f32 %v5162, %v5162
      %v5258 = vmul.f32 %v5163, %v5163
      %v5259 = vmul.f32 %v5164, %v5164
      %v5260 = vmul.f32 %v5165, %v5165
      %v5261 = vmul.f32 %v5166, %v5166
      %v5262 = vmul.f32 %v5167, %v5167
      %v5263 = vmul.f32 %v5168, %v5168
      %v5264 = vmul.f32 %v5169, %v5169
      %v5265 = vmul.f32 %v5170, %v5170
      %v5266 = vmul.f32 %v5171, %v5171
      %v5267 = vmul.f32 %v5172, %v5172
      %v5268 = vmul.f32 %v5173, %v5173
      %v5269 = vmul.f32 %v5174, %v5174
      %v5270 = vmul.f32 %v5175, %v5175
      %v5271 = vmul.f32 %v5176, %v5176
      %v5272 = vmul.f32 %v5177, %v5177
      %v5273 = vmul.f32 %v5178, %v5178
      %v5274 = vadd.f32 %v5226, %v5227
      %v5275 = vadd.f32 %v5274, %v5228
      %v5276 = vadd.f32 %v5275, %v5229
      %v5277 = vadd.f32 %v5276, %v5230
      %v5278 = vadd.f32 %v5277, %v5231
      %v5279 = vadd.f32 %v5278, %v5232
      %v5280 = vadd.f32 %v5279, %v5233
      %v5281 = vadd.f32 %v5280, %v5234
      %v5282 = vadd.f32 %v5281, %v5235
      %v5283 = vadd.f32 %v5282, %v5236
      %v5284 = vadd.f32 %v5283, %v5237
      %v5285 = vadd.f32 %v5284, %v5238
      %v5286 = vadd.f32 %v5285, %v5239
      %v5287 = vadd.f32 %v5286, %v5240
      %v5288 = vadd.f32 %v5287, %v5241
      %v5289 = vadd.f32 %v5288, %v5242
      %v5290 = vadd.f32 %v5289, %v5243
      %v5291 = vadd.f32 %v5290, %v5244
      %v5292 = vadd.f32 %v5291, %v5245
      %v5293 = vadd.f32 %v5292, %v5246
      %v5294 = vadd.f32 %v5293, %v5247
      %v5295 = vadd.f32 %v5294, %v5248
      %v5296 = vadd.f32 %v5295, %v5249
      %v5297 = vadd.f32 %v5296, %v5250
      %v5298 = vadd.f32 %v5297, %v5251
      %v5299 = vadd.f32 %v5298, %v5252
      %v5300 = vadd.f32 %v5299, %v5253
      %v5301 = vadd.f32 %v5300, %v5254
      %v5302 = vadd.f32 %v5301, %v5255
      %v5303 = vadd.f32 %v5302, %v5256
      %v5304 = vadd.f32 %v5303, %v5257
      %v5305 = vadd.f32 %v5304, %v5258
      %v5306 = vadd.f32 %v5305, %v5259
      %v5307 = vadd.f32 %v5306, %v5260
      %v5308 = vadd.f32 %v5307, %v5261
      %v5309 = vadd.f32 %v5308, %v5262
      %v5310 = vadd.f32 %v5309, %v5263
      %v5311 = vadd.f32 %v5310, %v5264
      %v5312 = vadd.f32 %v5311, %v5265
      %v5313 = vadd.f32 %v5312, %v5266
      %v5314 = vadd.f32 %v5313, %v5267
      %v5315 = vadd.f32 %v5314, %v5268
      %v5316 = vadd.f32 %v5315, %v5269
      %v5317 = vadd.f32 %v5316, %v5270
      %v5318 = vadd.f32 %v5317, %v5271
      %v5319 = vadd.f32 %v5318, %v5272
      %v5320 = vadd.f32 %v5319, %v5273
      %5321 = vmatpush.msra.mxu0 %v940
      %5322 = vmatpush.msra.mxu0 %v939
      %5323 = vmatpush.msra.mxu0 %v938
      %5324 = vmatpush.msra.mxu0 %v937
      %5325 = vmatpush.msra.mxu0 %v936
      %5326 = vmatpush.msra.mxu0 %v935
      %5327 = vmatpush.msra.mxu0 %v934
      %5328 = vmatpush.msra.mxu0 %v933
      %5329 = vmatpush.msra.mxu0 %v932
      %5330 = vmatpush.msra.mxu0 %v931
      %5331 = vmatpush.msra.mxu0 %v930
      %5332 = vmatpush.msra.mxu0 %v929
      %5333 = vmatpush.msra.mxu0 %v928
      %5334 = vmatpush.msra.mxu0 %v927
      %5335 = vmatpush.msra.mxu0 %v926
      %5336 = vmatpush.msra.mxu0 %v925
      %5337 = vmatmul.f32.gmra.mxu0 %v5225
      %v5338 = vpop.f32.mrf.mxu0
      %v5339 = vadd.f32 0.0, %v5338
      %5340 = vdwg.mxu0
      %v5341 = vrot.slane %v5339, 4
      %v5342 = vadd.f32 %v5339, %v5341
      %v5343 = vrot.slane %v5342, 2
      %v5344 = vadd.f32 %v5342, %v5343
      %v5345 = vrot.slane %v5344, 1
      %v5346 = vadd.f32 %v5344, %v5345
      %5347 = vmatpush.msra.mxu0 %v940
      %5348 = vmatpush.msra.mxu0 %v939
      %5349 = vmatpush.msra.mxu0 %v938
      %5350 = vmatpush.msra.mxu0 %v937
      %5351 = vmatpush.msra.mxu0 %v936
      %5352 = vmatpush.msra.mxu0 %v935
      %5353 = vmatpush.msra.mxu0 %v934
      %5354 = vmatpush.msra.mxu0 %v933
      %5355 = vmatpush.msra.mxu0 %v932
      %5356 = vmatpush.msra.mxu0 %v931
      %5357 = vmatpush.msra.mxu0 %v930
      %5358 = vmatpush.msra.mxu0 %v929
      %5359 = vmatpush.msra.mxu0 %v928
      %5360 = vmatpush.msra.mxu0 %v927
      %5361 = vmatpush.msra.mxu0 %v926
      %5362 = vmatpush.msra.mxu0 %v925
      %5363 = vmatmul.f32.gmra.mxu0 %v5320
      %v5364 = vpop.f32.mrf.mxu0
      %v5365 = vadd.f32 0.0, %v5364
      %5366 = vdwg.mxu0
      %v5367 = vrot.slane %v5365, 4
      %v5368 = vadd.f32 %v5365, %v5367
      %v5369 = vrot.slane %v5368, 2
      %v5370 = vadd.f32 %v5368, %v5369
      %v5371 = vrot.slane %v5370, 1
      %v5372 = vadd.f32 %v5370, %v5371
      %v5373 = vmul.f32 %v5346, %v5346
      %v5374 = vsub.f32 %v5372, %v5373
      %v5375 = vadd.f32 %v5374, 1e-05
      %v5376 = vrsqrt.pop %v5375
      %v5377 = vmul.f32 %v5376, %v5375
      %v5378 = vmul.f32 %v5377, %v5376
      %v5379 = vmul.f32 0.5, %v5378
      %v5380 = vsub.f32 1.5, %v5379
      %v5381 = vmul.f32 %v5376, %v5380
      %vm5382 = vweird.f32 %v5375
      %vm5383 = vweird.f32 %v5376
      %vm5384 = vmor %vm5382, %vm5383
      %v5385 = vsel %vm5384, %v5376, %v5381
      %v5386 = vsub.f32 %v4843, %v5346
      %v5387 = vsub.f32 %v4844, %v5346
      %v5388 = vsub.f32 %v4845, %v5346
      %v5389 = vsub.f32 %v4846, %v5346
      %v5390 = vsub.f32 %v4847, %v5346
      %v5391 = vsub.f32 %v4848, %v5346
      %v5392 = vsub.f32 %v4849, %v5346
      %v5393 = vsub.f32 %v4850, %v5346
      %v5394 = vsub.f32 %v4851, %v5346
      %v5395 = vsub.f32 %v4852, %v5346
      %v5396 = vsub.f32 %v4853, %v5346
      %v5397 = vsub.f32 %v4854, %v5346
      %v5398 = vsub.f32 %v4855, %v5346
      %v5399 = vsub.f32 %v4856, %v5346
      %v5400 = vsub.f32 %v4857, %v5346
      %v5401 = vsub.f32 %v4858, %v5346
      %v5402 = vsub.f32 %v4859, %v5346
      %v5403 = vsub.f32 %v4860, %v5346
      %v5404 = vsub.f32 %v4861, %v5346
      %v5405 = vsub.f32 %v4862, %v5346
      %v5406 = vsub.f32 %v4863, %v5346
      %v5407 = vsub.f32 %v4864, %v5346
      %v5408 = vsub.f32 %v4865, %v5346
      %v5409 = vsub.f32 %v4866, %v5346
      %v5410 = vsub.f32 %v4867, %v5346
      %v5411 = vsub.f32 %v4868, %v5346
      %v5412 = vsub.f32 %v4869, %v5346
      %v5413 = vsub.f32 %v4870, %v5346
      %v5414 = vsub.f32 %v4871, %v5346
      %v5415 = vsub.f32 %v4872, %v5346
      %v5416 = vsub.f32 %v4873, %v5346
      %v5417 = vsub.f32 %v4874, %v5346
      %v5418 = vsub.f32 %v4875, %v5346
      %v5419 = vsub.f32 %v4876, %v5346
      %v5420 = vsub.f32 %v4877, %v5346
      %v5421 = vsub.f32 %v4878, %v5346
      %v5422 = vsub.f32 %v4879, %v5346
      %v5423 = vsub.f32 %v4880, %v5346
      %v5424 = vsub.f32 %v4881, %v5346
      %v5425 = vsub.f32 %v4882, %v5346
      %v5426 = vsub.f32 %v4883, %v5346
      %v5427 = vsub.f32 %v4884, %v5346
      %v5428 = vsub.f32 %v4885, %v5346
      %v5429 = vsub.f32 %v4886, %v5346
      %v5430 = vsub.f32 %v4887, %v5346
      %v5431 = vsub.f32 %v4888, %v5346
      %v5432 = vsub.f32 %v4889, %v5346
      %v5433 = vsub.f32 %v4890, %v5346
      %v5434 = vmul.f32 %v5386, %v5385
      %v5435 = vmul.f32 %v5387, %v5385
      %v5436 = vmul.f32 %v5388, %v5385
      %v5437 = vmul.f32 %v5389, %v5385
      %v5438 = vmul.f32 %v5390, %v5385
      %v5439 = vmul.f32 %v5391, %v5385
      %v5440 = vmul.f32 %v5392, %v5385
      %v5441 = vmul.f32 %v5393, %v5385
      %v5442 = vmul.f32 %v5394, %v5385
      %v5443 = vmul.f32 %v5395, %v5385
      %v5444 = vmul.f32 %v5396, %v5385
      %v5445 = vmul.f32 %v5397, %v5385
      %v5446 = vmul.f32 %v5398, %v5385
      %v5447 = vmul.f32 %v5399, %v5385
      %v5448 = vmul.f32 %v5400, %v5385
      %v5449 = vmul.f32 %v5401, %v5385
      %v5450 = vmul.f32 %v5402, %v5385
      %v5451 = vmul.f32 %v5403, %v5385
      %v5452 = vmul.f32 %v5404, %v5385
      %v5453 = vmul.f32 %v5405, %v5385
      %v5454 = vmul.f32 %v5406, %v5385
      %v5455 = vmul.f32 %v5407, %v5385
      %v5456 = vmul.f32 %v5408, %v5385
      %v5457 = vmul.f32 %v5409, %v5385
      %v5458 = vmul.f32 %v5410, %v5385
      %v5459 = vmul.f32 %v5411, %v5385
      %v5460 = vmul.f32 %v5412, %v5385
      %v5461 = vmul.f32 %v5413, %v5385
      %v5462 = vmul.f32 %v5414, %v5385
      %v5463 = vmul.f32 %v5415, %v5385
      %v5464 = vmul.f32 %v5416, %v5385
      %v5465 = vmul.f32 %v5417, %v5385
      %v5466 = vmul.f32 %v5418, %v5385
      %v5467 = vmul.f32 %v5419, %v5385
      %v5468 = vmul.f32 %v5420, %v5385
      %v5469 = vmul.f32 %v5421, %v5385
      %v5470 = vmul.f32 %v5422, %v5385
      %v5471 = vmul.f32 %v5423, %v5385
      %v5472 = vmul.f32 %v5424, %v5385
      %v5473 = vmul.f32 %v5425, %v5385
      %v5474 = vmul.f32 %v5426, %v5385
      %v5475 = vmul.f32 %v5427, %v5385
      %v5476 = vmul.f32 %v5428, %v5385
      %v5477 = vmul.f32 %v5429, %v5385
      %v5478 = vmul.f32 %v5430, %v5385
      %v5479 = vmul.f32 %v5431, %v5385
      %v5480 = vmul.f32 %v5432, %v5385
      %v5481 = vmul.f32 %v5433, %v5385
      %v5482 = vmax.f32 %v5434, 0.0
      %v5483 = vmax.f32 %v5435, 0.0
      %v5484 = vmax.f32 %v5436, 0.0
      %v5485 = vmax.f32 %v5437, 0.0
      %v5486 = vmax.f32 %v5438, 0.0
      %v5487 = vmax.f32 %v5439, 0.0
      %v5488 = vmax.f32 %v5440, 0.0
      %v5489 = vmax.f32 %v5441, 0.0
      %v5490 = vmax.f32 %v5442, 0.0
      %v5491 = vmax.f32 %v5443, 0.0
      %v5492 = vmax.f32 %v5444, 0.0
      %v5493 = vmax.f32 %v5445, 0.0
      %v5494 = vmax.f32 %v5446, 0.0
      %v5495 = vmax.f32 %v5447, 0.0
      %v5496 = vmax.f32 %v5448, 0.0
      %v5497 = vmax.f32 %v5449, 0.0
      %v5498 = vmax.f32 %v5450, 0.0
      %v5499 = vmax.f32 %v5451, 0.0
      %v5500 = vmax.f32 %v5452, 0.0
      %v5501 = vmax.f32 %v5453, 0.0
      %v5502 = vmax.f32 %v5454, 0.0
      %v5503 = vmax.f32 %v5455, 0.0
      %v5504 = vmax.f32 %v5456, 0.0
      %v5505 = vmax.f32 %v5457, 0.0
      %v5506 = vmax.f32 %v5458, 0.0
      %v5507 = vmax.f32 %v5459, 0.0
      %v5508 = vmax.f32 %v5460, 0.0
      %v5509 = vmax.f32 %v5461, 0.0
      %v5510 = vmax.f32 %v5462, 0.0
      %v5511 = vmax.f32 %v5463, 0.0
      %v5512 = vmax.f32 %v5464, 0.0
      %v5513 = vmax.f32 %v5465, 0.0
      %v5514 = vmax.f32 %v5466, 0.0
      %v5515 = vmax.f32 %v5467, 0.0
      %v5516 = vmax.f32 %v5468, 0.0
      %v5517 = vmax.f32 %v5469, 0.0
      %v5518 = vmax.f32 %v5470, 0.0
      %v5519 = vmax.f32 %v5471, 0.0
      %v5520 = vmax.f32 %v5472, 0.0
      %v5521 = vmax.f32 %v5473, 0.0
      %v5522 = vmax.f32 %v5474, 0.0
      %v5523 = vmax.f32 %v5475, 0.0
      %v5524 = vmax.f32 %v5476, 0.0
      %v5525 = vmax.f32 %v5477, 0.0
      %v5526 = vmax.f32 %v5478, 0.0
      %v5527 = vmax.f32 %v5479, 0.0
      %v5528 = vmax.f32 %v5480, 0.0
      %v5529 = vmax.f32 %v5481, 0.0
      %v5530 = vmul.f32 %v5482, %v4894
      %v5531 = vmul.f32 %v5483, %v4899
      %v5532 = vmul.f32 %v5484, %v4904
      %v5533 = vmul.f32 %v5485, %v4909
      %v5534 = vmul.f32 %v5486, %v4914
      %v5535 = vmul.f32 %v5487, %v4919
      %v5536 = vmul.f32 %v5488, %v4924
      %v5537 = vmul.f32 %v5489, %v4929
      %v5538 = vmul.f32 %v5490, %v4934
      %v5539 = vmul.f32 %v5491, %v4939
      %v5540 = vmul.f32 %v5492, %v4944
      %v5541 = vmul.f32 %v5493, %v4949
      %v5542 = vmul.f32 %v5494, %v4954
      %v5543 = vmul.f32 %v5495, %v4959
      %v5544 = vmul.f32 %v5496, %v4964
      %v5545 = vmul.f32 %v5497, %v4969
      %v5546 = vmul.f32 %v5498, %v4974
      %v5547 = vmul.f32 %v5499, %v4979
      %v5548 = vmul.f32 %v5500, %v4984
      %v5549 = vmul.f32 %v5501, %v4989
      %v5550 = vmul.f32 %v5502, %v4994
      %v5551 = vmul.f32 %v5503, %v4999
      %v5552 = vmul.f32 %v5504, %v5004
      %v5553 = vmul.f32 %v5505, %v5009
      %v5554 = vmul.f32 %v5506, %v5014
      %v5555 = vmul.f32 %v5507, %v5019
      %v5556 = vmul.f32 %v5508, %v5024
      %v5557 = vmul.f32 %v5509, %v5029
      %v5558 = vmul.f32 %v5510, %v5034
      %v5559 = vmul.f32 %v5511, %v5039
      %v5560 = vmul.f32 %v5512, %v5044
      %v5561 = vmul.f32 %v5513, %v5049
      %v5562 = vmul.f32 %v5514, %v5054
      %v5563 = vmul.f32 %v5515, %v5059
      %v5564 = vmul.f32 %v5516, %v5064
      %v5565 = vmul.f32 %v5517, %v5069
      %v5566 = vmul.f32 %v5518, %v5074
      %v5567 = vmul.f32 %v5519, %v5079
      %v5568 = vmul.f32 %v5520, %v5084
      %v5569 = vmul.f32 %v5521, %v5089
      %v5570 = vmul.f32 %v5522, %v5094
      %v5571 = vmul.f32 %v5523, %v5099
      %v5572 = vmul.f32 %v5524, %v5104
      %v5573 = vmul.f32 %v5525, %v5109
      %v5574 = vmul.f32 %v5526, %v5114
      %v5575 = vmul.f32 %v5527, %v5119
      %v5576 = vmul.f32 %v5528, %v5124
      %v5577 = vmul.f32 %v5529, %v5129
      %v5578 = vpack.c.bf16 %v5530, %v5530
      %v5579 = vpack.c.bf16 %v5531, %v5531
      %v5580 = vpack.c.bf16 %v5532, %v5532
      %v5581 = vpack.c.bf16 %v5533, %v5533
      %v5582 = vpack.c.bf16 %v5534, %v5534
      %v5583 = vpack.c.bf16 %v5535, %v5535
      %v5584 = vpack.c.bf16 %v5536, %v5536
      %v5585 = vpack.c.bf16 %v5537, %v5537
      %v5586 = vpack.c.bf16 %v5538, %v5538
      %v5587 = vpack.c.bf16 %v5539, %v5539
      %v5588 = vpack.c.bf16 %v5540, %v5540
      %v5589 = vpack.c.bf16 %v5541, %v5541
      %v5590 = vpack.c.bf16 %v5542, %v5542
      %v5591 = vpack.c.bf16 %v5543, %v5543
      %v5592 = vpack.c.bf16 %v5544, %v5544
      %v5593 = vpack.c.bf16 %v5545, %v5545
      %v5594 = vpack.c.bf16 %v5546, %v5546
      %v5595 = vpack.c.bf16 %v5547, %v5547
      %v5596 = vpack.c.bf16 %v5548, %v5548
      %v5597 = vpack.c.bf16 %v5549, %v5549
      %v5598 = vpack.c.bf16 %v5550, %v5550
      %v5599 = vpack.c.bf16 %v5551, %v5551
      %v5600 = vpack.c.bf16 %v5552, %v5552
      %v5601 = vpack.c.bf16 %v5553, %v5553
      %v5602 = vpack.c.bf16 %v5554, %v5554
      %v5603 = vpack.c.bf16 %v5555, %v5555
      %v5604 = vpack.c.bf16 %v5556, %v5556
      %v5605 = vpack.c.bf16 %v5557, %v5557
      %v5606 = vpack.c.bf16 %v5558, %v5558
      %v5607 = vpack.c.bf16 %v5559, %v5559
      %v5608 = vpack.c.bf16 %v5560, %v5560
      %v5609 = vpack.c.bf16 %v5561, %v5561
      %v5610 = vpack.c.bf16 %v5562, %v5562
      %v5611 = vpack.c.bf16 %v5563, %v5563
      %v5612 = vpack.c.bf16 %v5564, %v5564
      %v5613 = vpack.c.bf16 %v5565, %v5565
      %v5614 = vpack.c.bf16 %v5566, %v5566
      %v5615 = vpack.c.bf16 %v5567, %v5567
      %v5616 = vpack.c.bf16 %v5568, %v5568
      %v5617 = vpack.c.bf16 %v5569, %v5569
      %v5618 = vpack.c.bf16 %v5570, %v5570
      %v5619 = vpack.c.bf16 %v5571, %v5571
      %v5620 = vpack.c.bf16 %v5572, %v5572
      %v5621 = vpack.c.bf16 %v5573, %v5573
      %v5622 = vpack.c.bf16 %v5574, %v5574
      %v5623 = vpack.c.bf16 %v5575, %v5575
      %v5624 = vpack.c.bf16 %v5576, %v5576
      %v5625 = vpack.c.bf16 %v5577, %v5577
      %v5627 = vshrl.u32 %v5578, 16
      %v5629 = vrot.slane %v5627, 7
      %v5630 = vshll.u32 %v5578, 16
      %v5632 = vor.u32 %v5629, %v5630
      %v5633 = vrot.slane %v5629, 4
      %v5635 = vshrl.u32 %v5579, 16
      %v5637 = vrot.slane %v5635, 7
      %v5638 = vshll.u32 %v5579, 16
      %v5640 = vor.u32 %v5637, %v5638
      %v5641 = vsel %vm343, %v5633, %v5640
      %v5642 = vrot.slane %v5637, 4
      %v5644 = vshrl.u32 %v5580, 16
      %v5646 = vrot.slane %v5644, 7
      %v5647 = vshll.u32 %v5580, 16
      %v5649 = vor.u32 %v5646, %v5647
      %v5650 = vsel %vm343, %v5642, %v5649
      %v5651 = vrot.slane %v5646, 4
      %v5653 = vshrl.u32 %v5581, 16
      %v5655 = vrot.slane %v5653, 7
      %v5656 = vshll.u32 %v5581, 16
      %v5658 = vor.u32 %v5655, %v5656
      %v5659 = vsel %vm343, %v5651, %v5658
      %v5660 = vrot.slane %v5655, 4
      %v5662 = vshrl.u32 %v5582, 16
      %v5664 = vrot.slane %v5662, 7
      %v5665 = vshll.u32 %v5582, 16
      %v5667 = vor.u32 %v5664, %v5665
      %v5668 = vsel %vm343, %v5660, %v5667
      %v5669 = vrot.slane %v5664, 4
      %v5671 = vshrl.u32 %v5583, 16
      %v5673 = vrot.slane %v5671, 7
      %v5674 = vshll.u32 %v5583, 16
      %v5676 = vor.u32 %v5673, %v5674
      %v5677 = vsel %vm343, %v5669, %v5676
      %v5678 = vrot.slane %v5673, 4
      %v5680 = vshrl.u32 %v5584, 16
      %v5682 = vrot.slane %v5680, 7
      %v5683 = vshll.u32 %v5584, 16
      %v5685 = vor.u32 %v5682, %v5683
      %v5686 = vsel %vm343, %v5678, %v5685
      %v5687 = vrot.slane %v5682, 4
      %v5689 = vshrl.u32 %v5585, 16
      %v5691 = vrot.slane %v5689, 7
      %v5692 = vshll.u32 %v5585, 16
      %v5694 = vor.u32 %v5691, %v5692
      %v5695 = vsel %vm343, %v5687, %v5694
      %v5696 = vrot.slane %v5691, 4
      %v5698 = vshrl.u32 %v5586, 16
      %v5700 = vrot.slane %v5698, 7
      %v5701 = vshll.u32 %v5586, 16
      %v5703 = vor.u32 %v5700, %v5701
      %v5704 = vsel %vm343, %v5696, %v5703
      %v5705 = vrot.slane %v5700, 4
      %v5707 = vshrl.u32 %v5587, 16
      %v5709 = vrot.slane %v5707, 7
      %v5710 = vshll.u32 %v5587, 16
      %v5712 = vor.u32 %v5709, %v5710
      %v5713 = vsel %vm343, %v5705, %v5712
      %v5714 = vrot.slane %v5709, 4
      %v5716 = vshrl.u32 %v5588, 16
      %v5718 = vrot.slane %v5716, 7
      %v5719 = vshll.u32 %v5588, 16
      %v5721 = vor.u32 %v5718, %v5719
      %v5722 = vsel %vm343, %v5714, %v5721
      %v5723 = vrot.slane %v5718, 4
      %v5725 = vshrl.u32 %v5589, 16
      %v5727 = vrot.slane %v5725, 7
      %v5728 = vshll.u32 %v5589, 16
      %v5730 = vor.u32 %v5727, %v5728
      %v5731 = vsel %vm343, %v5723, %v5730
      %v5732 = vrot.slane %v5727, 4
      %v5734 = vshrl.u32 %v5590, 16
      %v5736 = vrot.slane %v5734, 7
      %v5737 = vshll.u32 %v5590, 16
      %v5739 = vor.u32 %v5736, %v5737
      %v5740 = vsel %vm343, %v5732, %v5739
      %v5741 = vrot.slane %v5736, 4
      %v5743 = vshrl.u32 %v5591, 16
      %v5745 = vrot.slane %v5743, 7
      %v5746 = vshll.u32 %v5591, 16
      %v5748 = vor.u32 %v5745, %v5746
      %v5749 = vsel %vm343, %v5741, %v5748
      %v5750 = vrot.slane %v5745, 4
      %v5752 = vshrl.u32 %v5592, 16
      %v5754 = vrot.slane %v5752, 7
      %v5755 = vshll.u32 %v5592, 16
      %v5757 = vor.u32 %v5754, %v5755
      %v5758 = vsel %vm343, %v5750, %v5757
      %v5759 = vrot.slane %v5754, 4
      %v5761 = vshrl.u32 %v5593, 16
      %v5763 = vrot.slane %v5761, 7
      %v5764 = vshll.u32 %v5593, 16
      %v5766 = vor.u32 %v5763, %v5764
      %v5767 = vsel %vm343, %v5759, %v5766
      %v5768 = vrot.slane %v5763, 4
      %v5770 = vshrl.u32 %v5594, 16
      %v5772 = vrot.slane %v5770, 7
      %v5773 = vshll.u32 %v5594, 16
      %v5775 = vor.u32 %v5772, %v5773
      %v5776 = vsel %vm343, %v5768, %v5775
      %v5777 = vrot.slane %v5772, 4
      %v5779 = vshrl.u32 %v5595, 16
      %v5781 = vrot.slane %v5779, 7
      %v5782 = vshll.u32 %v5595, 16
      %v5784 = vor.u32 %v5781, %v5782
      %v5785 = vsel %vm343, %v5777, %v5784
      %v5786 = vrot.slane %v5781, 4
      %v5788 = vshrl.u32 %v5596, 16
      %v5790 = vrot.slane %v5788, 7
      %v5791 = vshll.u32 %v5596, 16
      %v5793 = vor.u32 %v5790, %v5791
      %v5794 = vsel %vm343, %v5786, %v5793
      %v5795 = vrot.slane %v5790, 4
      %v5797 = vshrl.u32 %v5597, 16
      %v5799 = vrot.slane %v5797, 7
      %v5800 = vshll.u32 %v5597, 16
      %v5802 = vor.u32 %v5799, %v5800
      %v5803 = vsel %vm343, %v5795, %v5802
      %v5804 = vrot.slane %v5799, 4
      %v5806 = vshrl.u32 %v5598, 16
      %v5808 = vrot.slane %v5806, 7
      %v5809 = vshll.u32 %v5598, 16
      %v5811 = vor.u32 %v5808, %v5809
      %v5812 = vsel %vm343, %v5804, %v5811
      %v5813 = vrot.slane %v5808, 4
      %v5815 = vshrl.u32 %v5599, 16
      %v5817 = vrot.slane %v5815, 7
      %v5818 = vshll.u32 %v5599, 16
      %v5820 = vor.u32 %v5817, %v5818
      %v5821 = vsel %vm343, %v5813, %v5820
      %v5822 = vrot.slane %v5817, 4
      %v5824 = vshrl.u32 %v5600, 16
      %v5826 = vrot.slane %v5824, 7
      %v5827 = vshll.u32 %v5600, 16
      %v5829 = vor.u32 %v5826, %v5827
      %v5830 = vsel %vm343, %v5822, %v5829
      %v5831 = vrot.slane %v5826, 4
      %v5833 = vshrl.u32 %v5601, 16
      %v5835 = vrot.slane %v5833, 7
      %v5836 = vshll.u32 %v5601, 16
      %v5838 = vor.u32 %v5835, %v5836
      %v5839 = vsel %vm343, %v5831, %v5838
      %v5840 = vrot.slane %v5835, 4
      %v5842 = vshrl.u32 %v5602, 16
      %v5844 = vrot.slane %v5842, 7
      %v5845 = vshll.u32 %v5602, 16
      %v5847 = vor.u32 %v5844, %v5845
      %v5848 = vsel %vm343, %v5840, %v5847
      %v5849 = vrot.slane %v5844, 4
      %v5851 = vshrl.u32 %v5603, 16
      %v5853 = vrot.slane %v5851, 7
      %v5854 = vshll.u32 %v5603, 16
      %v5856 = vor.u32 %v5853, %v5854
      %v5857 = vsel %vm343, %v5849, %v5856
      %v5858 = vrot.slane %v5853, 4
      %v5860 = vshrl.u32 %v5604, 16
      %v5862 = vrot.slane %v5860, 7
      %v5863 = vshll.u32 %v5604, 16
      %v5865 = vor.u32 %v5862, %v5863
      %v5866 = vsel %vm343, %v5858, %v5865
      %v5867 = vrot.slane %v5862, 4
      %v5869 = vshrl.u32 %v5605, 16
      %v5871 = vrot.slane %v5869, 7
      %v5872 = vshll.u32 %v5605, 16
      %v5874 = vor.u32 %v5871, %v5872
      %v5875 = vsel %vm343, %v5867, %v5874
      %v5876 = vrot.slane %v5871, 4
      %v5878 = vshrl.u32 %v5606, 16
      %v5880 = vrot.slane %v5878, 7
      %v5881 = vshll.u32 %v5606, 16
      %v5883 = vor.u32 %v5880, %v5881
      %v5884 = vsel %vm343, %v5876, %v5883
      %v5885 = vrot.slane %v5880, 4
      %v5887 = vshrl.u32 %v5607, 16
      %v5889 = vrot.slane %v5887, 7
      %v5890 = vshll.u32 %v5607, 16
      %v5892 = vor.u32 %v5889, %v5890
      %v5893 = vsel %vm343, %v5885, %v5892
      %v5894 = vrot.slane %v5889, 4
      %v5896 = vshrl.u32 %v5608, 16
      %v5898 = vrot.slane %v5896, 7
      %v5899 = vshll.u32 %v5608, 16
      %v5901 = vor.u32 %v5898, %v5899
      %v5902 = vsel %vm343, %v5894, %v5901
      %v5903 = vrot.slane %v5898, 4
      %v5905 = vshrl.u32 %v5609, 16
      %v5907 = vrot.slane %v5905, 7
      %v5908 = vshll.u32 %v5609, 16
      %v5910 = vor.u32 %v5907, %v5908
      %v5911 = vsel %vm343, %v5903, %v5910
      %v5912 = vrot.slane %v5907, 4
      %v5914 = vshrl.u32 %v5610, 16
      %v5916 = vrot.slane %v5914, 7
      %v5917 = vshll.u32 %v5610, 16
      %v5919 = vor.u32 %v5916, %v5917
      %v5920 = vsel %vm343, %v5912, %v5919
      %v5921 = vrot.slane %v5916, 4
      %v5923 = vshrl.u32 %v5611, 16
      %v5925 = vrot.slane %v5923, 7
      %v5926 = vshll.u32 %v5611, 16
      %v5928 = vor.u32 %v5925, %v5926
      %v5929 = vsel %vm343, %v5921, %v5928
      %v5930 = vrot.slane %v5925, 4
      %v5932 = vshrl.u32 %v5612, 16
      %v5934 = vrot.slane %v5932, 7
      %v5935 = vshll.u32 %v5612, 16
      %v5937 = vor.u32 %v5934, %v5935
      %v5938 = vsel %vm343, %v5930, %v5937
      %v5939 = vrot.slane %v5934, 4
      %v5941 = vshrl.u32 %v5613, 16
      %v5943 = vrot.slane %v5941, 7
      %v5944 = vshll.u32 %v5613, 16
      %v5946 = vor.u32 %v5943, %v5944
      %v5947 = vsel %vm343, %v5939, %v5946
      %v5948 = vrot.slane %v5943, 4
      %v5950 = vshrl.u32 %v5614, 16
      %v5952 = vrot.slane %v5950, 7
      %v5953 = vshll.u32 %v5614, 16
      %v5955 = vor.u32 %v5952, %v5953
      %v5956 = vsel %vm343, %v5948, %v5955
      %v5957 = vrot.slane %v5952, 4
      %v5959 = vshrl.u32 %v5615, 16
      %v5961 = vrot.slane %v5959, 7
      %v5962 = vshll.u32 %v5615, 16
      %v5964 = vor.u32 %v5961, %v5962
      %v5965 = vsel %vm343, %v5957, %v5964
      %v5966 = vrot.slane %v5961, 4
      %v5968 = vshrl.u32 %v5616, 16
      %v5970 = vrot.slane %v5968, 7
      %v5971 = vshll.u32 %v5616, 16
      %v5973 = vor.u32 %v5970, %v5971
      %v5974 = vsel %vm343, %v5966, %v5973
      %v5975 = vrot.slane %v5970, 4
      %v5977 = vshrl.u32 %v5617, 16
      %v5979 = vrot.slane %v5977, 7
      %v5980 = vshll.u32 %v5617, 16
      %v5982 = vor.u32 %v5979, %v5980
      %v5983 = vsel %vm343, %v5975, %v5982
      %v5984 = vrot.slane %v5979, 4
      %v5986 = vshrl.u32 %v5618, 16
      %v5988 = vrot.slane %v5986, 7
      %v5989 = vshll.u32 %v5618, 16
      %v5991 = vor.u32 %v5988, %v5989
      %v5992 = vsel %vm343, %v5984, %v5991
      %v5993 = vrot.slane %v5988, 4
      %v5995 = vshrl.u32 %v5619, 16
      %v5997 = vrot.slane %v5995, 7
      %v5998 = vshll.u32 %v5619, 16
      %v6000 = vor.u32 %v5997, %v5998
      %v6001 = vsel %vm343, %v5993, %v6000
      %v6002 = vrot.slane %v5997, 4
      %v6004 = vshrl.u32 %v5620, 16
      %v6006 = vrot.slane %v6004, 7
      %v6007 = vshll.u32 %v5620, 16
      %v6009 = vor.u32 %v6006, %v6007
      %v6010 = vsel %vm343, %v6002, %v6009
      %v6011 = vrot.slane %v6006, 4
      %v6013 = vshrl.u32 %v5621, 16
      %v6015 = vrot.slane %v6013, 7
      %v6016 = vshll.u32 %v5621, 16
      %v6018 = vor.u32 %v6015, %v6016
      %v6019 = vsel %vm343, %v6011, %v6018
      %v6020 = vrot.slane %v6015, 4
      %v6022 = vshrl.u32 %v5622, 16
      %v6024 = vrot.slane %v6022, 7
      %v6025 = vshll.u32 %v5622, 16
      %v6027 = vor.u32 %v6024, %v6025
      %v6028 = vsel %vm343, %v6020, %v6027
      %v6029 = vrot.slane %v6024, 4
      %v6031 = vshrl.u32 %v5623, 16
      %v6033 = vrot.slane %v6031, 7
      %v6034 = vshll.u32 %v5623, 16
      %v6036 = vor.u32 %v6033, %v6034
      %v6037 = vsel %vm343, %v6029, %v6036
      %v6038 = vrot.slane %v6033, 4
      %v6040 = vshrl.u32 %v5624, 16
      %v6042 = vrot.slane %v6040, 7
      %v6043 = vshll.u32 %v5624, 16
      %v6045 = vor.u32 %v6042, %v6043
      %v6046 = vsel %vm343, %v6038, %v6045
      %v6047 = vrot.slane %v6042, 4
      %v6049 = vshrl.u32 %v5625, 16
      %v6051 = vrot.slane %v6049, 7
      %v6052 = vshll.u32 %v5625, 16
      %v6054 = vor.u32 %v6051, %v6052
      %v6055 = vsel %vm343, %v6047, %v6054
      %v6056 = vrot.slane %v6051, 4
      %v6106 = vsel %vm237, %v5632, %v2499
      %6107 = vst [vmem:[#allocation2 + $0xc] sm:$0xf] %v6106
      %6108 = vst [vmem:[#allocation2 + $0x10] sm:$0xf] %v5641
      %6109 = vst [vmem:[#allocation2 + $0x14] sm:$0xf] %v5650
      %6110 = vst [vmem:[#allocation2 + $0x18] sm:$0xf] %v5659
      %6111 = vst [vmem:[#allocation2 + $0x1c] sm:$0xf] %v5668
      %6112 = vst [vmem:[#allocation2 + $0x20] sm:$0xf] %v5677
      %6113 = vst [vmem:[#allocation2 + $0x24] sm:$0xf] %v5686
      %6114 = vst [vmem:[#allocation2 + $0x28] sm:$0xf] %v5695
      %6115 = vst [vmem:[#allocation2 + $0x2c] sm:$0xf] %v5704
      %6116 = vst [vmem:[#allocation2 + $0x30] sm:$0xf] %v5713
      %6117 = vst [vmem:[#allocation2 + $0x34] sm:$0xf] %v5722
      %6118 = vst [vmem:[#allocation2 + $0x38] sm:$0xf] %v5731
      %6119 = vst [vmem:[#allocation2 + $0x3c] sm:$0xf] %v5740
      %6120 = vst [vmem:[#allocation2 + $0x40] sm:$0xf] %v5749
      %6121 = vst [vmem:[#allocation2 + $0x44] sm:$0xf] %v5758
      %6122 = vst [vmem:[#allocation2 + $0x48] sm:$0xf] %v5767
      %6123 = vst [vmem:[#allocation2 + $0x4c] sm:$0xf] %v5776
      %6124 = vst [vmem:[#allocation2 + $0x50] sm:$0xf] %v5785
      %6125 = vst [vmem:[#allocation2 + $0x54] sm:$0xf] %v5794
      %6126 = vst [vmem:[#allocation2 + $0x58] sm:$0xf] %v5803
      %6127 = vst [vmem:[#allocation2 + $0x5c] sm:$0xf] %v5812
      %6128 = vst [vmem:[#allocation2 + $0x60] sm:$0xf] %v5821
      %6129 = vst [vmem:[#allocation2 + $0x64] sm:$0xf] %v5830
      %6130 = vst [vmem:[#allocation2 + $0x68] sm:$0xf] %v5839
      %6131 = vst [vmem:[#allocation2 + $0x6c] sm:$0xf] %v5848
      %6132 = vst [vmem:[#allocation2 + $0x70] sm:$0xf] %v5857
      %6133 = vst [vmem:[#allocation2 + $0x74] sm:$0xf] %v5866
      %6134 = vst [vmem:[#allocation2 + $0x78] sm:$0xf] %v5875
      %6135 = vst [vmem:[#allocation2 + $0x7c] sm:$0xf] %v5884
      %6136 = vst [vmem:[#allocation2 + $0x80] sm:$0xf] %v5893
      %6137 = vst [vmem:[#allocation2 + $0x84] sm:$0xf] %v5902
      %6138 = vst [vmem:[#allocation2 + $0x88] sm:$0xf] %v5911
      %6139 = vst [vmem:[#allocation2 + $0x8c] sm:$0xf] %v5920
      %6140 = vst [vmem:[#allocation2 + $0x90] sm:$0xf] %v5929
      %6141 = vst [vmem:[#allocation2 + $0x94] sm:$0xf] %v5938
      %6142 = vst [vmem:[#allocation2 + $0x98] sm:$0xf] %v5947
      %6143 = vst [vmem:[#allocation2 + $0x9c] sm:$0xf] %v5956
      %6144 = vst [vmem:[#allocation2 + $0xa0] sm:$0xf] %v5965
      %6145 = vst [vmem:[#allocation2 + $0xa4] sm:$0xf] %v5974
      %6146 = vst [vmem:[#allocation2 + $0xa8] sm:$0xf] %v5983
      %6147 = vst [vmem:[#allocation2 + $0xac] sm:$0xf] %v5992
      %6148 = vst [vmem:[#allocation2 + $0xb0] sm:$0xf] %v6001
      %6149 = vst [vmem:[#allocation2 + $0xb4] sm:$0xf] %v6010
      %6150 = vst [vmem:[#allocation2 + $0xb8] sm:$0xf] %v6019
      %6151 = vst [vmem:[#allocation2 + $0xbc] sm:$0xf] %v6028
      %6152 = vst [vmem:[#allocation2 + $0xc0] sm:$0xf] %v6037
      %6153 = vst [vmem:[#allocation2 + $0xc4] sm:$0xf] %v6046
      %6154 = vst [vmem:[#allocation2 + $0xc8] sm:$0xf] %v6055
      %v6155 = vld [vmem:[#allocation2 + $0xcc] sm:$0x1]
      %v6156 = vsel %vm231, %v6056, %v6155
      %6157 = vst [vmem:[#allocation2 + $0xcc] sm:$0x1] %v6156
      %v6158 = vld [vmem:[#allocation2] sm:$0xf]
      %v6159 = vld [vmem:[#allocation2 + $0x4] sm:$0xf]
      %v6160 = vld [vmem:[#allocation2 + $0x8] sm:$0xf]
      %v6161 = vld [vmem:[#allocation2 + $0xc] sm:$0xf]
      %v6162 = vld [vmem:[#allocation2 + $0x10] sm:$0xf]
      %v6163 = vld [vmem:[#allocation2 + $0x14] sm:$0xf]
      %v6164 = vld [vmem:[#allocation2 + $0x18] sm:$0xf]
      %v6165 = vld [vmem:[#allocation2 + $0x1c] sm:$0xf]
      %v6166 = vld [vmem:[#allocation2 + $0x20] sm:$0xf]
      %v6167 = vld [vmem:[#allocation2 + $0x24] sm:$0xf]
      %v6168 = vld [vmem:[#allocation2 + $0x28] sm:$0xf]
      %v6169 = vld [vmem:[#allocation2 + $0x2c] sm:$0xf]
      %v6170 = vld [vmem:[#allocation2 + $0x30] sm:$0xf]
      %v6171 = vld [vmem:[#allocation2 + $0x34] sm:$0xf]
      %v6172 = vld [vmem:[#allocation2 + $0x38] sm:$0xf]
      %v6173 = vld [vmem:[#allocation2 + $0x3c] sm:$0xf]
      %v6174 = vld [vmem:[#allocation2 + $0x40] sm:$0xf]
      %v6175 = vld [vmem:[#allocation2 + $0x44] sm:$0xf]
      %v6176 = vld [vmem:[#allocation2 + $0x48] sm:$0xf]
      %v6177 = vld [vmem:[#allocation2 + $0x4c] sm:$0xf]
      %v6178 = vld [vmem:[#allocation2 + $0x50] sm:$0xf]
      %v6179 = vld [vmem:[#allocation2 + $0x54] sm:$0xf]
      %v6180 = vld [vmem:[#allocation2 + $0x58] sm:$0xf]
      %v6181 = vld [vmem:[#allocation2 + $0x5c] sm:$0xf]
      %v6182 = vld [vmem:[#allocation2 + $0x60] sm:$0xf]
      %v6183 = vld [vmem:[#allocation2 + $0x64] sm:$0xf]
      %v6184 = vld [vmem:[#allocation2 + $0x68] sm:$0xf]
      %v6185 = vld [vmem:[#allocation2 + $0x6c] sm:$0xf]
      %v6186 = vld [vmem:[#allocation2 + $0x70] sm:$0xf]
      %v6187 = vld [vmem:[#allocation2 + $0x74] sm:$0xf]
      %v6188 = vld [vmem:[#allocation2 + $0x78] sm:$0xf]
      %v6189 = vld [vmem:[#allocation2 + $0x7c] sm:$0xf]
      %v6190 = vld [vmem:[#allocation2 + $0x80] sm:$0xf]
      %v6191 = vld [vmem:[#allocation2 + $0x84] sm:$0xf]
      %v6192 = vld [vmem:[#allocation2 + $0x88] sm:$0xf]
      %v6193 = vld [vmem:[#allocation2 + $0x8c] sm:$0xf]
      %v6194 = vld [vmem:[#allocation2 + $0x90] sm:$0xf]
      %v6195 = vld [vmem:[#allocation2 + $0x94] sm:$0xf]
      %v6196 = vld [vmem:[#allocation2 + $0x98] sm:$0xf]
      %v6197 = vld [vmem:[#allocation2 + $0x9c] sm:$0xf]
      %v6198 = vld [vmem:[#allocation2 + $0xa0] sm:$0xf]
      %v6199 = vld [vmem:[#allocation2 + $0xa4] sm:$0xf]
      %v6200 = vld [vmem:[#allocation2 + $0xa8] sm:$0xf]
      %v6201 = vld [vmem:[#allocation2 + $0xac] sm:$0xf]
      %v6202 = vld [vmem:[#allocation2 + $0xb0] sm:$0xf]
      %v6203 = vld [vmem:[#allocation2 + $0xb4] sm:$0xf]
      %v6204 = vld [vmem:[#allocation2 + $0xb8] sm:$0xf]
      %v6205 = vld [vmem:[#allocation2 + $0xbc] sm:$0xf]
      %s6206 = scalar_lea.vmem %s1, 576
      %v6207 = vld [vmem:[%s6206] sm:$0xf]
      %v6208 = vld [vmem:[%s6206 + $0x4] sm:$0xf]
      %v6209 = vld [vmem:[%s6206 + $0x8] sm:$0xf]
      %v6210 = vld [vmem:[%s6206 + $0xc] sm:$0xf]
      %v6211 = vld [vmem:[%s6206 + $0x10] sm:$0xf]
      %v6212 = vld [vmem:[%s6206 + $0x14] sm:$0xf]
      %v6213 = vld [vmem:[%s6206 + $0x18] sm:$0xf]
      %v6214 = vld [vmem:[%s6206 + $0x1c] sm:$0xf]
      %v6215 = vld [vmem:[%s6206 + $0x20] sm:$0xf]
      %v6216 = vld [vmem:[%s6206 + $0x24] sm:$0xf]
      %v6217 = vld [vmem:[%s6206 + $0x28] sm:$0xf]
      %v6218 = vld [vmem:[%s6206 + $0x2c] sm:$0xf]
      %v6219 = vld [vmem:[%s6206 + $0x30] sm:$0xf]
      %v6220 = vld [vmem:[%s6206 + $0x34] sm:$0xf]
      %v6221 = vld [vmem:[%s6206 + $0x38] sm:$0xf]
      %v6222 = vld [vmem:[%s6206 + $0x3c] sm:$0xf]
      %v6223 = vld [vmem:[#allocation2 + $0xc0] sm:$0x1]
      %s6224 = scalar_lea.vmem %s1, 640
      %v6225 = vld [vmem:[%s6224] sm:$0xf]
      %v6226 = vld [vmem:[%s6224 + $0x4] sm:$0xf]
      %v6227 = vld [vmem:[%s6224 + $0x8] sm:$0xf]
      %v6228 = vld [vmem:[%s6224 + $0xc] sm:$0xf]
      %v6229 = vld [vmem:[%s6224 + $0x10] sm:$0xf]
      %v6230 = vld [vmem:[%s6224 + $0x14] sm:$0xf]
      %v6231 = vld [vmem:[%s6224 + $0x18] sm:$0xf]
      %v6232 = vld [vmem:[%s6224 + $0x1c] sm:$0xf]
      %v6233 = vld [vmem:[%s6224 + $0x20] sm:$0xf]
      %v6234 = vld [vmem:[%s6224 + $0x24] sm:$0xf]
      %v6235 = vld [vmem:[%s6224 + $0x28] sm:$0xf]
      %v6236 = vld [vmem:[%s6224 + $0x2c] sm:$0xf]
      %v6237 = vld [vmem:[%s6224 + $0x30] sm:$0xf]
      %v6238 = vld [vmem:[%s6224 + $0x34] sm:$0xf]
      %v6239 = vld [vmem:[%s6224 + $0x38] sm:$0xf]
      %v6240 = vld [vmem:[%s6224 + $0x3c] sm:$0xf]
      %v6290 = vunpack.c.l.b16 %v6158
      %v6291 = vunpack.c.l.b16 %v6159
      %v6292 = vunpack.c.l.b16 %v6160
      %v6293 = vunpack.c.l.b16 %v6161
      %v6294 = vunpack.c.l.b16 %v6162
      %v6295 = vunpack.c.l.b16 %v6163
      %v6296 = vunpack.c.l.b16 %v6164
      %v6297 = vunpack.c.l.b16 %v6165
      %v6298 = vunpack.c.l.b16 %v6166
      %v6299 = vunpack.c.l.b16 %v6167
      %v6300 = vunpack.c.l.b16 %v6168
      %v6301 = vunpack.c.l.b16 %v6169
      %v6302 = vunpack.c.l.b16 %v6170
      %v6303 = vunpack.c.l.b16 %v6171
      %v6304 = vunpack.c.l.b16 %v6172
      %v6305 = vunpack.c.l.b16 %v6173
      %v6306 = vunpack.c.l.b16 %v6174
      %v6307 = vunpack.c.l.b16 %v6175
      %v6308 = vunpack.c.l.b16 %v6176
      %v6309 = vunpack.c.l.b16 %v6177
      %v6310 = vunpack.c.l.b16 %v6178
      %v6311 = vunpack.c.l.b16 %v6179
      %v6312 = vunpack.c.l.b16 %v6180
      %v6313 = vunpack.c.l.b16 %v6181
      %v6314 = vunpack.c.l.b16 %v6182
      %v6315 = vunpack.c.l.b16 %v6183
      %v6316 = vunpack.c.l.b16 %v6184
      %v6317 = vunpack.c.l.b16 %v6185
      %v6318 = vunpack.c.l.b16 %v6186
      %v6319 = vunpack.c.l.b16 %v6187
      %v6320 = vunpack.c.l.b16 %v6188
      %v6321 = vunpack.c.l.b16 %v6189
      %v6322 = vunpack.c.l.b16 %v6190
      %v6323 = vunpack.c.l.b16 %v6191
      %v6324 = vunpack.c.l.b16 %v6192
      %v6325 = vunpack.c.l.b16 %v6193
      %v6326 = vunpack.c.l.b16 %v6194
      %v6327 = vunpack.c.l.b16 %v6195
      %v6328 = vunpack.c.l.b16 %v6196
      %v6329 = vunpack.c.l.b16 %v6197
      %v6330 = vunpack.c.l.b16 %v6198
      %v6331 = vunpack.c.l.b16 %v6199
      %v6332 = vunpack.c.l.b16 %v6200
      %v6333 = vunpack.c.l.b16 %v6201
      %v6334 = vunpack.c.l.b16 %v6202
      %v6335 = vunpack.c.l.b16 %v6203
      %v6336 = vunpack.c.l.b16 %v6204
      %v6337 = vunpack.c.l.b16 %v6205
      %v6338 = vunpack.c.l.b16 %v6223
      %v6339 = vpack.c.b16 %v6291, %v6290
      %v6340 = vpack.c.b16 %v6293, %v6292
      %v6341 = vpack.c.b16 %v6295, %v6294
      %v6342 = vpack.c.b16 %v6297, %v6296
      %v6343 = vpack.c.b16 %v6299, %v6298
      %v6344 = vpack.c.b16 %v6301, %v6300
      %v6345 = vpack.c.b16 %v6303, %v6302
      %v6346 = vpack.c.b16 %v6305, %v6304
      %v6347 = vpack.c.b16 %v6307, %v6306
      %v6348 = vpack.c.b16 %v6309, %v6308
      %v6349 = vpack.c.b16 %v6311, %v6310
      %v6350 = vpack.c.b16 %v6313, %v6312
      %v6351 = vpack.c.b16 %v6315, %v6314
      %v6352 = vpack.c.b16 %v6317, %v6316
      %v6353 = vpack.c.b16 %v6319, %v6318
      %v6354 = vpack.c.b16 %v6321, %v6320
      %v6355 = vpack.c.b16 %v6323, %v6322
      %v6356 = vpack.c.b16 %v6325, %v6324
      %v6357 = vpack.c.b16 %v6327, %v6326
      %v6358 = vpack.c.b16 %v6329, %v6328
      %v6359 = vpack.c.b16 %v6331, %v6330
      %v6360 = vpack.c.b16 %v6333, %v6332
      %v6361 = vpack.c.b16 %v6335, %v6334
      %v6362 = vpack.c.b16 %v6337, %v6336
      %v6363 = vpack.c.b16 %v6338, %v6338
      %v6365 = vshrl.u32 %v6339, 16
      %v6367 = vshll.u32 %v6339, 16
      %v6369 = vrot.slane %v6367, 1
      %v6370 = vor.u32 %v6365, %v6369
      %v6372 = vshll.u32 %v6340, 16
      %v6374 = vrot.slane %v6372, 1
      %v6375 = vsel %vm1146, %v6370, %v6374
      %v6376 = vshrl.u32 %v6340, 16
      %v6378 = vor.u32 %v6376, %v6374
      %v6380 = vshll.u32 %v6341, 16
      %v6382 = vrot.slane %v6380, 1
      %v6383 = vsel %vm1146, %v6378, %v6382
      %v6384 = vshrl.u32 %v6341, 16
      %v6386 = vor.u32 %v6384, %v6382
      %v6388 = vshll.u32 %v6342, 16
      %v6390 = vrot.slane %v6388, 1
      %v6391 = vsel %vm1146, %v6386, %v6390
      %v6392 = vshrl.u32 %v6342, 16
      %v6394 = vor.u32 %v6392, %v6390
      %v6396 = vshll.u32 %v6343, 16
      %v6398 = vrot.slane %v6396, 1
      %v6399 = vsel %vm1146, %v6394, %v6398
      %v6400 = vshrl.u32 %v6343, 16
      %v6402 = vor.u32 %v6400, %v6398
      %v6404 = vshll.u32 %v6344, 16
      %v6406 = vrot.slane %v6404, 1
      %v6407 = vsel %vm1146, %v6402, %v6406
      %v6408 = vshrl.u32 %v6344, 16
      %v6410 = vor.u32 %v6408, %v6406
      %v6412 = vshll.u32 %v6345, 16
      %v6414 = vrot.slane %v6412, 1
      %v6415 = vsel %vm1146, %v6410, %v6414
      %v6416 = vshrl.u32 %v6345, 16
      %v6418 = vor.u32 %v6416, %v6414
      %v6420 = vshll.u32 %v6346, 16
      %v6422 = vrot.slane %v6420, 1
      %v6423 = vsel %vm1146, %v6418, %v6422
      %v6424 = vshrl.u32 %v6346, 16
      %v6426 = vor.u32 %v6424, %v6422
      %v6428 = vshll.u32 %v6347, 16
      %v6430 = vrot.slane %v6428, 1
      %v6431 = vsel %vm1146, %v6426, %v6430
      %v6432 = vshrl.u32 %v6347, 16
      %v6434 = vor.u32 %v6432, %v6430
      %v6436 = vshll.u32 %v6348, 16
      %v6438 = vrot.slane %v6436, 1
      %v6439 = vsel %vm1146, %v6434, %v6438
      %v6440 = vshrl.u32 %v6348, 16
      %v6442 = vor.u32 %v6440, %v6438
      %v6444 = vshll.u32 %v6349, 16
      %v6446 = vrot.slane %v6444, 1
      %v6447 = vsel %vm1146, %v6442, %v6446
      %v6448 = vshrl.u32 %v6349, 16
      %v6450 = vor.u32 %v6448, %v6446
      %v6452 = vshll.u32 %v6350, 16
      %v6454 = vrot.slane %v6452, 1
      %v6455 = vsel %vm1146, %v6450, %v6454
      %v6456 = vshrl.u32 %v6350, 16
      %v6458 = vor.u32 %v6456, %v6454
      %v6460 = vshll.u32 %v6351, 16
      %v6462 = vrot.slane %v6460, 1
      %v6463 = vsel %vm1146, %v6458, %v6462
      %v6464 = vshrl.u32 %v6351, 16
      %v6466 = vor.u32 %v6464, %v6462
      %v6468 = vshll.u32 %v6352, 16
      %v6470 = vrot.slane %v6468, 1
      %v6471 = vsel %vm1146, %v6466, %v6470
      %v6472 = vshrl.u32 %v6352, 16
      %v6474 = vor.u32 %v6472, %v6470
      %v6476 = vshll.u32 %v6353, 16
      %v6478 = vrot.slane %v6476, 1
      %v6479 = vsel %vm1146, %v6474, %v6478
      %v6480 = vshrl.u32 %v6353, 16
      %v6482 = vor.u32 %v6480, %v6478
      %v6484 = vshll.u32 %v6354, 16
      %v6486 = vrot.slane %v6484, 1
      %v6487 = vsel %vm1146, %v6482, %v6486
      %v6488 = vshrl.u32 %v6354, 16
      %v6490 = vor.u32 %v6488, %v6486
      %v6492 = vshll.u32 %v6355, 16
      %v6494 = vrot.slane %v6492, 1
      %v6495 = vsel %vm1146, %v6490, %v6494
      %v6496 = vshrl.u32 %v6355, 16
      %v6498 = vor.u32 %v6496, %v6494
      %v6500 = vshll.u32 %v6356, 16
      %v6502 = vrot.slane %v6500, 1
      %v6503 = vsel %vm1146, %v6498, %v6502
      %v6504 = vshrl.u32 %v6356, 16
      %v6506 = vor.u32 %v6504, %v6502
      %v6508 = vshll.u32 %v6357, 16
      %v6510 = vrot.slane %v6508, 1
      %v6511 = vsel %vm1146, %v6506, %v6510
      %v6512 = vshrl.u32 %v6357, 16
      %v6514 = vor.u32 %v6512, %v6510
      %v6516 = vshll.u32 %v6358, 16
      %v6518 = vrot.slane %v6516, 1
      %v6519 = vsel %vm1146, %v6514, %v6518
      %v6520 = vshrl.u32 %v6358, 16
      %v6522 = vor.u32 %v6520, %v6518
      %v6524 = vshll.u32 %v6359, 16
      %v6526 = vrot.slane %v6524, 1
      %v6527 = vsel %vm1146, %v6522, %v6526
      %v6528 = vshrl.u32 %v6359, 16
      %v6530 = vor.u32 %v6528, %v6526
      %v6532 = vshll.u32 %v6360, 16
      %v6534 = vrot.slane %v6532, 1
      %v6535 = vsel %vm1146, %v6530, %v6534
      %v6536 = vshrl.u32 %v6360, 16
      %v6538 = vor.u32 %v6536, %v6534
      %v6540 = vshll.u32 %v6361, 16
      %v6542 = vrot.slane %v6540, 1
      %v6543 = vsel %vm1146, %v6538, %v6542
      %v6544 = vshrl.u32 %v6361, 16
      %v6546 = vor.u32 %v6544, %v6542
      %v6548 = vshll.u32 %v6362, 16
      %v6550 = vrot.slane %v6548, 1
      %v6551 = vsel %vm1146, %v6546, %v6550
      %v6552 = vshrl.u32 %v6362, 16
      %v6554 = vor.u32 %v6552, %v6550
      %v6556 = vshll.u32 %v6363, 16
      %v6558 = vrot.slane %v6556, 1
      %v6559 = vsel %vm1146, %v6554, %v6558
      %v6600 = vunpack.c.l.b16 %v6225
      %v6601 = vunpack.c.l.b16 %v6226
      %v6602 = vunpack.c.l.b16 %v6227
      %v6603 = vunpack.c.l.b16 %v6228
      %v6604 = vunpack.c.l.b16 %v6229
      %v6605 = vunpack.c.l.b16 %v6230
      %v6606 = vunpack.c.l.b16 %v6231
      %v6607 = vunpack.c.l.b16 %v6232
      %v6608 = vunpack.c.l.b16 %v6233
      %v6609 = vunpack.c.l.b16 %v6234
      %v6610 = vunpack.c.l.b16 %v6235
      %v6611 = vunpack.c.l.b16 %v6236
      %v6612 = vunpack.c.l.b16 %v6237
      %v6613 = vunpack.c.l.b16 %v6238
      %v6614 = vunpack.c.l.b16 %v6239
      %v6615 = vunpack.c.l.b16 %v6240
      %v6616 = vpack.c.b16 %v6601, %v6600
      %v6617 = vpack.c.b16 %v6603, %v6602
      %v6618 = vpack.c.b16 %v6605, %v6604
      %v6619 = vpack.c.b16 %v6607, %v6606
      %v6620 = vpack.c.b16 %v6609, %v6608
      %v6621 = vpack.c.b16 %v6611, %v6610
      %v6622 = vpack.c.b16 %v6613, %v6612
      %v6623 = vpack.c.b16 %v6615, %v6614
      %6632 = vmatpush.bf16.msra.mxu0 %v6623
      %6633 = vmatpush.bf16.msra.mxu0 %v6622
      %6634 = vmatpush.bf16.msra.mxu0 %v6621
      %6635 = vmatpush.bf16.msra.mxu0 %v6620
      %6636 = vmatpush.bf16.msra.mxu0 %v6619
      %6637 = vmatpush.bf16.msra.mxu0 %v6618
      %6638 = vmatpush.bf16.msra.mxu0 %v6617
      %6639 = vmatpush.bf16.msra.mxu0 %v6616
      %6640 = vmatmul.bf16.gmra.mxu0 %v6375
      %v6641 = vpop.f32.mrf.mxu0
      %v6642 = vadd.f32 0.0, %v6641
      %v6643 = vpop.f32.mrf.mxu0
      %v6644 = vadd.f32 0.0, %v6643
      %6645 = vmatmul.bf16.gmra.mxu0 %v6383
      %v6646 = vpop.f32.mrf.mxu0
      %v6647 = vadd.f32 0.0, %v6646
      %v6648 = vpop.f32.mrf.mxu0
      %v6649 = vadd.f32 0.0, %v6648
      %6650 = vmatmul.bf16.gmra.mxu0 %v6391
      %v6651 = vpop.f32.mrf.mxu0
      %v6652 = vadd.f32 0.0, %v6651
      %v6653 = vpop.f32.mrf.mxu0
      %v6654 = vadd.f32 0.0, %v6653
      %6655 = vmatmul.bf16.gmra.mxu0 %v6399
      %v6656 = vpop.f32.mrf.mxu0
      %v6657 = vadd.f32 0.0, %v6656
      %v6658 = vpop.f32.mrf.mxu0
      %v6659 = vadd.f32 0.0, %v6658
      %6660 = vmatmul.bf16.gmra.mxu0 %v6407
      %v6661 = vpop.f32.mrf.mxu0
      %v6662 = vadd.f32 0.0, %v6661
      %v6663 = vpop.f32.mrf.mxu0
      %v6664 = vadd.f32 0.0, %v6663
      %6665 = vmatmul.bf16.gmra.mxu0 %v6415
      %v6666 = vpop.f32.mrf.mxu0
      %v6667 = vadd.f32 0.0, %v6666
      %v6668 = vpop.f32.mrf.mxu0
      %v6669 = vadd.f32 0.0, %v6668
      %6670 = vmatmul.bf16.gmra.mxu0 %v6423
      %v6671 = vpop.f32.mrf.mxu0
      %v6672 = vadd.f32 0.0, %v6671
      %v6673 = vpop.f32.mrf.mxu0
      %v6674 = vadd.f32 0.0, %v6673
      %6675 = vmatmul.bf16.gmra.mxu0 %v6431
      %v6676 = vpop.f32.mrf.mxu0
      %v6677 = vadd.f32 0.0, %v6676
      %v6678 = vpop.f32.mrf.mxu0
      %v6679 = vadd.f32 0.0, %v6678
      %6680 = vmatmul.bf16.gmra.mxu0 %v6439
      %v6681 = vpop.f32.mrf.mxu0
      %v6682 = vadd.f32 0.0, %v6681
      %v6683 = vpop.f32.mrf.mxu0
      %v6684 = vadd.f32 0.0, %v6683
      %6685 = vmatmul.bf16.gmra.mxu0 %v6447
      %v6686 = vpop.f32.mrf.mxu0
      %v6687 = vadd.f32 0.0, %v6686
      %v6688 = vpop.f32.mrf.mxu0
      %v6689 = vadd.f32 0.0, %v6688
      %6690 = vmatmul.bf16.gmra.mxu0 %v6455
      %v6691 = vpop.f32.mrf.mxu0
      %v6692 = vadd.f32 0.0, %v6691
      %v6693 = vpop.f32.mrf.mxu0
      %v6694 = vadd.f32 0.0, %v6693
      %6695 = vmatmul.bf16.gmra.mxu0 %v6463
      %v6696 = vpop.f32.mrf.mxu0
      %v6697 = vadd.f32 0.0, %v6696
      %v6698 = vpop.f32.mrf.mxu0
      %v6699 = vadd.f32 0.0, %v6698
      %6700 = vmatmul.bf16.gmra.mxu0 %v6471
      %v6701 = vpop.f32.mrf.mxu0
      %v6702 = vadd.f32 0.0, %v6701
      %v6703 = vpop.f32.mrf.mxu0
      %v6704 = vadd.f32 0.0, %v6703
      %6705 = vmatmul.bf16.gmra.mxu0 %v6479
      %v6706 = vpop.f32.mrf.mxu0
      %v6707 = vadd.f32 0.0, %v6706
      %v6708 = vpop.f32.mrf.mxu0
      %v6709 = vadd.f32 0.0, %v6708
      %6710 = vmatmul.bf16.gmra.mxu0 %v6487
      %v6711 = vpop.f32.mrf.mxu0
      %v6712 = vadd.f32 0.0, %v6711
      %v6713 = vpop.f32.mrf.mxu0
      %v6714 = vadd.f32 0.0, %v6713
      %6715 = vmatmul.bf16.gmra.mxu0 %v6495
      %v6716 = vpop.f32.mrf.mxu0
      %v6717 = vadd.f32 0.0, %v6716
      %v6718 = vpop.f32.mrf.mxu0
      %v6719 = vadd.f32 0.0, %v6718
      %6720 = vmatmul.bf16.gmra.mxu0 %v6503
      %v6721 = vpop.f32.mrf.mxu0
      %v6722 = vadd.f32 0.0, %v6721
      %v6723 = vpop.f32.mrf.mxu0
      %v6724 = vadd.f32 0.0, %v6723
      %6725 = vmatmul.bf16.gmra.mxu0 %v6511
      %v6726 = vpop.f32.mrf.mxu0
      %v6727 = vadd.f32 0.0, %v6726
      %v6728 = vpop.f32.mrf.mxu0
      %v6729 = vadd.f32 0.0, %v6728
      %6730 = vmatmul.bf16.gmra.mxu0 %v6519
      %v6731 = vpop.f32.mrf.mxu0
      %v6732 = vadd.f32 0.0, %v6731
      %v6733 = vpop.f32.mrf.mxu0
      %v6734 = vadd.f32 0.0, %v6733
      %6735 = vmatmul.bf16.gmra.mxu0 %v6527
      %v6736 = vpop.f32.mrf.mxu0
      %v6737 = vadd.f32 0.0, %v6736
      %v6738 = vpop.f32.mrf.mxu0
      %v6739 = vadd.f32 0.0, %v6738
      %6740 = vmatmul.bf16.gmra.mxu0 %v6535
      %v6741 = vpop.f32.mrf.mxu0
      %v6742 = vadd.f32 0.0, %v6741
      %v6743 = vpop.f32.mrf.mxu0
      %v6744 = vadd.f32 0.0, %v6743
      %6745 = vmatmul.bf16.gmra.mxu0 %v6543
      %v6746 = vpop.f32.mrf.mxu0
      %v6747 = vadd.f32 0.0, %v6746
      %v6748 = vpop.f32.mrf.mxu0
      %v6749 = vadd.f32 0.0, %v6748
      %6750 = vmatmul.bf16.gmra.mxu0 %v6551
      %v6751 = vpop.f32.mrf.mxu0
      %v6752 = vadd.f32 0.0, %v6751
      %v6753 = vpop.f32.mrf.mxu0
      %v6754 = vadd.f32 0.0, %v6753
      %6755 = vmatmul.bf16.gmra.mxu0 %v6559
      %v6756 = vpop.f32.mrf.mxu0
      %v6757 = vadd.f32 0.0, %v6756
      %v6758 = vpop.f32.mrf.mxu0
      %v6759 = vadd.f32 0.0, %v6758
      %6760 = vdwg.mxu0
      %v6801 = vunpack.c.l.b16 %v6207
      %v6802 = vunpack.c.l.b16 %v6208
      %v6803 = vunpack.c.l.b16 %v6209
      %v6804 = vunpack.c.l.b16 %v6210
      %v6805 = vunpack.c.l.b16 %v6211
      %v6806 = vunpack.c.l.b16 %v6212
      %v6807 = vunpack.c.l.b16 %v6213
      %v6808 = vunpack.c.l.b16 %v6214
      %v6809 = vunpack.c.l.b16 %v6215
      %v6810 = vunpack.c.l.b16 %v6216
      %v6811 = vunpack.c.l.b16 %v6217
      %v6812 = vunpack.c.l.b16 %v6218
      %v6813 = vunpack.c.l.b16 %v6219
      %v6814 = vunpack.c.l.b16 %v6220
      %v6815 = vunpack.c.l.b16 %v6221
      %v6816 = vunpack.c.l.b16 %v6222
      %v6817 = vpack.c.b16 %v6802, %v6801
      %v6818 = vpack.c.b16 %v6804, %v6803
      %v6819 = vpack.c.b16 %v6806, %v6805
      %v6820 = vpack.c.b16 %v6808, %v6807
      %v6821 = vpack.c.b16 %v6810, %v6809
      %v6822 = vpack.c.b16 %v6812, %v6811
      %v6823 = vpack.c.b16 %v6814, %v6813
      %v6824 = vpack.c.b16 %v6816, %v6815
      %6833 = vmatpush.bf16.msra.mxu0 %v6824
      %6834 = vmatpush.bf16.msra.mxu0 %v6823
      %6835 = vmatpush.bf16.msra.mxu0 %v6822
      %6836 = vmatpush.bf16.msra.mxu0 %v6821
      %6837 = vmatpush.bf16.msra.mxu0 %v6820
      %6838 = vmatpush.bf16.msra.mxu0 %v6819
      %6839 = vmatpush.bf16.msra.mxu0 %v6818
      %6840 = vmatpush.bf16.msra.mxu0 %v6817
      %6841 = vmatmul.bf16.gmra.mxu0 %v6339
      %v6842 = vpop.f32.mrf.mxu0
      %v6843 = vadd.f32 %v6642, %v6842
      %v6844 = vpop.f32.mrf.mxu0
      %v6845 = vadd.f32 %v6644, %v6844
      %6846 = vmatmul.bf16.gmra.mxu0 %v6340
      %v6847 = vpop.f32.mrf.mxu0
      %v6848 = vadd.f32 %v6647, %v6847
      %v6849 = vpop.f32.mrf.mxu0
      %v6850 = vadd.f32 %v6649, %v6849
      %6851 = vmatmul.bf16.gmra.mxu0 %v6341
      %v6852 = vpop.f32.mrf.mxu0
      %v6853 = vadd.f32 %v6652, %v6852
      %v6854 = vpop.f32.mrf.mxu0
      %v6855 = vadd.f32 %v6654, %v6854
      %6856 = vmatmul.bf16.gmra.mxu0 %v6342
      %v6857 = vpop.f32.mrf.mxu0
      %v6858 = vadd.f32 %v6657, %v6857
      %v6859 = vpop.f32.mrf.mxu0
      %v6860 = vadd.f32 %v6659, %v6859
      %6861 = vmatmul.bf16.gmra.mxu0 %v6343
      %v6862 = vpop.f32.mrf.mxu0
      %v6863 = vadd.f32 %v6662, %v6862
      %v6864 = vpop.f32.mrf.mxu0
      %v6865 = vadd.f32 %v6664, %v6864
      %6866 = vmatmul.bf16.gmra.mxu0 %v6344
      %v6867 = vpop.f32.mrf.mxu0
      %v6868 = vadd.f32 %v6667, %v6867
      %v6869 = vpop.f32.mrf.mxu0
      %v6870 = vadd.f32 %v6669, %v6869
      %6871 = vmatmul.bf16.gmra.mxu0 %v6345
      %v6872 = vpop.f32.mrf.mxu0
      %v6873 = vadd.f32 %v6672, %v6872
      %v6874 = vpop.f32.mrf.mxu0
      %v6875 = vadd.f32 %v6674, %v6874
      %6876 = vmatmul.bf16.gmra.mxu0 %v6346
      %v6877 = vpop.f32.mrf.mxu0
      %v6878 = vadd.f32 %v6677, %v6877
      %v6879 = vpop.f32.mrf.mxu0
      %v6880 = vadd.f32 %v6679, %v6879
      %6881 = vmatmul.bf16.gmra.mxu0 %v6347
      %v6882 = vpop.f32.mrf.mxu0
      %v6883 = vadd.f32 %v6682, %v6882
      %v6884 = vpop.f32.mrf.mxu0
      %v6885 = vadd.f32 %v6684, %v6884
      %6886 = vmatmul.bf16.gmra.mxu0 %v6348
      %v6887 = vpop.f32.mrf.mxu0
      %v6888 = vadd.f32 %v6687, %v6887
      %v6889 = vpop.f32.mrf.mxu0
      %v6890 = vadd.f32 %v6689, %v6889
      %6891 = vmatmul.bf16.gmra.mxu0 %v6349
      %v6892 = vpop.f32.mrf.mxu0
      %v6893 = vadd.f32 %v6692, %v6892
      %v6894 = vpop.f32.mrf.mxu0
      %v6895 = vadd.f32 %v6694, %v6894
      %6896 = vmatmul.bf16.gmra.mxu0 %v6350
      %v6897 = vpop.f32.mrf.mxu0
      %v6898 = vadd.f32 %v6697, %v6897
      %v6899 = vpop.f32.mrf.mxu0
      %v6900 = vadd.f32 %v6699, %v6899
      %6901 = vmatmul.bf16.gmra.mxu0 %v6351
      %v6902 = vpop.f32.mrf.mxu0
      %v6903 = vadd.f32 %v6702, %v6902
      %v6904 = vpop.f32.mrf.mxu0
      %v6905 = vadd.f32 %v6704, %v6904
      %6906 = vmatmul.bf16.gmra.mxu0 %v6352
      %v6907 = vpop.f32.mrf.mxu0
      %v6908 = vadd.f32 %v6707, %v6907
      %v6909 = vpop.f32.mrf.mxu0
      %v6910 = vadd.f32 %v6709, %v6909
      %6911 = vmatmul.bf16.gmra.mxu0 %v6353
      %v6912 = vpop.f32.mrf.mxu0
      %v6913 = vadd.f32 %v6712, %v6912
      %v6914 = vpop.f32.mrf.mxu0
      %v6915 = vadd.f32 %v6714, %v6914
      %6916 = vmatmul.bf16.gmra.mxu0 %v6354
      %v6917 = vpop.f32.mrf.mxu0
      %v6918 = vadd.f32 %v6717, %v6917
      %v6919 = vpop.f32.mrf.mxu0
      %v6920 = vadd.f32 %v6719, %v6919
      %6921 = vmatmul.bf16.gmra.mxu0 %v6355
      %v6922 = vpop.f32.mrf.mxu0
      %v6923 = vadd.f32 %v6722, %v6922
      %v6924 = vpop.f32.mrf.mxu0
      %v6925 = vadd.f32 %v6724, %v6924
      %6926 = vmatmul.bf16.gmra.mxu0 %v6356
      %v6927 = vpop.f32.mrf.mxu0
      %v6928 = vadd.f32 %v6727, %v6927
      %v6929 = vpop.f32.mrf.mxu0
      %v6930 = vadd.f32 %v6729, %v6929
      %6931 = vmatmul.bf16.gmra.mxu0 %v6357
      %v6932 = vpop.f32.mrf.mxu0
      %v6933 = vadd.f32 %v6732, %v6932
      %v6934 = vpop.f32.mrf.mxu0
      %v6935 = vadd.f32 %v6734, %v6934
      %6936 = vmatmul.bf16.gmra.mxu0 %v6358
      %v6937 = vpop.f32.mrf.mxu0
      %v6938 = vadd.f32 %v6737, %v6937
      %v6939 = vpop.f32.mrf.mxu0
      %v6940 = vadd.f32 %v6739, %v6939
      %6941 = vmatmul.bf16.gmra.mxu0 %v6359
      %v6942 = vpop.f32.mrf.mxu0
      %v6943 = vadd.f32 %v6742, %v6942
      %v6944 = vpop.f32.mrf.mxu0
      %v6945 = vadd.f32 %v6744, %v6944
      %6946 = vmatmul.bf16.gmra.mxu0 %v6360
      %v6947 = vpop.f32.mrf.mxu0
      %v6948 = vadd.f32 %v6747, %v6947
      %v6949 = vpop.f32.mrf.mxu0
      %v6950 = vadd.f32 %v6749, %v6949
      %6951 = vmatmul.bf16.gmra.mxu0 %v6361
      %v6952 = vpop.f32.mrf.mxu0
      %v6953 = vadd.f32 %v6752, %v6952
      %v6954 = vpop.f32.mrf.mxu0
      %v6955 = vadd.f32 %v6754, %v6954
      %6956 = vmatmul.bf16.gmra.mxu0 %v6362
      %v6957 = vpop.f32.mrf.mxu0
      %v6958 = vadd.f32 %v6757, %v6957
      %v6959 = vpop.f32.mrf.mxu0
      %v6960 = vadd.f32 %v6759, %v6959
      %6961 = vdwg.mxu0
      %v6962 = vld [vmem:[#allocation2] sm:$0xe]
      %s6963 = scalar_lea.vmem %s1, 704
      %v6964 = vld [vmem:[%s6963] sm:$0xf]
      %v6965 = vld [vmem:[%s6963 + $0x4] sm:$0xf]
      %v6966 = vld [vmem:[%s6963 + $0x8] sm:$0xf]
      %v6967 = vld [vmem:[%s6963 + $0xc] sm:$0xf]
      %v6968 = vld [vmem:[%s6963 + $0x10] sm:$0xf]
      %v6969 = vld [vmem:[%s6963 + $0x14] sm:$0xf]
      %v6970 = vld [vmem:[%s6963 + $0x18] sm:$0xf]
      %v6971 = vld [vmem:[%s6963 + $0x1c] sm:$0xf]
      %v6972 = vld [vmem:[%s6963 + $0x20] sm:$0xf]
      %v6973 = vld [vmem:[%s6963 + $0x24] sm:$0xf]
      %v6974 = vld [vmem:[%s6963 + $0x28] sm:$0xf]
      %v6975 = vld [vmem:[%s6963 + $0x2c] sm:$0xf]
      %v6976 = vld [vmem:[%s6963 + $0x30] sm:$0xf]
      %v6977 = vld [vmem:[%s6963 + $0x34] sm:$0xf]
      %v6978 = vld [vmem:[%s6963 + $0x38] sm:$0xf]
      %v6979 = vld [vmem:[%s6963 + $0x3c] sm:$0xf]
      %v6981 = vunpack.c.l.b16 %v6962
      %v6982 = vpack.c.b16 %v6291, %v6981
      %v6983 = vrot.slane %v6982, 1
      %v6984 = vrot.slane %v6340, 1
      %v6985 = vsel %vm1766, %v6983, %v6984
      %v6986 = vrot.slane %v6341, 1
      %v6987 = vsel %vm1766, %v6984, %v6986
      %v6988 = vrot.slane %v6342, 1
      %v6989 = vsel %vm1766, %v6986, %v6988
      %v6990 = vrot.slane %v6343, 1
      %v6991 = vsel %vm1766, %v6988, %v6990
      %v6992 = vrot.slane %v6344, 1
      %v6993 = vsel %vm1766, %v6990, %v6992
      %v6994 = vrot.slane %v6345, 1
      %v6995 = vsel %vm1766, %v6992, %v6994
      %v6996 = vrot.slane %v6346, 1
      %v6997 = vsel %vm1766, %v6994, %v6996
      %v6998 = vrot.slane %v6347, 1
      %v6999 = vsel %vm1766, %v6996, %v6998
      %v7000 = vrot.slane %v6348, 1
      %v7001 = vsel %vm1766, %v6998, %v7000
      %v7002 = vrot.slane %v6349, 1
      %v7003 = vsel %vm1766, %v7000, %v7002
      %v7004 = vrot.slane %v6350, 1
      %v7005 = vsel %vm1766, %v7002, %v7004
      %v7006 = vrot.slane %v6351, 1
      %v7007 = vsel %vm1766, %v7004, %v7006
      %v7008 = vrot.slane %v6352, 1
      %v7009 = vsel %vm1766, %v7006, %v7008
      %v7010 = vrot.slane %v6353, 1
      %v7011 = vsel %vm1766, %v7008, %v7010
      %v7012 = vrot.slane %v6354, 1
      %v7013 = vsel %vm1766, %v7010, %v7012
      %v7014 = vrot.slane %v6355, 1
      %v7015 = vsel %vm1766, %v7012, %v7014
      %v7016 = vrot.slane %v6356, 1
      %v7017 = vsel %vm1766, %v7014, %v7016
      %v7018 = vrot.slane %v6357, 1
      %v7019 = vsel %vm1766, %v7016, %v7018
      %v7020 = vrot.slane %v6358, 1
      %v7021 = vsel %vm1766, %v7018, %v7020
      %v7022 = vrot.slane %v6359, 1
      %v7023 = vsel %vm1766, %v7020, %v7022
      %v7024 = vrot.slane %v6360, 1
      %v7025 = vsel %vm1766, %v7022, %v7024
      %v7026 = vrot.slane %v6361, 1
      %v7027 = vsel %vm1766, %v7024, %v7026
      %v7028 = vrot.slane %v6362, 1
      %v7029 = vsel %vm1766, %v7026, %v7028
      %v7030 = vrot.slane %v6363, 1
      %v7031 = vsel %vm1766, %v7028, %v7030
      %v7072 = vunpack.c.l.b16 %v6964
      %v7073 = vunpack.c.l.b16 %v6965
      %v7074 = vunpack.c.l.b16 %v6966
      %v7075 = vunpack.c.l.b16 %v6967
      %v7076 = vunpack.c.l.b16 %v6968
      %v7077 = vunpack.c.l.b16 %v6969
      %v7078 = vunpack.c.l.b16 %v6970
      %v7079 = vunpack.c.l.b16 %v6971
      %v7080 = vunpack.c.l.b16 %v6972
      %v7081 = vunpack.c.l.b16 %v6973
      %v7082 = vunpack.c.l.b16 %v6974
      %v7083 = vunpack.c.l.b16 %v6975
      %v7084 = vunpack.c.l.b16 %v6976
      %v7085 = vunpack.c.l.b16 %v6977
      %v7086 = vunpack.c.l.b16 %v6978
      %v7087 = vunpack.c.l.b16 %v6979
      %v7088 = vpack.c.b16 %v7073, %v7072
      %v7089 = vpack.c.b16 %v7075, %v7074
      %v7090 = vpack.c.b16 %v7077, %v7076
      %v7091 = vpack.c.b16 %v7079, %v7078
      %v7092 = vpack.c.b16 %v7081, %v7080
      %v7093 = vpack.c.b16 %v7083, %v7082
      %v7094 = vpack.c.b16 %v7085, %v7084
      %v7095 = vpack.c.b16 %v7087, %v7086
      %7104 = vmatpush.bf16.msra.mxu0 %v7095
      %7105 = vmatpush.bf16.msra.mxu0 %v7094
      %7106 = vmatpush.bf16.msra.mxu0 %v7093
      %7107 = vmatpush.bf16.msra.mxu0 %v7092
      %7108 = vmatpush.bf16.msra.mxu0 %v7091
      %7109 = vmatpush.bf16.msra.mxu0 %v7090
      %7110 = vmatpush.bf16.msra.mxu0 %v7089
      %7111 = vmatpush.bf16.msra.mxu0 %v7088
      %7112 = vmatmul.bf16.gmra.mxu0 %v6985
      %v7113 = vpop.f32.mrf.mxu0
      %v7114 = vadd.f32 0.0, %v7113
      %v7115 = vpop.f32.mrf.mxu0
      %v7116 = vadd.f32 0.0, %v7115
      %7117 = vmatmul.bf16.gmra.mxu0 %v6987
      %v7118 = vpop.f32.mrf.mxu0
      %v7119 = vadd.f32 0.0, %v7118
      %v7120 = vpop.f32.mrf.mxu0
      %v7121 = vadd.f32 0.0, %v7120
      %7122 = vmatmul.bf16.gmra.mxu0 %v6989
      %v7123 = vpop.f32.mrf.mxu0
      %v7124 = vadd.f32 0.0, %v7123
      %v7125 = vpop.f32.mrf.mxu0
      %v7126 = vadd.f32 0.0, %v7125
      %7127 = vmatmul.bf16.gmra.mxu0 %v6991
      %v7128 = vpop.f32.mrf.mxu0
      %v7129 = vadd.f32 0.0, %v7128
      %v7130 = vpop.f32.mrf.mxu0
      %v7131 = vadd.f32 0.0, %v7130
      %7132 = vmatmul.bf16.gmra.mxu0 %v6993
      %v7133 = vpop.f32.mrf.mxu0
      %v7134 = vadd.f32 0.0, %v7133
      %v7135 = vpop.f32.mrf.mxu0
      %v7136 = vadd.f32 0.0, %v7135
      %7137 = vmatmul.bf16.gmra.mxu0 %v6995
      %v7138 = vpop.f32.mrf.mxu0
      %v7139 = vadd.f32 0.0, %v7138
      %v7140 = vpop.f32.mrf.mxu0
      %v7141 = vadd.f32 0.0, %v7140
      %7142 = vmatmul.bf16.gmra.mxu0 %v6997
      %v7143 = vpop.f32.mrf.mxu0
      %v7144 = vadd.f32 0.0, %v7143
      %v7145 = vpop.f32.mrf.mxu0
      %v7146 = vadd.f32 0.0, %v7145
      %7147 = vmatmul.bf16.gmra.mxu0 %v6999
      %v7148 = vpop.f32.mrf.mxu0
      %v7149 = vadd.f32 0.0, %v7148
      %v7150 = vpop.f32.mrf.mxu0
      %v7151 = vadd.f32 0.0, %v7150
      %7152 = vmatmul.bf16.gmra.mxu0 %v7001
      %v7153 = vpop.f32.mrf.mxu0
      %v7154 = vadd.f32 0.0, %v7153
      %v7155 = vpop.f32.mrf.mxu0
      %v7156 = vadd.f32 0.0, %v7155
      %7157 = vmatmul.bf16.gmra.mxu0 %v7003
      %v7158 = vpop.f32.mrf.mxu0
      %v7159 = vadd.f32 0.0, %v7158
      %v7160 = vpop.f32.mrf.mxu0
      %v7161 = vadd.f32 0.0, %v7160
      %7162 = vmatmul.bf16.gmra.mxu0 %v7005
      %v7163 = vpop.f32.mrf.mxu0
      %v7164 = vadd.f32 0.0, %v7163
      %v7165 = vpop.f32.mrf.mxu0
      %v7166 = vadd.f32 0.0, %v7165
      %7167 = vmatmul.bf16.gmra.mxu0 %v7007
      %v7168 = vpop.f32.mrf.mxu0
      %v7169 = vadd.f32 0.0, %v7168
      %v7170 = vpop.f32.mrf.mxu0
      %v7171 = vadd.f32 0.0, %v7170
      %7172 = vmatmul.bf16.gmra.mxu0 %v7009
      %v7173 = vpop.f32.mrf.mxu0
      %v7174 = vadd.f32 0.0, %v7173
      %v7175 = vpop.f32.mrf.mxu0
      %v7176 = vadd.f32 0.0, %v7175
      %7177 = vmatmul.bf16.gmra.mxu0 %v7011
      %v7178 = vpop.f32.mrf.mxu0
      %v7179 = vadd.f32 0.0, %v7178
      %v7180 = vpop.f32.mrf.mxu0
      %v7181 = vadd.f32 0.0, %v7180
      %7182 = vmatmul.bf16.gmra.mxu0 %v7013
      %v7183 = vpop.f32.mrf.mxu0
      %v7184 = vadd.f32 0.0, %v7183
      %v7185 = vpop.f32.mrf.mxu0
      %v7186 = vadd.f32 0.0, %v7185
      %7187 = vmatmul.bf16.gmra.mxu0 %v7015
      %v7188 = vpop.f32.mrf.mxu0
      %v7189 = vadd.f32 0.0, %v7188
      %v7190 = vpop.f32.mrf.mxu0
      %v7191 = vadd.f32 0.0, %v7190
      %7192 = vmatmul.bf16.gmra.mxu0 %v7017
      %v7193 = vpop.f32.mrf.mxu0
      %v7194 = vadd.f32 0.0, %v7193
      %v7195 = vpop.f32.mrf.mxu0
      %v7196 = vadd.f32 0.0, %v7195
      %7197 = vmatmul.bf16.gmra.mxu0 %v7019
      %v7198 = vpop.f32.mrf.mxu0
      %v7199 = vadd.f32 0.0, %v7198
      %v7200 = vpop.f32.mrf.mxu0
      %v7201 = vadd.f32 0.0, %v7200
      %7202 = vmatmul.bf16.gmra.mxu0 %v7021
      %v7203 = vpop.f32.mrf.mxu0
      %v7204 = vadd.f32 0.0, %v7203
      %v7205 = vpop.f32.mrf.mxu0
      %v7206 = vadd.f32 0.0, %v7205
      %7207 = vmatmul.bf16.gmra.mxu0 %v7023
      %v7208 = vpop.f32.mrf.mxu0
      %v7209 = vadd.f32 0.0, %v7208
      %v7210 = vpop.f32.mrf.mxu0
      %v7211 = vadd.f32 0.0, %v7210
      %7212 = vmatmul.bf16.gmra.mxu0 %v7025
      %v7213 = vpop.f32.mrf.mxu0
      %v7214 = vadd.f32 0.0, %v7213
      %v7215 = vpop.f32.mrf.mxu0
      %v7216 = vadd.f32 0.0, %v7215
      %7217 = vmatmul.bf16.gmra.mxu0 %v7027
      %v7218 = vpop.f32.mrf.mxu0
      %v7219 = vadd.f32 0.0, %v7218
      %v7220 = vpop.f32.mrf.mxu0
      %v7221 = vadd.f32 0.0, %v7220
      %7222 = vmatmul.bf16.gmra.mxu0 %v7029
      %v7223 = vpop.f32.mrf.mxu0
      %v7224 = vadd.f32 0.0, %v7223
      %v7225 = vpop.f32.mrf.mxu0
      %v7226 = vadd.f32 0.0, %v7225
      %7227 = vmatmul.bf16.gmra.mxu0 %v7031
      %v7228 = vpop.f32.mrf.mxu0
      %v7229 = vadd.f32 0.0, %v7228
      %v7230 = vpop.f32.mrf.mxu0
      %v7231 = vadd.f32 0.0, %v7230
      %7232 = vdwg.mxu0
      %v7233 = vadd.f32 %v6843, %v7114
      %v7234 = vadd.f32 %v6845, %v7116
      %v7235 = vadd.f32 %v6848, %v7119
      %v7236 = vadd.f32 %v6850, %v7121
      %v7237 = vadd.f32 %v6853, %v7124
      %v7238 = vadd.f32 %v6855, %v7126
      %v7239 = vadd.f32 %v6858, %v7129
      %v7240 = vadd.f32 %v6860, %v7131
      %v7241 = vadd.f32 %v6863, %v7134
      %v7242 = vadd.f32 %v6865, %v7136
      %v7243 = vadd.f32 %v6868, %v7139
      %v7244 = vadd.f32 %v6870, %v7141
      %v7245 = vadd.f32 %v6873, %v7144
      %v7246 = vadd.f32 %v6875, %v7146
      %v7247 = vadd.f32 %v6878, %v7149
      %v7248 = vadd.f32 %v6880, %v7151
      %v7249 = vadd.f32 %v6883, %v7154
      %v7250 = vadd.f32 %v6885, %v7156
      %v7251 = vadd.f32 %v6888, %v7159
      %v7252 = vadd.f32 %v6890, %v7161
      %v7253 = vadd.f32 %v6893, %v7164
      %v7254 = vadd.f32 %v6895, %v7166
      %v7255 = vadd.f32 %v6898, %v7169
      %v7256 = vadd.f32 %v6900, %v7171
      %v7257 = vadd.f32 %v6903, %v7174
      %v7258 = vadd.f32 %v6905, %v7176
      %v7259 = vadd.f32 %v6908, %v7179
      %v7260 = vadd.f32 %v6910, %v7181
      %v7261 = vadd.f32 %v6913, %v7184
      %v7262 = vadd.f32 %v6915, %v7186
      %v7263 = vadd.f32 %v6918, %v7189
      %v7264 = vadd.f32 %v6920, %v7191
      %v7265 = vadd.f32 %v6923, %v7194
      %v7266 = vadd.f32 %v6925, %v7196
      %v7267 = vadd.f32 %v6928, %v7199
      %v7268 = vadd.f32 %v6930, %v7201
      %v7269 = vadd.f32 %v6933, %v7204
      %v7270 = vadd.f32 %v6935, %v7206
      %v7271 = vadd.f32 %v6938, %v7209
      %v7272 = vadd.f32 %v6940, %v7211
      %v7273 = vadd.f32 %v6943, %v7214
      %v7274 = vadd.f32 %v6945, %v7216
      %v7275 = vadd.f32 %v6948, %v7219
      %v7276 = vadd.f32 %v6950, %v7221
      %v7277 = vadd.f32 %v6953, %v7224
      %v7278 = vadd.f32 %v6955, %v7226
      %v7279 = vadd.f32 %v6958, %v7229
      %v7280 = vadd.f32 %v6960, %v7231
      %v7281 = vld [vmem:[#allocation2 + $0xc] sm:$0xf]
      %v7282 = vld [vmem:[#allocation2 + $0x10] sm:$0xf]
      %v7283 = vld [vmem:[#allocation2 + $0x14] sm:$0xf]
      %v7284 = vld [vmem:[#allocation2 + $0x18] sm:$0xf]
      %v7285 = vld [vmem:[#allocation2 + $0x1c] sm:$0xf]
      %v7286 = vld [vmem:[#allocation2 + $0x20] sm:$0xf]
      %v7287 = vld [vmem:[#allocation2 + $0x24] sm:$0xf]
      %v7288 = vld [vmem:[#allocation2 + $0x28] sm:$0xf]
      %v7289 = vld [vmem:[#allocation2 + $0x2c] sm:$0xf]
      %v7290 = vld [vmem:[#allocation2 + $0x30] sm:$0xf]
      %v7291 = vld [vmem:[#allocation2 + $0x34] sm:$0xf]
      %v7292 = vld [vmem:[#allocation2 + $0x38] sm:$0xf]
      %v7293 = vld [vmem:[#allocation2 + $0x3c] sm:$0xf]
      %v7294 = vld [vmem:[#allocation2 + $0x40] sm:$0xf]
      %v7295 = vld [vmem:[#allocation2 + $0x44] sm:$0xf]
      %v7296 = vld [vmem:[#allocation2 + $0x48] sm:$0xf]
      %v7297 = vld [vmem:[#allocation2 + $0x4c] sm:$0xf]
      %v7298 = vld [vmem:[#allocation2 + $0x50] sm:$0xf]
      %v7299 = vld [vmem:[#allocation2 + $0x54] sm:$0xf]
      %v7300 = vld [vmem:[#allocation2 + $0x58] sm:$0xf]
      %v7301 = vld [vmem:[#allocation2 + $0x5c] sm:$0xf]
      %v7302 = vld [vmem:[#allocation2 + $0x60] sm:$0xf]
      %v7303 = vld [vmem:[#allocation2 + $0x64] sm:$0xf]
      %v7304 = vld [vmem:[#allocation2 + $0x68] sm:$0xf]
      %v7305 = vld [vmem:[#allocation2 + $0x6c] sm:$0xf]
      %v7306 = vld [vmem:[#allocation2 + $0x70] sm:$0xf]
      %v7307 = vld [vmem:[#allocation2 + $0x74] sm:$0xf]
      %v7308 = vld [vmem:[#allocation2 + $0x78] sm:$0xf]
      %v7309 = vld [vmem:[#allocation2 + $0x7c] sm:$0xf]
      %v7310 = vld [vmem:[#allocation2 + $0x80] sm:$0xf]
      %v7311 = vld [vmem:[#allocation2 + $0x84] sm:$0xf]
      %v7312 = vld [vmem:[#allocation2 + $0x88] sm:$0xf]
      %v7313 = vld [vmem:[#allocation2 + $0x8c] sm:$0xf]
      %v7314 = vld [vmem:[#allocation2 + $0x90] sm:$0xf]
      %v7315 = vld [vmem:[#allocation2 + $0x94] sm:$0xf]
      %v7316 = vld [vmem:[#allocation2 + $0x98] sm:$0xf]
      %v7317 = vld [vmem:[#allocation2 + $0x9c] sm:$0xf]
      %v7318 = vld [vmem:[#allocation2 + $0xa0] sm:$0xf]
      %v7319 = vld [vmem:[#allocation2 + $0xa4] sm:$0xf]
      %v7320 = vld [vmem:[#allocation2 + $0xa8] sm:$0xf]
      %v7321 = vld [vmem:[#allocation2 + $0xac] sm:$0xf]
      %v7322 = vld [vmem:[#allocation2 + $0xb0] sm:$0xf]
      %v7323 = vld [vmem:[#allocation2 + $0xb4] sm:$0xf]
      %v7324 = vld [vmem:[#allocation2 + $0xb8] sm:$0xf]
      %v7325 = vld [vmem:[#allocation2 + $0xbc] sm:$0xf]
      %v7326 = vld [vmem:[#allocation2 + $0xc0] sm:$0xf]
      %v7327 = vld [vmem:[#allocation2 + $0xc4] sm:$0xf]
      %v7328 = vld [vmem:[#allocation2 + $0xc8] sm:$0xf]
      %s7329 = scalar_lea.vmem %s1, 768
      %v7330 = vld [vmem:[%s7329] sm:$0xf]
      %v7331 = vld [vmem:[%s7329 + $0x4] sm:$0xf]
      %v7332 = vld [vmem:[%s7329 + $0x8] sm:$0xf]
      %v7333 = vld [vmem:[%s7329 + $0xc] sm:$0xf]
      %v7334 = vld [vmem:[%s7329 + $0x10] sm:$0xf]
      %v7335 = vld [vmem:[%s7329 + $0x14] sm:$0xf]
      %v7336 = vld [vmem:[%s7329 + $0x18] sm:$0xf]
      %v7337 = vld [vmem:[%s7329 + $0x1c] sm:$0xf]
      %v7338 = vld [vmem:[%s7329 + $0x20] sm:$0xf]
      %v7339 = vld [vmem:[%s7329 + $0x24] sm:$0xf]
      %v7340 = vld [vmem:[%s7329 + $0x28] sm:$0xf]
      %v7341 = vld [vmem:[%s7329 + $0x2c] sm:$0xf]
      %v7342 = vld [vmem:[%s7329 + $0x30] sm:$0xf]
      %v7343 = vld [vmem:[%s7329 + $0x34] sm:$0xf]
      %v7344 = vld [vmem:[%s7329 + $0x38] sm:$0xf]
      %v7345 = vld [vmem:[%s7329 + $0x3c] sm:$0xf]
      %v7394 = vunpack.c.l.b16 %v7281
      %v7395 = vunpack.c.l.b16 %v7282
      %v7396 = vunpack.c.l.b16 %v7283
      %v7397 = vunpack.c.l.b16 %v7284
      %v7398 = vunpack.c.l.b16 %v7285
      %v7399 = vunpack.c.l.b16 %v7286
      %v7400 = vunpack.c.l.b16 %v7287
      %v7401 = vunpack.c.l.b16 %v7288
      %v7402 = vunpack.c.l.b16 %v7289
      %v7403 = vunpack.c.l.b16 %v7290
      %v7404 = vunpack.c.l.b16 %v7291
      %v7405 = vunpack.c.l.b16 %v7292
      %v7406 = vunpack.c.l.b16 %v7293
      %v7407 = vunpack.c.l.b16 %v7294
      %v7408 = vunpack.c.l.b16 %v7295
      %v7409 = vunpack.c.l.b16 %v7296
      %v7410 = vunpack.c.l.b16 %v7297
      %v7411 = vunpack.c.l.b16 %v7298
      %v7412 = vunpack.c.l.b16 %v7299
      %v7413 = vunpack.c.l.b16 %v7300
      %v7414 = vunpack.c.l.b16 %v7301
      %v7415 = vunpack.c.l.b16 %v7302
      %v7416 = vunpack.c.l.b16 %v7303
      %v7417 = vunpack.c.l.b16 %v7304
      %v7418 = vunpack.c.l.b16 %v7305
      %v7419 = vunpack.c.l.b16 %v7306
      %v7420 = vunpack.c.l.b16 %v7307
      %v7421 = vunpack.c.l.b16 %v7308
      %v7422 = vunpack.c.l.b16 %v7309
      %v7423 = vunpack.c.l.b16 %v7310
      %v7424 = vunpack.c.l.b16 %v7311
      %v7425 = vunpack.c.l.b16 %v7312
      %v7426 = vunpack.c.l.b16 %v7313
      %v7427 = vunpack.c.l.b16 %v7314
      %v7428 = vunpack.c.l.b16 %v7315
      %v7429 = vunpack.c.l.b16 %v7316
      %v7430 = vunpack.c.l.b16 %v7317
      %v7431 = vunpack.c.l.b16 %v7318
      %v7432 = vunpack.c.l.b16 %v7319
      %v7433 = vunpack.c.l.b16 %v7320
      %v7434 = vunpack.c.l.b16 %v7321
      %v7435 = vunpack.c.l.b16 %v7322
      %v7436 = vunpack.c.l.b16 %v7323
      %v7437 = vunpack.c.l.b16 %v7324
      %v7438 = vunpack.c.l.b16 %v7325
      %v7439 = vunpack.c.l.b16 %v7326
      %v7440 = vunpack.c.l.b16 %v7327
      %v7441 = vunpack.c.l.b16 %v7328
      %v7442 = vpack.c.b16 %v7395, %v7394
      %v7443 = vpack.c.b16 %v7397, %v7396
      %v7444 = vpack.c.b16 %v7399, %v7398
      %v7445 = vpack.c.b16 %v7401, %v7400
      %v7446 = vpack.c.b16 %v7403, %v7402
      %v7447 = vpack.c.b16 %v7405, %v7404
      %v7448 = vpack.c.b16 %v7407, %v7406
      %v7449 = vpack.c.b16 %v7409, %v7408
      %v7450 = vpack.c.b16 %v7411, %v7410
      %v7451 = vpack.c.b16 %v7413, %v7412
      %v7452 = vpack.c.b16 %v7415, %v7414
      %v7453 = vpack.c.b16 %v7417, %v7416
      %v7454 = vpack.c.b16 %v7419, %v7418
      %v7455 = vpack.c.b16 %v7421, %v7420
      %v7456 = vpack.c.b16 %v7423, %v7422
      %v7457 = vpack.c.b16 %v7425, %v7424
      %v7458 = vpack.c.b16 %v7427, %v7426
      %v7459 = vpack.c.b16 %v7429, %v7428
      %v7460 = vpack.c.b16 %v7431, %v7430
      %v7461 = vpack.c.b16 %v7433, %v7432
      %v7462 = vpack.c.b16 %v7435, %v7434
      %v7463 = vpack.c.b16 %v7437, %v7436
      %v7464 = vpack.c.b16 %v7439, %v7438
      %v7465 = vpack.c.b16 %v7441, %v7440
      %v7506 = vunpack.c.l.b16 %v7330
      %v7507 = vunpack.c.l.b16 %v7331
      %v7508 = vunpack.c.l.b16 %v7332
      %v7509 = vunpack.c.l.b16 %v7333
      %v7510 = vunpack.c.l.b16 %v7334
      %v7511 = vunpack.c.l.b16 %v7335
      %v7512 = vunpack.c.l.b16 %v7336
      %v7513 = vunpack.c.l.b16 %v7337
      %v7514 = vunpack.c.l.b16 %v7338
      %v7515 = vunpack.c.l.b16 %v7339
      %v7516 = vunpack.c.l.b16 %v7340
      %v7517 = vunpack.c.l.b16 %v7341
      %v7518 = vunpack.c.l.b16 %v7342
      %v7519 = vunpack.c.l.b16 %v7343
      %v7520 = vunpack.c.l.b16 %v7344
      %v7521 = vunpack.c.l.b16 %v7345
      %v7522 = vpack.c.b16 %v7507, %v7506
      %v7523 = vpack.c.b16 %v7509, %v7508
      %v7524 = vpack.c.b16 %v7511, %v7510
      %v7525 = vpack.c.b16 %v7513, %v7512
      %v7526 = vpack.c.b16 %v7515, %v7514
      %v7527 = vpack.c.b16 %v7517, %v7516
      %v7528 = vpack.c.b16 %v7519, %v7518
      %v7529 = vpack.c.b16 %v7521, %v7520
      %7538 = vmatpush.bf16.msra.mxu0 %v7529
      %7539 = vmatpush.bf16.msra.mxu0 %v7528
      %7540 = vmatpush.bf16.msra.mxu0 %v7527
      %7541 = vmatpush.bf16.msra.mxu0 %v7526
      %7542 = vmatpush.bf16.msra.mxu0 %v7525
      %7543 = vmatpush.bf16.msra.mxu0 %v7524
      %7544 = vmatpush.bf16.msra.mxu0 %v7523
      %7545 = vmatpush.bf16.msra.mxu0 %v7522
      %7546 = vmatmul.bf16.gmra.mxu0 %v7442
      %v7547 = vpop.f32.mrf.mxu0
      %v7548 = vadd.f32 0.0, %v7547
      %v7549 = vpop.f32.mrf.mxu0
      %v7550 = vadd.f32 0.0, %v7549
      %7551 = vmatmul.bf16.gmra.mxu0 %v7443
      %v7552 = vpop.f32.mrf.mxu0
      %v7553 = vadd.f32 0.0, %v7552
      %v7554 = vpop.f32.mrf.mxu0
      %v7555 = vadd.f32 0.0, %v7554
      %7556 = vmatmul.bf16.gmra.mxu0 %v7444
      %v7557 = vpop.f32.mrf.mxu0
      %v7558 = vadd.f32 0.0, %v7557
      %v7559 = vpop.f32.mrf.mxu0
      %v7560 = vadd.f32 0.0, %v7559
      %7561 = vmatmul.bf16.gmra.mxu0 %v7445
      %v7562 = vpop.f32.mrf.mxu0
      %v7563 = vadd.f32 0.0, %v7562
      %v7564 = vpop.f32.mrf.mxu0
      %v7565 = vadd.f32 0.0, %v7564
      %7566 = vmatmul.bf16.gmra.mxu0 %v7446
      %v7567 = vpop.f32.mrf.mxu0
      %v7568 = vadd.f32 0.0, %v7567
      %v7569 = vpop.f32.mrf.mxu0
      %v7570 = vadd.f32 0.0, %v7569
      %7571 = vmatmul.bf16.gmra.mxu0 %v7447
      %v7572 = vpop.f32.mrf.mxu0
      %v7573 = vadd.f32 0.0, %v7572
      %v7574 = vpop.f32.mrf.mxu0
      %v7575 = vadd.f32 0.0, %v7574
      %7576 = vmatmul.bf16.gmra.mxu0 %v7448
      %v7577 = vpop.f32.mrf.mxu0
      %v7578 = vadd.f32 0.0, %v7577
      %v7579 = vpop.f32.mrf.mxu0
      %v7580 = vadd.f32 0.0, %v7579
      %7581 = vmatmul.bf16.gmra.mxu0 %v7449
      %v7582 = vpop.f32.mrf.mxu0
      %v7583 = vadd.f32 0.0, %v7582
      %v7584 = vpop.f32.mrf.mxu0
      %v7585 = vadd.f32 0.0, %v7584
      %7586 = vmatmul.bf16.gmra.mxu0 %v7450
      %v7587 = vpop.f32.mrf.mxu0
      %v7588 = vadd.f32 0.0, %v7587
      %v7589 = vpop.f32.mrf.mxu0
      %v7590 = vadd.f32 0.0, %v7589
      %7591 = vmatmul.bf16.gmra.mxu0 %v7451
      %v7592 = vpop.f32.mrf.mxu0
      %v7593 = vadd.f32 0.0, %v7592
      %v7594 = vpop.f32.mrf.mxu0
      %v7595 = vadd.f32 0.0, %v7594
      %7596 = vmatmul.bf16.gmra.mxu0 %v7452
      %v7597 = vpop.f32.mrf.mxu0
      %v7598 = vadd.f32 0.0, %v7597
      %v7599 = vpop.f32.mrf.mxu0
      %v7600 = vadd.f32 0.0, %v7599
      %7601 = vmatmul.bf16.gmra.mxu0 %v7453
      %v7602 = vpop.f32.mrf.mxu0
      %v7603 = vadd.f32 0.0, %v7602
      %v7604 = vpop.f32.mrf.mxu0
      %v7605 = vadd.f32 0.0, %v7604
      %7606 = vmatmul.bf16.gmra.mxu0 %v7454
      %v7607 = vpop.f32.mrf.mxu0
      %v7608 = vadd.f32 0.0, %v7607
      %v7609 = vpop.f32.mrf.mxu0
      %v7610 = vadd.f32 0.0, %v7609
      %7611 = vmatmul.bf16.gmra.mxu0 %v7455
      %v7612 = vpop.f32.mrf.mxu0
      %v7613 = vadd.f32 0.0, %v7612
      %v7614 = vpop.f32.mrf.mxu0
      %v7615 = vadd.f32 0.0, %v7614
      %7616 = vmatmul.bf16.gmra.mxu0 %v7456
      %v7617 = vpop.f32.mrf.mxu0
      %v7618 = vadd.f32 0.0, %v7617
      %v7619 = vpop.f32.mrf.mxu0
      %v7620 = vadd.f32 0.0, %v7619
      %7621 = vmatmul.bf16.gmra.mxu0 %v7457
      %v7622 = vpop.f32.mrf.mxu0
      %v7623 = vadd.f32 0.0, %v7622
      %v7624 = vpop.f32.mrf.mxu0
      %v7625 = vadd.f32 0.0, %v7624
      %7626 = vmatmul.bf16.gmra.mxu0 %v7458
      %v7627 = vpop.f32.mrf.mxu0
      %v7628 = vadd.f32 0.0, %v7627
      %v7629 = vpop.f32.mrf.mxu0
      %v7630 = vadd.f32 0.0, %v7629
      %7631 = vmatmul.bf16.gmra.mxu0 %v7459
      %v7632 = vpop.f32.mrf.mxu0
      %v7633 = vadd.f32 0.0, %v7632
      %v7634 = vpop.f32.mrf.mxu0
      %v7635 = vadd.f32 0.0, %v7634
      %7636 = vmatmul.bf16.gmra.mxu0 %v7460
      %v7637 = vpop.f32.mrf.mxu0
      %v7638 = vadd.f32 0.0, %v7637
      %v7639 = vpop.f32.mrf.mxu0
      %v7640 = vadd.f32 0.0, %v7639
      %7641 = vmatmul.bf16.gmra.mxu0 %v7461
      %v7642 = vpop.f32.mrf.mxu0
      %v7643 = vadd.f32 0.0, %v7642
      %v7644 = vpop.f32.mrf.mxu0
      %v7645 = vadd.f32 0.0, %v7644
      %7646 = vmatmul.bf16.gmra.mxu0 %v7462
      %v7647 = vpop.f32.mrf.mxu0
      %v7648 = vadd.f32 0.0, %v7647
      %v7649 = vpop.f32.mrf.mxu0
      %v7650 = vadd.f32 0.0, %v7649
      %7651 = vmatmul.bf16.gmra.mxu0 %v7463
      %v7652 = vpop.f32.mrf.mxu0
      %v7653 = vadd.f32 0.0, %v7652
      %v7654 = vpop.f32.mrf.mxu0
      %v7655 = vadd.f32 0.0, %v7654
      %7656 = vmatmul.bf16.gmra.mxu0 %v7464
      %v7657 = vpop.f32.mrf.mxu0
      %v7658 = vadd.f32 0.0, %v7657
      %v7659 = vpop.f32.mrf.mxu0
      %v7660 = vadd.f32 0.0, %v7659
      %7661 = vmatmul.bf16.gmra.mxu0 %v7465
      %v7662 = vpop.f32.mrf.mxu0
      %v7663 = vadd.f32 0.0, %v7662
      %v7664 = vpop.f32.mrf.mxu0
      %v7665 = vadd.f32 0.0, %v7664
      %7666 = vdwg.mxu0
      %v7667 = vadd.f32 %v7233, %v7548
      %v7668 = vadd.f32 %v7234, %v7550
      %v7669 = vadd.f32 %v7235, %v7553
      %v7670 = vadd.f32 %v7236, %v7555
      %v7671 = vadd.f32 %v7237, %v7558
      %v7672 = vadd.f32 %v7238, %v7560
      %v7673 = vadd.f32 %v7239, %v7563
      %v7674 = vadd.f32 %v7240, %v7565
      %v7675 = vadd.f32 %v7241, %v7568
      %v7676 = vadd.f32 %v7242, %v7570
      %v7677 = vadd.f32 %v7243, %v7573
      %v7678 = vadd.f32 %v7244, %v7575
      %v7679 = vadd.f32 %v7245, %v7578
      %v7680 = vadd.f32 %v7246, %v7580
      %v7681 = vadd.f32 %v7247, %v7583
      %v7682 = vadd.f32 %v7248, %v7585
      %v7683 = vadd.f32 %v7249, %v7588
      %v7684 = vadd.f32 %v7250, %v7590
      %v7685 = vadd.f32 %v7251, %v7593
      %v7686 = vadd.f32 %v7252, %v7595
      %v7687 = vadd.f32 %v7253, %v7598
      %v7688 = vadd.f32 %v7254, %v7600
      %v7689 = vadd.f32 %v7255, %v7603
      %v7690 = vadd.f32 %v7256, %v7605
      %v7691 = vadd.f32 %v7257, %v7608
      %v7692 = vadd.f32 %v7258, %v7610
      %v7693 = vadd.f32 %v7259, %v7613
      %v7694 = vadd.f32 %v7260, %v7615
      %v7695 = vadd.f32 %v7261, %v7618
      %v7696 = vadd.f32 %v7262, %v7620
      %v7697 = vadd.f32 %v7263, %v7623
      %v7698 = vadd.f32 %v7264, %v7625
      %v7699 = vadd.f32 %v7265, %v7628
      %v7700 = vadd.f32 %v7266, %v7630
      %v7701 = vadd.f32 %v7267, %v7633
      %v7702 = vadd.f32 %v7268, %v7635
      %v7703 = vadd.f32 %v7269, %v7638
      %v7704 = vadd.f32 %v7270, %v7640
      %v7705 = vadd.f32 %v7271, %v7643
      %v7706 = vadd.f32 %v7272, %v7645
      %v7707 = vadd.f32 %v7273, %v7648
      %v7708 = vadd.f32 %v7274, %v7650
      %v7709 = vadd.f32 %v7275, %v7653
      %v7710 = vadd.f32 %v7276, %v7655
      %v7711 = vadd.f32 %v7277, %v7658
      %v7712 = vadd.f32 %v7278, %v7660
      %v7713 = vadd.f32 %v7279, %v7663
      %v7714 = vadd.f32 %v7280, %v7665
      %v7715 = vld [vmem:[#allocation2 + $0xc] sm:$0xf]
      %v7716 = vld [vmem:[#allocation2 + $0x10] sm:$0xf]
      %v7717 = vld [vmem:[#allocation2 + $0x14] sm:$0xf]
      %v7718 = vld [vmem:[#allocation2 + $0x18] sm:$0xf]
      %v7719 = vld [vmem:[#allocation2 + $0x1c] sm:$0xf]
      %v7720 = vld [vmem:[#allocation2 + $0x20] sm:$0xf]
      %v7721 = vld [vmem:[#allocation2 + $0x24] sm:$0xf]
      %v7722 = vld [vmem:[#allocation2 + $0x28] sm:$0xf]
      %v7723 = vld [vmem:[#allocation2 + $0x2c] sm:$0xf]
      %v7724 = vld [vmem:[#allocation2 + $0x30] sm:$0xf]
      %v7725 = vld [vmem:[#allocation2 + $0x34] sm:$0xf]
      %v7726 = vld [vmem:[#allocation2 + $0x38] sm:$0xf]
      %v7727 = vld [vmem:[#allocation2 + $0x3c] sm:$0xf]
      %v7728 = vld [vmem:[#allocation2 + $0x40] sm:$0xf]
      %v7729 = vld [vmem:[#allocation2 + $0x44] sm:$0xf]
      %v7730 = vld [vmem:[#allocation2 + $0x48] sm:$0xf]
      %v7731 = vld [vmem:[#allocation2 + $0x4c] sm:$0xf]
      %v7732 = vld [vmem:[#allocation2 + $0x50] sm:$0xf]
      %v7733 = vld [vmem:[#allocation2 + $0x54] sm:$0xf]
      %v7734 = vld [vmem:[#allocation2 + $0x58] sm:$0xf]
      %v7735 = vld [vmem:[#allocation2 + $0x5c] sm:$0xf]
      %v7736 = vld [vmem:[#allocation2 + $0x60] sm:$0xf]
      %v7737 = vld [vmem:[#allocation2 + $0x64] sm:$0xf]
      %v7738 = vld [vmem:[#allocation2 + $0x68] sm:$0xf]
      %v7739 = vld [vmem:[#allocation2 + $0x6c] sm:$0xf]
      %v7740 = vld [vmem:[#allocation2 + $0x70] sm:$0xf]
      %v7741 = vld [vmem:[#allocation2 + $0x74] sm:$0xf]
      %v7742 = vld [vmem:[#allocation2 + $0x78] sm:$0xf]
      %v7743 = vld [vmem:[#allocation2 + $0x7c] sm:$0xf]
      %v7744 = vld [vmem:[#allocation2 + $0x80] sm:$0xf]
      %v7745 = vld [vmem:[#allocation2 + $0x84] sm:$0xf]
      %v7746 = vld [vmem:[#allocation2 + $0x88] sm:$0xf]
      %v7747 = vld [vmem:[#allocation2 + $0x8c] sm:$0xf]
      %v7748 = vld [vmem:[#allocation2 + $0x90] sm:$0xf]
      %v7749 = vld [vmem:[#allocation2 + $0x94] sm:$0xf]
      %v7750 = vld [vmem:[#allocation2 + $0x98] sm:$0xf]
      %v7751 = vld [vmem:[#allocation2 + $0x9c] sm:$0xf]
      %v7752 = vld [vmem:[#allocation2 + $0xa0] sm:$0xf]
      %v7753 = vld [vmem:[#allocation2 + $0xa4] sm:$0xf]
      %v7754 = vld [vmem:[#allocation2 + $0xa8] sm:$0xf]
      %v7755 = vld [vmem:[#allocation2 + $0xac] sm:$0xf]
      %v7756 = vld [vmem:[#allocation2 + $0xb0] sm:$0xf]
      %v7757 = vld [vmem:[#allocation2 + $0xb4] sm:$0xf]
      %v7758 = vld [vmem:[#allocation2 + $0xb8] sm:$0xf]
      %v7759 = vld [vmem:[#allocation2 + $0xbc] sm:$0xf]
      %v7760 = vld [vmem:[#allocation2 + $0xc0] sm:$0xf]
      %v7761 = vld [vmem:[#allocation2 + $0xc4] sm:$0xf]
      %v7762 = vld [vmem:[#allocation2 + $0xc8] sm:$0xf]
      %v7763 = vld [vmem:[#allocation2 + $0xcc] sm:$0x1]
      %s7764 = scalar_lea.vmem %s1, 832
      %v7765 = vld [vmem:[%s7764] sm:$0xf]
      %v7766 = vld [vmem:[%s7764 + $0x4] sm:$0xf]
      %v7767 = vld [vmem:[%s7764 + $0x8] sm:$0xf]
      %v7768 = vld [vmem:[%s7764 + $0xc] sm:$0xf]
      %v7769 = vld [vmem:[%s7764 + $0x10] sm:$0xf]
      %v7770 = vld [vmem:[%s7764 + $0x14] sm:$0xf]
      %v7771 = vld [vmem:[%s7764 + $0x18] sm:$0xf]
      %v7772 = vld [vmem:[%s7764 + $0x1c] sm:$0xf]
      %v7773 = vld [vmem:[%s7764 + $0x20] sm:$0xf]
      %v7774 = vld [vmem:[%s7764 + $0x24] sm:$0xf]
      %v7775 = vld [vmem:[%s7764 + $0x28] sm:$0xf]
      %v7776 = vld [vmem:[%s7764 + $0x2c] sm:$0xf]
      %v7777 = vld [vmem:[%s7764 + $0x30] sm:$0xf]
      %v7778 = vld [vmem:[%s7764 + $0x34] sm:$0xf]
      %v7779 = vld [vmem:[%s7764 + $0x38] sm:$0xf]
      %v7780 = vld [vmem:[%s7764 + $0x3c] sm:$0xf]
      %v7830 = vunpack.c.l.b16 %v7715
      %v7831 = vunpack.c.l.b16 %v7716
      %v7832 = vunpack.c.l.b16 %v7717
      %v7833 = vunpack.c.l.b16 %v7718
      %v7834 = vunpack.c.l.b16 %v7719
      %v7835 = vunpack.c.l.b16 %v7720
      %v7836 = vunpack.c.l.b16 %v7721
      %v7837 = vunpack.c.l.b16 %v7722
      %v7838 = vunpack.c.l.b16 %v7723
      %v7839 = vunpack.c.l.b16 %v7724
      %v7840 = vunpack.c.l.b16 %v7725
      %v7841 = vunpack.c.l.b16 %v7726
      %v7842 = vunpack.c.l.b16 %v7727
      %v7843 = vunpack.c.l.b16 %v7728
      %v7844 = vunpack.c.l.b16 %v7729
      %v7845 = vunpack.c.l.b16 %v7730
      %v7846 = vunpack.c.l.b16 %v7731
      %v7847 = vunpack.c.l.b16 %v7732
      %v7848 = vunpack.c.l.b16 %v7733
      %v7849 = vunpack.c.l.b16 %v7734
      %v7850 = vunpack.c.l.b16 %v7735
      %v7851 = vunpack.c.l.b16 %v7736
      %v7852 = vunpack.c.l.b16 %v7737
      %v7853 = vunpack.c.l.b16 %v7738
      %v7854 = vunpack.c.l.b16 %v7739
      %v7855 = vunpack.c.l.b16 %v7740
      %v7856 = vunpack.c.l.b16 %v7741
      %v7857 = vunpack.c.l.b16 %v7742
      %v7858 = vunpack.c.l.b16 %v7743
      %v7859 = vunpack.c.l.b16 %v7744
      %v7860 = vunpack.c.l.b16 %v7745
      %v7861 = vunpack.c.l.b16 %v7746
      %v7862 = vunpack.c.l.b16 %v7747
      %v7863 = vunpack.c.l.b16 %v7748
      %v7864 = vunpack.c.l.b16 %v7749
      %v7865 = vunpack.c.l.b16 %v7750
      %v7866 = vunpack.c.l.b16 %v7751
      %v7867 = vunpack.c.l.b16 %v7752
      %v7868 = vunpack.c.l.b16 %v7753
      %v7869 = vunpack.c.l.b16 %v7754
      %v7870 = vunpack.c.l.b16 %v7755
      %v7871 = vunpack.c.l.b16 %v7756
      %v7872 = vunpack.c.l.b16 %v7757
      %v7873 = vunpack.c.l.b16 %v7758
      %v7874 = vunpack.c.l.b16 %v7759
      %v7875 = vunpack.c.l.b16 %v7760
      %v7876 = vunpack.c.l.b16 %v7761
      %v7877 = vunpack.c.l.b16 %v7762
      %v7878 = vunpack.c.l.b16 %v7763
      %v7879 = vpack.c.b16 %v7831, %v7830
      %v7880 = vpack.c.b16 %v7833, %v7832
      %v7881 = vpack.c.b16 %v7835, %v7834
      %v7882 = vpack.c.b16 %v7837, %v7836
      %v7883 = vpack.c.b16 %v7839, %v7838
      %v7884 = vpack.c.b16 %v7841, %v7840
      %v7885 = vpack.c.b16 %v7843, %v7842
      %v7886 = vpack.c.b16 %v7845, %v7844
      %v7887 = vpack.c.b16 %v7847, %v7846
      %v7888 = vpack.c.b16 %v7849, %v7848
      %v7889 = vpack.c.b16 %v7851, %v7850
      %v7890 = vpack.c.b16 %v7853, %v7852
      %v7891 = vpack.c.b16 %v7855, %v7854
      %v7892 = vpack.c.b16 %v7857, %v7856
      %v7893 = vpack.c.b16 %v7859, %v7858
      %v7894 = vpack.c.b16 %v7861, %v7860
      %v7895 = vpack.c.b16 %v7863, %v7862
      %v7896 = vpack.c.b16 %v7865, %v7864
      %v7897 = vpack.c.b16 %v7867, %v7866
      %v7898 = vpack.c.b16 %v7869, %v7868
      %v7899 = vpack.c.b16 %v7871, %v7870
      %v7900 = vpack.c.b16 %v7873, %v7872
      %v7901 = vpack.c.b16 %v7875, %v7874
      %v7902 = vpack.c.b16 %v7877, %v7876
      %v7903 = vpack.c.b16 %v7878, %v7878
      %v7905 = vshrl.u32 %v7879, 16
      %v7907 = vshll.u32 %v7879, 16
      %v7909 = vrot.slane %v7907, 1
      %v7910 = vor.u32 %v7905, %v7909
      %v7912 = vshll.u32 %v7880, 16
      %v7914 = vrot.slane %v7912, 1
      %v7915 = vsel %vm1146, %v7910, %v7914
      %v7916 = vshrl.u32 %v7880, 16
      %v7918 = vor.u32 %v7916, %v7914
      %v7920 = vshll.u32 %v7881, 16
      %v7922 = vrot.slane %v7920, 1
      %v7923 = vsel %vm1146, %v7918, %v7922
      %v7924 = vshrl.u32 %v7881, 16
      %v7926 = vor.u32 %v7924, %v7922
      %v7928 = vshll.u32 %v7882, 16
      %v7930 = vrot.slane %v7928, 1
      %v7931 = vsel %vm1146, %v7926, %v7930
      %v7932 = vshrl.u32 %v7882, 16
      %v7934 = vor.u32 %v7932, %v7930
      %v7936 = vshll.u32 %v7883, 16
      %v7938 = vrot.slane %v7936, 1
      %v7939 = vsel %vm1146, %v7934, %v7938
      %v7940 = vshrl.u32 %v7883, 16
      %v7942 = vor.u32 %v7940, %v7938
      %v7944 = vshll.u32 %v7884, 16
      %v7946 = vrot.slane %v7944, 1
      %v7947 = vsel %vm1146, %v7942, %v7946
      %v7948 = vshrl.u32 %v7884, 16
      %v7950 = vor.u32 %v7948, %v7946
      %v7952 = vshll.u32 %v7885, 16
      %v7954 = vrot.slane %v7952, 1
      %v7955 = vsel %vm1146, %v7950, %v7954
      %v7956 = vshrl.u32 %v7885, 16
      %v7958 = vor.u32 %v7956, %v7954
      %v7960 = vshll.u32 %v7886, 16
      %v7962 = vrot.slane %v7960, 1
      %v7963 = vsel %vm1146, %v7958, %v7962
      %v7964 = vshrl.u32 %v7886, 16
      %v7966 = vor.u32 %v7964, %v7962
      %v7968 = vshll.u32 %v7887, 16
      %v7970 = vrot.slane %v7968, 1
      %v7971 = vsel %vm1146, %v7966, %v7970
      %v7972 = vshrl.u32 %v7887, 16
      %v7974 = vor.u32 %v7972, %v7970
      %v7976 = vshll.u32 %v7888, 16
      %v7978 = vrot.slane %v7976, 1
      %v7979 = vsel %vm1146, %v7974, %v7978
      %v7980 = vshrl.u32 %v7888, 16
      %v7982 = vor.u32 %v7980, %v7978
      %v7984 = vshll.u32 %v7889, 16
      %v7986 = vrot.slane %v7984, 1
      %v7987 = vsel %vm1146, %v7982, %v7986
      %v7988 = vshrl.u32 %v7889, 16
      %v7990 = vor.u32 %v7988, %v7986
      %v7992 = vshll.u32 %v7890, 16
      %v7994 = vrot.slane %v7992, 1
      %v7995 = vsel %vm1146, %v7990, %v7994
      %v7996 = vshrl.u32 %v7890, 16
      %v7998 = vor.u32 %v7996, %v7994
      %v8000 = vshll.u32 %v7891, 16
      %v8002 = vrot.slane %v8000, 1
      %v8003 = vsel %vm1146, %v7998, %v8002
      %v8004 = vshrl.u32 %v7891, 16
      %v8006 = vor.u32 %v8004, %v8002
      %v8008 = vshll.u32 %v7892, 16
      %v8010 = vrot.slane %v8008, 1
      %v8011 = vsel %vm1146, %v8006, %v8010
      %v8012 = vshrl.u32 %v7892, 16
      %v8014 = vor.u32 %v8012, %v8010
      %v8016 = vshll.u32 %v7893, 16
      %v8018 = vrot.slane %v8016, 1
      %v8019 = vsel %vm1146, %v8014, %v8018
      %v8020 = vshrl.u32 %v7893, 16
      %v8022 = vor.u32 %v8020, %v8018
      %v8024 = vshll.u32 %v7894, 16
      %v8026 = vrot.slane %v8024, 1
      %v8027 = vsel %vm1146, %v8022, %v8026
      %v8028 = vshrl.u32 %v7894, 16
      %v8030 = vor.u32 %v8028, %v8026
      %v8032 = vshll.u32 %v7895, 16
      %v8034 = vrot.slane %v8032, 1
      %v8035 = vsel %vm1146, %v8030, %v8034
      %v8036 = vshrl.u32 %v7895, 16
      %v8038 = vor.u32 %v8036, %v8034
      %v8040 = vshll.u32 %v7896, 16
      %v8042 = vrot.slane %v8040, 1
      %v8043 = vsel %vm1146, %v8038, %v8042
      %v8044 = vshrl.u32 %v7896, 16
      %v8046 = vor.u32 %v8044, %v8042
      %v8048 = vshll.u32 %v7897, 16
      %v8050 = vrot.slane %v8048, 1
      %v8051 = vsel %vm1146, %v8046, %v8050
      %v8052 = vshrl.u32 %v7897, 16
      %v8054 = vor.u32 %v8052, %v8050
      %v8056 = vshll.u32 %v7898, 16
      %v8058 = vrot.slane %v8056, 1
      %v8059 = vsel %vm1146, %v8054, %v8058
      %v8060 = vshrl.u32 %v7898, 16
      %v8062 = vor.u32 %v8060, %v8058
      %v8064 = vshll.u32 %v7899, 16
      %v8066 = vrot.slane %v8064, 1
      %v8067 = vsel %vm1146, %v8062, %v8066
      %v8068 = vshrl.u32 %v7899, 16
      %v8070 = vor.u32 %v8068, %v8066
      %v8072 = vshll.u32 %v7900, 16
      %v8074 = vrot.slane %v8072, 1
      %v8075 = vsel %vm1146, %v8070, %v8074
      %v8076 = vshrl.u32 %v7900, 16
      %v8078 = vor.u32 %v8076, %v8074
      %v8080 = vshll.u32 %v7901, 16
      %v8082 = vrot.slane %v8080, 1
      %v8083 = vsel %vm1146, %v8078, %v8082
      %v8084 = vshrl.u32 %v7901, 16
      %v8086 = vor.u32 %v8084, %v8082
      %v8088 = vshll.u32 %v7902, 16
      %v8090 = vrot.slane %v8088, 1
      %v8091 = vsel %vm1146, %v8086, %v8090
      %v8092 = vshrl.u32 %v7902, 16
      %v8094 = vor.u32 %v8092, %v8090
      %v8096 = vshll.u32 %v7903, 16
      %v8098 = vrot.slane %v8096, 1
      %v8099 = vsel %vm1146, %v8094, %v8098
      %v8140 = vunpack.c.l.b16 %v7765
      %v8141 = vunpack.c.l.b16 %v7766
      %v8142 = vunpack.c.l.b16 %v7767
      %v8143 = vunpack.c.l.b16 %v7768
      %v8144 = vunpack.c.l.b16 %v7769
      %v8145 = vunpack.c.l.b16 %v7770
      %v8146 = vunpack.c.l.b16 %v7771
      %v8147 = vunpack.c.l.b16 %v7772
      %v8148 = vunpack.c.l.b16 %v7773
      %v8149 = vunpack.c.l.b16 %v7774
      %v8150 = vunpack.c.l.b16 %v7775
      %v8151 = vunpack.c.l.b16 %v7776
      %v8152 = vunpack.c.l.b16 %v7777
      %v8153 = vunpack.c.l.b16 %v7778
      %v8154 = vunpack.c.l.b16 %v7779
      %v8155 = vunpack.c.l.b16 %v7780
      %v8156 = vpack.c.b16 %v8141, %v8140
      %v8157 = vpack.c.b16 %v8143, %v8142
      %v8158 = vpack.c.b16 %v8145, %v8144
      %v8159 = vpack.c.b16 %v8147, %v8146
      %v8160 = vpack.c.b16 %v8149, %v8148
      %v8161 = vpack.c.b16 %v8151, %v8150
      %v8162 = vpack.c.b16 %v8153, %v8152
      %v8163 = vpack.c.b16 %v8155, %v8154
      %8172 = vmatpush.bf16.msra.mxu0 %v8163
      %8173 = vmatpush.bf16.msra.mxu0 %v8162
      %8174 = vmatpush.bf16.msra.mxu0 %v8161
      %8175 = vmatpush.bf16.msra.mxu0 %v8160
      %8176 = vmatpush.bf16.msra.mxu0 %v8159
      %8177 = vmatpush.bf16.msra.mxu0 %v8158
      %8178 = vmatpush.bf16.msra.mxu0 %v8157
      %8179 = vmatpush.bf16.msra.mxu0 %v8156
      %8180 = vmatmul.bf16.gmra.mxu0 %v7915
      %v8181 = vpop.f32.mrf.mxu0
      %v8182 = vadd.f32 0.0, %v8181
      %v8183 = vpop.f32.mrf.mxu0
      %v8184 = vadd.f32 0.0, %v8183
      %8185 = vmatmul.bf16.gmra.mxu0 %v7923
      %v8186 = vpop.f32.mrf.mxu0
      %v8187 = vadd.f32 0.0, %v8186
      %v8188 = vpop.f32.mrf.mxu0
      %v8189 = vadd.f32 0.0, %v8188
      %8190 = vmatmul.bf16.gmra.mxu0 %v7931
      %v8191 = vpop.f32.mrf.mxu0
      %v8192 = vadd.f32 0.0, %v8191
      %v8193 = vpop.f32.mrf.mxu0
      %v8194 = vadd.f32 0.0, %v8193
      %8195 = vmatmul.bf16.gmra.mxu0 %v7939
      %v8196 = vpop.f32.mrf.mxu0
      %v8197 = vadd.f32 0.0, %v8196
      %v8198 = vpop.f32.mrf.mxu0
      %v8199 = vadd.f32 0.0, %v8198
      %8200 = vmatmul.bf16.gmra.mxu0 %v7947
      %v8201 = vpop.f32.mrf.mxu0
      %v8202 = vadd.f32 0.0, %v8201
      %v8203 = vpop.f32.mrf.mxu0
      %v8204 = vadd.f32 0.0, %v8203
      %8205 = vmatmul.bf16.gmra.mxu0 %v7955
      %v8206 = vpop.f32.mrf.mxu0
      %v8207 = vadd.f32 0.0, %v8206
      %v8208 = vpop.f32.mrf.mxu0
      %v8209 = vadd.f32 0.0, %v8208
      %8210 = vmatmul.bf16.gmra.mxu0 %v7963
      %v8211 = vpop.f32.mrf.mxu0
      %v8212 = vadd.f32 0.0, %v8211
      %v8213 = vpop.f32.mrf.mxu0
      %v8214 = vadd.f32 0.0, %v8213
      %8215 = vmatmul.bf16.gmra.mxu0 %v7971
      %v8216 = vpop.f32.mrf.mxu0
      %v8217 = vadd.f32 0.0, %v8216
      %v8218 = vpop.f32.mrf.mxu0
      %v8219 = vadd.f32 0.0, %v8218
      %8220 = vmatmul.bf16.gmra.mxu0 %v7979
      %v8221 = vpop.f32.mrf.mxu0
      %v8222 = vadd.f32 0.0, %v8221
      %v8223 = vpop.f32.mrf.mxu0
      %v8224 = vadd.f32 0.0, %v8223
      %8225 = vmatmul.bf16.gmra.mxu0 %v7987
      %v8226 = vpop.f32.mrf.mxu0
      %v8227 = vadd.f32 0.0, %v8226
      %v8228 = vpop.f32.mrf.mxu0
      %v8229 = vadd.f32 0.0, %v8228
      %8230 = vmatmul.bf16.gmra.mxu0 %v7995
      %v8231 = vpop.f32.mrf.mxu0
      %v8232 = vadd.f32 0.0, %v8231
      %v8233 = vpop.f32.mrf.mxu0
      %v8234 = vadd.f32 0.0, %v8233
      %8235 = vmatmul.bf16.gmra.mxu0 %v8003
      %v8236 = vpop.f32.mrf.mxu0
      %v8237 = vadd.f32 0.0, %v8236
      %v8238 = vpop.f32.mrf.mxu0
      %v8239 = vadd.f32 0.0, %v8238
      %8240 = vmatmul.bf16.gmra.mxu0 %v8011
      %v8241 = vpop.f32.mrf.mxu0
      %v8242 = vadd.f32 0.0, %v8241
      %v8243 = vpop.f32.mrf.mxu0
      %v8244 = vadd.f32 0.0, %v8243
      %8245 = vmatmul.bf16.gmra.mxu0 %v8019
      %v8246 = vpop.f32.mrf.mxu0
      %v8247 = vadd.f32 0.0, %v8246
      %v8248 = vpop.f32.mrf.mxu0
      %v8249 = vadd.f32 0.0, %v8248
      %8250 = vmatmul.bf16.gmra.mxu0 %v8027
      %v8251 = vpop.f32.mrf.mxu0
      %v8252 = vadd.f32 0.0, %v8251
      %v8253 = vpop.f32.mrf.mxu0
      %v8254 = vadd.f32 0.0, %v8253
      %8255 = vmatmul.bf16.gmra.mxu0 %v8035
      %v8256 = vpop.f32.mrf.mxu0
      %v8257 = vadd.f32 0.0, %v8256
      %v8258 = vpop.f32.mrf.mxu0
      %v8259 = vadd.f32 0.0, %v8258
      %8260 = vmatmul.bf16.gmra.mxu0 %v8043
      %v8261 = vpop.f32.mrf.mxu0
      %v8262 = vadd.f32 0.0, %v8261
      %v8263 = vpop.f32.mrf.mxu0
      %v8264 = vadd.f32 0.0, %v8263
      %8265 = vmatmul.bf16.gmra.mxu0 %v8051
      %v8266 = vpop.f32.mrf.mxu0
      %v8267 = vadd.f32 0.0, %v8266
      %v8268 = vpop.f32.mrf.mxu0
      %v8269 = vadd.f32 0.0, %v8268
      %8270 = vmatmul.bf16.gmra.mxu0 %v8059
      %v8271 = vpop.f32.mrf.mxu0
      %v8272 = vadd.f32 0.0, %v8271
      %v8273 = vpop.f32.mrf.mxu0
      %v8274 = vadd.f32 0.0, %v8273
      %8275 = vmatmul.bf16.gmra.mxu0 %v8067
      %v8276 = vpop.f32.mrf.mxu0
      %v8277 = vadd.f32 0.0, %v8276
      %v8278 = vpop.f32.mrf.mxu0
      %v8279 = vadd.f32 0.0, %v8278
      %8280 = vmatmul.bf16.gmra.mxu0 %v8075
      %v8281 = vpop.f32.mrf.mxu0
      %v8282 = vadd.f32 0.0, %v8281
      %v8283 = vpop.f32.mrf.mxu0
      %v8284 = vadd.f32 0.0, %v8283
      %8285 = vmatmul.bf16.gmra.mxu0 %v8083
      %v8286 = vpop.f32.mrf.mxu0
      %v8287 = vadd.f32 0.0, %v8286
      %v8288 = vpop.f32.mrf.mxu0
      %v8289 = vadd.f32 0.0, %v8288
      %8290 = vmatmul.bf16.gmra.mxu0 %v8091
      %v8291 = vpop.f32.mrf.mxu0
      %v8292 = vadd.f32 0.0, %v8291
      %v8293 = vpop.f32.mrf.mxu0
      %v8294 = vadd.f32 0.0, %v8293
      %8295 = vmatmul.bf16.gmra.mxu0 %v8099
      %v8296 = vpop.f32.mrf.mxu0
      %v8297 = vadd.f32 0.0, %v8296
      %v8298 = vpop.f32.mrf.mxu0
      %v8299 = vadd.f32 0.0, %v8298
      %8300 = vdwg.mxu0
      %v8301 = vadd.f32 %v7667, %v8182
      %v8302 = vadd.f32 %v7668, %v8184
      %v8303 = vadd.f32 %v7669, %v8187
      %v8304 = vadd.f32 %v7670, %v8189
      %v8305 = vadd.f32 %v7671, %v8192
      %v8306 = vadd.f32 %v7672, %v8194
      %v8307 = vadd.f32 %v7673, %v8197
      %v8308 = vadd.f32 %v7674, %v8199
      %v8309 = vadd.f32 %v7675, %v8202
      %v8310 = vadd.f32 %v7676, %v8204
      %v8311 = vadd.f32 %v7677, %v8207
      %v8312 = vadd.f32 %v7678, %v8209
      %v8313 = vadd.f32 %v7679, %v8212
      %v8314 = vadd.f32 %v7680, %v8214
      %v8315 = vadd.f32 %v7681, %v8217
      %v8316 = vadd.f32 %v7682, %v8219
      %v8317 = vadd.f32 %v7683, %v8222
      %v8318 = vadd.f32 %v7684, %v8224
      %v8319 = vadd.f32 %v7685, %v8227
      %v8320 = vadd.f32 %v7686, %v8229
      %v8321 = vadd.f32 %v7687, %v8232
      %v8322 = vadd.f32 %v7688, %v8234
      %v8323 = vadd.f32 %v7689, %v8237
      %v8324 = vadd.f32 %v7690, %v8239
      %v8325 = vadd.f32 %v7691, %v8242
      %v8326 = vadd.f32 %v7692, %v8244
      %v8327 = vadd.f32 %v7693, %v8247
      %v8328 = vadd.f32 %v7694, %v8249
      %v8329 = vadd.f32 %v7695, %v8252
      %v8330 = vadd.f32 %v7696, %v8254
      %v8331 = vadd.f32 %v7697, %v8257
      %v8332 = vadd.f32 %v7698, %v8259
      %v8333 = vadd.f32 %v7699, %v8262
      %v8334 = vadd.f32 %v7700, %v8264
      %v8335 = vadd.f32 %v7701, %v8267
      %v8336 = vadd.f32 %v7702, %v8269
      %v8337 = vadd.f32 %v7703, %v8272
      %v8338 = vadd.f32 %v7704, %v8274
      %v8339 = vadd.f32 %v7705, %v8277
      %v8340 = vadd.f32 %v7706, %v8279
      %v8341 = vadd.f32 %v7707, %v8282
      %v8342 = vadd.f32 %v7708, %v8284
      %v8343 = vadd.f32 %v7709, %v8287
      %v8344 = vadd.f32 %v7710, %v8289
      %v8345 = vadd.f32 %v7711, %v8292
      %v8346 = vadd.f32 %v7712, %v8294
      %v8347 = vadd.f32 %v7713, %v8297
      %v8348 = vadd.f32 %v7714, %v8299
      %v8349 = vld [vmem:[#allocation2 + $0xc] sm:$0xe]
      %s8350 = scalar_lea.vmem %s1, 896
      %v8351 = vld [vmem:[%s8350] sm:$0xf]
      %v8352 = vld [vmem:[%s8350 + $0x4] sm:$0xf]
      %v8353 = vld [vmem:[%s8350 + $0x8] sm:$0xf]
      %v8354 = vld [vmem:[%s8350 + $0xc] sm:$0xf]
      %v8355 = vld [vmem:[%s8350 + $0x10] sm:$0xf]
      %v8356 = vld [vmem:[%s8350 + $0x14] sm:$0xf]
      %v8357 = vld [vmem:[%s8350 + $0x18] sm:$0xf]
      %v8358 = vld [vmem:[%s8350 + $0x1c] sm:$0xf]
      %v8359 = vld [vmem:[%s8350 + $0x20] sm:$0xf]
      %v8360 = vld [vmem:[%s8350 + $0x24] sm:$0xf]
      %v8361 = vld [vmem:[%s8350 + $0x28] sm:$0xf]
      %v8362 = vld [vmem:[%s8350 + $0x2c] sm:$0xf]
      %v8363 = vld [vmem:[%s8350 + $0x30] sm:$0xf]
      %v8364 = vld [vmem:[%s8350 + $0x34] sm:$0xf]
      %v8365 = vld [vmem:[%s8350 + $0x38] sm:$0xf]
      %v8366 = vld [vmem:[%s8350 + $0x3c] sm:$0xf]
      %v8368 = vunpack.c.l.b16 %v8349
      %v8369 = vpack.c.b16 %v7831, %v8368
      %v8370 = vrot.slane %v8369, 1
      %v8371 = vrot.slane %v7880, 1
      %v8372 = vsel %vm1766, %v8370, %v8371
      %v8373 = vrot.slane %v7881, 1
      %v8374 = vsel %vm1766, %v8371, %v8373
      %v8375 = vrot.slane %v7882, 1
      %v8376 = vsel %vm1766, %v8373, %v8375
      %v8377 = vrot.slane %v7883, 1
      %v8378 = vsel %vm1766, %v8375, %v8377
      %v8379 = vrot.slane %v7884, 1
      %v8380 = vsel %vm1766, %v8377, %v8379
      %v8381 = vrot.slane %v7885, 1
      %v8382 = vsel %vm1766, %v8379, %v8381
      %v8383 = vrot.slane %v7886, 1
      %v8384 = vsel %vm1766, %v8381, %v8383
      %v8385 = vrot.slane %v7887, 1
      %v8386 = vsel %vm1766, %v8383, %v8385
      %v8387 = vrot.slane %v7888, 1
      %v8388 = vsel %vm1766, %v8385, %v8387
      %v8389 = vrot.slane %v7889, 1
      %v8390 = vsel %vm1766, %v8387, %v8389
      %v8391 = vrot.slane %v7890, 1
      %v8392 = vsel %vm1766, %v8389, %v8391
      %v8393 = vrot.slane %v7891, 1
      %v8394 = vsel %vm1766, %v8391, %v8393
      %v8395 = vrot.slane %v7892, 1
      %v8396 = vsel %vm1766, %v8393, %v8395
      %v8397 = vrot.slane %v7893, 1
      %v8398 = vsel %vm1766, %v8395, %v8397
      %v8399 = vrot.slane %v7894, 1
      %v8400 = vsel %vm1766, %v8397, %v8399
      %v8401 = vrot.slane %v7895, 1
      %v8402 = vsel %vm1766, %v8399, %v8401
      %v8403 = vrot.slane %v7896, 1
      %v8404 = vsel %vm1766, %v8401, %v8403
      %v8405 = vrot.slane %v7897, 1
      %v8406 = vsel %vm1766, %v8403, %v8405
      %v8407 = vrot.slane %v7898, 1
      %v8408 = vsel %vm1766, %v8405, %v8407
      %v8409 = vrot.slane %v7899, 1
      %v8410 = vsel %vm1766, %v8407, %v8409
      %v8411 = vrot.slane %v7900, 1
      %v8412 = vsel %vm1766, %v8409, %v8411
      %v8413 = vrot.slane %v7901, 1
      %v8414 = vsel %vm1766, %v8411, %v8413
      %v8415 = vrot.slane %v7902, 1
      %v8416 = vsel %vm1766, %v8413, %v8415
      %v8417 = vrot.slane %v7903, 1
      %v8418 = vsel %vm1766, %v8415, %v8417
      %v8459 = vunpack.c.l.b16 %v8351
      %v8460 = vunpack.c.l.b16 %v8352
      %v8461 = vunpack.c.l.b16 %v8353
      %v8462 = vunpack.c.l.b16 %v8354
      %v8463 = vunpack.c.l.b16 %v8355
      %v8464 = vunpack.c.l.b16 %v8356
      %v8465 = vunpack.c.l.b16 %v8357
      %v8466 = vunpack.c.l.b16 %v8358
      %v8467 = vunpack.c.l.b16 %v8359
      %v8468 = vunpack.c.l.b16 %v8360
      %v8469 = vunpack.c.l.b16 %v8361
      %v8470 = vunpack.c.l.b16 %v8362
      %v8471 = vunpack.c.l.b16 %v8363
      %v8472 = vunpack.c.l.b16 %v8364
      %v8473 = vunpack.c.l.b16 %v8365
      %v8474 = vunpack.c.l.b16 %v8366
      %v8475 = vpack.c.b16 %v8460, %v8459
      %v8476 = vpack.c.b16 %v8462, %v8461
      %v8477 = vpack.c.b16 %v8464, %v8463
      %v8478 = vpack.c.b16 %v8466, %v8465
      %v8479 = vpack.c.b16 %v8468, %v8467
      %v8480 = vpack.c.b16 %v8470, %v8469
      %v8481 = vpack.c.b16 %v8472, %v8471
      %v8482 = vpack.c.b16 %v8474, %v8473
      %8491 = vmatpush.bf16.msra.mxu0 %v8482
      %8492 = vmatpush.bf16.msra.mxu0 %v8481
      %8493 = vmatpush.bf16.msra.mxu0 %v8480
      %8494 = vmatpush.bf16.msra.mxu0 %v8479
      %8495 = vmatpush.bf16.msra.mxu0 %v8478
      %8496 = vmatpush.bf16.msra.mxu0 %v8477
      %8497 = vmatpush.bf16.msra.mxu0 %v8476
      %8498 = vmatpush.bf16.msra.mxu0 %v8475
      %8499 = vmatmul.bf16.gmra.mxu0 %v8372
      %v8500 = vpop.f32.mrf.mxu0
      %v8501 = vadd.f32 0.0, %v8500
      %v8502 = vpop.f32.mrf.mxu0
      %v8503 = vadd.f32 0.0, %v8502
      %8504 = vmatmul.bf16.gmra.mxu0 %v8374
      %v8505 = vpop.f32.mrf.mxu0
      %v8506 = vadd.f32 0.0, %v8505
      %v8507 = vpop.f32.mrf.mxu0
      %v8508 = vadd.f32 0.0, %v8507
      %8509 = vmatmul.bf16.gmra.mxu0 %v8376
      %v8510 = vpop.f32.mrf.mxu0
      %v8511 = vadd.f32 0.0, %v8510
      %v8512 = vpop.f32.mrf.mxu0
      %v8513 = vadd.f32 0.0, %v8512
      %8514 = vmatmul.bf16.gmra.mxu0 %v8378
      %v8515 = vpop.f32.mrf.mxu0
      %v8516 = vadd.f32 0.0, %v8515
      %v8517 = vpop.f32.mrf.mxu0
      %v8518 = vadd.f32 0.0, %v8517
      %8519 = vmatmul.bf16.gmra.mxu0 %v8380
      %v8520 = vpop.f32.mrf.mxu0
      %v8521 = vadd.f32 0.0, %v8520
      %v8522 = vpop.f32.mrf.mxu0
      %v8523 = vadd.f32 0.0, %v8522
      %8524 = vmatmul.bf16.gmra.mxu0 %v8382
      %v8525 = vpop.f32.mrf.mxu0
      %v8526 = vadd.f32 0.0, %v8525
      %v8527 = vpop.f32.mrf.mxu0
      %v8528 = vadd.f32 0.0, %v8527
      %8529 = vmatmul.bf16.gmra.mxu0 %v8384
      %v8530 = vpop.f32.mrf.mxu0
      %v8531 = vadd.f32 0.0, %v8530
      %v8532 = vpop.f32.mrf.mxu0
      %v8533 = vadd.f32 0.0, %v8532
      %8534 = vmatmul.bf16.gmra.mxu0 %v8386
      %v8535 = vpop.f32.mrf.mxu0
      %v8536 = vadd.f32 0.0, %v8535
      %v8537 = vpop.f32.mrf.mxu0
      %v8538 = vadd.f32 0.0, %v8537
      %8539 = vmatmul.bf16.gmra.mxu0 %v8388
      %v8540 = vpop.f32.mrf.mxu0
      %v8541 = vadd.f32 0.0, %v8540
      %v8542 = vpop.f32.mrf.mxu0
      %v8543 = vadd.f32 0.0, %v8542
      %8544 = vmatmul.bf16.gmra.mxu0 %v8390
      %v8545 = vpop.f32.mrf.mxu0
      %v8546 = vadd.f32 0.0, %v8545
      %v8547 = vpop.f32.mrf.mxu0
      %v8548 = vadd.f32 0.0, %v8547
      %8549 = vmatmul.bf16.gmra.mxu0 %v8392
      %v8550 = vpop.f32.mrf.mxu0
      %v8551 = vadd.f32 0.0, %v8550
      %v8552 = vpop.f32.mrf.mxu0
      %v8553 = vadd.f32 0.0, %v8552
      %8554 = vmatmul.bf16.gmra.mxu0 %v8394
      %v8555 = vpop.f32.mrf.mxu0
      %v8556 = vadd.f32 0.0, %v8555
      %v8557 = vpop.f32.mrf.mxu0
      %v8558 = vadd.f32 0.0, %v8557
      %8559 = vmatmul.bf16.gmra.mxu0 %v8396
      %v8560 = vpop.f32.mrf.mxu0
      %v8561 = vadd.f32 0.0, %v8560
      %v8562 = vpop.f32.mrf.mxu0
      %v8563 = vadd.f32 0.0, %v8562
      %8564 = vmatmul.bf16.gmra.mxu0 %v8398
      %v8565 = vpop.f32.mrf.mxu0
      %v8566 = vadd.f32 0.0, %v8565
      %v8567 = vpop.f32.mrf.mxu0
      %v8568 = vadd.f32 0.0, %v8567
      %8569 = vmatmul.bf16.gmra.mxu0 %v8400
      %v8570 = vpop.f32.mrf.mxu0
      %v8571 = vadd.f32 0.0, %v8570
      %v8572 = vpop.f32.mrf.mxu0
      %v8573 = vadd.f32 0.0, %v8572
      %8574 = vmatmul.bf16.gmra.mxu0 %v8402
      %v8575 = vpop.f32.mrf.mxu0
      %v8576 = vadd.f32 0.0, %v8575
      %v8577 = vpop.f32.mrf.mxu0
      %v8578 = vadd.f32 0.0, %v8577
      %8579 = vmatmul.bf16.gmra.mxu0 %v8404
      %v8580 = vpop.f32.mrf.mxu0
      %v8581 = vadd.f32 0.0, %v8580
      %v8582 = vpop.f32.mrf.mxu0
      %v8583 = vadd.f32 0.0, %v8582
      %8584 = vmatmul.bf16.gmra.mxu0 %v8406
      %v8585 = vpop.f32.mrf.mxu0
      %v8586 = vadd.f32 0.0, %v8585
      %v8587 = vpop.f32.mrf.mxu0
      %v8588 = vadd.f32 0.0, %v8587
      %8589 = vmatmul.bf16.gmra.mxu0 %v8408
      %v8590 = vpop.f32.mrf.mxu0
      %v8591 = vadd.f32 0.0, %v8590
      %v8592 = vpop.f32.mrf.mxu0
      %v8593 = vadd.f32 0.0, %v8592
      %8594 = vmatmul.bf16.gmra.mxu0 %v8410
      %v8595 = vpop.f32.mrf.mxu0
      %v8596 = vadd.f32 0.0, %v8595
      %v8597 = vpop.f32.mrf.mxu0
      %v8598 = vadd.f32 0.0, %v8597
      %8599 = vmatmul.bf16.gmra.mxu0 %v8412
      %v8600 = vpop.f32.mrf.mxu0
      %v8601 = vadd.f32 0.0, %v8600
      %v8602 = vpop.f32.mrf.mxu0
      %v8603 = vadd.f32 0.0, %v8602
      %8604 = vmatmul.bf16.gmra.mxu0 %v8414
      %v8605 = vpop.f32.mrf.mxu0
      %v8606 = vadd.f32 0.0, %v8605
      %v8607 = vpop.f32.mrf.mxu0
      %v8608 = vadd.f32 0.0, %v8607
      %8609 = vmatmul.bf16.gmra.mxu0 %v8416
      %v8610 = vpop.f32.mrf.mxu0
      %v8611 = vadd.f32 0.0, %v8610
      %v8612 = vpop.f32.mrf.mxu0
      %v8613 = vadd.f32 0.0, %v8612
      %8614 = vmatmul.bf16.gmra.mxu0 %v8418
      %v8615 = vpop.f32.mrf.mxu0
      %v8616 = vadd.f32 0.0, %v8615
      %v8617 = vpop.f32.mrf.mxu0
      %v8618 = vadd.f32 0.0, %v8617
      %8619 = vdwg.mxu0
      %v8620 = vadd.f32 %v8301, %v8501
      %v8621 = vadd.f32 %v8302, %v8503
      %v8622 = vadd.f32 %v8303, %v8506
      %v8623 = vadd.f32 %v8304, %v8508
      %v8624 = vadd.f32 %v8305, %v8511
      %v8625 = vadd.f32 %v8306, %v8513
      %v8626 = vadd.f32 %v8307, %v8516
      %v8627 = vadd.f32 %v8308, %v8518
      %v8628 = vadd.f32 %v8309, %v8521
      %v8629 = vadd.f32 %v8310, %v8523
      %v8630 = vadd.f32 %v8311, %v8526
      %v8631 = vadd.f32 %v8312, %v8528
      %v8632 = vadd.f32 %v8313, %v8531
      %v8633 = vadd.f32 %v8314, %v8533
      %v8634 = vadd.f32 %v8315, %v8536
      %v8635 = vadd.f32 %v8316, %v8538
      %v8636 = vadd.f32 %v8317, %v8541
      %v8637 = vadd.f32 %v8318, %v8543
      %v8638 = vadd.f32 %v8319, %v8546
      %v8639 = vadd.f32 %v8320, %v8548
      %v8640 = vadd.f32 %v8321, %v8551
      %v8641 = vadd.f32 %v8322, %v8553
      %v8642 = vadd.f32 %v8323, %v8556
      %v8643 = vadd.f32 %v8324, %v8558
      %v8644 = vadd.f32 %v8325, %v8561
      %v8645 = vadd.f32 %v8326, %v8563
      %v8646 = vadd.f32 %v8327, %v8566
      %v8647 = vadd.f32 %v8328, %v8568
      %v8648 = vadd.f32 %v8329, %v8571
      %v8649 = vadd.f32 %v8330, %v8573
      %v8650 = vadd.f32 %v8331, %v8576
      %v8651 = vadd.f32 %v8332, %v8578
      %v8652 = vadd.f32 %v8333, %v8581
      %v8653 = vadd.f32 %v8334, %v8583
      %v8654 = vadd.f32 %v8335, %v8586
      %v8655 = vadd.f32 %v8336, %v8588
      %v8656 = vadd.f32 %v8337, %v8591
      %v8657 = vadd.f32 %v8338, %v8593
      %v8658 = vadd.f32 %v8339, %v8596
      %v8659 = vadd.f32 %v8340, %v8598
      %v8660 = vadd.f32 %v8341, %v8601
      %v8661 = vadd.f32 %v8342, %v8603
      %v8662 = vadd.f32 %v8343, %v8606
      %v8663 = vadd.f32 %v8344, %v8608
      %v8664 = vadd.f32 %v8345, %v8611
      %v8665 = vadd.f32 %v8346, %v8613
      %v8666 = vadd.f32 %v8347, %v8616
      %v8667 = vadd.f32 %v8348, %v8618
      %v8668 = vld [vmem:[#allocation2 + $0x18] sm:$0xf]
      %v8669 = vld [vmem:[#allocation2 + $0x1c] sm:$0xf]
      %v8670 = vld [vmem:[#allocation2 + $0x20] sm:$0xf]
      %v8671 = vld [vmem:[#allocation2 + $0x24] sm:$0xf]
      %v8672 = vld [vmem:[#allocation2 + $0x28] sm:$0xf]
      %v8673 = vld [vmem:[#allocation2 + $0x2c] sm:$0xf]
      %v8674 = vld [vmem:[#allocation2 + $0x30] sm:$0xf]
      %v8675 = vld [vmem:[#allocation2 + $0x34] sm:$0xf]
      %v8676 = vld [vmem:[#allocation2 + $0x38] sm:$0xf]
      %v8677 = vld [vmem:[#allocation2 + $0x3c] sm:$0xf]
      %v8678 = vld [vmem:[#allocation2 + $0x40] sm:$0xf]
      %v8679 = vld [vmem:[#allocation2 + $0x44] sm:$0xf]
      %v8680 = vld [vmem:[#allocation2 + $0x48] sm:$0xf]
      %v8681 = vld [vmem:[#allocation2 + $0x4c] sm:$0xf]
      %v8682 = vld [vmem:[#allocation2 + $0x50] sm:$0xf]
      %v8683 = vld [vmem:[#allocation2 + $0x54] sm:$0xf]
      %v8684 = vld [vmem:[#allocation2 + $0x58] sm:$0xf]
      %v8685 = vld [vmem:[#allocation2 + $0x5c] sm:$0xf]
      %v8686 = vld [vmem:[#allocation2 + $0x60] sm:$0xf]
      %v8687 = vld [vmem:[#allocation2 + $0x64] sm:$0xf]
      %v8688 = vld [vmem:[#allocation2 + $0x68] sm:$0xf]
      %v8689 = vld [vmem:[#allocation2 + $0x6c] sm:$0xf]
      %v8690 = vld [vmem:[#allocation2 + $0x70] sm:$0xf]
      %v8691 = vld [vmem:[#allocation2 + $0x74] sm:$0xf]
      %v8692 = vld [vmem:[#allocation2 + $0x78] sm:$0xf]
      %v8693 = vld [vmem:[#allocation2 + $0x7c] sm:$0xf]
      %v8694 = vld [vmem:[#allocation2 + $0x80] sm:$0xf]
      %v8695 = vld [vmem:[#allocation2 + $0x84] sm:$0xf]
      %v8696 = vld [vmem:[#allocation2 + $0x88] sm:$0xf]
      %v8697 = vld [vmem:[#allocation2 + $0x8c] sm:$0xf]
      %v8698 = vld [vmem:[#allocation2 + $0x90] sm:$0xf]
      %v8699 = vld [vmem:[#allocation2 + $0x94] sm:$0xf]
      %v8700 = vld [vmem:[#allocation2 + $0x98] sm:$0xf]
      %v8701 = vld [vmem:[#allocation2 + $0x9c] sm:$0xf]
      %v8702 = vld [vmem:[#allocation2 + $0xa0] sm:$0xf]
      %v8703 = vld [vmem:[#allocation2 + $0xa4] sm:$0xf]
      %v8704 = vld [vmem:[#allocation2 + $0xa8] sm:$0xf]
      %v8705 = vld [vmem:[#allocation2 + $0xac] sm:$0xf]
      %v8706 = vld [vmem:[#allocation2 + $0xb0] sm:$0xf]
      %v8707 = vld [vmem:[#allocation2 + $0xb4] sm:$0xf]
      %v8708 = vld [vmem:[#allocation2 + $0xb8] sm:$0xf]
      %v8709 = vld [vmem:[#allocation2 + $0xbc] sm:$0xf]
      %v8710 = vld [vmem:[#allocation2 + $0xc0] sm:$0xf]
      %v8711 = vld [vmem:[#allocation2 + $0xc4] sm:$0xf]
      %v8712 = vld [vmem:[#allocation2 + $0xc8] sm:$0xf]
      %v8713 = vld [vmem:[#allocation2 + $0xcc] sm:$0xf]
      %v8714 = vld [vmem:[#allocation2 + $0xd0] sm:$0xf]
      %v8715 = vld [vmem:[#allocation2 + $0xd4] sm:$0xf]
      %s8716 = scalar_lea.vmem %s1, 960
      %v8717 = vld [vmem:[%s8716] sm:$0xf]
      %v8718 = vld [vmem:[%s8716 + $0x4] sm:$0xf]
      %v8719 = vld [vmem:[%s8716 + $0x8] sm:$0xf]
      %v8720 = vld [vmem:[%s8716 + $0xc] sm:$0xf]
      %v8721 = vld [vmem:[%s8716 + $0x10] sm:$0xf]
      %v8722 = vld [vmem:[%s8716 + $0x14] sm:$0xf]
      %v8723 = vld [vmem:[%s8716 + $0x18] sm:$0xf]
      %v8724 = vld [vmem:[%s8716 + $0x1c] sm:$0xf]
      %v8725 = vld [vmem:[%s8716 + $0x20] sm:$0xf]
      %v8726 = vld [vmem:[%s8716 + $0x24] sm:$0xf]
      %v8727 = vld [vmem:[%s8716 + $0x28] sm:$0xf]
      %v8728 = vld [vmem:[%s8716 + $0x2c] sm:$0xf]
      %v8729 = vld [vmem:[%s8716 + $0x30] sm:$0xf]
      %v8730 = vld [vmem:[%s8716 + $0x34] sm:$0xf]
      %v8731 = vld [vmem:[%s8716 + $0x38] sm:$0xf]
      %v8732 = vld [vmem:[%s8716 + $0x3c] sm:$0xf]
      %v8781 = vunpack.c.l.b16 %v8668
      %v8782 = vunpack.c.l.b16 %v8669
      %v8783 = vunpack.c.l.b16 %v8670
      %v8784 = vunpack.c.l.b16 %v8671
      %v8785 = vunpack.c.l.b16 %v8672
      %v8786 = vunpack.c.l.b16 %v8673
      %v8787 = vunpack.c.l.b16 %v8674
      %v8788 = vunpack.c.l.b16 %v8675
      %v8789 = vunpack.c.l.b16 %v8676
      %v8790 = vunpack.c.l.b16 %v8677
      %v8791 = vunpack.c.l.b16 %v8678
      %v8792 = vunpack.c.l.b16 %v8679
      %v8793 = vunpack.c.l.b16 %v8680
      %v8794 = vunpack.c.l.b16 %v8681
      %v8795 = vunpack.c.l.b16 %v8682
      %v8796 = vunpack.c.l.b16 %v8683
      %v8797 = vunpack.c.l.b16 %v8684
      %v8798 = vunpack.c.l.b16 %v8685
      %v8799 = vunpack.c.l.b16 %v8686
      %v8800 = vunpack.c.l.b16 %v8687
      %v8801 = vunpack.c.l.b16 %v8688
      %v8802 = vunpack.c.l.b16 %v8689
      %v8803 = vunpack.c.l.b16 %v8690
      %v8804 = vunpack.c.l.b16 %v8691
      %v8805 = vunpack.c.l.b16 %v8692
      %v8806 = vunpack.c.l.b16 %v8693
      %v8807 = vunpack.c.l.b16 %v8694
      %v8808 = vunpack.c.l.b16 %v8695
      %v8809 = vunpack.c.l.b16 %v8696
      %v8810 = vunpack.c.l.b16 %v8697
      %v8811 = vunpack.c.l.b16 %v8698
      %v8812 = vunpack.c.l.b16 %v8699
      %v8813 = vunpack.c.l.b16 %v8700
      %v8814 = vunpack.c.l.b16 %v8701
      %v8815 = vunpack.c.l.b16 %v8702
      %v8816 = vunpack.c.l.b16 %v8703
      %v8817 = vunpack.c.l.b16 %v8704
      %v8818 = vunpack.c.l.b16 %v8705
      %v8819 = vunpack.c.l.b16 %v8706
      %v8820 = vunpack.c.l.b16 %v8707
      %v8821 = vunpack.c.l.b16 %v8708
      %v8822 = vunpack.c.l.b16 %v8709
      %v8823 = vunpack.c.l.b16 %v8710
      %v8824 = vunpack.c.l.b16 %v8711
      %v8825 = vunpack.c.l.b16 %v8712
      %v8826 = vunpack.c.l.b16 %v8713
      %v8827 = vunpack.c.l.b16 %v8714
      %v8828 = vunpack.c.l.b16 %v8715
      %v8829 = vpack.c.b16 %v8782, %v8781
      %v8830 = vpack.c.b16 %v8784, %v8783
      %v8831 = vpack.c.b16 %v8786, %v8785
      %v8832 = vpack.c.b16 %v8788, %v8787
      %v8833 = vpack.c.b16 %v8790, %v8789
      %v8834 = vpack.c.b16 %v8792, %v8791
      %v8835 = vpack.c.b16 %v8794, %v8793
      %v8836 = vpack.c.b16 %v8796, %v8795
      %v8837 = vpack.c.b16 %v8798, %v8797
      %v8838 = vpack.c.b16 %v8800, %v8799
      %v8839 = vpack.c.b16 %v8802, %v8801
      %v8840 = vpack.c.b16 %v8804, %v8803
      %v8841 = vpack.c.b16 %v8806, %v8805
      %v8842 = vpack.c.b16 %v8808, %v8807
      %v8843 = vpack.c.b16 %v8810, %v8809
      %v8844 = vpack.c.b16 %v8812, %v8811
      %v8845 = vpack.c.b16 %v8814, %v8813
      %v8846 = vpack.c.b16 %v8816, %v8815
      %v8847 = vpack.c.b16 %v8818, %v8817
      %v8848 = vpack.c.b16 %v8820, %v8819
      %v8849 = vpack.c.b16 %v8822, %v8821
      %v8850 = vpack.c.b16 %v8824, %v8823
      %v8851 = vpack.c.b16 %v8826, %v8825
      %v8852 = vpack.c.b16 %v8828, %v8827
      %v8893 = vunpack.c.l.b16 %v8717
      %v8894 = vunpack.c.l.b16 %v8718
      %v8895 = vunpack.c.l.b16 %v8719
      %v8896 = vunpack.c.l.b16 %v8720
      %v8897 = vunpack.c.l.b16 %v8721
      %v8898 = vunpack.c.l.b16 %v8722
      %v8899 = vunpack.c.l.b16 %v8723
      %v8900 = vunpack.c.l.b16 %v8724
      %v8901 = vunpack.c.l.b16 %v8725
      %v8902 = vunpack.c.l.b16 %v8726
      %v8903 = vunpack.c.l.b16 %v8727
      %v8904 = vunpack.c.l.b16 %v8728
      %v8905 = vunpack.c.l.b16 %v8729
      %v8906 = vunpack.c.l.b16 %v8730
      %v8907 = vunpack.c.l.b16 %v8731
      %v8908 = vunpack.c.l.b16 %v8732
      %v8909 = vpack.c.b16 %v8894, %v8893
      %v8910 = vpack.c.b16 %v8896, %v8895
      %v8911 = vpack.c.b16 %v8898, %v8897
      %v8912 = vpack.c.b16 %v8900, %v8899
      %v8913 = vpack.c.b16 %v8902, %v8901
      %v8914 = vpack.c.b16 %v8904, %v8903
      %v8915 = vpack.c.b16 %v8906, %v8905
      %v8916 = vpack.c.b16 %v8908, %v8907
      %8925 = vmatpush.bf16.msra.mxu0 %v8916
      %8926 = vmatpush.bf16.msra.mxu0 %v8915
      %8927 = vmatpush.bf16.msra.mxu0 %v8914
      %8928 = vmatpush.bf16.msra.mxu0 %v8913
      %8929 = vmatpush.bf16.msra.mxu0 %v8912
      %8930 = vmatpush.bf16.msra.mxu0 %v8911
      %8931 = vmatpush.bf16.msra.mxu0 %v8910
      %8932 = vmatpush.bf16.msra.mxu0 %v8909
      %8933 = vmatmul.bf16.gmra.mxu0 %v8829
      %v8934 = vpop.f32.mrf.mxu0
      %v8935 = vadd.f32 0.0, %v8934
      %v8936 = vpop.f32.mrf.mxu0
      %v8937 = vadd.f32 0.0, %v8936
      %8938 = vmatmul.bf16.gmra.mxu0 %v8830
      %v8939 = vpop.f32.mrf.mxu0
      %v8940 = vadd.f32 0.0, %v8939
      %v8941 = vpop.f32.mrf.mxu0
      %v8942 = vadd.f32 0.0, %v8941
      %8943 = vmatmul.bf16.gmra.mxu0 %v8831
      %v8944 = vpop.f32.mrf.mxu0
      %v8945 = vadd.f32 0.0, %v8944
      %v8946 = vpop.f32.mrf.mxu0
      %v8947 = vadd.f32 0.0, %v8946
      %8948 = vmatmul.bf16.gmra.mxu0 %v8832
      %v8949 = vpop.f32.mrf.mxu0
      %v8950 = vadd.f32 0.0, %v8949
      %v8951 = vpop.f32.mrf.mxu0
      %v8952 = vadd.f32 0.0, %v8951
      %8953 = vmatmul.bf16.gmra.mxu0 %v8833
      %v8954 = vpop.f32.mrf.mxu0
      %v8955 = vadd.f32 0.0, %v8954
      %v8956 = vpop.f32.mrf.mxu0
      %v8957 = vadd.f32 0.0, %v8956
      %8958 = vmatmul.bf16.gmra.mxu0 %v8834
      %v8959 = vpop.f32.mrf.mxu0
      %v8960 = vadd.f32 0.0, %v8959
      %v8961 = vpop.f32.mrf.mxu0
      %v8962 = vadd.f32 0.0, %v8961
      %8963 = vmatmul.bf16.gmra.mxu0 %v8835
      %v8964 = vpop.f32.mrf.mxu0
      %v8965 = vadd.f32 0.0, %v8964
      %v8966 = vpop.f32.mrf.mxu0
      %v8967 = vadd.f32 0.0, %v8966
      %8968 = vmatmul.bf16.gmra.mxu0 %v8836
      %v8969 = vpop.f32.mrf.mxu0
      %v8970 = vadd.f32 0.0, %v8969
      %v8971 = vpop.f32.mrf.mxu0
      %v8972 = vadd.f32 0.0, %v8971
      %8973 = vmatmul.bf16.gmra.mxu0 %v8837
      %v8974 = vpop.f32.mrf.mxu0
      %v8975 = vadd.f32 0.0, %v8974
      %v8976 = vpop.f32.mrf.mxu0
      %v8977 = vadd.f32 0.0, %v8976
      %8978 = vmatmul.bf16.gmra.mxu0 %v8838
      %v8979 = vpop.f32.mrf.mxu0
      %v8980 = vadd.f32 0.0, %v8979
      %v8981 = vpop.f32.mrf.mxu0
      %v8982 = vadd.f32 0.0, %v8981
      %8983 = vmatmul.bf16.gmra.mxu0 %v8839
      %v8984 = vpop.f32.mrf.mxu0
      %v8985 = vadd.f32 0.0, %v8984
      %v8986 = vpop.f32.mrf.mxu0
      %v8987 = vadd.f32 0.0, %v8986
      %8988 = vmatmul.bf16.gmra.mxu0 %v8840
      %v8989 = vpop.f32.mrf.mxu0
      %v8990 = vadd.f32 0.0, %v8989
      %v8991 = vpop.f32.mrf.mxu0
      %v8992 = vadd.f32 0.0, %v8991
      %8993 = vmatmul.bf16.gmra.mxu0 %v8841
      %v8994 = vpop.f32.mrf.mxu0
      %v8995 = vadd.f32 0.0, %v8994
      %v8996 = vpop.f32.mrf.mxu0
      %v8997 = vadd.f32 0.0, %v8996
      %8998 = vmatmul.bf16.gmra.mxu0 %v8842
      %v8999 = vpop.f32.mrf.mxu0
      %v9000 = vadd.f32 0.0, %v8999
      %v9001 = vpop.f32.mrf.mxu0
      %v9002 = vadd.f32 0.0, %v9001
      %9003 = vmatmul.bf16.gmra.mxu0 %v8843
      %v9004 = vpop.f32.mrf.mxu0
      %v9005 = vadd.f32 0.0, %v9004
      %v9006 = vpop.f32.mrf.mxu0
      %v9007 = vadd.f32 0.0, %v9006
      %9008 = vmatmul.bf16.gmra.mxu0 %v8844
      %v9009 = vpop.f32.mrf.mxu0
      %v9010 = vadd.f32 0.0, %v9009
      %v9011 = vpop.f32.mrf.mxu0
      %v9012 = vadd.f32 0.0, %v9011
      %9013 = vmatmul.bf16.gmra.mxu0 %v8845
      %v9014 = vpop.f32.mrf.mxu0
      %v9015 = vadd.f32 0.0, %v9014
      %v9016 = vpop.f32.mrf.mxu0
      %v9017 = vadd.f32 0.0, %v9016
      %9018 = vmatmul.bf16.gmra.mxu0 %v8846
      %v9019 = vpop.f32.mrf.mxu0
      %v9020 = vadd.f32 0.0, %v9019
      %v9021 = vpop.f32.mrf.mxu0
      %v9022 = vadd.f32 0.0, %v9021
      %9023 = vmatmul.bf16.gmra.mxu0 %v8847
      %v9024 = vpop.f32.mrf.mxu0
      %v9025 = vadd.f32 0.0, %v9024
      %v9026 = vpop.f32.mrf.mxu0
      %v9027 = vadd.f32 0.0, %v9026
      %9028 = vmatmul.bf16.gmra.mxu0 %v8848
      %v9029 = vpop.f32.mrf.mxu0
      %v9030 = vadd.f32 0.0, %v9029
      %v9031 = vpop.f32.mrf.mxu0
      %v9032 = vadd.f32 0.0, %v9031
      %9033 = vmatmul.bf16.gmra.mxu0 %v8849
      %v9034 = vpop.f32.mrf.mxu0
      %v9035 = vadd.f32 0.0, %v9034
      %v9036 = vpop.f32.mrf.mxu0
      %v9037 = vadd.f32 0.0, %v9036
      %9038 = vmatmul.bf16.gmra.mxu0 %v8850
      %v9039 = vpop.f32.mrf.mxu0
      %v9040 = vadd.f32 0.0, %v9039
      %v9041 = vpop.f32.mrf.mxu0
      %v9042 = vadd.f32 0.0, %v9041
      %9043 = vmatmul.bf16.gmra.mxu0 %v8851
      %v9044 = vpop.f32.mrf.mxu0
      %v9045 = vadd.f32 0.0, %v9044
      %v9046 = vpop.f32.mrf.mxu0
      %v9047 = vadd.f32 0.0, %v9046
      %9048 = vmatmul.bf16.gmra.mxu0 %v8852
      %v9049 = vpop.f32.mrf.mxu0
      %v9050 = vadd.f32 0.0, %v9049
      %v9051 = vpop.f32.mrf.mxu0
      %v9052 = vadd.f32 0.0, %v9051
      %9053 = vdwg.mxu0
      %v9054 = vadd.f32 %v8620, %v8935
      %v9055 = vadd.f32 %v8621, %v8937
      %v9056 = vadd.f32 %v8622, %v8940
      %v9057 = vadd.f32 %v8623, %v8942
      %v9058 = vadd.f32 %v8624, %v8945
      %v9059 = vadd.f32 %v8625, %v8947
      %v9060 = vadd.f32 %v8626, %v8950
      %v9061 = vadd.f32 %v8627, %v8952
      %v9062 = vadd.f32 %v8628, %v8955
      %v9063 = vadd.f32 %v8629, %v8957
      %v9064 = vadd.f32 %v8630, %v8960
      %v9065 = vadd.f32 %v8631, %v8962
      %v9066 = vadd.f32 %v8632, %v8965
      %v9067 = vadd.f32 %v8633, %v8967
      %v9068 = vadd.f32 %v8634, %v8970
      %v9069 = vadd.f32 %v8635, %v8972
      %v9070 = vadd.f32 %v8636, %v8975
      %v9071 = vadd.f32 %v8637, %v8977
      %v9072 = vadd.f32 %v8638, %v8980
      %v9073 = vadd.f32 %v8639, %v8982
      %v9074 = vadd.f32 %v8640, %v8985
      %v9075 = vadd.f32 %v8641, %v8987
      %v9076 = vadd.f32 %v8642, %v8990
      %v9077 = vadd.f32 %v8643, %v8992
      %v9078 = vadd.f32 %v8644, %v8995
      %v9079 = vadd.f32 %v8645, %v8997
      %v9080 = vadd.f32 %v8646, %v9000
      %v9081 = vadd.f32 %v8647, %v9002
      %v9082 = vadd.f32 %v8648, %v9005
      %v9083 = vadd.f32 %v8649, %v9007
      %v9084 = vadd.f32 %v8650, %v9010
      %v9085 = vadd.f32 %v8651, %v9012
      %v9086 = vadd.f32 %v8652, %v9015
      %v9087 = vadd.f32 %v8653, %v9017
      %v9088 = vadd.f32 %v8654, %v9020
      %v9089 = vadd.f32 %v8655, %v9022
      %v9090 = vadd.f32 %v8656, %v9025
      %v9091 = vadd.f32 %v8657, %v9027
      %v9092 = vadd.f32 %v8658, %v9030
      %v9093 = vadd.f32 %v8659, %v9032
      %v9094 = vadd.f32 %v8660, %v9035
      %v9095 = vadd.f32 %v8661, %v9037
      %v9096 = vadd.f32 %v8662, %v9040
      %v9097 = vadd.f32 %v8663, %v9042
      %v9098 = vadd.f32 %v8664, %v9045
      %v9099 = vadd.f32 %v8665, %v9047
      %v9100 = vadd.f32 %v8666, %v9050
      %v9101 = vadd.f32 %v8667, %v9052
      %v9102 = vld [vmem:[#allocation2 + $0x18] sm:$0xf]
      %v9103 = vld [vmem:[#allocation2 + $0x1c] sm:$0xf]
      %v9104 = vld [vmem:[#allocation2 + $0x20] sm:$0xf]
      %v9105 = vld [vmem:[#allocation2 + $0x24] sm:$0xf]
      %v9106 = vld [vmem:[#allocation2 + $0x28] sm:$0xf]
      %v9107 = vld [vmem:[#allocation2 + $0x2c] sm:$0xf]
      %v9108 = vld [vmem:[#allocation2 + $0x30] sm:$0xf]
      %v9109 = vld [vmem:[#allocation2 + $0x34] sm:$0xf]
      %v9110 = vld [vmem:[#allocation2 + $0x38] sm:$0xf]
      %v9111 = vld [vmem:[#allocation2 + $0x3c] sm:$0xf]
      %v9112 = vld [vmem:[#allocation2 + $0x40] sm:$0xf]
      %v9113 = vld [vmem:[#allocation2 + $0x44] sm:$0xf]
      %v9114 = vld [vmem:[#allocation2 + $0x48] sm:$0xf]
      %v9115 = vld [vmem:[#allocation2 + $0x4c] sm:$0xf]
      %v9116 = vld [vmem:[#allocation2 + $0x50] sm:$0xf]
      %v9117 = vld [vmem:[#allocation2 + $0x54] sm:$0xf]
      %v9118 = vld [vmem:[#allocation2 + $0x58] sm:$0xf]
      %v9119 = vld [vmem:[#allocation2 + $0x5c] sm:$0xf]
      %v9120 = vld [vmem:[#allocation2 + $0x60] sm:$0xf]
      %v9121 = vld [vmem:[#allocation2 + $0x64] sm:$0xf]
      %v9122 = vld [vmem:[#allocation2 + $0x68] sm:$0xf]
      %v9123 = vld [vmem:[#allocation2 + $0x6c] sm:$0xf]
      %v9124 = vld [vmem:[#allocation2 + $0x70] sm:$0xf]
      %v9125 = vld [vmem:[#allocation2 + $0x74] sm:$0xf]
      %v9126 = vld [vmem:[#allocation2 + $0x78] sm:$0xf]
      %v9127 = vld [vmem:[#allocation2 + $0x7c] sm:$0xf]
      %v9128 = vld [vmem:[#allocation2 + $0x80] sm:$0xf]
      %v9129 = vld [vmem:[#allocation2 + $0x84] sm:$0xf]
      %v9130 = vld [vmem:[#allocation2 + $0x88] sm:$0xf]
      %v9131 = vld [vmem:[#allocation2 + $0x8c] sm:$0xf]
      %v9132 = vld [vmem:[#allocation2 + $0x90] sm:$0xf]
      %v9133 = vld [vmem:[#allocation2 + $0x94] sm:$0xf]
      %v9134 = vld [vmem:[#allocation2 + $0x98] sm:$0xf]
      %v9135 = vld [vmem:[#allocation2 + $0x9c] sm:$0xf]
      %v9136 = vld [vmem:[#allocation2 + $0xa0] sm:$0xf]
      %v9137 = vld [vmem:[#allocation2 + $0xa4] sm:$0xf]
      %v9138 = vld [vmem:[#allocation2 + $0xa8] sm:$0xf]
      %v9139 = vld [vmem:[#allocation2 + $0xac] sm:$0xf]
      %v9140 = vld [vmem:[#allocation2 + $0xb0] sm:$0xf]
      %v9141 = vld [vmem:[#allocation2 + $0xb4] sm:$0xf]
      %v9142 = vld [vmem:[#allocation2 + $0xb8] sm:$0xf]
      %v9143 = vld [vmem:[#allocation2 + $0xbc] sm:$0xf]
      %v9144 = vld [vmem:[#allocation2 + $0xc0] sm:$0xf]
      %v9145 = vld [vmem:[#allocation2 + $0xc4] sm:$0xf]
      %v9146 = vld [vmem:[#allocation2 + $0xc8] sm:$0xf]
      %v9147 = vld [vmem:[#allocation2 + $0xcc] sm:$0xf]
      %v9148 = vld [vmem:[#allocation2 + $0xd0] sm:$0xf]
      %v9149 = vld [vmem:[#allocation2 + $0xd4] sm:$0xf]
      %v9150 = vld [vmem:[#allocation2 + $0xd8] sm:$0x1]
      %s9151 = scalar_lea.vmem %s1, 1024
      %v9152 = vld [vmem:[%s9151] sm:$0xf]
      %v9153 = vld [vmem:[%s9151 + $0x4] sm:$0xf]
      %v9154 = vld [vmem:[%s9151 + $0x8] sm:$0xf]
      %v9155 = vld [vmem:[%s9151 + $0xc] sm:$0xf]
      %v9156 = vld [vmem:[%s9151 + $0x10] sm:$0xf]
      %v9157 = vld [vmem:[%s9151 + $0x14] sm:$0xf]
      %v9158 = vld [vmem:[%s9151 + $0x18] sm:$0xf]
      %v9159 = vld [vmem:[%s9151 + $0x1c] sm:$0xf]
      %v9160 = vld [vmem:[%s9151 + $0x20] sm:$0xf]
      %v9161 = vld [vmem:[%s9151 + $0x24] sm:$0xf]
      %v9162 = vld [vmem:[%s9151 + $0x28] sm:$0xf]
      %v9163 = vld [vmem:[%s9151 + $0x2c] sm:$0xf]
      %v9164 = vld [vmem:[%s9151 + $0x30] sm:$0xf]
      %v9165 = vld [vmem:[%s9151 + $0x34] sm:$0xf]
      %v9166 = vld [vmem:[%s9151 + $0x38] sm:$0xf]
      %v9167 = vld [vmem:[%s9151 + $0x3c] sm:$0xf]
      %v9217 = vunpack.c.l.b16 %v9102
      %v9218 = vunpack.c.l.b16 %v9103
      %v9219 = vunpack.c.l.b16 %v9104
      %v9220 = vunpack.c.l.b16 %v9105
      %v9221 = vunpack.c.l.b16 %v9106
      %v9222 = vunpack.c.l.b16 %v9107
      %v9223 = vunpack.c.l.b16 %v9108
      %v9224 = vunpack.c.l.b16 %v9109
      %v9225 = vunpack.c.l.b16 %v9110
      %v9226 = vunpack.c.l.b16 %v9111
      %v9227 = vunpack.c.l.b16 %v9112
      %v9228 = vunpack.c.l.b16 %v9113
      %v9229 = vunpack.c.l.b16 %v9114
      %v9230 = vunpack.c.l.b16 %v9115
      %v9231 = vunpack.c.l.b16 %v9116
      %v9232 = vunpack.c.l.b16 %v9117
      %v9233 = vunpack.c.l.b16 %v9118
      %v9234 = vunpack.c.l.b16 %v9119
      %v9235 = vunpack.c.l.b16 %v9120
      %v9236 = vunpack.c.l.b16 %v9121
      %v9237 = vunpack.c.l.b16 %v9122
      %v9238 = vunpack.c.l.b16 %v9123
      %v9239 = vunpack.c.l.b16 %v9124
      %v9240 = vunpack.c.l.b16 %v9125
      %v9241 = vunpack.c.l.b16 %v9126
      %v9242 = vunpack.c.l.b16 %v9127
      %v9243 = vunpack.c.l.b16 %v9128
      %v9244 = vunpack.c.l.b16 %v9129
      %v9245 = vunpack.c.l.b16 %v9130
      %v9246 = vunpack.c.l.b16 %v9131
      %v9247 = vunpack.c.l.b16 %v9132
      %v9248 = vunpack.c.l.b16 %v9133
      %v9249 = vunpack.c.l.b16 %v9134
      %v9250 = vunpack.c.l.b16 %v9135
      %v9251 = vunpack.c.l.b16 %v9136
      %v9252 = vunpack.c.l.b16 %v9137
      %v9253 = vunpack.c.l.b16 %v9138
      %v9254 = vunpack.c.l.b16 %v9139
      %v9255 = vunpack.c.l.b16 %v9140
      %v9256 = vunpack.c.l.b16 %v9141
      %v9257 = vunpack.c.l.b16 %v9142
      %v9258 = vunpack.c.l.b16 %v9143
      %v9259 = vunpack.c.l.b16 %v9144
      %v9260 = vunpack.c.l.b16 %v9145
      %v9261 = vunpack.c.l.b16 %v9146
      %v9262 = vunpack.c.l.b16 %v9147
      %v9263 = vunpack.c.l.b16 %v9148
      %v9264 = vunpack.c.l.b16 %v9149
      %v9265 = vunpack.c.l.b16 %v9150
      %v9266 = vpack.c.b16 %v9218, %v9217
      %v9267 = vpack.c.b16 %v9220, %v9219
      %v9268 = vpack.c.b16 %v9222, %v9221
      %v9269 = vpack.c.b16 %v9224, %v9223
      %v9270 = vpack.c.b16 %v9226, %v9225
      %v9271 = vpack.c.b16 %v9228, %v9227
      %v9272 = vpack.c.b16 %v9230, %v9229
      %v9273 = vpack.c.b16 %v9232, %v9231
      %v9274 = vpack.c.b16 %v9234, %v9233
      %v9275 = vpack.c.b16 %v9236, %v9235
      %v9276 = vpack.c.b16 %v9238, %v9237
      %v9277 = vpack.c.b16 %v9240, %v9239
      %v9278 = vpack.c.b16 %v9242, %v9241
      %v9279 = vpack.c.b16 %v9244, %v9243
      %v9280 = vpack.c.b16 %v9246, %v9245
      %v9281 = vpack.c.b16 %v9248, %v9247
      %v9282 = vpack.c.b16 %v9250, %v9249
      %v9283 = vpack.c.b16 %v9252, %v9251
      %v9284 = vpack.c.b16 %v9254, %v9253
      %v9285 = vpack.c.b16 %v9256, %v9255
      %v9286 = vpack.c.b16 %v9258, %v9257
      %v9287 = vpack.c.b16 %v9260, %v9259
      %v9288 = vpack.c.b16 %v9262, %v9261
      %v9289 = vpack.c.b16 %v9264, %v9263
      %v9290 = vpack.c.b16 %v9265, %v9265
      %v9292 = vshrl.u32 %v9266, 16
      %v9294 = vshll.u32 %v9266, 16
      %v9296 = vrot.slane %v9294, 1
      %v9297 = vor.u32 %v9292, %v9296
      %v9299 = vshll.u32 %v9267, 16
      %v9301 = vrot.slane %v9299, 1
      %v9302 = vsel %vm1146, %v9297, %v9301
      %v9303 = vshrl.u32 %v9267, 16
      %v9305 = vor.u32 %v9303, %v9301
      %v9307 = vshll.u32 %v9268, 16
      %v9309 = vrot.slane %v9307, 1
      %v9310 = vsel %vm1146, %v9305, %v9309
      %v9311 = vshrl.u32 %v9268, 16
      %v9313 = vor.u32 %v9311, %v9309
      %v9315 = vshll.u32 %v9269, 16
      %v9317 = vrot.slane %v9315, 1
      %v9318 = vsel %vm1146, %v9313, %v9317
      %v9319 = vshrl.u32 %v9269, 16
      %v9321 = vor.u32 %v9319, %v9317
      %v9323 = vshll.u32 %v9270, 16
      %v9325 = vrot.slane %v9323, 1
      %v9326 = vsel %vm1146, %v9321, %v9325
      %v9327 = vshrl.u32 %v9270, 16
      %v9329 = vor.u32 %v9327, %v9325
      %v9331 = vshll.u32 %v9271, 16
      %v9333 = vrot.slane %v9331, 1
      %v9334 = vsel %vm1146, %v9329, %v9333
      %v9335 = vshrl.u32 %v9271, 16
      %v9337 = vor.u32 %v9335, %v9333
      %v9339 = vshll.u32 %v9272, 16
      %v9341 = vrot.slane %v9339, 1
      %v9342 = vsel %vm1146, %v9337, %v9341
      %v9343 = vshrl.u32 %v9272, 16
      %v9345 = vor.u32 %v9343, %v9341
      %v9347 = vshll.u32 %v9273, 16
      %v9349 = vrot.slane %v9347, 1
      %v9350 = vsel %vm1146, %v9345, %v9349
      %v9351 = vshrl.u32 %v9273, 16
      %v9353 = vor.u32 %v9351, %v9349
      %v9355 = vshll.u32 %v9274, 16
      %v9357 = vrot.slane %v9355, 1
      %v9358 = vsel %vm1146, %v9353, %v9357
      %v9359 = vshrl.u32 %v9274, 16
      %v9361 = vor.u32 %v9359, %v9357
      %v9363 = vshll.u32 %v9275, 16
      %v9365 = vrot.slane %v9363, 1
      %v9366 = vsel %vm1146, %v9361, %v9365
      %v9367 = vshrl.u32 %v9275, 16
      %v9369 = vor.u32 %v9367, %v9365
      %v9371 = vshll.u32 %v9276, 16
      %v9373 = vrot.slane %v9371, 1
      %v9374 = vsel %vm1146, %v9369, %v9373
      %v9375 = vshrl.u32 %v9276, 16
      %v9377 = vor.u32 %v9375, %v9373
      %v9379 = vshll.u32 %v9277, 16
      %v9381 = vrot.slane %v9379, 1
      %v9382 = vsel %vm1146, %v9377, %v9381
      %v9383 = vshrl.u32 %v9277, 16
      %v9385 = vor.u32 %v9383, %v9381
      %v9387 = vshll.u32 %v9278, 16
      %v9389 = vrot.slane %v9387, 1
      %v9390 = vsel %vm1146, %v9385, %v9389
      %v9391 = vshrl.u32 %v9278, 16
      %v9393 = vor.u32 %v9391, %v9389
      %v9395 = vshll.u32 %v9279, 16
      %v9397 = vrot.slane %v9395, 1
      %v9398 = vsel %vm1146, %v9393, %v9397
      %v9399 = vshrl.u32 %v9279, 16
      %v9401 = vor.u32 %v9399, %v9397
      %v9403 = vshll.u32 %v9280, 16
      %v9405 = vrot.slane %v9403, 1
      %v9406 = vsel %vm1146, %v9401, %v9405
      %v9407 = vshrl.u32 %v9280, 16
      %v9409 = vor.u32 %v9407, %v9405
      %v9411 = vshll.u32 %v9281, 16
      %v9413 = vrot.slane %v9411, 1
      %v9414 = vsel %vm1146, %v9409, %v9413
      %v9415 = vshrl.u32 %v9281, 16
      %v9417 = vor.u32 %v9415, %v9413
      %v9419 = vshll.u32 %v9282, 16
      %v9421 = vrot.slane %v9419, 1
      %v9422 = vsel %vm1146, %v9417, %v9421
      %v9423 = vshrl.u32 %v9282, 16
      %v9425 = vor.u32 %v9423, %v9421
      %v9427 = vshll.u32 %v9283, 16
      %v9429 = vrot.slane %v9427, 1
      %v9430 = vsel %vm1146, %v9425, %v9429
      %v9431 = vshrl.u32 %v9283, 16
      %v9433 = vor.u32 %v9431, %v9429
      %v9435 = vshll.u32 %v9284, 16
      %v9437 = vrot.slane %v9435, 1
      %v9438 = vsel %vm1146, %v9433, %v9437
      %v9439 = vshrl.u32 %v9284, 16
      %v9441 = vor.u32 %v9439, %v9437
      %v9443 = vshll.u32 %v9285, 16
      %v9445 = vrot.slane %v9443, 1
      %v9446 = vsel %vm1146, %v9441, %v9445
      %v9447 = vshrl.u32 %v9285, 16
      %v9449 = vor.u32 %v9447, %v9445
      %v9451 = vshll.u32 %v9286, 16
      %v9453 = vrot.slane %v9451, 1
      %v9454 = vsel %vm1146, %v9449, %v9453
      %v9455 = vshrl.u32 %v9286, 16
      %v9457 = vor.u32 %v9455, %v9453
      %v9459 = vshll.u32 %v9287, 16
      %v9461 = vrot.slane %v9459, 1
      %v9462 = vsel %vm1146, %v9457, %v9461
      %v9463 = vshrl.u32 %v9287, 16
      %v9465 = vor.u32 %v9463, %v9461
      %v9467 = vshll.u32 %v9288, 16
      %v9469 = vrot.slane %v9467, 1
      %v9470 = vsel %vm1146, %v9465, %v9469
      %v9471 = vshrl.u32 %v9288, 16
      %v9473 = vor.u32 %v9471, %v9469
      %v9475 = vshll.u32 %v9289, 16
      %v9477 = vrot.slane %v9475, 1
      %v9478 = vsel %vm1146, %v9473, %v9477
      %v9479 = vshrl.u32 %v9289, 16
      %v9481 = vor.u32 %v9479, %v9477
      %v9483 = vshll.u32 %v9290, 16
      %v9485 = vrot.slane %v9483, 1
      %v9486 = vsel %vm1146, %v9481, %v9485
      %v9527 = vunpack.c.l.b16 %v9152
      %v9528 = vunpack.c.l.b16 %v9153
      %v9529 = vunpack.c.l.b16 %v9154
      %v9530 = vunpack.c.l.b16 %v9155
      %v9531 = vunpack.c.l.b16 %v9156
      %v9532 = vunpack.c.l.b16 %v9157
      %v9533 = vunpack.c.l.b16 %v9158
      %v9534 = vunpack.c.l.b16 %v9159
      %v9535 = vunpack.c.l.b16 %v9160
      %v9536 = vunpack.c.l.b16 %v9161
      %v9537 = vunpack.c.l.b16 %v9162
      %v9538 = vunpack.c.l.b16 %v9163
      %v9539 = vunpack.c.l.b16 %v9164
      %v9540 = vunpack.c.l.b16 %v9165
      %v9541 = vunpack.c.l.b16 %v9166
      %v9542 = vunpack.c.l.b16 %v9167
      %v9543 = vpack.c.b16 %v9528, %v9527
      %v9544 = vpack.c.b16 %v9530, %v9529
      %v9545 = vpack.c.b16 %v9532, %v9531
      %v9546 = vpack.c.b16 %v9534, %v9533
      %v9547 = vpack.c.b16 %v9536, %v9535
      %v9548 = vpack.c.b16 %v9538, %v9537
      %v9549 = vpack.c.b16 %v9540, %v9539
      %v9550 = vpack.c.b16 %v9542, %v9541
      %9559 = vmatpush.bf16.msra.mxu0 %v9550
      %9560 = vmatpush.bf16.msra.mxu0 %v9549
      %9561 = vmatpush.bf16.msra.mxu0 %v9548
      %9562 = vmatpush.bf16.msra.mxu0 %v9547
      %9563 = vmatpush.bf16.msra.mxu0 %v9546
      %9564 = vmatpush.bf16.msra.mxu0 %v9545
      %9565 = vmatpush.bf16.msra.mxu0 %v9544
      %9566 = vmatpush.bf16.msra.mxu0 %v9543
      %9567 = vmatmul.bf16.gmra.mxu0 %v9302
      %v9568 = vpop.f32.mrf.mxu0
      %v9569 = vadd.f32 0.0, %v9568
      %v9570 = vpop.f32.mrf.mxu0
      %v9571 = vadd.f32 0.0, %v9570
      %9572 = vmatmul.bf16.gmra.mxu0 %v9310
      %v9573 = vpop.f32.mrf.mxu0
      %v9574 = vadd.f32 0.0, %v9573
      %v9575 = vpop.f32.mrf.mxu0
      %v9576 = vadd.f32 0.0, %v9575
      %9577 = vmatmul.bf16.gmra.mxu0 %v9318
      %v9578 = vpop.f32.mrf.mxu0
      %v9579 = vadd.f32 0.0, %v9578
      %v9580 = vpop.f32.mrf.mxu0
      %v9581 = vadd.f32 0.0, %v9580
      %9582 = vmatmul.bf16.gmra.mxu0 %v9326
      %v9583 = vpop.f32.mrf.mxu0
      %v9584 = vadd.f32 0.0, %v9583
      %v9585 = vpop.f32.mrf.mxu0
      %v9586 = vadd.f32 0.0, %v9585
      %9587 = vmatmul.bf16.gmra.mxu0 %v9334
      %v9588 = vpop.f32.mrf.mxu0
      %v9589 = vadd.f32 0.0, %v9588
      %v9590 = vpop.f32.mrf.mxu0
      %v9591 = vadd.f32 0.0, %v9590
      %9592 = vmatmul.bf16.gmra.mxu0 %v9342
      %v9593 = vpop.f32.mrf.mxu0
      %v9594 = vadd.f32 0.0, %v9593
      %v9595 = vpop.f32.mrf.mxu0
      %v9596 = vadd.f32 0.0, %v9595
      %9597 = vmatmul.bf16.gmra.mxu0 %v9350
      %v9598 = vpop.f32.mrf.mxu0
      %v9599 = vadd.f32 0.0, %v9598
      %v9600 = vpop.f32.mrf.mxu0
      %v9601 = vadd.f32 0.0, %v9600
      %9602 = vmatmul.bf16.gmra.mxu0 %v9358
      %v9603 = vpop.f32.mrf.mxu0
      %v9604 = vadd.f32 0.0, %v9603
      %v9605 = vpop.f32.mrf.mxu0
      %v9606 = vadd.f32 0.0, %v9605
      %9607 = vmatmul.bf16.gmra.mxu0 %v9366
      %v9608 = vpop.f32.mrf.mxu0
      %v9609 = vadd.f32 0.0, %v9608
      %v9610 = vpop.f32.mrf.mxu0
      %v9611 = vadd.f32 0.0, %v9610
      %9612 = vmatmul.bf16.gmra.mxu0 %v9374
      %v9613 = vpop.f32.mrf.mxu0
      %v9614 = vadd.f32 0.0, %v9613
      %v9615 = vpop.f32.mrf.mxu0
      %v9616 = vadd.f32 0.0, %v9615
      %9617 = vmatmul.bf16.gmra.mxu0 %v9382
      %v9618 = vpop.f32.mrf.mxu0
      %v9619 = vadd.f32 0.0, %v9618
      %v9620 = vpop.f32.mrf.mxu0
      %v9621 = vadd.f32 0.0, %v9620
      %9622 = vmatmul.bf16.gmra.mxu0 %v9390
      %v9623 = vpop.f32.mrf.mxu0
      %v9624 = vadd.f32 0.0, %v9623
      %v9625 = vpop.f32.mrf.mxu0
      %v9626 = vadd.f32 0.0, %v9625
      %9627 = vmatmul.bf16.gmra.mxu0 %v9398
      %v9628 = vpop.f32.mrf.mxu0
      %v9629 = vadd.f32 0.0, %v9628
      %v9630 = vpop.f32.mrf.mxu0
      %v9631 = vadd.f32 0.0, %v9630
      %9632 = vmatmul.bf16.gmra.mxu0 %v9406
      %v9633 = vpop.f32.mrf.mxu0
      %v9634 = vadd.f32 0.0, %v9633
      %v9635 = vpop.f32.mrf.mxu0
      %v9636 = vadd.f32 0.0, %v9635
      %9637 = vmatmul.bf16.gmra.mxu0 %v9414
      %v9638 = vpop.f32.mrf.mxu0
      %v9639 = vadd.f32 0.0, %v9638
      %v9640 = vpop.f32.mrf.mxu0
      %v9641 = vadd.f32 0.0, %v9640
      %9642 = vmatmul.bf16.gmra.mxu0 %v9422
      %v9643 = vpop.f32.mrf.mxu0
      %v9644 = vadd.f32 0.0, %v9643
      %v9645 = vpop.f32.mrf.mxu0
      %v9646 = vadd.f32 0.0, %v9645
      %9647 = vmatmul.bf16.gmra.mxu0 %v9430
      %v9648 = vpop.f32.mrf.mxu0
      %v9649 = vadd.f32 0.0, %v9648
      %v9650 = vpop.f32.mrf.mxu0
      %v9651 = vadd.f32 0.0, %v9650
      %9652 = vmatmul.bf16.gmra.mxu0 %v9438
      %v9653 = vpop.f32.mrf.mxu0
      %v9654 = vadd.f32 0.0, %v9653
      %v9655 = vpop.f32.mrf.mxu0
      %v9656 = vadd.f32 0.0, %v9655
      %9657 = vmatmul.bf16.gmra.mxu0 %v9446
      %v9658 = vpop.f32.mrf.mxu0
      %v9659 = vadd.f32 0.0, %v9658
      %v9660 = vpop.f32.mrf.mxu0
      %v9661 = vadd.f32 0.0, %v9660
      %9662 = vmatmul.bf16.gmra.mxu0 %v9454
      %v9663 = vpop.f32.mrf.mxu0
      %v9664 = vadd.f32 0.0, %v9663
      %v9665 = vpop.f32.mrf.mxu0
      %v9666 = vadd.f32 0.0, %v9665
      %9667 = vmatmul.bf16.gmra.mxu0 %v9462
      %v9668 = vpop.f32.mrf.mxu0
      %v9669 = vadd.f32 0.0, %v9668
      %v9670 = vpop.f32.mrf.mxu0
      %v9671 = vadd.f32 0.0, %v9670
      %9672 = vmatmul.bf16.gmra.mxu0 %v9470
      %v9673 = vpop.f32.mrf.mxu0
      %v9674 = vadd.f32 0.0, %v9673
      %v9675 = vpop.f32.mrf.mxu0
      %v9676 = vadd.f32 0.0, %v9675
      %9677 = vmatmul.bf16.gmra.mxu0 %v9478
      %v9678 = vpop.f32.mrf.mxu0
      %v9679 = vadd.f32 0.0, %v9678
      %v9680 = vpop.f32.mrf.mxu0
      %v9681 = vadd.f32 0.0, %v9680
      %9682 = vmatmul.bf16.gmra.mxu0 %v9486
      %v9683 = vpop.f32.mrf.mxu0
      %v9684 = vadd.f32 0.0, %v9683
      %v9685 = vpop.f32.mrf.mxu0
      %v9686 = vadd.f32 0.0, %v9685
      %9687 = vdwg.mxu0
      %v9688 = vadd.f32 %v9054, %v9569
      %v9689 = vadd.f32 %v9055, %v9571
      %v9690 = vadd.f32 %v9056, %v9574
      %v9691 = vadd.f32 %v9057, %v9576
      %v9692 = vadd.f32 %v9058, %v9579
      %v9693 = vadd.f32 %v9059, %v9581
      %v9694 = vadd.f32 %v9060, %v9584
      %v9695 = vadd.f32 %v9061, %v9586
      %v9696 = vadd.f32 %v9062, %v9589
      %v9697 = vadd.f32 %v9063, %v9591
      %v9698 = vadd.f32 %v9064, %v9594
      %v9699 = vadd.f32 %v9065, %v9596
      %v9700 = vadd.f32 %v9066, %v9599
      %v9701 = vadd.f32 %v9067, %v9601
      %v9702 = vadd.f32 %v9068, %v9604
      %v9703 = vadd.f32 %v9069, %v9606
      %v9704 = vadd.f32 %v9070, %v9609
      %v9705 = vadd.f32 %v9071, %v9611
      %v9706 = vadd.f32 %v9072, %v9614
      %v9707 = vadd.f32 %v9073, %v9616
      %v9708 = vadd.f32 %v9074, %v9619
      %v9709 = vadd.f32 %v9075, %v9621
      %v9710 = vadd.f32 %v9076, %v9624
      %v9711 = vadd.f32 %v9077, %v9626
      %v9712 = vadd.f32 %v9078, %v9629
      %v9713 = vadd.f32 %v9079, %v9631
      %v9714 = vadd.f32 %v9080, %v9634
      %v9715 = vadd.f32 %v9081, %v9636
      %v9716 = vadd.f32 %v9082, %v9639
      %v9717 = vadd.f32 %v9083, %v9641
      %v9718 = vadd.f32 %v9084, %v9644
      %v9719 = vadd.f32 %v9085, %v9646
      %v9720 = vadd.f32 %v9086, %v9649
      %v9721 = vadd.f32 %v9087, %v9651
      %v9722 = vadd.f32 %v9088, %v9654
      %v9723 = vadd.f32 %v9089, %v9656
      %v9724 = vadd.f32 %v9090, %v9659
      %v9725 = vadd.f32 %v9091, %v9661
      %v9726 = vadd.f32 %v9092, %v9664
      %v9727 = vadd.f32 %v9093, %v9666
      %v9728 = vadd.f32 %v9094, %v9669
      %v9729 = vadd.f32 %v9095, %v9671
      %v9730 = vadd.f32 %v9096, %v9674
      %v9731 = vadd.f32 %v9097, %v9676
      %v9732 = vadd.f32 %v9098, %v9679
      %v9733 = vadd.f32 %v9099, %v9681
      %v9734 = vadd.f32 %v9100, %v9684
      %v9735 = vadd.f32 %v9101, %v9686
      %v9736 = vld [vmem:[#allocation2 + $0x18] sm:$0xe]
      %s9737 = scalar_lea.vmem %s1, 1088
      %v9738 = vld [vmem:[%s9737] sm:$0xf]
      %v9739 = vld [vmem:[%s9737 + $0x4] sm:$0xf]
      %v9740 = vld [vmem:[%s9737 + $0x8] sm:$0xf]
      %v9741 = vld [vmem:[%s9737 + $0xc] sm:$0xf]
      %v9742 = vld [vmem:[%s9737 + $0x10] sm:$0xf]
      %v9743 = vld [vmem:[%s9737 + $0x14] sm:$0xf]
      %v9744 = vld [vmem:[%s9737 + $0x18] sm:$0xf]
      %v9745 = vld [vmem:[%s9737 + $0x1c] sm:$0xf]
      %v9746 = vld [vmem:[%s9737 + $0x20] sm:$0xf]
      %v9747 = vld [vmem:[%s9737 + $0x24] sm:$0xf]
      %v9748 = vld [vmem:[%s9737 + $0x28] sm:$0xf]
      %v9749 = vld [vmem:[%s9737 + $0x2c] sm:$0xf]
      %v9750 = vld [vmem:[%s9737 + $0x30] sm:$0xf]
      %v9751 = vld [vmem:[%s9737 + $0x34] sm:$0xf]
      %v9752 = vld [vmem:[%s9737 + $0x38] sm:$0xf]
      %v9753 = vld [vmem:[%s9737 + $0x3c] sm:$0xf]
      %v9755 = vunpack.c.l.b16 %v9736
      %v9756 = vpack.c.b16 %v9218, %v9755
      %v9757 = vrot.slane %v9756, 1
      %v9758 = vrot.slane %v9267, 1
      %v9759 = vsel %vm1766, %v9757, %v9758
      %v9760 = vrot.slane %v9268, 1
      %v9761 = vsel %vm1766, %v9758, %v9760
      %v9762 = vrot.slane %v9269, 1
      %v9763 = vsel %vm1766, %v9760, %v9762
      %v9764 = vrot.slane %v9270, 1
      %v9765 = vsel %vm1766, %v9762, %v9764
      %v9766 = vrot.slane %v9271, 1
      %v9767 = vsel %vm1766, %v9764, %v9766
      %v9768 = vrot.slane %v9272, 1
      %v9769 = vsel %vm1766, %v9766, %v9768
      %v9770 = vrot.slane %v9273, 1
      %v9771 = vsel %vm1766, %v9768, %v9770
      %v9772 = vrot.slane %v9274, 1
      %v9773 = vsel %vm1766, %v9770, %v9772
      %v9774 = vrot.slane %v9275, 1
      %v9775 = vsel %vm1766, %v9772, %v9774
      %v9776 = vrot.slane %v9276, 1
      %v9777 = vsel %vm1766, %v9774, %v9776
      %v9778 = vrot.slane %v9277, 1
      %v9779 = vsel %vm1766, %v9776, %v9778
      %v9780 = vrot.slane %v9278, 1
      %v9781 = vsel %vm1766, %v9778, %v9780
      %v9782 = vrot.slane %v9279, 1
      %v9783 = vsel %vm1766, %v9780, %v9782
      %v9784 = vrot.slane %v9280, 1
      %v9785 = vsel %vm1766, %v9782, %v9784
      %v9786 = vrot.slane %v9281, 1
      %v9787 = vsel %vm1766, %v9784, %v9786
      %v9788 = vrot.slane %v9282, 1
      %v9789 = vsel %vm1766, %v9786, %v9788
      %v9790 = vrot.slane %v9283, 1
      %v9791 = vsel %vm1766, %v9788, %v9790
      %v9792 = vrot.slane %v9284, 1
      %v9793 = vsel %vm1766, %v9790, %v9792
      %v9794 = vrot.slane %v9285, 1
      %v9795 = vsel %vm1766, %v9792, %v9794
      %v9796 = vrot.slane %v9286, 1
      %v9797 = vsel %vm1766, %v9794, %v9796
      %v9798 = vrot.slane %v9287, 1
      %v9799 = vsel %vm1766, %v9796, %v9798
      %v9800 = vrot.slane %v9288, 1
      %v9801 = vsel %vm1766, %v9798, %v9800
      %v9802 = vrot.slane %v9289, 1
      %v9803 = vsel %vm1766, %v9800, %v9802
      %v9804 = vrot.slane %v9290, 1
      %v9805 = vsel %vm1766, %v9802, %v9804
      %v9846 = vunpack.c.l.b16 %v9738
      %v9847 = vunpack.c.l.b16 %v9739
      %v9848 = vunpack.c.l.b16 %v9740
      %v9849 = vunpack.c.l.b16 %v9741
      %v9850 = vunpack.c.l.b16 %v9742
      %v9851 = vunpack.c.l.b16 %v9743
      %v9852 = vunpack.c.l.b16 %v9744
      %v9853 = vunpack.c.l.b16 %v9745
      %v9854 = vunpack.c.l.b16 %v9746
      %v9855 = vunpack.c.l.b16 %v9747
      %v9856 = vunpack.c.l.b16 %v9748
      %v9857 = vunpack.c.l.b16 %v9749
      %v9858 = vunpack.c.l.b16 %v9750
      %v9859 = vunpack.c.l.b16 %v9751
      %v9860 = vunpack.c.l.b16 %v9752
      %v9861 = vunpack.c.l.b16 %v9753
      %v9862 = vpack.c.b16 %v9847, %v9846
      %v9863 = vpack.c.b16 %v9849, %v9848
      %v9864 = vpack.c.b16 %v9851, %v9850
      %v9865 = vpack.c.b16 %v9853, %v9852
      %v9866 = vpack.c.b16 %v9855, %v9854
      %v9867 = vpack.c.b16 %v9857, %v9856
      %v9868 = vpack.c.b16 %v9859, %v9858
      %v9869 = vpack.c.b16 %v9861, %v9860
      %9878 = vmatpush.bf16.msra.mxu0 %v9869
      %9879 = vmatpush.bf16.msra.mxu0 %v9868
      %9880 = vmatpush.bf16.msra.mxu0 %v9867
      %9881 = vmatpush.bf16.msra.mxu0 %v9866
      %9882 = vmatpush.bf16.msra.mxu0 %v9865
      %9883 = vmatpush.bf16.msra.mxu0 %v9864
      %9884 = vmatpush.bf16.msra.mxu0 %v9863
      %9885 = vmatpush.bf16.msra.mxu0 %v9862
      %9886 = vmatmul.bf16.gmra.mxu0 %v9759
      %v9887 = vpop.f32.mrf.mxu0
      %v9888 = vadd.f32 0.0, %v9887
      %v9889 = vpop.f32.mrf.mxu0
      %v9890 = vadd.f32 0.0, %v9889
      %9891 = vmatmul.bf16.gmra.mxu0 %v9761
      %v9892 = vpop.f32.mrf.mxu0
      %v9893 = vadd.f32 0.0, %v9892
      %v9894 = vpop.f32.mrf.mxu0
      %v9895 = vadd.f32 0.0, %v9894
      %9896 = vmatmul.bf16.gmra.mxu0 %v9763
      %v9897 = vpop.f32.mrf.mxu0
      %v9898 = vadd.f32 0.0, %v9897
      %v9899 = vpop.f32.mrf.mxu0
      %v9900 = vadd.f32 0.0, %v9899
      %9901 = vmatmul.bf16.gmra.mxu0 %v9765
      %v9902 = vpop.f32.mrf.mxu0
      %v9903 = vadd.f32 0.0, %v9902
      %v9904 = vpop.f32.mrf.mxu0
      %v9905 = vadd.f32 0.0, %v9904
      %9906 = vmatmul.bf16.gmra.mxu0 %v9767
      %v9907 = vpop.f32.mrf.mxu0
      %v9908 = vadd.f32 0.0, %v9907
      %v9909 = vpop.f32.mrf.mxu0
      %v9910 = vadd.f32 0.0, %v9909
      %9911 = vmatmul.bf16.gmra.mxu0 %v9769
      %v9912 = vpop.f32.mrf.mxu0
      %v9913 = vadd.f32 0.0, %v9912
      %v9914 = vpop.f32.mrf.mxu0
      %v9915 = vadd.f32 0.0, %v9914
      %9916 = vmatmul.bf16.gmra.mxu0 %v9771
      %v9917 = vpop.f32.mrf.mxu0
      %v9918 = vadd.f32 0.0, %v9917
      %v9919 = vpop.f32.mrf.mxu0
      %v9920 = vadd.f32 0.0, %v9919
      %9921 = vmatmul.bf16.gmra.mxu0 %v9773
      %v9922 = vpop.f32.mrf.mxu0
      %v9923 = vadd.f32 0.0, %v9922
      %v9924 = vpop.f32.mrf.mxu0
      %v9925 = vadd.f32 0.0, %v9924
      %9926 = vmatmul.bf16.gmra.mxu0 %v9775
      %v9927 = vpop.f32.mrf.mxu0
      %v9928 = vadd.f32 0.0, %v9927
      %v9929 = vpop.f32.mrf.mxu0
      %v9930 = vadd.f32 0.0, %v9929
      %9931 = vmatmul.bf16.gmra.mxu0 %v9777
      %v9932 = vpop.f32.mrf.mxu0
      %v9933 = vadd.f32 0.0, %v9932
      %v9934 = vpop.f32.mrf.mxu0
      %v9935 = vadd.f32 0.0, %v9934
      %9936 = vmatmul.bf16.gmra.mxu0 %v9779
      %v9937 = vpop.f32.mrf.mxu0
      %v9938 = vadd.f32 0.0, %v9937
      %v9939 = vpop.f32.mrf.mxu0
      %v9940 = vadd.f32 0.0, %v9939
      %9941 = vmatmul.bf16.gmra.mxu0 %v9781
      %v9942 = vpop.f32.mrf.mxu0
      %v9943 = vadd.f32 0.0, %v9942
      %v9944 = vpop.f32.mrf.mxu0
      %v9945 = vadd.f32 0.0, %v9944
      %9946 = vmatmul.bf16.gmra.mxu0 %v9783
      %v9947 = vpop.f32.mrf.mxu0
      %v9948 = vadd.f32 0.0, %v9947
      %v9949 = vpop.f32.mrf.mxu0
      %v9950 = vadd.f32 0.0, %v9949
      %9951 = vmatmul.bf16.gmra.mxu0 %v9785
      %v9952 = vpop.f32.mrf.mxu0
      %v9953 = vadd.f32 0.0, %v9952
      %v9954 = vpop.f32.mrf.mxu0
      %v9955 = vadd.f32 0.0, %v9954
      %9956 = vmatmul.bf16.gmra.mxu0 %v9787
      %v9957 = vpop.f32.mrf.mxu0
      %v9958 = vadd.f32 0.0, %v9957
      %v9959 = vpop.f32.mrf.mxu0
      %v9960 = vadd.f32 0.0, %v9959
      %9961 = vmatmul.bf16.gmra.mxu0 %v9789
      %v9962 = vpop.f32.mrf.mxu0
      %v9963 = vadd.f32 0.0, %v9962
      %v9964 = vpop.f32.mrf.mxu0
      %v9965 = vadd.f32 0.0, %v9964
      %9966 = vmatmul.bf16.gmra.mxu0 %v9791
      %v9967 = vpop.f32.mrf.mxu0
      %v9968 = vadd.f32 0.0, %v9967
      %v9969 = vpop.f32.mrf.mxu0
      %v9970 = vadd.f32 0.0, %v9969
      %9971 = vmatmul.bf16.gmra.mxu0 %v9793
      %v9972 = vpop.f32.mrf.mxu0
      %v9973 = vadd.f32 0.0, %v9972
      %v9974 = vpop.f32.mrf.mxu0
      %v9975 = vadd.f32 0.0, %v9974
      %9976 = vmatmul.bf16.gmra.mxu0 %v9795
      %v9977 = vpop.f32.mrf.mxu0
      %v9978 = vadd.f32 0.0, %v9977
      %v9979 = vpop.f32.mrf.mxu0
      %v9980 = vadd.f32 0.0, %v9979
      %9981 = vmatmul.bf16.gmra.mxu0 %v9797
      %v9982 = vpop.f32.mrf.mxu0
      %v9983 = vadd.f32 0.0, %v9982
      %v9984 = vpop.f32.mrf.mxu0
      %v9985 = vadd.f32 0.0, %v9984
      %9986 = vmatmul.bf16.gmra.mxu0 %v9799
      %v9987 = vpop.f32.mrf.mxu0
      %v9988 = vadd.f32 0.0, %v9987
      %v9989 = vpop.f32.mrf.mxu0
      %v9990 = vadd.f32 0.0, %v9989
      %9991 = vmatmul.bf16.gmra.mxu0 %v9801
      %v9992 = vpop.f32.mrf.mxu0
      %v9993 = vadd.f32 0.0, %v9992
      %v9994 = vpop.f32.mrf.mxu0
      %v9995 = vadd.f32 0.0, %v9994
      %9996 = vmatmul.bf16.gmra.mxu0 %v9803
      %v9997 = vpop.f32.mrf.mxu0
      %v9998 = vadd.f32 0.0, %v9997
      %v9999 = vpop.f32.mrf.mxu0
      %v10000 = vadd.f32 0.0, %v9999
      %10001 = vmatmul.bf16.gmra.mxu0 %v9805
      %v10002 = vpop.f32.mrf.mxu0
      %v10003 = vadd.f32 0.0, %v10002
      %v10004 = vpop.f32.mrf.mxu0
      %v10005 = vadd.f32 0.0, %v10004
      %10006 = vdwg.mxu0
      %v10007 = vadd.f32 %v9688, %v9888
      %v10008 = vadd.f32 %v9689, %v9890
      %v10009 = vadd.f32 %v9690, %v9893
      %v10010 = vadd.f32 %v9691, %v9895
      %v10011 = vadd.f32 %v9692, %v9898
      %v10012 = vadd.f32 %v9693, %v9900
      %v10013 = vadd.f32 %v9694, %v9903
      %v10014 = vadd.f32 %v9695, %v9905
      %v10015 = vadd.f32 %v9696, %v9908
      %v10016 = vadd.f32 %v9697, %v9910
      %v10017 = vadd.f32 %v9698, %v9913
      %v10018 = vadd.f32 %v9699, %v9915
      %v10019 = vadd.f32 %v9700, %v9918
      %v10020 = vadd.f32 %v9701, %v9920
      %v10021 = vadd.f32 %v9702, %v9923
      %v10022 = vadd.f32 %v9703, %v9925
      %v10023 = vadd.f32 %v9704, %v9928
      %v10024 = vadd.f32 %v9705, %v9930
      %v10025 = vadd.f32 %v9706, %v9933
      %v10026 = vadd.f32 %v9707, %v9935
      %v10027 = vadd.f32 %v9708, %v9938
      %v10028 = vadd.f32 %v9709, %v9940
      %v10029 = vadd.f32 %v9710, %v9943
      %v10030 = vadd.f32 %v9711, %v9945
      %v10031 = vadd.f32 %v9712, %v9948
      %v10032 = vadd.f32 %v9713, %v9950
      %v10033 = vadd.f32 %v9714, %v9953
      %v10034 = vadd.f32 %v9715, %v9955
      %v10035 = vadd.f32 %v9716, %v9958
      %v10036 = vadd.f32 %v9717, %v9960
      %v10037 = vadd.f32 %v9718, %v9963
      %v10038 = vadd.f32 %v9719, %v9965
      %v10039 = vadd.f32 %v9720, %v9968
      %v10040 = vadd.f32 %v9721, %v9970
      %v10041 = vadd.f32 %v9722, %v9973
      %v10042 = vadd.f32 %v9723, %v9975
      %v10043 = vadd.f32 %v9724, %v9978
      %v10044 = vadd.f32 %v9725, %v9980
      %v10045 = vadd.f32 %v9726, %v9983
      %v10046 = vadd.f32 %v9727, %v9985
      %v10047 = vadd.f32 %v9728, %v9988
      %v10048 = vadd.f32 %v9729, %v9990
      %v10049 = vadd.f32 %v9730, %v9993
      %v10050 = vadd.f32 %v9731, %v9995
      %v10051 = vadd.f32 %v9732, %v9998
      %v10052 = vadd.f32 %v9733, %v10000
      %v10053 = vadd.f32 %v9734, %v10003
      %v10054 = vadd.f32 %v9735, %v10005
      %s10055 = scalar_lea.vmem %s2, 1
      %v10056 = vld [vmem:[%s10055] sm:$0x1]
      %v10058 = vperm.slane %v10056, 0
      %v10060 = vadd.f32 %v10007, %v10058
      %v10061 = vadd.f32 %v10008, %v10058
      %v10062 = vadd.f32 %v10009, %v10058
      %v10063 = vadd.f32 %v10010, %v10058
      %v10064 = vadd.f32 %v10011, %v10058
      %v10065 = vadd.f32 %v10012, %v10058
      %v10066 = vadd.f32 %v10013, %v10058
      %v10067 = vadd.f32 %v10014, %v10058
      %v10068 = vadd.f32 %v10015, %v10058
      %v10069 = vadd.f32 %v10016, %v10058
      %v10070 = vadd.f32 %v10017, %v10058
      %v10071 = vadd.f32 %v10018, %v10058
      %v10072 = vadd.f32 %v10019, %v10058
      %v10073 = vadd.f32 %v10020, %v10058
      %v10074 = vadd.f32 %v10021, %v10058
      %v10075 = vadd.f32 %v10022, %v10058
      %v10076 = vadd.f32 %v10023, %v10058
      %v10077 = vadd.f32 %v10024, %v10058
      %v10078 = vadd.f32 %v10025, %v10058
      %v10079 = vadd.f32 %v10026, %v10058
      %v10080 = vadd.f32 %v10027, %v10058
      %v10081 = vadd.f32 %v10028, %v10058
      %v10082 = vadd.f32 %v10029, %v10058
      %v10083 = vadd.f32 %v10030, %v10058
      %v10084 = vadd.f32 %v10031, %v10058
      %v10085 = vadd.f32 %v10032, %v10058
      %v10086 = vadd.f32 %v10033, %v10058
      %v10087 = vadd.f32 %v10034, %v10058
      %v10088 = vadd.f32 %v10035, %v10058
      %v10089 = vadd.f32 %v10036, %v10058
      %v10090 = vadd.f32 %v10037, %v10058
      %v10091 = vadd.f32 %v10038, %v10058
      %v10092 = vadd.f32 %v10039, %v10058
      %v10093 = vadd.f32 %v10040, %v10058
      %v10094 = vadd.f32 %v10041, %v10058
      %v10095 = vadd.f32 %v10042, %v10058
      %v10096 = vadd.f32 %v10043, %v10058
      %v10097 = vadd.f32 %v10044, %v10058
      %v10098 = vadd.f32 %v10045, %v10058
      %v10099 = vadd.f32 %v10046, %v10058
      %v10100 = vadd.f32 %v10047, %v10058
      %v10101 = vadd.f32 %v10048, %v10058
      %v10102 = vadd.f32 %v10049, %v10058
      %v10103 = vadd.f32 %v10050, %v10058
      %v10104 = vadd.f32 %v10051, %v10058
      %v10105 = vadd.f32 %v10052, %v10058
      %v10106 = vadd.f32 %v10053, %v10058
      %v10107 = vadd.f32 %v10054, %v10058
      %v10108 = vmul.f32 %v10060, %v4894
      %v10109 = vmul.f32 %v10061, %v4899
      %v10110 = vmul.f32 %v10062, %v4904
      %v10111 = vmul.f32 %v10063, %v4909
      %v10112 = vmul.f32 %v10064, %v4914
      %v10113 = vmul.f32 %v10065, %v4919
      %v10114 = vmul.f32 %v10066, %v4924
      %v10115 = vmul.f32 %v10067, %v4929
      %v10116 = vmul.f32 %v10068, %v4934
      %v10117 = vmul.f32 %v10069, %v4939
      %v10118 = vmul.f32 %v10070, %v4944
      %v10119 = vmul.f32 %v10071, %v4949
      %v10120 = vmul.f32 %v10072, %v4954
      %v10121 = vmul.f32 %v10073, %v4959
      %v10122 = vmul.f32 %v10074, %v4964
      %v10123 = vmul.f32 %v10075, %v4969
      %v10124 = vmul.f32 %v10076, %v4974
      %v10125 = vmul.f32 %v10077, %v4979
      %v10126 = vmul.f32 %v10078, %v4984
      %v10127 = vmul.f32 %v10079, %v4989
      %v10128 = vmul.f32 %v10080, %v4994
      %v10129 = vmul.f32 %v10081, %v4999
      %v10130 = vmul.f32 %v10082, %v5004
      %v10131 = vmul.f32 %v10083, %v5009
      %v10132 = vmul.f32 %v10084, %v5014
      %v10133 = vmul.f32 %v10085, %v5019
      %v10134 = vmul.f32 %v10086, %v5024
      %v10135 = vmul.f32 %v10087, %v5029
      %v10136 = vmul.f32 %v10088, %v5034
      %v10137 = vmul.f32 %v10089, %v5039
      %v10138 = vmul.f32 %v10090, %v5044
      %v10139 = vmul.f32 %v10091, %v5049
      %v10140 = vmul.f32 %v10092, %v5054
      %v10141 = vmul.f32 %v10093, %v5059
      %v10142 = vmul.f32 %v10094, %v5064
      %v10143 = vmul.f32 %v10095, %v5069
      %v10144 = vmul.f32 %v10096, %v5074
      %v10145 = vmul.f32 %v10097, %v5079
      %v10146 = vmul.f32 %v10098, %v5084
      %v10147 = vmul.f32 %v10099, %v5089
      %v10148 = vmul.f32 %v10100, %v5094
      %v10149 = vmul.f32 %v10101, %v5099
      %v10150 = vmul.f32 %v10102, %v5104
      %v10151 = vmul.f32 %v10103, %v5109
      %v10152 = vmul.f32 %v10104, %v5114
      %v10153 = vmul.f32 %v10105, %v5119
      %v10154 = vmul.f32 %v10106, %v5124
      %v10155 = vmul.f32 %v10107, %v5129
      %v10156 = vadd.f32 %v10108, %v10109
      %v10157 = vadd.f32 %v10156, %v10110
      %v10158 = vadd.f32 %v10157, %v10111
      %v10159 = vadd.f32 %v10158, %v10112
      %v10160 = vadd.f32 %v10159, %v10113
      %v10161 = vadd.f32 %v10160, %v10114
      %v10162 = vadd.f32 %v10161, %v10115
      %v10163 = vadd.f32 %v10162, %v10116
      %v10164 = vadd.f32 %v10163, %v10117
      %v10165 = vadd.f32 %v10164, %v10118
      %v10166 = vadd.f32 %v10165, %v10119
      %v10167 = vadd.f32 %v10166, %v10120
      %v10168 = vadd.f32 %v10167, %v10121
      %v10169 = vadd.f32 %v10168, %v10122
      %v10170 = vadd.f32 %v10169, %v10123
      %v10171 = vadd.f32 %v10170, %v10124
      %v10172 = vadd.f32 %v10171, %v10125
      %v10173 = vadd.f32 %v10172, %v10126
      %v10174 = vadd.f32 %v10173, %v10127
      %v10175 = vadd.f32 %v10174, %v10128
      %v10176 = vadd.f32 %v10175, %v10129
      %v10177 = vadd.f32 %v10176, %v10130
      %v10178 = vadd.f32 %v10177, %v10131
      %v10179 = vadd.f32 %v10178, %v10132
      %v10180 = vadd.f32 %v10179, %v10133
      %v10181 = vadd.f32 %v10180, %v10134
      %v10182 = vadd.f32 %v10181, %v10135
      %v10183 = vadd.f32 %v10182, %v10136
      %v10184 = vadd.f32 %v10183, %v10137
      %v10185 = vadd.f32 %v10184, %v10138
      %v10186 = vadd.f32 %v10185, %v10139
      %v10187 = vadd.f32 %v10186, %v10140
      %v10188 = vadd.f32 %v10187, %v10141
      %v10189 = vadd.f32 %v10188, %v10142
      %v10190 = vadd.f32 %v10189, %v10143
      %v10191 = vadd.f32 %v10190, %v10144
      %v10192 = vadd.f32 %v10191, %v10145
      %v10193 = vadd.f32 %v10192, %v10146
      %v10194 = vadd.f32 %v10193, %v10147
      %v10195 = vadd.f32 %v10194, %v10148
      %v10196 = vadd.f32 %v10195, %v10149
      %v10197 = vadd.f32 %v10196, %v10150
      %v10198 = vadd.f32 %v10197, %v10151
      %v10199 = vadd.f32 %v10198, %v10152
      %v10200 = vadd.f32 %v10199, %v10153
      %v10201 = vadd.f32 %v10200, %v10154
      %v10202 = vadd.f32 %v10201, %v10155
      %v10203 = vmul.f32 %v10108, %v10108
      %v10204 = vmul.f32 %v10109, %v10109
      %v10205 = vmul.f32 %v10110, %v10110
      %v10206 = vmul.f32 %v10111, %v10111
      %v10207 = vmul.f32 %v10112, %v10112
      %v10208 = vmul.f32 %v10113, %v10113
      %v10209 = vmul.f32 %v10114, %v10114
      %v10210 = vmul.f32 %v10115, %v10115
      %v10211 = vmul.f32 %v10116, %v10116
      %v10212 = vmul.f32 %v10117, %v10117
      %v10213 = vmul.f32 %v10118, %v10118
      %v10214 = vmul.f32 %v10119, %v10119
      %v10215 = vmul.f32 %v10120, %v10120
      %v10216 = vmul.f32 %v10121, %v10121
      %v10217 = vmul.f32 %v10122, %v10122
      %v10218 = vmul.f32 %v10123, %v10123
      %v10219 = vmul.f32 %v10124, %v10124
      %v10220 = vmul.f32 %v10125, %v10125
      %v10221 = vmul.f32 %v10126, %v10126
      %v10222 = vmul.f32 %v10127, %v10127
      %v10223 = vmul.f32 %v10128, %v10128
      %v10224 = vmul.f32 %v10129, %v10129
      %v10225 = vmul.f32 %v10130, %v10130
      %v10226 = vmul.f32 %v10131, %v10131
      %v10227 = vmul.f32 %v10132, %v10132
      %v10228 = vmul.f32 %v10133, %v10133
      %v10229 = vmul.f32 %v10134, %v10134
      %v10230 = vmul.f32 %v10135, %v10135
      %v10231 = vmul.f32 %v10136, %v10136
      %v10232 = vmul.f32 %v10137, %v10137
      %v10233 = vmul.f32 %v10138, %v10138
      %v10234 = vmul.f32 %v10139, %v10139
      %v10235 = vmul.f32 %v10140, %v10140
      %v10236 = vmul.f32 %v10141, %v10141
      %v10237 = vmul.f32 %v10142, %v10142
      %v10238 = vmul.f32 %v10143, %v10143
      %v10239 = vmul.f32 %v10144, %v10144
      %v10240 = vmul.f32 %v10145, %v10145
      %v10241 = vmul.f32 %v10146, %v10146
      %v10242 = vmul.f32 %v10147, %v10147
      %v10243 = vmul.f32 %v10148, %v10148
      %v10244 = vmul.f32 %v10149, %v10149
      %v10245 = vmul.f32 %v10150, %v10150
      %v10246 = vmul.f32 %v10151, %v10151
      %v10247 = vmul.f32 %v10152, %v10152
      %v10248 = vmul.f32 %v10153, %v10153
      %v10249 = vmul.f32 %v10154, %v10154
      %v10250 = vmul.f32 %v10155, %v10155
      %v10251 = vadd.f32 %v10203, %v10204
      %v10252 = vadd.f32 %v10251, %v10205
      %v10253 = vadd.f32 %v10252, %v10206
      %v10254 = vadd.f32 %v10253, %v10207
      %v10255 = vadd.f32 %v10254, %v10208
      %v10256 = vadd.f32 %v10255, %v10209
      %v10257 = vadd.f32 %v10256, %v10210
      %v10258 = vadd.f32 %v10257, %v10211
      %v10259 = vadd.f32 %v10258, %v10212
      %v10260 = vadd.f32 %v10259, %v10213
      %v10261 = vadd.f32 %v10260, %v10214
      %v10262 = vadd.f32 %v10261, %v10215
      %v10263 = vadd.f32 %v10262, %v10216
      %v10264 = vadd.f32 %v10263, %v10217
      %v10265 = vadd.f32 %v10264, %v10218
      %v10266 = vadd.f32 %v10265, %v10219
      %v10267 = vadd.f32 %v10266, %v10220
      %v10268 = vadd.f32 %v10267, %v10221
      %v10269 = vadd.f32 %v10268, %v10222
      %v10270 = vadd.f32 %v10269, %v10223
      %v10271 = vadd.f32 %v10270, %v10224
      %v10272 = vadd.f32 %v10271, %v10225
      %v10273 = vadd.f32 %v10272, %v10226
      %v10274 = vadd.f32 %v10273, %v10227
      %v10275 = vadd.f32 %v10274, %v10228
      %v10276 = vadd.f32 %v10275, %v10229
      %v10277 = vadd.f32 %v10276, %v10230
      %v10278 = vadd.f32 %v10277, %v10231
      %v10279 = vadd.f32 %v10278, %v10232
      %v10280 = vadd.f32 %v10279, %v10233
      %v10281 = vadd.f32 %v10280, %v10234
      %v10282 = vadd.f32 %v10281, %v10235
      %v10283 = vadd.f32 %v10282, %v10236
      %v10284 = vadd.f32 %v10283, %v10237
      %v10285 = vadd.f32 %v10284, %v10238
      %v10286 = vadd.f32 %v10285, %v10239
      %v10287 = vadd.f32 %v10286, %v10240
      %v10288 = vadd.f32 %v10287, %v10241
      %v10289 = vadd.f32 %v10288, %v10242
      %v10290 = vadd.f32 %v10289, %v10243
      %v10291 = vadd.f32 %v10290, %v10244
      %v10292 = vadd.f32 %v10291, %v10245
      %v10293 = vadd.f32 %v10292, %v10246
      %v10294 = vadd.f32 %v10293, %v10247
      %v10295 = vadd.f32 %v10294, %v10248
      %v10296 = vadd.f32 %v10295, %v10249
      %v10297 = vadd.f32 %v10296, %v10250
      %10298 = vmatpush.msra.mxu0 %v940
      %10299 = vmatpush.msra.mxu0 %v939
      %10300 = vmatpush.msra.mxu0 %v938
      %10301 = vmatpush.msra.mxu0 %v937
      %10302 = vmatpush.msra.mxu0 %v936
      %10303 = vmatpush.msra.mxu0 %v935
      %10304 = vmatpush.msra.mxu0 %v934
      %10305 = vmatpush.msra.mxu0 %v933
      %10306 = vmatpush.msra.mxu0 %v932
      %10307 = vmatpush.msra.mxu0 %v931
      %10308 = vmatpush.msra.mxu0 %v930
      %10309 = vmatpush.msra.mxu0 %v929
      %10310 = vmatpush.msra.mxu0 %v928
      %10311 = vmatpush.msra.mxu0 %v927
      %10312 = vmatpush.msra.mxu0 %v926
      %10313 = vmatpush.msra.mxu0 %v925
      %10314 = vmatmul.f32.gmra.mxu0 %v10202
      %v10315 = vpop.f32.mrf.mxu0
      %v10316 = vadd.f32 0.0, %v10315
      %10317 = vdwg.mxu0
      %v10318 = vrot.slane %v10316, 4
      %v10319 = vadd.f32 %v10316, %v10318
      %v10320 = vrot.slane %v10319, 2
      %v10321 = vadd.f32 %v10319, %v10320
      %v10322 = vrot.slane %v10321, 1
      %v10323 = vadd.f32 %v10321, %v10322
      %10324 = vmatpush.msra.mxu0 %v940
      %10325 = vmatpush.msra.mxu0 %v939
      %10326 = vmatpush.msra.mxu0 %v938
      %10327 = vmatpush.msra.mxu0 %v937
      %10328 = vmatpush.msra.mxu0 %v936
      %10329 = vmatpush.msra.mxu0 %v935
      %10330 = vmatpush.msra.mxu0 %v934
      %10331 = vmatpush.msra.mxu0 %v933
      %10332 = vmatpush.msra.mxu0 %v932
      %10333 = vmatpush.msra.mxu0 %v931
      %10334 = vmatpush.msra.mxu0 %v930
      %10335 = vmatpush.msra.mxu0 %v929
      %10336 = vmatpush.msra.mxu0 %v928
      %10337 = vmatpush.msra.mxu0 %v927
      %10338 = vmatpush.msra.mxu0 %v926
      %10339 = vmatpush.msra.mxu0 %v925
      %10340 = vmatmul.f32.gmra.mxu0 %v10297
      %v10341 = vpop.f32.mrf.mxu0
      %v10342 = vadd.f32 0.0, %v10341
      %10343 = vdwg.mxu0
      %v10344 = vrot.slane %v10342, 4
      %v10345 = vadd.f32 %v10342, %v10344
      %v10346 = vrot.slane %v10345, 2
      %v10347 = vadd.f32 %v10345, %v10346
      %v10348 = vrot.slane %v10347, 1
      %v10349 = vadd.f32 %v10347, %v10348
      %v10350 = vmul.f32 %v10323, %v10323
      %v10351 = vsub.f32 %v10349, %v10350
      %v10352 = vadd.f32 %v10351, 1e-05
      %v10353 = vrsqrt.pop %v10352
      %v10354 = vmul.f32 %v10353, %v10352
      %v10355 = vmul.f32 %v10354, %v10353
      %v10356 = vmul.f32 0.5, %v10355
      %v10357 = vsub.f32 1.5, %v10356
      %v10358 = vmul.f32 %v10353, %v10357
      %vm10359 = vweird.f32 %v10352
      %vm10360 = vweird.f32 %v10353
      %vm10361 = vmor %vm10359, %vm10360
      %v10362 = vsel %vm10361, %v10353, %v10358
      %v10363 = vsub.f32 %v10060, %v10323
      %v10364 = vsub.f32 %v10061, %v10323
      %v10365 = vsub.f32 %v10062, %v10323
      %v10366 = vsub.f32 %v10063, %v10323
      %v10367 = vsub.f32 %v10064, %v10323
      %v10368 = vsub.f32 %v10065, %v10323
      %v10369 = vsub.f32 %v10066, %v10323
      %v10370 = vsub.f32 %v10067, %v10323
      %v10371 = vsub.f32 %v10068, %v10323
      %v10372 = vsub.f32 %v10069, %v10323
      %v10373 = vsub.f32 %v10070, %v10323
      %v10374 = vsub.f32 %v10071, %v10323
      %v10375 = vsub.f32 %v10072, %v10323
      %v10376 = vsub.f32 %v10073, %v10323
      %v10377 = vsub.f32 %v10074, %v10323
      %v10378 = vsub.f32 %v10075, %v10323
      %v10379 = vsub.f32 %v10076, %v10323
      %v10380 = vsub.f32 %v10077, %v10323
      %v10381 = vsub.f32 %v10078, %v10323
      %v10382 = vsub.f32 %v10079, %v10323
      %v10383 = vsub.f32 %v10080, %v10323
      %v10384 = vsub.f32 %v10081, %v10323
      %v10385 = vsub.f32 %v10082, %v10323
      %v10386 = vsub.f32 %v10083, %v10323
      %v10387 = vsub.f32 %v10084, %v10323
      %v10388 = vsub.f32 %v10085, %v10323
      %v10389 = vsub.f32 %v10086, %v10323
      %v10390 = vsub.f32 %v10087, %v10323
      %v10391 = vsub.f32 %v10088, %v10323
      %v10392 = vsub.f32 %v10089, %v10323
      %v10393 = vsub.f32 %v10090, %v10323
      %v10394 = vsub.f32 %v10091, %v10323
      %v10395 = vsub.f32 %v10092, %v10323
      %v10396 = vsub.f32 %v10093, %v10323
      %v10397 = vsub.f32 %v10094, %v10323
      %v10398 = vsub.f32 %v10095, %v10323
      %v10399 = vsub.f32 %v10096, %v10323
      %v10400 = vsub.f32 %v10097, %v10323
      %v10401 = vsub.f32 %v10098, %v10323
      %v10402 = vsub.f32 %v10099, %v10323
      %v10403 = vsub.f32 %v10100, %v10323
      %v10404 = vsub.f32 %v10101, %v10323
      %v10405 = vsub.f32 %v10102, %v10323
      %v10406 = vsub.f32 %v10103, %v10323
      %v10407 = vsub.f32 %v10104, %v10323
      %v10408 = vsub.f32 %v10105, %v10323
      %v10409 = vsub.f32 %v10106, %v10323
      %v10410 = vsub.f32 %v10107, %v10323
      %v10411 = vmul.f32 %v10363, %v10362
      %v10412 = vmul.f32 %v10364, %v10362
      %v10413 = vmul.f32 %v10365, %v10362
      %v10414 = vmul.f32 %v10366, %v10362
      %v10415 = vmul.f32 %v10367, %v10362
      %v10416 = vmul.f32 %v10368, %v10362
      %v10417 = vmul.f32 %v10369, %v10362
      %v10418 = vmul.f32 %v10370, %v10362
      %v10419 = vmul.f32 %v10371, %v10362
      %v10420 = vmul.f32 %v10372, %v10362
      %v10421 = vmul.f32 %v10373, %v10362
      %v10422 = vmul.f32 %v10374, %v10362
      %v10423 = vmul.f32 %v10375, %v10362
      %v10424 = vmul.f32 %v10376, %v10362
      %v10425 = vmul.f32 %v10377, %v10362
      %v10426 = vmul.f32 %v10378, %v10362
      %v10427 = vmul.f32 %v10379, %v10362
      %v10428 = vmul.f32 %v10380, %v10362
      %v10429 = vmul.f32 %v10381, %v10362
      %v10430 = vmul.f32 %v10382, %v10362
      %v10431 = vmul.f32 %v10383, %v10362
      %v10432 = vmul.f32 %v10384, %v10362
      %v10433 = vmul.f32 %v10385, %v10362
      %v10434 = vmul.f32 %v10386, %v10362
      %v10435 = vmul.f32 %v10387, %v10362
      %v10436 = vmul.f32 %v10388, %v10362
      %v10437 = vmul.f32 %v10389, %v10362
      %v10438 = vmul.f32 %v10390, %v10362
      %v10439 = vmul.f32 %v10391, %v10362
      %v10440 = vmul.f32 %v10392, %v10362
      %v10441 = vmul.f32 %v10393, %v10362
      %v10442 = vmul.f32 %v10394, %v10362
      %v10443 = vmul.f32 %v10395, %v10362
      %v10444 = vmul.f32 %v10396, %v10362
      %v10445 = vmul.f32 %v10397, %v10362
      %v10446 = vmul.f32 %v10398, %v10362
      %v10447 = vmul.f32 %v10399, %v10362
      %v10448 = vmul.f32 %v10400, %v10362
      %v10449 = vmul.f32 %v10401, %v10362
      %v10450 = vmul.f32 %v10402, %v10362
      %v10451 = vmul.f32 %v10403, %v10362
      %v10452 = vmul.f32 %v10404, %v10362
      %v10453 = vmul.f32 %v10405, %v10362
      %v10454 = vmul.f32 %v10406, %v10362
      %v10455 = vmul.f32 %v10407, %v10362
      %v10456 = vmul.f32 %v10408, %v10362
      %v10457 = vmul.f32 %v10409, %v10362
      %v10458 = vmul.f32 %v10410, %v10362
      %10459 = vst [vmem:[%s224] sm:$0xff] %v10411
      %10460 = vst [vmem:[%s224 + $0x8] sm:$0xff] %v10412
      %10461 = vst [vmem:[%s224 + $0x10] sm:$0xff] %v10413
      %10462 = vst [vmem:[%s224 + $0x18] sm:$0xff] %v10414
      %10463 = vst [vmem:[%s224 + $0x20] sm:$0xff] %v10415
      %10464 = vst [vmem:[%s224 + $0x28] sm:$0xff] %v10416
      %10465 = vst [vmem:[%s224 + $0x30] sm:$0xff] %v10417
      %10466 = vst [vmem:[%s224 + $0x38] sm:$0xff] %v10418
      %10467 = vst [vmem:[%s224 + $0x40] sm:$0xff] %v10419
      %10468 = vst [vmem:[%s224 + $0x48] sm:$0xff] %v10420
      %10469 = vst [vmem:[%s224 + $0x50] sm:$0xff] %v10421
      %10470 = vst [vmem:[%s224 + $0x58] sm:$0xff] %v10422
      %10471 = vst [vmem:[%s224 + $0x60] sm:$0xff] %v10423
      %10472 = vst [vmem:[%s224 + $0x68] sm:$0xff] %v10424
      %10473 = vst [vmem:[%s224 + $0x70] sm:$0xff] %v10425
      %10474 = vst [vmem:[%s224 + $0x78] sm:$0xff] %v10426
      %10475 = vst [vmem:[%s224 + $0x80] sm:$0xff] %v10427
      %10476 = vst [vmem:[%s224 + $0x88] sm:$0xff] %v10428
      %10477 = vst [vmem:[%s224 + $0x90] sm:$0xff] %v10429
      %10478 = vst [vmem:[%s224 + $0x98] sm:$0xff] %v10430
      %10479 = vst [vmem:[%s224 + $0xa0] sm:$0xff] %v10431
      %10480 = vst [vmem:[%s224 + $0xa8] sm:$0xff] %v10432
      %10481 = vst [vmem:[%s224 + $0xb0] sm:$0xff] %v10433
      %10482 = vst [vmem:[%s224 + $0xb8] sm:$0xff] %v10434
      %10483 = vst [vmem:[%s224 + $0xc0] sm:$0xff] %v10435
      %10484 = vst [vmem:[%s224 + $0xc8] sm:$0xff] %v10436
      %10485 = vst [vmem:[%s224 + $0xd0] sm:$0xff] %v10437
      %10486 = vst [vmem:[%s224 + $0xd8] sm:$0xff] %v10438
      %10487 = vst [vmem:[%s224 + $0xe0] sm:$0xff] %v10439
      %10488 = vst [vmem:[%s224 + $0xe8] sm:$0xff] %v10440
      %10489 = vst [vmem:[%s224 + $0xf0] sm:$0xff] %v10441
      %10490 = vst [vmem:[%s224 + $0xf8] sm:$0xff] %v10442
      %10491 = vst [vmem:[%s224 + $0x100] sm:$0xff] %v10443
      %10492 = vst [vmem:[%s224 + $0x108] sm:$0xff] %v10444
      %10493 = vst [vmem:[%s224 + $0x110] sm:$0xff] %v10445
      %10494 = vst [vmem:[%s224 + $0x118] sm:$0xff] %v10446
      %10495 = vst [vmem:[%s224 + $0x120] sm:$0xff] %v10447
      %10496 = vst [vmem:[%s224 + $0x128] sm:$0xff] %v10448
      %10497 = vst [vmem:[%s224 + $0x130] sm:$0xff] %v10449
      %10498 = vst [vmem:[%s224 + $0x138] sm:$0xff] %v10450
      %10499 = vst [vmem:[%s224 + $0x140] sm:$0xff] %v10451
      %10500 = vst [vmem:[%s224 + $0x148] sm:$0xff] %v10452
      %10501 = vst [vmem:[%s224 + $0x150] sm:$0xff] %v10453
      %10502 = vst [vmem:[%s224 + $0x158] sm:$0xff] %v10454
      %10503 = vst [vmem:[%s224 + $0x160] sm:$0xff] %v10455
      %10504 = vst [vmem:[%s224 + $0x168] sm:$0xff] %v10456
      %10505 = vst [vmem:[%s224 + $0x170] sm:$0xff] %v10457
      %10506 = vst [vmem:[%s224 + $0x178] sm:$0xff] %v10458
      %p10507 = scmp.lt.s32.totalorder %s16, 1
      %s10508 = scalar_select %p10507, %s16, 1
      %s10509 = smul.addr %s10508, 48
      %s10510 = smul.addr %s10509, 8
      %s10511 = scalar_lea.vmem %s5, %s10510
      // Predicated region
      $region41: #{_graph_tower_level.1} parent=39 // pred_check
        %p10512 = pneg %p144
      $region42: #{_graph_tower_level.1} parent=39 // pred_check_branch
        %10514 = sbr.rel (%p10512) target = $region44
      $region43: #{_graph_tower_level.1} parent=39 // pred_region
        _
      $region44: #{_graph_tower_level.1} parent=39 // pred_fallthru
        _
    $region40: #{_graph_tower_level.1} parent=5 // pred_fallthru
      _
    %p10515 = scmp.le.s32.totalorder 2, %s11
    // Predicated region
    $region45: #{_graph_tower_level.1} parent=5 // pred_check
      %p10516 = pneg %p10515
    $region46: #{_graph_tower_level.1} parent=5 // pred_check_branch
      %10518 = sbr.rel (%p10516) target = $region48
    $region47: #{_graph_tower_level.1} parent=5 // pred_region
      %s10519 = ssub.s32 %s11, 2
      // Predicated region
      $region49: #{_graph_tower_level.1} parent=47 // pred_check
        %p10520 = pneg %p150
      $region50: #{_graph_tower_level.1} parent=47 // pred_check_branch
        %10522 = sbr.rel (%p10520) target = $region52
      $region51: #{_graph_tower_level.1} parent=47 // pred_region
        %p10523 = scmp.lt.s32.totalorder %s17, 1
        %s10524 = scalar_select %p10523, %s17, 1
        %s10525 = smul.addr %s10524, 48
        %s10526 = smul.addr %s10525, 8
        %s10527 = scalar_lea.vmem %s5, %s10526
      $region52: #{_graph_tower_level.1} parent=47 // pred_fallthru
        _
    $region48: #{_graph_tower_level.1} parent=5 // pred_fallthru
      _
  $region6: #{_graph_tower_level.1} parent=0 // loop_footer
    %s15 = sadd.s32 1, %s11
  $region7: #{_graph_tower_level.1} parent=0 // loop_footer_branch
    %10 = sbr.rel target = $region3
  $region8: #{_graph_tower_level.1} parent=0 // loop_exit
    _

</llo_original>
